<compile_context>
chip_gen: v7x
topology: tpu7x:2x2x1
jax: 0.10.0
libtpu: 0.0.40
codegen_flags: <defaults>
</compile_context>

<pallas_src>
import functools

import jax
import jax.numpy as jnp
from jax.experimental import pallas as pl
from jax.experimental.pallas import tpu as pltpu

_EPS = 1e-5
_VMEM_LIMIT = 48 * 1024 * 1024   # stays under v7x's 64 MiB per-TensorCore VMEM


# ---------------------------------------------------------------------------
# Kernel 1: fused chain of small layers (all weights resident in VMEM, no grid).
# ---------------------------------------------------------------------------
def _chain_kernel(*refs, layer_flags):
    # refs = (x_ref, per-layer [w, b, (gamma, beta)]..., o_ref)
    x_ref, o_ref = refs[0], refs[-1]
    h = x_ref[...]                                   # float32 (B, F0)
    idx = 1
    for has_bn, has_tanh in layer_flags:
        w_ref, b_ref = refs[idx], refs[idx + 1]
        idx += 2
        y = jnp.dot(h.astype(jnp.bfloat16), w_ref[...],
                    preferred_element_type=jnp.float32) + b_ref[...]
        if has_bn:
            g_ref, bt_ref = refs[idx], refs[idx + 1]
            idx += 2
            mean = jnp.mean(y, axis=0, keepdims=True)
            var = jnp.mean(jnp.square(y - mean), axis=0, keepdims=True)
            y = (y - mean) * jax.lax.rsqrt(var + _EPS) * g_ref[...] + bt_ref[...]
        if has_tanh:
            y = jnp.tanh(y)
        h = y
    o_ref[...] = h.astype(o_ref.dtype)


def fused_chain(x, layers):
    """One pallas_call running several Linear(+BN+Tanh) layers back to back."""
    B = x.shape[0]
    args = [x]
    flags = []
    for p in layers:
        args += [p["w"], p["b"]]
        if p["has_bn"]:
            args += [p["gamma"], p["beta"]]
        flags.append((p["has_bn"], p["has_bn"]))     # tanh always follows BN here
    n_out = layers[-1]["w"].shape[1]
    kernel = functools.partial(_chain_kernel, layer_flags=tuple(flags))
    return pl.pallas_call(
        kernel,
        out_shape=jax.ShapeDtypeStruct((B, n_out), jnp.float32),
        compiler_params=pltpu.CompilerParams(vmem_limit_bytes=_VMEM_LIMIT),
    )(*args)


# ---------------------------------------------------------------------------
# Kernel 2: big Linear with K <= 2048 (2048 -> 20480).
# Grid over N only ("parallel"), full K per step => no accumulator, x resident.
# ---------------------------------------------------------------------------
def _big_linear_kernel(x_ref, w_ref, b_ref, o_ref):
    o_ref[...] = (jnp.dot(x_ref[...].astype(jnp.bfloat16), w_ref[...],
                          preferred_element_type=jnp.float32)
                  + b_ref[...]).astype(o_ref.dtype)


def big_linear(x, w, b, *, tn):
    B, K = x.shape
    Kw, N = w.shape
    assert K == Kw and N % tn == 0
    return pl.pallas_call(
        _big_linear_kernel,
        out_shape=jax.ShapeDtypeStruct((B, N), jnp.float32),
        grid_spec=pltpu.PrefetchScalarGridSpec(
            num_scalar_prefetch=0,
            grid=(N // tn,),
            in_specs=[
                pl.BlockSpec((B, K), lambda n: (0, 0)),    # x stays resident in VMEM
                pl.BlockSpec((K, tn), lambda n: (0, n)),   # bf16 weight stream (8 MiB tiles)
                pl.BlockSpec((1, tn), lambda n: (0, n)),   # bias
            ],
            out_specs=pl.BlockSpec((B, tn), lambda n: (0, n)),
        ),
        compiler_params=pltpu.CompilerParams(
            dimension_semantics=("parallel",),
            vmem_limit_bytes=_VMEM_LIMIT),
    )(x, w, b)


# ---------------------------------------------------------------------------
# Kernel 3: big Linear + BN + Tanh with K = 20480 (20480 -> 2048).
# Grid (N "parallel", K "arbitrary") with a VMEM float32 accumulator.
# ---------------------------------------------------------------------------
def _big_linear_bn_tanh_kernel(x_ref, w_ref, b_ref, g_ref, bt_ref, o_ref, acc_ref):
    k = pl.program_id(1)

    @pl.when(k == 0)
    def _():
        acc_ref[...] = jnp.zeros_like(acc_ref)

    acc_ref[...] += jnp.dot(x_ref[...].astype(jnp.bfloat16), w_ref[...],
                            preferred_element_type=jnp.float32)

    @pl.when(k == pl.num_programs(1) - 1)
    def _():
        y = acc_ref[...] + b_ref[...]
        # BatchNorm1d training mode: biased batch statistics per feature
        # (exact because the batch dim is never tiled).
        mean = jnp.mean(y, axis=0, keepdims=True)
        var = jnp.mean(jnp.square(y - mean), axis=0, keepdims=True)
        y = (y - mean) * jax.lax.rsqrt(var + _EPS) * g_ref[...] + bt_ref[...]
        o_ref[...] = jnp.tanh(y).astype(o_ref.dtype)


def big_linear_bn_tanh(x, w, b, gamma, beta, *, tn, tk):
    B, K = x.shape
    Kw, N = w.shape
    assert K == Kw and N % tn == 0 and K % tk == 0
    return pl.pallas_call(
        _big_linear_bn_tanh_kernel,
        out_shape=jax.ShapeDtypeStruct((B, N), jnp.float32),
        grid_spec=pltpu.PrefetchScalarGridSpec(
            num_scalar_prefetch=0,
            grid=(N // tn, K // tk),
            in_specs=[
                pl.BlockSpec((B, tk), lambda n, k: (0, k)),   # x (64 KB / step)
                pl.BlockSpec((tk, tn), lambda n, k: (k, n)),  # bf16 W (8 MiB tiles)
                pl.BlockSpec((1, tn), lambda n, k: (0, n)),   # bias
                pl.BlockSpec((1, tn), lambda n, k: (0, n)),   # gamma
                pl.BlockSpec((1, tn), lambda n, k: (0, n)),   # beta
            ],
            out_specs=pl.BlockSpec((B, tn), lambda n, k: (0, n)),
            scratch_shapes=[pltpu.VMEM((B, tn), jnp.float32)],
        ),
        compiler_params=pltpu.CompilerParams(
            dimension_semantics=("parallel", "arbitrary"),
            vmem_limit_bytes=_VMEM_LIMIT),
    )(x, w, b, gamma, beta)


# ---------------------------------------------------------------------------
# Parameter construction (deterministic, PyTorch-default-style init).
# ---------------------------------------------------------------------------
ENCODER_DIMS = [(296, 128, True), (128, 256, True), (256, 512, True),
                (512, 1024, True), (1024, 2048, True), (2048, 5 * 4096, False)]
DECODER_DIMS = [(5 * 4096, 2048, True), (2048, 1024, True),
                (1024, 512, True), (512, 296, False)]


def init_params(key):
    params = []
    for (fin, fout, has_bn) in ENCODER_DIMS + DECODER_DIMS:
        key, kw, kb = jax.random.split(key, 3)
        bound = 1.0 / jnp.sqrt(fin)
        w = jax.random.uniform(kw, (fin, fout), jnp.float32, -bound, bound)
        b = jax.random.uniform(kb, (fout,), jnp.float32, -bound, bound)
        params.append(dict(
            w=w.astype(jnp.bfloat16),               # weights stored/streamed as bf16
            b=b.reshape(1, fout),                   # f32
            gamma=jnp.ones((1, fout), jnp.float32),  # PyTorch BN defaults
            beta=jnp.zeros((1, fout), jnp.float32),
            has_bn=has_bn))
    return params


def ae_forward(params, x):
    x = x.reshape(x.shape[0], -1)                     # x.view(x.size(0), -1)
    enc_small, enc_big = params[:5], params[5]
    dec_big, dec_small = params[6], params[7:]

    h = fused_chain(x, enc_small)                                     # (B, 2048)
    encoded = big_linear(h, enc_big["w"], enc_big["b"], tn=2048)      # (B, 20480)
    h = big_linear_bn_tanh(encoded, dec_big["w"], dec_big["b"],
                           dec_big["gamma"], dec_big["beta"],
                           tn=1024, tk=4096)                          # (B, 2048)
    decoded = fused_chain(h, dec_small)                               # (B, 296)
    decoded = decoded.reshape(x.shape[0], 296)
    return encoded, decoded


# Pure-JAX reference (same bf16-weight math) used only for a sanity check.
def _ref_forward(params, x):
    x = x.reshape(x.shape[0], -1)

    def layer(h, p):
        y = jnp.dot(h.astype(jnp.bfloat16), p["w"],
                    preferred_element_type=jnp.float32) + p["b"]
        if p["has_bn"]:
            m = jnp.mean(y, axis=0, keepdims=True)
            v = jnp.mean(jnp.square(y - m), axis=0, keepdims=True)
            y = (y - m) * jax.lax.rsqrt(v + _EPS) * p["gamma"] + p["beta"]
            y = jnp.tanh(y)
        return y

    h = x
    for p in params[:6]:
        h = layer(h, p)
    enc = h
    for p in params[6:]:
        h = layer(h, p)
    return enc, h.reshape(x.shape[0], 296)


if __name__ == "__main__":
    key = jax.random.PRNGKey(0)
    kp, kx = jax.random.split(key)
    params = init_params(kp)

    B = 8
    x = jax.random.normal(kx, (B, 296), jnp.float32)

    encoded, decoded = ae_forward(params, x)
    encoded = jax.block_until_ready(encoded)
    decoded = jax.block_until_ready(decoded)

    assert encoded.shape == (B, 5 * 4096) and decoded.shape == (B, 296)

    enc_ref, dec_ref = _ref_forward(params, x)
    assert jnp.allclose(encoded, enc_ref, rtol=2e-3, atol=2e-3)
    assert jnp.allclose(decoded, dec_ref, rtol=2e-3, atol=2e-3)

    print("KERNEL_OK")
</pallas_src>

<mosaic_0001>
module attributes {stable_mosaic.version = 11 : i64} {
  func.func @_chain_kernel(%arg0: memref<8x296xf32, #tpu.memory_space<vmem>>, %arg1: memref<296x128xbf16, #tpu.memory_space<vmem>>, %arg2: memref<1x128xf32, #tpu.memory_space<vmem>>, %arg3: memref<1x128xf32, #tpu.memory_space<vmem>>, %arg4: memref<1x128xf32, #tpu.memory_space<vmem>>, %arg5: memref<128x256xbf16, #tpu.memory_space<vmem>>, %arg6: memref<1x256xf32, #tpu.memory_space<vmem>>, %arg7: memref<1x256xf32, #tpu.memory_space<vmem>>, %arg8: memref<1x256xf32, #tpu.memory_space<vmem>>, %arg9: memref<256x512xbf16, #tpu.memory_space<vmem>>, %arg10: memref<1x512xf32, #tpu.memory_space<vmem>>, %arg11: memref<1x512xf32, #tpu.memory_space<vmem>>, %arg12: memref<1x512xf32, #tpu.memory_space<vmem>>, %arg13: memref<512x1024xbf16, #tpu.memory_space<vmem>>, %arg14: memref<1x1024xf32, #tpu.memory_space<vmem>>, %arg15: memref<1x1024xf32, #tpu.memory_space<vmem>>, %arg16: memref<1x1024xf32, #tpu.memory_space<vmem>>, %arg17: memref<1024x2048xbf16, #tpu.memory_space<vmem>>, %arg18: memref<1x2048xf32, #tpu.memory_space<vmem>>, %arg19: memref<1x2048xf32, #tpu.memory_space<vmem>>, %arg20: memref<1x2048xf32, #tpu.memory_space<vmem>>, %arg21: memref<8x2048xf32, #tpu.memory_space<vmem>>) attributes {dimension_semantics = [], scalar_prefetch = 0 : i64, scratch_operands = 0 : i64, tpu.core_type = #tpu.core_type<tc>} {
    %c0 = arith.constant 0 : index
    %c0_0 = arith.constant 0 : index
    %0 = vector.load %arg0[%c0, %c0_0] : memref<8x296xf32, #tpu.memory_space<vmem>>, vector<8x296xf32>
    %1 = arith.truncf %0 : vector<8x296xf32> to vector<8x296xbf16>
    %c0_1 = arith.constant 0 : index
    %c0_2 = arith.constant 0 : index
    %2 = vector.load %arg1[%c0_1, %c0_2] : memref<296x128xbf16, #tpu.memory_space<vmem>>, vector<296x128xbf16>
    %cst = arith.constant dense<0.000000e+00> : vector<8x128xf32>
    %3 = tpu.matmul %1, %2, %cst {dimension_numbers = #tpu.dot_dimension_numbers<[1], [0], [0], [1], [0, 0, 1, 1], [], []>} : vector<8x296xbf16>, vector<296x128xbf16>, vector<8x128xf32> -> vector<8x128xf32>
    %c0_3 = arith.constant 0 : index
    %c0_4 = arith.constant 0 : index
    %4 = vector.load %arg2[%c0_3, %c0_4] : memref<1x128xf32, #tpu.memory_space<vmem>>, vector<1x128xf32>
    %5 = vector.broadcast %4 : vector<1x128xf32> to vector<8x128xf32>
    %6 = arith.addf %3, %5 : vector<8x128xf32>
    %cst_5 = arith.constant dense<0.000000e+00> : vector<128xf32>
    %7 = vector.multi_reduction <add>, %6, %cst_5 [0] : vector<8x128xf32> to vector<128xf32>
    %8 = vector.shape_cast %7 : vector<128xf32> to vector<1x128xf32>
    %cst_6 = arith.constant 8.000000e+00 : f32
    %9 = vector.broadcast %cst_6 : f32 to vector<1x128xf32>
    %10 = arith.divf %8, %9 : vector<1x128xf32>
    %11 = vector.broadcast %10 : vector<1x128xf32> to vector<8x128xf32>
    %12 = arith.subf %6, %11 : vector<8x128xf32>
    %13 = arith.mulf %12, %12 : vector<8x128xf32>
    %cst_7 = arith.constant dense<0.000000e+00> : vector<128xf32>
    %14 = vector.multi_reduction <add>, %13, %cst_7 [0] : vector<8x128xf32> to vector<128xf32>
    %15 = vector.shape_cast %14 : vector<128xf32> to vector<1x128xf32>
    %cst_8 = arith.constant 8.000000e+00 : f32
    %16 = vector.broadcast %cst_8 : f32 to vector<1x128xf32>
    %17 = arith.divf %15, %16 : vector<1x128xf32>
    %18 = vector.broadcast %10 : vector<1x128xf32> to vector<8x128xf32>
    %19 = arith.subf %6, %18 : vector<8x128xf32>
    %cst_9 = arith.constant 9.99999974E-6 : f32
    %20 = vector.broadcast %cst_9 : f32 to vector<1x128xf32>
    %21 = arith.addf %17, %20 : vector<1x128xf32>
    %22 = math.rsqrt %21 : vector<1x128xf32>
    %23 = vector.broadcast %22 : vector<1x128xf32> to vector<8x128xf32>
    %24 = arith.mulf %19, %23 : vector<8x128xf32>
    %c0_10 = arith.constant 0 : index
    %c0_11 = arith.constant 0 : index
    %25 = vector.load %arg3[%c0_10, %c0_11] : memref<1x128xf32, #tpu.memory_space<vmem>>, vector<1x128xf32>
    %26 = vector.broadcast %25 : vector<1x128xf32> to vector<8x128xf32>
    %27 = arith.mulf %24, %26 : vector<8x128xf32>
    %c0_12 = arith.constant 0 : index
    %c0_13 = arith.constant 0 : index
    %28 = vector.load %arg4[%c0_12, %c0_13] : memref<1x128xf32, #tpu.memory_space<vmem>>, vector<1x128xf32>
    %29 = vector.broadcast %28 : vector<1x128xf32> to vector<8x128xf32>
    %30 = arith.addf %27, %29 : vector<8x128xf32>
    %31 = math.tanh %30 : vector<8x128xf32>
    %32 = arith.truncf %31 : vector<8x128xf32> to vector<8x128xbf16>
    %c0_14 = arith.constant 0 : index
    %c0_15 = arith.constant 0 : index
    %33 = vector.load %arg5[%c0_14, %c0_15] : memref<128x256xbf16, #tpu.memory_space<vmem>>, vector<128x256xbf16>
    %cst_16 = arith.constant dense<0.000000e+00> : vector<8x256xf32>
    %34 = tpu.matmul %32, %33, %cst_16 {dimension_numbers = #tpu.dot_dimension_numbers<[1], [0], [0], [1], [0, 0, 1, 1], [], []>} : vector<8x128xbf16>, vector<128x256xbf16>, vector<8x256xf32> -> vector<8x256xf32>
    %c0_17 = arith.constant 0 : index
    %c0_18 = arith.constant 0 : index
    %35 = vector.load %arg6[%c0_17, %c0_18] : memref<1x256xf32, #tpu.memory_space<vmem>>, vector<1x256xf32>
    %36 = vector.broadcast %35 : vector<1x256xf32> to vector<8x256xf32>
    %37 = arith.addf %34, %36 : vector<8x256xf32>
    %cst_19 = arith.constant dense<0.000000e+00> : vector<256xf32>
    %38 = vector.multi_reduction <add>, %37, %cst_19 [0] : vector<8x256xf32> to vector<256xf32>
    %39 = vector.shape_cast %38 : vector<256xf32> to vector<1x256xf32>
    %cst_20 = arith.constant 8.000000e+00 : f32
    %40 = vector.broadcast %cst_20 : f32 to vector<1x256xf32>
    %41 = arith.divf %39, %40 : vector<1x256xf32>
    %42 = vector.broadcast %41 : vector<1x256xf32> to vector<8x256xf32>
    %43 = arith.subf %37, %42 : vector<8x256xf32>
    %44 = arith.mulf %43, %43 : vector<8x256xf32>
    %cst_21 = arith.constant dense<0.000000e+00> : vector<256xf32>
    %45 = vector.multi_reduction <add>, %44, %cst_21 [0] : vector<8x256xf32> to vector<256xf32>
    %46 = vector.shape_cast %45 : vector<256xf32> to vector<1x256xf32>
    %cst_22 = arith.constant 8.000000e+00 : f32
    %47 = vector.broadcast %cst_22 : f32 to vector<1x256xf32>
    %48 = arith.divf %46, %47 : vector<1x256xf32>
    %49 = vector.broadcast %41 : vector<1x256xf32> to vector<8x256xf32>
    %50 = arith.subf %37, %49 : vector<8x256xf32>
    %cst_23 = arith.constant 9.99999974E-6 : f32
    %51 = vector.broadcast %cst_23 : f32 to vector<1x256xf32>
    %52 = arith.addf %48, %51 : vector<1x256xf32>
    %53 = math.rsqrt %52 : vector<1x256xf32>
    %54 = vector.broadcast %53 : vector<1x256xf32> to vector<8x256xf32>
    %55 = arith.mulf %50, %54 : vector<8x256xf32>
    %c0_24 = arith.constant 0 : index
    %c0_25 = arith.constant 0 : index
    %56 = vector.load %arg7[%c0_24, %c0_25] : memref<1x256xf32, #tpu.memory_space<vmem>>, vector<1x256xf32>
    %57 = vector.broadcast %56 : vector<1x256xf32> to vector<8x256xf32>
    %58 = arith.mulf %55, %57 : vector<8x256xf32>
    %c0_26 = arith.constant 0 : index
    %c0_27 = arith.constant 0 : index
    %59 = vector.load %arg8[%c0_26, %c0_27] : memref<1x256xf32, #tpu.memory_space<vmem>>, vector<1x256xf32>
    %60 = vector.broadcast %59 : vector<1x256xf32> to vector<8x256xf32>
    %61 = arith.addf %58, %60 : vector<8x256xf32>
    %62 = math.tanh %61 : vector<8x256xf32>
    %63 = arith.truncf %62 : vector<8x256xf32> to vector<8x256xbf16>
    %c0_28 = arith.constant 0 : index
    %c0_29 = arith.constant 0 : index
    %64 = vector.load %arg9[%c0_28, %c0_29] : memref<256x512xbf16, #tpu.memory_space<vmem>>, vector<256x512xbf16>
    %cst_30 = arith.constant dense<0.000000e+00> : vector<8x512xf32>
    %65 = tpu.matmul %63, %64, %cst_30 {dimension_numbers = #tpu.dot_dimension_numbers<[1], [0], [0], [1], [0, 0, 1, 1], [], []>} : vector<8x256xbf16>, vector<256x512xbf16>, vector<8x512xf32> -> vector<8x512xf32>
    %c0_31 = arith.constant 0 : index
    %c0_32 = arith.constant 0 : index
    %66 = vector.load %arg10[%c0_31, %c0_32] : memref<1x512xf32, #tpu.memory_space<vmem>>, vector<1x512xf32>
    %67 = vector.broadcast %66 : vector<1x512xf32> to vector<8x512xf32>
    %68 = arith.addf %65, %67 : vector<8x512xf32>
    %cst_33 = arith.constant dense<0.000000e+00> : vector<512xf32>
    %69 = vector.multi_reduction <add>, %68, %cst_33 [0] : vector<8x512xf32> to vector<512xf32>
    %70 = vector.shape_cast %69 : vector<512xf32> to vector<1x512xf32>
    %cst_34 = arith.constant 8.000000e+00 : f32
    %71 = vector.broadcast %cst_34 : f32 to vector<1x512xf32>
    %72 = arith.divf %70, %71 : vector<1x512xf32>
    %73 = vector.broadcast %72 : vector<1x512xf32> to vector<8x512xf32>
    %74 = arith.subf %68, %73 : vector<8x512xf32>
    %75 = arith.mulf %74, %74 : vector<8x512xf32>
    %cst_35 = arith.constant dense<0.000000e+00> : vector<512xf32>
    %76 = vector.multi_reduction <add>, %75, %cst_35 [0] : vector<8x512xf32> to vector<512xf32>
    %77 = vector.shape_cast %76 : vector<512xf32> to vector<1x512xf32>
    %cst_36 = arith.constant 8.000000e+00 : f32
    %78 = vector.broadcast %cst_36 : f32 to vector<1x512xf32>
    %79 = arith.divf %77, %78 : vector<1x512xf32>
    %80 = vector.broadcast %72 : vector<1x512xf32> to vector<8x512xf32>
    %81 = arith.subf %68, %80 : vector<8x512xf32>
    %cst_37 = arith.constant 9.99999974E-6 : f32
    %82 = vector.broadcast %cst_37 : f32 to vector<1x512xf32>
    %83 = arith.addf %79, %82 : vector<1x512xf32>
    %84 = math.rsqrt %83 : vector<1x512xf32>
    %85 = vector.broadcast %84 : vector<1x512xf32> to vector<8x512xf32>
    %86 = arith.mulf %81, %85 : vector<8x512xf32>
    %c0_38 = arith.constant 0 : index
    %c0_39 = arith.constant 0 : index
    %87 = vector.load %arg11[%c0_38, %c0_39] : memref<1x512xf32, #tpu.memory_space<vmem>>, vector<1x512xf32>
    %88 = vector.broadcast %87 : vector<1x512xf32> to vector<8x512xf32>
    %89 = arith.mulf %86, %88 : vector<8x512xf32>
    %c0_40 = arith.constant 0 : index
    %c0_41 = arith.constant 0 : index
    %90 = vector.load %arg12[%c0_40, %c0_41] : memref<1x512xf32, #tpu.memory_space<vmem>>, vector<1x512xf32>
    %91 = vector.broadcast %90 : vector<1x512xf32> to vector<8x512xf32>
    %92 = arith.addf %89, %91 : vector<8x512xf32>
    %93 = math.tanh %92 : vector<8x512xf32>
    %94 = arith.truncf %93 : vector<8x512xf32> to vector<8x512xbf16>
    %c0_42 = arith.constant 0 : index
    %c0_43 = arith.constant 0 : index
    %95 = vector.load %arg13[%c0_42, %c0_43] : memref<512x1024xbf16, #tpu.memory_space<vmem>>, vector<512x1024xbf16>
    %cst_44 = arith.constant dense<0.000000e+00> : vector<8x1024xf32>
    %96 = tpu.matmul %94, %95, %cst_44 {dimension_numbers = #tpu.dot_dimension_numbers<[1], [0], [0], [1], [0, 0, 1, 1], [], []>} : vector<8x512xbf16>, vector<512x1024xbf16>, vector<8x1024xf32> -> vector<8x1024xf32>
    %c0_45 = arith.constant 0 : index
    %c0_46 = arith.constant 0 : index
    %97 = vector.load %arg14[%c0_45, %c0_46] : memref<1x1024xf32, #tpu.memory_space<vmem>>, vector<1x1024xf32>
    %98 = vector.broadcast %97 : vector<1x1024xf32> to vector<8x1024xf32>
    %99 = arith.addf %96, %98 : vector<8x1024xf32>
    %cst_47 = arith.constant dense<0.000000e+00> : vector<1024xf32>
    %100 = vector.multi_reduction <add>, %99, %cst_47 [0] : vector<8x1024xf32> to vector<1024xf32>
    %101 = vector.shape_cast %100 : vector<1024xf32> to vector<1x1024xf32>
    %cst_48 = arith.constant 8.000000e+00 : f32
    %102 = vector.broadcast %cst_48 : f32 to vector<1x1024xf32>
    %103 = arith.divf %101, %102 : vector<1x1024xf32>
    %104 = vector.broadcast %103 : vector<1x1024xf32> to vector<8x1024xf32>
    %105 = arith.subf %99, %104 : vector<8x1024xf32>
    %106 = arith.mulf %105, %105 : vector<8x1024xf32>
    %cst_49 = arith.constant dense<0.000000e+00> : vector<1024xf32>
    %107 = vector.multi_reduction <add>, %106, %cst_49 [0] : vector<8x1024xf32> to vector<1024xf32>
    %108 = vector.shape_cast %107 : vector<1024xf32> to vector<1x1024xf32>
    %cst_50 = arith.constant 8.000000e+00 : f32
    %109 = vector.broadcast %cst_50 : f32 to vector<1x1024xf32>
    %110 = arith.divf %108, %109 : vector<1x1024xf32>
    %111 = vector.broadcast %103 : vector<1x1024xf32> to vector<8x1024xf32>
    %112 = arith.subf %99, %111 : vector<8x1024xf32>
    %cst_51 = arith.constant 9.99999974E-6 : f32
    %113 = vector.broadcast %cst_51 : f32 to vector<1x1024xf32>
    %114 = arith.addf %110, %113 : vector<1x1024xf32>
    %115 = math.rsqrt %114 : vector<1x1024xf32>
    %116 = vector.broadcast %115 : vector<1x1024xf32> to vector<8x1024xf32>
    %117 = arith.mulf %112, %116 : vector<8x1024xf32>
    %c0_52 = arith.constant 0 : index
    %c0_53 = arith.constant 0 : index
    %118 = vector.load %arg15[%c0_52, %c0_53] : memref<1x1024xf32, #tpu.memory_space<vmem>>, vector<1x1024xf32>
    %119 = vector.broadcast %118 : vector<1x1024xf32> to vector<8x1024xf32>
    %120 = arith.mulf %117, %119 : vector<8x1024xf32>
    %c0_54 = arith.constant 0 : index
    %c0_55 = arith.constant 0 : index
    %121 = vector.load %arg16[%c0_54, %c0_55] : memref<1x1024xf32, #tpu.memory_space<vmem>>, vector<1x1024xf32>
    %122 = vector.broadcast %121 : vector<1x1024xf32> to vector<8x1024xf32>
    %123 = arith.addf %120, %122 : vector<8x1024xf32>
    %124 = math.tanh %123 : vector<8x1024xf32>
    %125 = arith.truncf %124 : vector<8x1024xf32> to vector<8x1024xbf16>
    %c0_56 = arith.constant 0 : index
    %c0_57 = arith.constant 0 : index
    %126 = vector.load %arg17[%c0_56, %c0_57] : memref<1024x2048xbf16, #tpu.memory_space<vmem>>, vector<1024x2048xbf16>
    %cst_58 = arith.constant dense<0.000000e+00> : vector<8x2048xf32>
    %127 = tpu.matmul %125, %126, %cst_58 {dimension_numbers = #tpu.dot_dimension_numbers<[1], [0], [0], [1], [0, 0, 1, 1], [], []>} : vector<8x1024xbf16>, vector<1024x2048xbf16>, vector<8x2048xf32> -> vector<8x2048xf32>
    %c0_59 = arith.constant 0 : index
    %c0_60 = arith.constant 0 : index
    %128 = vector.load %arg18[%c0_59, %c0_60] : memref<1x2048xf32, #tpu.memory_space<vmem>>, vector<1x2048xf32>
    %129 = vector.broadcast %128 : vector<1x2048xf32> to vector<8x2048xf32>
    %130 = arith.addf %127, %129 : vector<8x2048xf32>
    %cst_61 = arith.constant dense<0.000000e+00> : vector<2048xf32>
    %131 = vector.multi_reduction <add>, %130, %cst_61 [0] : vector<8x2048xf32> to vector<2048xf32>
    %132 = vector.shape_cast %131 : vector<2048xf32> to vector<1x2048xf32>
    %cst_62 = arith.constant 8.000000e+00 : f32
    %133 = vector.broadcast %cst_62 : f32 to vector<1x2048xf32>
    %134 = arith.divf %132, %133 : vector<1x2048xf32>
    %135 = vector.broadcast %134 : vector<1x2048xf32> to vector<8x2048xf32>
    %136 = arith.subf %130, %135 : vector<8x2048xf32>
    %137 = arith.mulf %136, %136 : vector<8x2048xf32>
    %cst_63 = arith.constant dense<0.000000e+00> : vector<2048xf32>
    %138 = vector.multi_reduction <add>, %137, %cst_63 [0] : vector<8x2048xf32> to vector<2048xf32>
    %139 = vector.shape_cast %138 : vector<2048xf32> to vector<1x2048xf32>
    %cst_64 = arith.constant 8.000000e+00 : f32
    %140 = vector.broadcast %cst_64 : f32 to vector<1x2048xf32>
    %141 = arith.divf %139, %140 : vector<1x2048xf32>
    %142 = vector.broadcast %134 : vector<1x2048xf32> to vector<8x2048xf32>
    %143 = arith.subf %130, %142 : vector<8x2048xf32>
    %cst_65 = arith.constant 9.99999974E-6 : f32
    %144 = vector.broadcast %cst_65 : f32 to vector<1x2048xf32>
    %145 = arith.addf %141, %144 : vector<1x2048xf32>
    %146 = math.rsqrt %145 : vector<1x2048xf32>
    %147 = vector.broadcast %146 : vector<1x2048xf32> to vector<8x2048xf32>
    %148 = arith.mulf %143, %147 : vector<8x2048xf32>
    %c0_66 = arith.constant 0 : index
    %c0_67 = arith.constant 0 : index
    %149 = vector.load %arg19[%c0_66, %c0_67] : memref<1x2048xf32, #tpu.memory_space<vmem>>, vector<1x2048xf32>
    %150 = vector.broadcast %149 : vector<1x2048xf32> to vector<8x2048xf32>
    %151 = arith.mulf %148, %150 : vector<8x2048xf32>
    %c0_68 = arith.constant 0 : index
    %c0_69 = arith.constant 0 : index
    %152 = vector.load %arg20[%c0_68, %c0_69] : memref<1x2048xf32, #tpu.memory_space<vmem>>, vector<1x2048xf32>
    %153 = vector.broadcast %152 : vector<1x2048xf32> to vector<8x2048xf32>
    %154 = arith.addf %151, %153 : vector<8x2048xf32>
    %155 = math.tanh %154 : vector<8x2048xf32>
    %c0_70 = arith.constant 0 : index
    %c0_71 = arith.constant 0 : index
    %156 = vector.load %arg21[%c0_70, %c0_71] : memref<8x2048xf32, #tpu.memory_space<vmem>>, vector<8x2048xf32>
    tpu.vector_store %arg21[%c0_70, %c0_71], %155 {strides = array<i32>} : memref<8x2048xf32, #tpu.memory_space<vmem>>, vector<8x2048xf32>,
    return
  }
}

</mosaic_0001>

<llo_original>
// kernel: tpu_custom_call.1
$region0: #{tpu_custom_call.1}
  #allocation0 [shape = 'u32[]', space=smem, size = 0x4, offset = 0x4, fixed_abs, tag = 'smem constant byte address 0x4 - core index']
  #allocation1 [shape = 'u32[144,128]{1,0:T(1,128)}', space=vmem, size = 0x12000, scoped, tag = 'internal scratch']
  %s0 = inlined_call_operand.hbm [shape: f32[8,296], index: 0, kind: input, shape index: {}]
  %s1 = inlined_call_operand.hbm [shape: bf16[296,128], index: 1, kind: input, shape index: {}]
  %s2 = inlined_call_operand.hbm [shape: f32[1,128], index: 2, kind: input, shape index: {}]
  %s3 = inlined_call_operand.hbm [shape: f32[1,128], index: 3, kind: input, shape index: {}]
  %s4 = inlined_call_operand.hbm [shape: f32[1,128], index: 4, kind: input, shape index: {}]
  %s5 = inlined_call_operand.hbm [shape: bf16[128,256], index: 5, kind: input, shape index: {}]
  %s6 = inlined_call_operand.hbm [shape: f32[1,256], index: 6, kind: input, shape index: {}]
  %s7 = inlined_call_operand.hbm [shape: f32[1,256], index: 7, kind: input, shape index: {}]
  %s8 = inlined_call_operand.hbm [shape: f32[1,256], index: 8, kind: input, shape index: {}]
  %s9 = inlined_call_operand.hbm [shape: bf16[256,512], index: 9, kind: input, shape index: {}]
  %s10 = inlined_call_operand.hbm [shape: f32[1,512], index: 10, kind: input, shape index: {}]
  %s11 = inlined_call_operand.hbm [shape: f32[1,512], index: 11, kind: input, shape index: {}]
  %s12 = inlined_call_operand.hbm [shape: f32[1,512], index: 12, kind: input, shape index: {}]
  %s13 = inlined_call_operand.hbm [shape: bf16[512,1024], index: 13, kind: input, shape index: {}]
  %s14 = inlined_call_operand.hbm [shape: f32[1,1024], index: 14, kind: input, shape index: {}]
  %s15 = inlined_call_operand.hbm [shape: f32[1,1024], index: 15, kind: input, shape index: {}]
  %s16 = inlined_call_operand.hbm [shape: f32[1,1024], index: 16, kind: input, shape index: {}]
  %s17 = inlined_call_operand.hbm [shape: bf16[1024,2048], index: 17, kind: input, shape index: {}]
  %s18 = inlined_call_operand.hbm [shape: f32[1,2048], index: 18, kind: input, shape index: {}]
  %s19 = inlined_call_operand.hbm [shape: f32[1,2048], index: 19, kind: input, shape index: {}]
  %s20 = inlined_call_operand.hbm [shape: f32[1,2048], index: 20, kind: input, shape index: {}]
  %s21 = inlined_call_operand.hbm [shape: f32[8,2048], index: 21, kind: output, shape index: {}]
  %s22 = sld [smem:[#allocation0]]
  $region178: #{tpu_custom_call.1} parent=0
    _
  %s24 = ssub.s32 1, %s22
  %s25 = scalar_select 0, %s24, %s22
  $region1: #{tpu_custom_call.1} parent=0
    #allocation2 [shape = 'u8[12288]{0}', space=vmem, size = 0x3000, scoped, tag = 'input window, operand 0, single buffered']
    #allocation3 [shape = 's32[1]{0}', space=sflag, size = 0x4, scoped, tag = 'scoped memory for tpu_custom_call.1']
    #allocation4 [shape = 's32[1]{0}', space=sflag, size = 0x4, scoped, tag = 'scoped memory for tpu_custom_call.1']
    #allocation5 [shape = 'u8[75776]{0}', space=vmem, size = 0x12800, scoped, tag = 'input window, operand 1, single buffered']
    #allocation6 [shape = 's32[1]{0}', space=sflag, size = 0x4, scoped, tag = 'scoped memory for tpu_custom_call.1']
    #allocation7 [shape = 'u8[512]{0}', space=vmem, size = 0x400, scoped, tag = 'input window, operand 2, single buffered']
    #allocation8 [shape = 'u8[512]{0}', space=vmem, size = 0x400, scoped, tag = 'input window, operand 3, single buffered']
    #allocation9 [shape = 's32[1]{0}', space=sflag, size = 0x4, scoped, tag = 'scoped memory for tpu_custom_call.1']
    #allocation10 [shape = 'u8[512]{0}', space=vmem, size = 0x400, scoped, tag = 'input window, operand 4, single buffered']
    #allocation11 [shape = 'u8[65536]{0}', space=vmem, size = 0x10000, scoped, tag = 'input window, operand 5, single buffered']
    #allocation12 [shape = 's32[1]{0}', space=sflag, size = 0x4, scoped, tag = 'scoped memory for tpu_custom_call.1']
    #allocation13 [shape = 'u8[1024]{0}', space=vmem, size = 0x400, scoped, tag = 'input window, operand 6, single buffered']
    #allocation14 [shape = 'u8[1024]{0}', space=vmem, size = 0x400, scoped, tag = 'input window, operand 7, single buffered']
    #allocation15 [shape = 's32[1]{0}', space=sflag, size = 0x4, scoped, tag = 'scoped memory for tpu_custom_call.1']
    #allocation16 [shape = 'u8[1024]{0}', space=vmem, size = 0x400, scoped, tag = 'input window, operand 8, single buffered']
    #allocation17 [shape = 'u8[262144]{0}', space=vmem, size = 0x40000, scoped, tag = 'input window, operand 9, single buffered']
    #allocation18 [shape = 's32[1]{0}', space=sflag, size = 0x4, scoped, tag = 'scoped memory for tpu_custom_call.1']
    #allocation19 [shape = 'u8[2048]{0}', space=vmem, size = 0x800, scoped, tag = 'input window, operand 10, single buffered']
    #allocation20 [shape = 'u8[2048]{0}', space=vmem, size = 0x800, scoped, tag = 'input window, operand 11, single buffered']
    #allocation21 [shape = 's32[1]{0}', space=sflag, size = 0x4, scoped, tag = 'scoped memory for tpu_custom_call.1']
    #allocation22 [shape = 'u8[2048]{0}', space=vmem, size = 0x800, scoped, tag = 'input window, operand 12, single buffered']
    #allocation23 [shape = 'u8[1048576]{0}', space=vmem, size = 0x100000, scoped, tag = 'input window, operand 13, single buffered']
    #allocation24 [shape = 's32[1]{0}', space=sflag, size = 0x4, scoped, tag = 'scoped memory for tpu_custom_call.1']
    #allocation25 [shape = 'u8[4096]{0}', space=vmem, size = 0x1000, scoped, tag = 'input window, operand 14, single buffered']
    #allocation26 [shape = 'u8[4096]{0}', space=vmem, size = 0x1000, scoped, tag = 'input window, operand 15, single buffered']
    #allocation27 [shape = 's32[1]{0}', space=sflag, size = 0x4, scoped, tag = 'scoped memory for tpu_custom_call.1']
    #allocation28 [shape = 'u8[4096]{0}', space=vmem, size = 0x1000, scoped, tag = 'input window, operand 16, single buffered']
    #allocation29 [shape = 'u8[4194304]{0}', space=vmem, size = 0x400000, scoped, tag = 'input window, operand 17, single buffered']
    #allocation30 [shape = 's32[1]{0}', space=sflag, size = 0x4, scoped, tag = 'scoped memory for tpu_custom_call.1']
    #allocation31 [shape = 'u8[8192]{0}', space=vmem, size = 0x2000, scoped, tag = 'input window, operand 18, single buffered']
    #allocation32 [shape = 'u8[8192]{0}', space=vmem, size = 0x2000, scoped, tag = 'input window, operand 19, single buffered']
    #allocation33 [shape = 's32[1]{0}', space=sflag, size = 0x4, scoped, tag = 'scoped memory for tpu_custom_call.1']
    #allocation34 [shape = 'u8[8192]{0}', space=vmem, size = 0x2000, scoped, tag = 'input window, operand 20, single buffered']
    #allocation35 [shape = 'u8[65536]{0}', space=vmem, size = 0x10000, scoped, tag = 'output window, operand 0, single buffered']
    %26 = vsyncpa [#allocation3], 0
    %27 = vsyncpa [#allocation6], 0
    %28 = vsyncpa [#allocation9], 0
    %29 = vsyncpa [#allocation12], 0
    %30 = vsyncpa [#allocation15], 0
    %31 = vsyncpa [#allocation18], 0
    %32 = vsyncpa [#allocation21], 0
    %33 = vsyncpa [#allocation24], 0
    %34 = vsyncpa [#allocation27], 0
    %35 = vsyncpa [#allocation30], 0
    %36 = vsyncpa [#allocation33], 0
    %37 = vsyncpa [#allocation4], 0
    // Predicated region
    $region2: #{tpu_custom_call.1} parent=1 // pred_check
      _
    $region3: #{tpu_custom_call.1} parent=1 // pred_check_branch
      %39 = sbr.rel (0) target = $region5
    $region4: #{tpu_custom_call.1} parent=1 // pred_region
      %s41 = ssub.s32 384, 384
      %42 = vsyncadd [#allocation3], %s41
      %s44 = sshll.u32 [#allocation2], 4
      %s45 = int_to_ptr.vmem [resolvable:$true] %s44
      %47 = dma.hbm_to_vmem [thread:$0]  %s0, 384, %s45, [#allocation3]
    $region5: #{tpu_custom_call.1} parent=1 // pred_fallthru
      _
    // Predicated region
    $region6: #{tpu_custom_call.1} parent=1 // pred_check
      _
    $region7: #{tpu_custom_call.1} parent=1 // pred_check_branch
      %49 = sbr.rel (0) target = $region9
    $region8: #{tpu_custom_call.1} parent=1 // pred_region
      %s51 = ssub.s32 2368, 2368
      %52 = vsyncadd [#allocation6], %s51
      %s53 = sshll.u32 [#allocation5], 4
      %s54 = int_to_ptr.vmem [resolvable:$true] %s53
      %59 = dma.hbm_to_vmem [thread:$0]  %s1, 2368, %s54, [#allocation6], 64, 64, 4
    $region9: #{tpu_custom_call.1} parent=1 // pred_fallthru
      _
    // Predicated region
    $region10: #{tpu_custom_call.1} parent=1 // pred_check
      _
    $region11: #{tpu_custom_call.1} parent=1 // pred_check_branch
      %61 = sbr.rel (0) target = $region13
    $region12: #{tpu_custom_call.1} parent=1 // pred_region
      %s63 = ssub.s32 16, 16
      %64 = vsyncadd [#allocation6], %s63
      %s66 = sshll.u32 [#allocation7], 4
      %s67 = int_to_ptr.vmem [resolvable:$true] %s66
      %69 = dma.hbm_to_vmem [thread:$0]  %s2, 16, %s67, [#allocation6]
    $region13: #{tpu_custom_call.1} parent=1 // pred_fallthru
      _
    // Predicated region
    $region14: #{tpu_custom_call.1} parent=1 // pred_check
      _
    $region15: #{tpu_custom_call.1} parent=1 // pred_check_branch
      %71 = sbr.rel (0) target = $region17
    $region16: #{tpu_custom_call.1} parent=1 // pred_region
      %s73 = ssub.s32 16, 16
      %74 = vsyncadd [#allocation9], %s73
      %s76 = sshll.u32 [#allocation8], 4
      %s77 = int_to_ptr.vmem [resolvable:$true] %s76
      %79 = dma.hbm_to_vmem [thread:$0]  %s3, 16, %s77, [#allocation9]
    $region17: #{tpu_custom_call.1} parent=1 // pred_fallthru
      _
    // Predicated region
    $region18: #{tpu_custom_call.1} parent=1 // pred_check
      _
    $region19: #{tpu_custom_call.1} parent=1 // pred_check_branch
      %81 = sbr.rel (0) target = $region21
    $region20: #{tpu_custom_call.1} parent=1 // pred_region
      %s83 = ssub.s32 16, 16
      %84 = vsyncadd [#allocation9], %s83
      %s86 = sshll.u32 [#allocation10], 4
      %s87 = int_to_ptr.vmem [resolvable:$true] %s86
      %89 = dma.hbm_to_vmem [thread:$0]  %s4, 16, %s87, [#allocation9]
    $region21: #{tpu_custom_call.1} parent=1 // pred_fallthru
      _
    // Predicated region
    $region22: #{tpu_custom_call.1} parent=1 // pred_check
      _
    $region23: #{tpu_custom_call.1} parent=1 // pred_check_branch
      %91 = sbr.rel (0) target = $region25
    $region24: #{tpu_custom_call.1} parent=1 // pred_region
      %s93 = ssub.s32 2048, 2048
      %94 = vsyncadd [#allocation12], %s93
      %s95 = sshll.u32 [#allocation11], 4
      %s96 = int_to_ptr.vmem [resolvable:$true] %s95
      %101 = dma.hbm_to_vmem [thread:$0]  %s5, 2048, %s96, [#allocation12], 128, 128, 8
    $region25: #{tpu_custom_call.1} parent=1 // pred_fallthru
      _
    // Predicated region
    $region26: #{tpu_custom_call.1} parent=1 // pred_check
      _
    $region27: #{tpu_custom_call.1} parent=1 // pred_check_branch
      %103 = sbr.rel (0) target = $region29
    $region28: #{tpu_custom_call.1} parent=1 // pred_region
      %s105 = ssub.s32 32, 32
      %106 = vsyncadd [#allocation12], %s105
      %s108 = sshll.u32 [#allocation13], 4
      %s109 = int_to_ptr.vmem [resolvable:$true] %s108
      %111 = dma.hbm_to_vmem [thread:$0]  %s6, 32, %s109, [#allocation12]
    $region29: #{tpu_custom_call.1} parent=1 // pred_fallthru
      _
    // Predicated region
    $region30: #{tpu_custom_call.1} parent=1 // pred_check
      _
    $region31: #{tpu_custom_call.1} parent=1 // pred_check_branch
      %113 = sbr.rel (0) target = $region33
    $region32: #{tpu_custom_call.1} parent=1 // pred_region
      %s115 = ssub.s32 32, 32
      %116 = vsyncadd [#allocation15], %s115
      %s118 = sshll.u32 [#allocation14], 4
      %s119 = int_to_ptr.vmem [resolvable:$true] %s118
      %121 = dma.hbm_to_vmem [thread:$0]  %s7, 32, %s119, [#allocation15]
    $region33: #{tpu_custom_call.1} parent=1 // pred_fallthru
      _
    // Predicated region
    $region34: #{tpu_custom_call.1} parent=1 // pred_check
      _
    $region35: #{tpu_custom_call.1} parent=1 // pred_check_branch
      %123 = sbr.rel (0) target = $region37
    $region36: #{tpu_custom_call.1} parent=1 // pred_region
      %s125 = ssub.s32 32, 32
      %126 = vsyncadd [#allocation15], %s125
      %s128 = sshll.u32 [#allocation16], 4
      %s129 = int_to_ptr.vmem [resolvable:$true] %s128
      %131 = dma.hbm_to_vmem [thread:$0]  %s8, 32, %s129, [#allocation15]
    $region37: #{tpu_custom_call.1} parent=1 // pred_fallthru
      _
    // Predicated region
    $region38: #{tpu_custom_call.1} parent=1 // pred_check
      _
    $region39: #{tpu_custom_call.1} parent=1 // pred_check_branch
      %133 = sbr.rel (0) target = $region41
    $region40: #{tpu_custom_call.1} parent=1 // pred_region
      %s135 = ssub.s32 8192, 8192
      %136 = vsyncadd [#allocation18], %s135
      %s137 = sshll.u32 [#allocation17], 4
      %s138 = int_to_ptr.vmem [resolvable:$true] %s137
      %143 = dma.hbm_to_vmem [thread:$0]  %s9, 8192, %s138, [#allocation18], 256, 256, 16
    $region41: #{tpu_custom_call.1} parent=1 // pred_fallthru
      _
    // Predicated region
    $region42: #{tpu_custom_call.1} parent=1 // pred_check
      _
    $region43: #{tpu_custom_call.1} parent=1 // pred_check_branch
      %145 = sbr.rel (0) target = $region45
    $region44: #{tpu_custom_call.1} parent=1 // pred_region
      %s147 = ssub.s32 64, 64
      %148 = vsyncadd [#allocation18], %s147
      %s150 = sshll.u32 [#allocation19], 4
      %s151 = int_to_ptr.vmem [resolvable:$true] %s150
      %153 = dma.hbm_to_vmem [thread:$0]  %s10, 64, %s151, [#allocation18]
    $region45: #{tpu_custom_call.1} parent=1 // pred_fallthru
      _
    // Predicated region
    $region46: #{tpu_custom_call.1} parent=1 // pred_check
      _
    $region47: #{tpu_custom_call.1} parent=1 // pred_check_branch
      %155 = sbr.rel (0) target = $region49
    $region48: #{tpu_custom_call.1} parent=1 // pred_region
      %s157 = ssub.s32 64, 64
      %158 = vsyncadd [#allocation21], %s157
      %s160 = sshll.u32 [#allocation20], 4
      %s161 = int_to_ptr.vmem [resolvable:$true] %s160
      %163 = dma.hbm_to_vmem [thread:$0]  %s11, 64, %s161, [#allocation21]
    $region49: #{tpu_custom_call.1} parent=1 // pred_fallthru
      _
    // Predicated region
    $region50: #{tpu_custom_call.1} parent=1 // pred_check
      _
    $region51: #{tpu_custom_call.1} parent=1 // pred_check_branch
      %165 = sbr.rel (0) target = $region53
    $region52: #{tpu_custom_call.1} parent=1 // pred_region
      %s167 = ssub.s32 64, 64
      %168 = vsyncadd [#allocation21], %s167
      %s170 = sshll.u32 [#allocation22], 4
      %s171 = int_to_ptr.vmem [resolvable:$true] %s170
      %173 = dma.hbm_to_vmem [thread:$0]  %s12, 64, %s171, [#allocation21]
    $region53: #{tpu_custom_call.1} parent=1 // pred_fallthru
      _
    // Predicated region
    $region54: #{tpu_custom_call.1} parent=1 // pred_check
      _
    $region55: #{tpu_custom_call.1} parent=1 // pred_check_branch
      %175 = sbr.rel (0) target = $region57
    $region56: #{tpu_custom_call.1} parent=1 // pred_region
      %s177 = ssub.s32 32768, 32768
      %178 = vsyncadd [#allocation24], %s177
      %s179 = sshll.u32 [#allocation23], 4
      %s180 = int_to_ptr.vmem [resolvable:$true] %s179
      %185 = dma.hbm_to_vmem [thread:$0]  %s13, 32768, %s180, [#allocation24], 512, 512, 32
    $region57: #{tpu_custom_call.1} parent=1 // pred_fallthru
      _
    // Predicated region
    $region58: #{tpu_custom_call.1} parent=1 // pred_check
      _
    $region59: #{tpu_custom_call.1} parent=1 // pred_check_branch
      %187 = sbr.rel (0) target = $region61
    $region60: #{tpu_custom_call.1} parent=1 // pred_region
      %s189 = ssub.s32 128, 128
      %190 = vsyncadd [#allocation24], %s189
      %s192 = sshll.u32 [#allocation25], 4
      %s193 = int_to_ptr.vmem [resolvable:$true] %s192
      %195 = dma.hbm_to_vmem [thread:$0]  %s14, 128, %s193, [#allocation24]
    $region61: #{tpu_custom_call.1} parent=1 // pred_fallthru
      _
    // Predicated region
    $region62: #{tpu_custom_call.1} parent=1 // pred_check
      _
    $region63: #{tpu_custom_call.1} parent=1 // pred_check_branch
      %197 = sbr.rel (0) target = $region65
    $region64: #{tpu_custom_call.1} parent=1 // pred_region
      %s199 = ssub.s32 128, 128
      %200 = vsyncadd [#allocation27], %s199
      %s202 = sshll.u32 [#allocation26], 4
      %s203 = int_to_ptr.vmem [resolvable:$true] %s202
      %205 = dma.hbm_to_vmem [thread:$0]  %s15, 128, %s203, [#allocation27]
    $region65: #{tpu_custom_call.1} parent=1 // pred_fallthru
      _
    // Predicated region
    $region66: #{tpu_custom_call.1} parent=1 // pred_check
      _
    $region67: #{tpu_custom_call.1} parent=1 // pred_check_branch
      %207 = sbr.rel (0) target = $region69
    $region68: #{tpu_custom_call.1} parent=1 // pred_region
      %s209 = ssub.s32 128, 128
      %210 = vsyncadd [#allocation27], %s209
      %s212 = sshll.u32 [#allocation28], 4
      %s213 = int_to_ptr.vmem [resolvable:$true] %s212
      %215 = dma.hbm_to_vmem [thread:$0]  %s16, 128, %s213, [#allocation27]
    $region69: #{tpu_custom_call.1} parent=1 // pred_fallthru
      _
    // Predicated region
    $region70: #{tpu_custom_call.1} parent=1 // pred_check
      _
    $region71: #{tpu_custom_call.1} parent=1 // pred_check_branch
      %217 = sbr.rel (0) target = $region73
    $region72: #{tpu_custom_call.1} parent=1 // pred_region
      %s219 = ssub.s32 131072, 131072
      %220 = vsyncadd [#allocation30], %s219
      %s221 = sshll.u32 [#allocation29], 4
      %s222 = int_to_ptr.vmem [resolvable:$true] %s221
      %227 = dma.hbm_to_vmem [thread:$0]  %s17, 131072, %s222, [#allocation30], 1024, 1024, 64
    $region73: #{tpu_custom_call.1} parent=1 // pred_fallthru
      _
    // Predicated region
    $region74: #{tpu_custom_call.1} parent=1 // pred_check
      _
    $region75: #{tpu_custom_call.1} parent=1 // pred_check_branch
      %229 = sbr.rel (0) target = $region77
    $region76: #{tpu_custom_call.1} parent=1 // pred_region
      %s231 = ssub.s32 256, 256
      %232 = vsyncadd [#allocation30], %s231
      %s234 = sshll.u32 [#allocation31], 4
      %s235 = int_to_ptr.vmem [resolvable:$true] %s234
      %237 = dma.hbm_to_vmem [thread:$0]  %s18, 256, %s235, [#allocation30]
    $region77: #{tpu_custom_call.1} parent=1 // pred_fallthru
      _
    // Predicated region
    $region78: #{tpu_custom_call.1} parent=1 // pred_check
      _
    $region79: #{tpu_custom_call.1} parent=1 // pred_check_branch
      %239 = sbr.rel (0) target = $region81
    $region80: #{tpu_custom_call.1} parent=1 // pred_region
      %s241 = ssub.s32 256, 256
      %242 = vsyncadd [#allocation33], %s241
      %s244 = sshll.u32 [#allocation32], 4
      %s245 = int_to_ptr.vmem [resolvable:$true] %s244
      %247 = dma.hbm_to_vmem [thread:$0]  %s19, 256, %s245, [#allocation33]
    $region81: #{tpu_custom_call.1} parent=1 // pred_fallthru
      _
    // Predicated region
    $region82: #{tpu_custom_call.1} parent=1 // pred_check
      _
    $region83: #{tpu_custom_call.1} parent=1 // pred_check_branch
      %249 = sbr.rel (0) target = $region85
    $region84: #{tpu_custom_call.1} parent=1 // pred_region
      %s251 = ssub.s32 256, 256
      %252 = vsyncadd [#allocation33], %s251
      %s254 = sshll.u32 [#allocation34], 4
      %s255 = int_to_ptr.vmem [resolvable:$true] %s254
      %257 = dma.hbm_to_vmem [thread:$0]  %s20, 256, %s255, [#allocation33]
    $region85: #{tpu_custom_call.1} parent=1 // pred_fallthru
      _
    // Predicated region
    $region86: #{tpu_custom_call.1} parent=1 // pred_check
      _
    $region87: #{tpu_custom_call.1} parent=1 // pred_check_branch
      %259 = sbr.rel (0) target = $region89
    $region88: #{tpu_custom_call.1} parent=1 // pred_region
      %260 = dma.done [#allocation3], 384
    $region89: #{tpu_custom_call.1} parent=1 // pred_fallthru
      _
    // Predicated region
    $region90: #{tpu_custom_call.1} parent=1 // pred_check
      _
    $region91: #{tpu_custom_call.1} parent=1 // pred_check_branch
      %262 = sbr.rel (0) target = $region93
    $region92: #{tpu_custom_call.1} parent=1 // pred_region
      %263 = dma.done [#allocation6], 2368
    $region93: #{tpu_custom_call.1} parent=1 // pred_fallthru
      _
    // Predicated region
    $region94: #{tpu_custom_call.1} parent=1 // pred_check
      _
    $region95: #{tpu_custom_call.1} parent=1 // pred_check_branch
      %265 = sbr.rel (0) target = $region97
    $region96: #{tpu_custom_call.1} parent=1 // pred_region
      %266 = dma.done [#allocation6], 16
    $region97: #{tpu_custom_call.1} parent=1 // pred_fallthru
      _
    // Predicated region
    $region98: #{tpu_custom_call.1} parent=1 // pred_check
      _
    $region99: #{tpu_custom_call.1} parent=1 // pred_check_branch
      %268 = sbr.rel (0) target = $region101
    $region100: #{tpu_custom_call.1} parent=1 // pred_region
      %269 = dma.done [#allocation9], 16
    $region101: #{tpu_custom_call.1} parent=1 // pred_fallthru
      _
    // Predicated region
    $region102: #{tpu_custom_call.1} parent=1 // pred_check
      _
    $region103: #{tpu_custom_call.1} parent=1 // pred_check_branch
      %271 = sbr.rel (0) target = $region105
    $region104: #{tpu_custom_call.1} parent=1 // pred_region
      %272 = dma.done [#allocation9], 16
    $region105: #{tpu_custom_call.1} parent=1 // pred_fallthru
      _
    // Predicated region
    $region106: #{tpu_custom_call.1} parent=1 // pred_check
      _
    $region107: #{tpu_custom_call.1} parent=1 // pred_check_branch
      %274 = sbr.rel (0) target = $region109
    $region108: #{tpu_custom_call.1} parent=1 // pred_region
      %275 = dma.done [#allocation12], 2048
    $region109: #{tpu_custom_call.1} parent=1 // pred_fallthru
      _
    // Predicated region
    $region110: #{tpu_custom_call.1} parent=1 // pred_check
      _
    $region111: #{tpu_custom_call.1} parent=1 // pred_check_branch
      %277 = sbr.rel (0) target = $region113
    $region112: #{tpu_custom_call.1} parent=1 // pred_region
      %278 = dma.done [#allocation12], 32
    $region113: #{tpu_custom_call.1} parent=1 // pred_fallthru
      _
    // Predicated region
    $region114: #{tpu_custom_call.1} parent=1 // pred_check
      _
    $region115: #{tpu_custom_call.1} parent=1 // pred_check_branch
      %280 = sbr.rel (0) target = $region117
    $region116: #{tpu_custom_call.1} parent=1 // pred_region
      %281 = dma.done [#allocation15], 32
    $region117: #{tpu_custom_call.1} parent=1 // pred_fallthru
      _
    // Predicated region
    $region118: #{tpu_custom_call.1} parent=1 // pred_check
      _
    $region119: #{tpu_custom_call.1} parent=1 // pred_check_branch
      %283 = sbr.rel (0) target = $region121
    $region120: #{tpu_custom_call.1} parent=1 // pred_region
      %284 = dma.done [#allocation15], 32
    $region121: #{tpu_custom_call.1} parent=1 // pred_fallthru
      _
    // Predicated region
    $region122: #{tpu_custom_call.1} parent=1 // pred_check
      _
    $region123: #{tpu_custom_call.1} parent=1 // pred_check_branch
      %286 = sbr.rel (0) target = $region125
    $region124: #{tpu_custom_call.1} parent=1 // pred_region
      %287 = dma.done [#allocation18], 8192
    $region125: #{tpu_custom_call.1} parent=1 // pred_fallthru
      _
    // Predicated region
    $region126: #{tpu_custom_call.1} parent=1 // pred_check
      _
    $region127: #{tpu_custom_call.1} parent=1 // pred_check_branch
      %289 = sbr.rel (0) target = $region129
    $region128: #{tpu_custom_call.1} parent=1 // pred_region
      %290 = dma.done [#allocation18], 64
    $region129: #{tpu_custom_call.1} parent=1 // pred_fallthru
      _
    // Predicated region
    $region130: #{tpu_custom_call.1} parent=1 // pred_check
      _
    $region131: #{tpu_custom_call.1} parent=1 // pred_check_branch
      %292 = sbr.rel (0) target = $region133
    $region132: #{tpu_custom_call.1} parent=1 // pred_region
      %293 = dma.done [#allocation21], 64
    $region133: #{tpu_custom_call.1} parent=1 // pred_fallthru
      _
    // Predicated region
    $region134: #{tpu_custom_call.1} parent=1 // pred_check
      _
    $region135: #{tpu_custom_call.1} parent=1 // pred_check_branch
      %295 = sbr.rel (0) target = $region137
    $region136: #{tpu_custom_call.1} parent=1 // pred_region
      %296 = dma.done [#allocation21], 64
    $region137: #{tpu_custom_call.1} parent=1 // pred_fallthru
      _
    // Predicated region
    $region138: #{tpu_custom_call.1} parent=1 // pred_check
      _
    $region139: #{tpu_custom_call.1} parent=1 // pred_check_branch
      %298 = sbr.rel (0) target = $region141
    $region140: #{tpu_custom_call.1} parent=1 // pred_region
      %299 = dma.done [#allocation24], 32768
    $region141: #{tpu_custom_call.1} parent=1 // pred_fallthru
      _
    // Predicated region
    $region142: #{tpu_custom_call.1} parent=1 // pred_check
      _
    $region143: #{tpu_custom_call.1} parent=1 // pred_check_branch
      %301 = sbr.rel (0) target = $region145
    $region144: #{tpu_custom_call.1} parent=1 // pred_region
      %302 = dma.done [#allocation24], 128
    $region145: #{tpu_custom_call.1} parent=1 // pred_fallthru
      _
    // Predicated region
    $region146: #{tpu_custom_call.1} parent=1 // pred_check
      _
    $region147: #{tpu_custom_call.1} parent=1 // pred_check_branch
      %304 = sbr.rel (0) target = $region149
    $region148: #{tpu_custom_call.1} parent=1 // pred_region
      %305 = dma.done [#allocation27], 128
    $region149: #{tpu_custom_call.1} parent=1 // pred_fallthru
      _
    // Predicated region
    $region150: #{tpu_custom_call.1} parent=1 // pred_check
      _
    $region151: #{tpu_custom_call.1} parent=1 // pred_check_branch
      %307 = sbr.rel (0) target = $region153
    $region152: #{tpu_custom_call.1} parent=1 // pred_region
      %308 = dma.done [#allocation27], 128
    $region153: #{tpu_custom_call.1} parent=1 // pred_fallthru
      _
    // Predicated region
    $region154: #{tpu_custom_call.1} parent=1 // pred_check
      _
    $region155: #{tpu_custom_call.1} parent=1 // pred_check_branch
      %310 = sbr.rel (0) target = $region157
    $region156: #{tpu_custom_call.1} parent=1 // pred_region
      %311 = dma.done [#allocation30], 131072
    $region157: #{tpu_custom_call.1} parent=1 // pred_fallthru
      _
    // Predicated region
    $region158: #{tpu_custom_call.1} parent=1 // pred_check
      _
    $region159: #{tpu_custom_call.1} parent=1 // pred_check_branch
      %313 = sbr.rel (0) target = $region161
    $region160: #{tpu_custom_call.1} parent=1 // pred_region
      %314 = dma.done [#allocation30], 256
    $region161: #{tpu_custom_call.1} parent=1 // pred_fallthru
      _
    // Predicated region
    $region162: #{tpu_custom_call.1} parent=1 // pred_check
      _
    $region163: #{tpu_custom_call.1} parent=1 // pred_check_branch
      %316 = sbr.rel (0) target = $region165
    $region164: #{tpu_custom_call.1} parent=1 // pred_region
      %317 = dma.done [#allocation33], 256
    $region165: #{tpu_custom_call.1} parent=1 // pred_fallthru
      _
    // Predicated region
    $region166: #{tpu_custom_call.1} parent=1 // pred_check
      _
    $region167: #{tpu_custom_call.1} parent=1 // pred_check_branch
      %319 = sbr.rel (0) target = $region169
    $region168: #{tpu_custom_call.1} parent=1 // pred_region
      %320 = dma.done [#allocation33], 256
    $region169: #{tpu_custom_call.1} parent=1 // pred_fallthru
      _
    %v322 = vld [vmem:[#allocation2] sm:$0xff]
    %v323 = vld [vmem:[#allocation2 + $0x8] sm:$0xff]
    %v324 = vld [vmem:[#allocation2 + $0x10] sm:$0xff]
    %v325 = vpack.c.bf16 %v322, %v322
    %v326 = vpack.c.bf16 %v323, %v323
    %v327 = vpack.c.bf16 %v324, %v324
    %v328 = vld [vmem:[#allocation5] sm:$0xf]
    %v329 = vld [vmem:[#allocation5 + $0x4] sm:$0xf]
    %v330 = vld [vmem:[#allocation5 + $0x8] sm:$0xf]
    %v331 = vld [vmem:[#allocation5 + $0xc] sm:$0xf]
    %v332 = vld [vmem:[#allocation5 + $0x10] sm:$0xf]
    %v333 = vld [vmem:[#allocation5 + $0x14] sm:$0xf]
    %v334 = vld [vmem:[#allocation5 + $0x18] sm:$0xf]
    %v335 = vld [vmem:[#allocation5 + $0x1c] sm:$0xf]
    %v336 = vld [vmem:[#allocation5 + $0x20] sm:$0xf]
    %v337 = vld [vmem:[#allocation5 + $0x24] sm:$0xf]
    %v338 = vld [vmem:[#allocation5 + $0x28] sm:$0xf]
    %v339 = vld [vmem:[#allocation5 + $0x2c] sm:$0xf]
    %v340 = vld [vmem:[#allocation5 + $0x30] sm:$0xf]
    %v341 = vld [vmem:[#allocation5 + $0x34] sm:$0xf]
    %v342 = vld [vmem:[#allocation5 + $0x38] sm:$0xf]
    %v343 = vld [vmem:[#allocation5 + $0x3c] sm:$0xf]
    %v344 = vld [vmem:[#allocation5 + $0x40] sm:$0xf]
    %v345 = vld [vmem:[#allocation5 + $0x44] sm:$0xf]
    %v346 = vld [vmem:[#allocation5 + $0x48] sm:$0xf]
    %v347 = vld [vmem:[#allocation5 + $0x4c] sm:$0xf]
    %v348 = vld [vmem:[#allocation5 + $0x50] sm:$0xf]
    %v349 = vld [vmem:[#allocation5 + $0x54] sm:$0xf]
    %v350 = vld [vmem:[#allocation5 + $0x58] sm:$0xf]
    %v351 = vld [vmem:[#allocation5 + $0x5c] sm:$0xf]
    %v352 = vld [vmem:[#allocation5 + $0x60] sm:$0xf]
    %v353 = vld [vmem:[#allocation5 + $0x64] sm:$0xf]
    %v354 = vld [vmem:[#allocation5 + $0x68] sm:$0xf]
    %v355 = vld [vmem:[#allocation5 + $0x6c] sm:$0xf]
    %v356 = vld [vmem:[#allocation5 + $0x70] sm:$0xf]
    %v357 = vld [vmem:[#allocation5 + $0x74] sm:$0xf]
    %v358 = vld [vmem:[#allocation5 + $0x78] sm:$0xf]
    %v359 = vld [vmem:[#allocation5 + $0x7c] sm:$0xf]
    %v360 = vld [vmem:[#allocation5 + $0x80] sm:$0xf]
    %v361 = vld [vmem:[#allocation5 + $0x84] sm:$0xf]
    %v362 = vld [vmem:[#allocation5 + $0x88] sm:$0xf]
    %v363 = vld [vmem:[#allocation5 + $0x8c] sm:$0xf]
    %v364 = vld [vmem:[#allocation5 + $0x90] sm:$0xf]
    %v365 = vld [vmem:[#allocation7] sm:$0x1]
    %v367 = vlaneseq
    %v368 = vshrl.u32 %v367, 7
    %v369 = vsub.s32 0, %v368
    %v370 = vrot.slane %v365, %v369
    %v409 = vunpack.c.l.b16 %v328
    %v410 = vunpack.c.l.b16 %v329
    %v411 = vunpack.c.l.b16 %v330
    %v412 = vunpack.c.l.b16 %v331
    %v413 = vunpack.c.l.b16 %v332
    %v414 = vunpack.c.l.b16 %v333
    %v415 = vunpack.c.l.b16 %v334
    %v416 = vunpack.c.l.b16 %v335
    %v417 = vunpack.c.l.b16 %v336
    %v418 = vunpack.c.l.b16 %v337
    %v419 = vunpack.c.l.b16 %v338
    %v420 = vunpack.c.l.b16 %v339
    %v421 = vunpack.c.l.b16 %v340
    %v422 = vunpack.c.l.b16 %v341
    %v423 = vunpack.c.l.b16 %v342
    %v424 = vunpack.c.l.b16 %v343
    %v425 = vunpack.c.l.b16 %v344
    %v426 = vunpack.c.l.b16 %v345
    %v427 = vunpack.c.l.b16 %v346
    %v428 = vunpack.c.l.b16 %v347
    %v429 = vunpack.c.l.b16 %v348
    %v430 = vunpack.c.l.b16 %v349
    %v431 = vunpack.c.l.b16 %v350
    %v432 = vunpack.c.l.b16 %v351
    %v433 = vunpack.c.l.b16 %v352
    %v434 = vunpack.c.l.b16 %v353
    %v435 = vunpack.c.l.b16 %v354
    %v436 = vunpack.c.l.b16 %v355
    %v437 = vunpack.c.l.b16 %v356
    %v438 = vunpack.c.l.b16 %v357
    %v439 = vunpack.c.l.b16 %v358
    %v440 = vunpack.c.l.b16 %v359
    %v441 = vunpack.c.l.b16 %v360
    %v442 = vunpack.c.l.b16 %v361
    %v443 = vunpack.c.l.b16 %v362
    %v444 = vunpack.c.l.b16 %v363
    %v445 = vunpack.c.l.b16 %v364
    %v446 = vpack.c.b16 %v410, %v409
    %v447 = vpack.c.b16 %v412, %v411
    %v448 = vpack.c.b16 %v414, %v413
    %v449 = vpack.c.b16 %v416, %v415
    %v450 = vpack.c.b16 %v418, %v417
    %v451 = vpack.c.b16 %v420, %v419
    %v452 = vpack.c.b16 %v422, %v421
    %v453 = vpack.c.b16 %v424, %v423
    %v454 = vpack.c.b16 %v426, %v425
    %v455 = vpack.c.b16 %v428, %v427
    %v456 = vpack.c.b16 %v430, %v429
    %v457 = vpack.c.b16 %v432, %v431
    %v458 = vpack.c.b16 %v434, %v433
    %v459 = vpack.c.b16 %v436, %v435
    %v460 = vpack.c.b16 %v438, %v437
    %v461 = vpack.c.b16 %v440, %v439
    %v462 = vpack.c.b16 %v442, %v441
    %v463 = vpack.c.b16 %v444, %v443
    %v464 = vpack.c.b16 %v445, %v445
    %vm483 = vcmask 326656
    %v485 = vsel %vm483, %v327, 0
    %vm487 = vcmask 1043456
    %v489 = vsel %vm487, %v464, 0
    %491 = vmatprep.subr.bf16.mxu0 0
    %492 = vmatpush1.bf16.msra.mxu0 %v446
    %493 = vmatprep.subr.bf16.mxu0 0
    %494 = vmatpush1.bf16.msra.mxu0 %v447
    %495 = vmatprep.subr.bf16.mxu0 0
    %496 = vmatpush1.bf16.msra.mxu0 %v448
    %497 = vmatprep.subr.bf16.mxu0 0
    %498 = vmatpush1.bf16.msra.mxu0 %v449
    %499 = vmatprep.subr.bf16.mxu0 0
    %500 = vmatpush1.bf16.msra.mxu0 %v450
    %501 = vmatprep.subr.bf16.mxu0 0
    %502 = vmatpush1.bf16.msra.mxu0 %v451
    %503 = vmatprep.subr.bf16.mxu0 0
    %504 = vmatpush1.bf16.msra.mxu0 %v452
    %505 = vmatprep.subr.bf16.mxu0 0
    %506 = vmatpush1.bf16.msra.mxu0 %v453
    %507 = vmatprep.subr.bf16.mxu0 0
    %508 = vmatpush1.bf16.msra.mxu0 %v454
    %509 = vmatprep.subr.bf16.mxu0 0
    %510 = vmatpush1.bf16.msra.mxu0 %v455
    %511 = vmatprep.subr.bf16.mxu0 0
    %512 = vmatpush1.bf16.msra.mxu0 %v456
    %513 = vmatprep.subr.bf16.mxu0 0
    %514 = vmatpush1.bf16.msra.mxu0 %v457
    %515 = vmatprep.subr.bf16.mxu0 0
    %516 = vmatpush1.bf16.msra.mxu0 %v458
    %517 = vmatprep.subr.bf16.mxu0 0
    %518 = vmatpush1.bf16.msra.mxu0 %v459
    %519 = vmatprep.subr.bf16.mxu0 0
    %520 = vmatpush1.bf16.msra.mxu0 %v460
    %521 = vmatprep.subr.bf16.mxu0 0
    %522 = vmatpush1.bf16.msra.mxu0 %v461
    %523 = vmatprep.mubr.bf16.mxu0 %v326
    %524 = vmatmul.mubr.bf16.gmra.mrb[0].mxu0 %v325
    %v525 = vpop.f32.mrb[0].mxu0
    %v526 = vadd.f32 %v370, %v525
    %v527 = vpop.f32.mrb[0].mxu0
    %v528 = vpop.f32.mrb[0].mxu0
    %v529 = vpop.f32.mrb[0].mxu0
    %530 = vdwg.mxu0
    %531 = vmatprep.subr.bf16.mxu0 0
    %532 = vmatpush1.bf16.msra.mxu0 %v462
    %533 = vmatprep.subr.bf16.mxu0 0
    %534 = vmatpush1.bf16.msra.mxu0 %v463
    %535 = vmatprep.subr.bf16.mxu0 0
    %536 = vmatpush1.bf16.msra.mxu0 %v489
    %537 = vmatprep.subr.bf16.mxu0 0
    %538 = vmatpush1.bf16.msra.mxu0 0
    %539 = vmatprep.subr.bf16.mxu0 0
    %540 = vmatpush1.bf16.msra.mxu0 0
    %541 = vmatprep.subr.bf16.mxu0 0
    %542 = vmatpush1.bf16.msra.mxu0 0
    %543 = vmatprep.subr.bf16.mxu0 0
    %544 = vmatpush1.bf16.msra.mxu0 0
    %545 = vmatprep.subr.bf16.mxu0 0
    %546 = vmatpush1.bf16.msra.mxu0 0
    %547 = vmatprep.subr.bf16.mxu0 0
    %548 = vmatpush1.bf16.msra.mxu0 0
    %549 = vmatprep.subr.bf16.mxu0 0
    %550 = vmatpush1.bf16.msra.mxu0 0
    %551 = vmatprep.subr.bf16.mxu0 0
    %552 = vmatpush1.bf16.msra.mxu0 0
    %553 = vmatprep.subr.bf16.mxu0 0
    %554 = vmatpush1.bf16.msra.mxu0 0
    %555 = vmatprep.subr.bf16.mxu0 0
    %556 = vmatpush1.bf16.msra.mxu0 0
    %557 = vmatprep.subr.bf16.mxu0 0
    %558 = vmatpush1.bf16.msra.mxu0 0
    %559 = vmatprep.subr.bf16.mxu0 0
    %560 = vmatpush1.bf16.msra.mxu0 0
    %561 = vmatprep.subr.bf16.mxu0 0
    %562 = vmatpush1.bf16.msra.mxu0 0
    %563 = vmatprep.mubr.bf16.mxu0 0
    %564 = vmatmul.mubr.bf16.gmra.mrb[0].mxu0 %v485
    %v565 = vpop.f32.mrb[0].mxu0
    %v566 = vadd.f32 %v526, %v565
    %v567 = vpop.f32.mrb[0].mxu0
    %v568 = vpop.f32.mrb[0].mxu0
    %v569 = vpop.f32.mrb[0].mxu0
    %570 = vdwg.mxu0
    %v571 = vrot.slane %v566, 4
    %v572 = vadd.f32 %v566, %v571
    %v573 = vrot.slane %v572, 2
    %v574 = vadd.f32 %v572, %v573
    %v575 = vrot.slane %v574, 1
    %v576 = vadd.f32 %v574, %v575
    %v577 = vrcp.pop 8.0
    %v578 = vmul.f32 %v576, %v577
    %v579 = vsub.f32 %v566, %v578
    %v580 = vmul.f32 %v579, %v579
    %v581 = vrot.slane %v580, 4
    %v582 = vadd.f32 %v580, %v581
    %v583 = vrot.slane %v582, 2
    %v584 = vadd.f32 %v582, %v583
    %v585 = vrot.slane %v584, 1
    %v586 = vadd.f32 %v584, %v585
    %v587 = vmul.f32 %v586, %v577
    %v588 = vadd.f32 %v587, 1e-05
    %v589 = vrsqrt.pop %v588
    %v590 = vmul.f32 %v579, %v589
    %v591 = vld [vmem:[#allocation8] sm:$0x1]
    %v593 = vlaneseq
    %v594 = vshrl.u32 %v593, 7
    %v595 = vsub.s32 0, %v594
    %v596 = vrot.slane %v591, %v595
    %v598 = vmul.f32 %v590, %v596
    %v599 = vld [vmem:[#allocation10] sm:$0x1]
    %v601 = vlaneseq
    %v602 = vshrl.u32 %v601, 7
    %v603 = vsub.s32 0, %v602
    %v604 = vrot.slane %v599, %v603
    %v606 = vadd.f32 %v598, %v604
    %v607 = vtanh.pop %v606
    %v608 = vpack.c.bf16 %v607, %v607
    %v609 = vld [vmem:[#allocation11] sm:$0xff]
    %v610 = vld [vmem:[#allocation11 + $0x8] sm:$0xff]
    %v611 = vld [vmem:[#allocation11 + $0x10] sm:$0xff]
    %v612 = vld [vmem:[#allocation11 + $0x18] sm:$0xff]
    %v613 = vld [vmem:[#allocation11 + $0x20] sm:$0xff]
    %v614 = vld [vmem:[#allocation11 + $0x28] sm:$0xff]
    %v615 = vld [vmem:[#allocation11 + $0x30] sm:$0xff]
    %v616 = vld [vmem:[#allocation11 + $0x38] sm:$0xff]
    %v617 = vld [vmem:[#allocation11 + $0x40] sm:$0xff]
    %v618 = vld [vmem:[#allocation11 + $0x48] sm:$0xff]
    %v619 = vld [vmem:[#allocation11 + $0x50] sm:$0xff]
    %v620 = vld [vmem:[#allocation11 + $0x58] sm:$0xff]
    %v621 = vld [vmem:[#allocation11 + $0x60] sm:$0xff]
    %v622 = vld [vmem:[#allocation11 + $0x68] sm:$0xff]
    %v623 = vld [vmem:[#allocation11 + $0x70] sm:$0xff]
    %v624 = vld [vmem:[#allocation11 + $0x78] sm:$0xff]
    %v625 = vld [vmem:[#allocation13] sm:$0x3]
    %v627 = vlaneseq
    %v628 = vshrl.u32 %v627, 7
    %v629 = vsub.s32 0, %v628
    %v630 = vrot.slane %v625, %v629
    %v631 = vlaneseq
    %v632 = vshrl.u32 %v631, 7
    %v633 = vsub.s32 1, %v632
    %v634 = vrot.slane %v625, %v633
    %v653 = vunpack.c.l.b16 %v609
    %v654 = vunpack.c.h.b16 %v609
    %v655 = vunpack.c.l.b16 %v610
    %v656 = vunpack.c.h.b16 %v610
    %v657 = vunpack.c.l.b16 %v611
    %v658 = vunpack.c.h.b16 %v611
    %v659 = vunpack.c.l.b16 %v612
    %v660 = vunpack.c.h.b16 %v612
    %v661 = vunpack.c.l.b16 %v613
    %v662 = vunpack.c.h.b16 %v613
    %v663 = vunpack.c.l.b16 %v614
    %v664 = vunpack.c.h.b16 %v614
    %v665 = vunpack.c.l.b16 %v615
    %v666 = vunpack.c.h.b16 %v615
    %v667 = vunpack.c.l.b16 %v616
    %v668 = vunpack.c.h.b16 %v616
    %v669 = vunpack.c.l.b16 %v617
    %v670 = vunpack.c.h.b16 %v617
    %v671 = vunpack.c.l.b16 %v618
    %v672 = vunpack.c.h.b16 %v618
    %v673 = vunpack.c.l.b16 %v619
    %v674 = vunpack.c.h.b16 %v619
    %v675 = vunpack.c.l.b16 %v620
    %v676 = vunpack.c.h.b16 %v620
    %v677 = vunpack.c.l.b16 %v621
    %v678 = vunpack.c.h.b16 %v621
    %v679 = vunpack.c.l.b16 %v622
    %v680 = vunpack.c.h.b16 %v622
    %v681 = vunpack.c.l.b16 %v623
    %v682 = vunpack.c.h.b16 %v623
    %v683 = vunpack.c.l.b16 %v624
    %v684 = vunpack.c.h.b16 %v624
    %v685 = vpack.c.b16 %v655, %v653
    %v686 = vpack.c.b16 %v656, %v654
    %v687 = vpack.c.b16 %v659, %v657
    %v688 = vpack.c.b16 %v660, %v658
    %v689 = vpack.c.b16 %v663, %v661
    %v690 = vpack.c.b16 %v664, %v662
    %v691 = vpack.c.b16 %v667, %v665
    %v692 = vpack.c.b16 %v668, %v666
    %v693 = vpack.c.b16 %v671, %v669
    %v694 = vpack.c.b16 %v672, %v670
    %v695 = vpack.c.b16 %v675, %v673
    %v696 = vpack.c.b16 %v676, %v674
    %v697 = vpack.c.b16 %v679, %v677
    %v698 = vpack.c.b16 %v680, %v678
    %v699 = vpack.c.b16 %v683, %v681
    %v700 = vpack.c.b16 %v684, %v682
    %717 = vmatprep.subr.bf16.mxu0 %v686
    %718 = vmatpush1.bf16.msra.mxu0 %v685
    %719 = vmatprep.subr.bf16.mxu0 %v688
    %720 = vmatpush1.bf16.msra.mxu0 %v687
    %721 = vmatprep.subr.bf16.mxu0 %v690
    %722 = vmatpush1.bf16.msra.mxu0 %v689
    %723 = vmatprep.subr.bf16.mxu0 %v692
    %724 = vmatpush1.bf16.msra.mxu0 %v691
    %725 = vmatprep.subr.bf16.mxu0 %v694
    %726 = vmatpush1.bf16.msra.mxu0 %v693
    %727 = vmatprep.subr.bf16.mxu0 %v696
    %728 = vmatpush1.bf16.msra.mxu0 %v695
    %729 = vmatprep.subr.bf16.mxu0 %v698
    %730 = vmatpush1.bf16.msra.mxu0 %v697
    %731 = vmatprep.subr.bf16.mxu0 %v700
    %732 = vmatpush1.bf16.msra.mxu0 %v699
    %733 = vmatprep.subr.bf16.mxu0 0
    %734 = vmatpush1.bf16.msra.mxu0 0
    %735 = vmatprep.subr.bf16.mxu0 0
    %736 = vmatpush1.bf16.msra.mxu0 0
    %737 = vmatprep.subr.bf16.mxu0 0
    %738 = vmatpush1.bf16.msra.mxu0 0
    %739 = vmatprep.subr.bf16.mxu0 0
    %740 = vmatpush1.bf16.msra.mxu0 0
    %741 = vmatprep.subr.bf16.mxu0 0
    %742 = vmatpush1.bf16.msra.mxu0 0
    %743 = vmatprep.subr.bf16.mxu0 0
    %744 = vmatpush1.bf16.msra.mxu0 0
    %745 = vmatprep.subr.bf16.mxu0 0
    %746 = vmatpush1.bf16.msra.mxu0 0
    %747 = vmatprep.subr.bf16.mxu0 0
    %748 = vmatpush1.bf16.msra.mxu0 0
    %749 = vmatprep.mubr.bf16.mxu0 0
    %750 = vmatmul.mubr.bf16.gmra.mrb[0].mxu0 %v608
    %v751 = vpop.f32.mrb[0].mxu0
    %v752 = vadd.f32 %v630, %v751
    %v753 = vpop.f32.mrb[0].mxu0
    %v754 = vadd.f32 %v634, %v753
    %v755 = vpop.f32.mrb[0].mxu0
    %v756 = vpop.f32.mrb[0].mxu0
    %757 = vdwg.mxu0
    %v758 = vrot.slane %v752, 4
    %v759 = vadd.f32 %v752, %v758
    %v760 = vrot.slane %v759, 2
    %v761 = vadd.f32 %v759, %v760
    %v762 = vrot.slane %v761, 1
    %v763 = vadd.f32 %v761, %v762
    %v764 = vrot.slane %v754, 4
    %v765 = vadd.f32 %v754, %v764
    %v766 = vrot.slane %v765, 2
    %v767 = vadd.f32 %v765, %v766
    %v768 = vrot.slane %v767, 1
    %v769 = vadd.f32 %v767, %v768
    %v770 = vmul.f32 %v763, %v577
    %v771 = vmul.f32 %v769, %v577
    %v772 = vsub.f32 %v752, %v770
    %v773 = vsub.f32 %v754, %v771
    %v774 = vmul.f32 %v772, %v772
    %v775 = vmul.f32 %v773, %v773
    %v776 = vrot.slane %v774, 4
    %v777 = vadd.f32 %v774, %v776
    %v778 = vrot.slane %v777, 2
    %v779 = vadd.f32 %v777, %v778
    %v780 = vrot.slane %v779, 1
    %v781 = vadd.f32 %v779, %v780
    %v782 = vrot.slane %v775, 4
    %v783 = vadd.f32 %v775, %v782
    %v784 = vrot.slane %v783, 2
    %v785 = vadd.f32 %v783, %v784
    %v786 = vrot.slane %v785, 1
    %v787 = vadd.f32 %v785, %v786
    %v788 = vmul.f32 %v781, %v577
    %v789 = vmul.f32 %v787, %v577
    %v790 = vadd.f32 %v788, 1e-05
    %v791 = vadd.f32 %v789, 1e-05
    %v792 = vrsqrt.pop %v790
    %v793 = vrsqrt.pop %v791
    %v794 = vmul.f32 %v772, %v792
    %v795 = vmul.f32 %v773, %v793
    %v796 = vld [vmem:[#allocation14] sm:$0x3]
    %v798 = vlaneseq
    %v799 = vshrl.u32 %v798, 7
    %v800 = vsub.s32 0, %v799
    %v801 = vrot.slane %v796, %v800
    %v802 = vlaneseq
    %v803 = vshrl.u32 %v802, 7
    %v804 = vsub.s32 1, %v803
    %v805 = vrot.slane %v796, %v804
    %v808 = vmul.f32 %v794, %v801
    %v809 = vmul.f32 %v795, %v805
    %v810 = vld [vmem:[#allocation16] sm:$0x3]
    %v812 = vlaneseq
    %v813 = vshrl.u32 %v812, 7
    %v814 = vsub.s32 0, %v813
    %v815 = vrot.slane %v810, %v814
    %v816 = vlaneseq
    %v817 = vshrl.u32 %v816, 7
    %v818 = vsub.s32 1, %v817
    %v819 = vrot.slane %v810, %v818
    %v822 = vadd.f32 %v808, %v815
    %v823 = vadd.f32 %v809, %v819
    %v824 = vtanh.pop %v822
    %v825 = vtanh.pop %v823
    %v826 = vpack.c.bf16 %v824, %v824
    %v827 = vpack.c.bf16 %v825, %v825
    %v828 = vld [vmem:[#allocation17] sm:$0xff]
    %v829 = vld [vmem:[#allocation17 + $0x8] sm:$0xff]
    %v830 = vld [vmem:[#allocation17 + $0x10] sm:$0xff]
    %v831 = vld [vmem:[#allocation17 + $0x18] sm:$0xff]
    %v832 = vld [vmem:[#allocation17 + $0x20] sm:$0xff]
    %v833 = vld [vmem:[#allocation17 + $0x28] sm:$0xff]
    %v834 = vld [vmem:[#allocation17 + $0x30] sm:$0xff]
    %v835 = vld [vmem:[#allocation17 + $0x38] sm:$0xff]
    %v836 = vld [vmem:[#allocation17 + $0x40] sm:$0xff]
    %v837 = vld [vmem:[#allocation17 + $0x48] sm:$0xff]
    %v838 = vld [vmem:[#allocation17 + $0x50] sm:$0xff]
    %v839 = vld [vmem:[#allocation17 + $0x58] sm:$0xff]
    %v840 = vld [vmem:[#allocation17 + $0x60] sm:$0xff]
    %v841 = vld [vmem:[#allocation17 + $0x68] sm:$0xff]
    %v842 = vld [vmem:[#allocation17 + $0x70] sm:$0xff]
    %v843 = vld [vmem:[#allocation17 + $0x78] sm:$0xff]
    %v844 = vld [vmem:[#allocation17 + $0x80] sm:$0xff]
    %v845 = vld [vmem:[#allocation17 + $0x88] sm:$0xff]
    %v846 = vld [vmem:[#allocation17 + $0x90] sm:$0xff]
    %v847 = vld [vmem:[#allocation17 + $0x98] sm:$0xff]
    %v848 = vld [vmem:[#allocation17 + $0xa0] sm:$0xff]
    %v849 = vld [vmem:[#allocation17 + $0xa8] sm:$0xff]
    %v850 = vld [vmem:[#allocation17 + $0xb0] sm:$0xff]
    %v851 = vld [vmem:[#allocation17 + $0xb8] sm:$0xff]
    %v852 = vld [vmem:[#allocation17 + $0xc0] sm:$0xff]
    %v853 = vld [vmem:[#allocation17 + $0xc8] sm:$0xff]
    %v854 = vld [vmem:[#allocation17 + $0xd0] sm:$0xff]
    %v855 = vld [vmem:[#allocation17 + $0xd8] sm:$0xff]
    %v856 = vld [vmem:[#allocation17 + $0xe0] sm:$0xff]
    %v857 = vld [vmem:[#allocation17 + $0xe8] sm:$0xff]
    %v858 = vld [vmem:[#allocation17 + $0xf0] sm:$0xff]
    %v859 = vld [vmem:[#allocation17 + $0xf8] sm:$0xff]
    %v860 = vld [vmem:[#allocation17 + $0x100] sm:$0xff]
    %v861 = vld [vmem:[#allocation17 + $0x108] sm:$0xff]
    %v862 = vld [vmem:[#allocation17 + $0x110] sm:$0xff]
    %v863 = vld [vmem:[#allocation17 + $0x118] sm:$0xff]
    %v864 = vld [vmem:[#allocation17 + $0x120] sm:$0xff]
    %v865 = vld [vmem:[#allocation17 + $0x128] sm:$0xff]
    %v866 = vld [vmem:[#allocation17 + $0x130] sm:$0xff]
    %v867 = vld [vmem:[#allocation17 + $0x138] sm:$0xff]
    %v868 = vld [vmem:[#allocation17 + $0x140] sm:$0xff]
    %v869 = vld [vmem:[#allocation17 + $0x148] sm:$0xff]
    %v870 = vld [vmem:[#allocation17 + $0x150] sm:$0xff]
    %v871 = vld [vmem:[#allocation17 + $0x158] sm:$0xff]
    %v872 = vld [vmem:[#allocation17 + $0x160] sm:$0xff]
    %v873 = vld [vmem:[#allocation17 + $0x168] sm:$0xff]
    %v874 = vld [vmem:[#allocation17 + $0x170] sm:$0xff]
    %v875 = vld [vmem:[#allocation17 + $0x178] sm:$0xff]
    %v876 = vld [vmem:[#allocation17 + $0x180] sm:$0xff]
    %v877 = vld [vmem:[#allocation17 + $0x188] sm:$0xff]
    %v878 = vld [vmem:[#allocation17 + $0x190] sm:$0xff]
    %v879 = vld [vmem:[#allocation17 + $0x198] sm:$0xff]
    %v880 = vld [vmem:[#allocation17 + $0x1a0] sm:$0xff]
    %v881 = vld [vmem:[#allocation17 + $0x1a8] sm:$0xff]
    %v882 = vld [vmem:[#allocation17 + $0x1b0] sm:$0xff]
    %v883 = vld [vmem:[#allocation17 + $0x1b8] sm:$0xff]
    %v884 = vld [vmem:[#allocation17 + $0x1c0] sm:$0xff]
    %v885 = vld [vmem:[#allocation17 + $0x1c8] sm:$0xff]
    %v886 = vld [vmem:[#allocation17 + $0x1d0] sm:$0xff]
    %v887 = vld [vmem:[#allocation17 + $0x1d8] sm:$0xff]
    %v888 = vld [vmem:[#allocation17 + $0x1e0] sm:$0xff]
    %v889 = vld [vmem:[#allocation17 + $0x1e8] sm:$0xff]
    %v890 = vld [vmem:[#allocation17 + $0x1f0] sm:$0xff]
    %v891 = vld [vmem:[#allocation17 + $0x1f8] sm:$0xff]
    %v892 = vld [vmem:[#allocation19] sm:$0xf]
    %v894 = vlaneseq
    %v895 = vshrl.u32 %v894, 7
    %v896 = vsub.s32 0, %v895
    %v897 = vrot.slane %v892, %v896
    %v898 = vlaneseq
    %v899 = vshrl.u32 %v898, 7
    %v900 = vsub.s32 1, %v899
    %v901 = vrot.slane %v892, %v900
    %v902 = vlaneseq
    %v903 = vshrl.u32 %v902, 7
    %v904 = vsub.s32 2, %v903
    %v905 = vrot.slane %v892, %v904
    %v906 = vlaneseq
    %v907 = vshrl.u32 %v906, 7
    %v908 = vsub.s32 3, %v907
    %v909 = vrot.slane %v892, %v908
    %v978 = vunpack.c.l.b16 %v828
    %v979 = vunpack.c.h.b16 %v828
    %v980 = vunpack.c.l.b16 %v829
    %v981 = vunpack.c.h.b16 %v829
    %v982 = vunpack.c.l.b16 %v830
    %v983 = vunpack.c.h.b16 %v830
    %v984 = vunpack.c.l.b16 %v831
    %v985 = vunpack.c.h.b16 %v831
    %v986 = vunpack.c.l.b16 %v832
    %v987 = vunpack.c.h.b16 %v832
    %v988 = vunpack.c.l.b16 %v833
    %v989 = vunpack.c.h.b16 %v833
    %v990 = vunpack.c.l.b16 %v834
    %v991 = vunpack.c.h.b16 %v834
    %v992 = vunpack.c.l.b16 %v835
    %v993 = vunpack.c.h.b16 %v835
    %v994 = vunpack.c.l.b16 %v836
    %v995 = vunpack.c.h.b16 %v836
    %v996 = vunpack.c.l.b16 %v837
    %v997 = vunpack.c.h.b16 %v837
    %v998 = vunpack.c.l.b16 %v838
    %v999 = vunpack.c.h.b16 %v838
    %v1000 = vunpack.c.l.b16 %v839
    %v1001 = vunpack.c.h.b16 %v839
    %v1002 = vunpack.c.l.b16 %v840
    %v1003 = vunpack.c.h.b16 %v840
    %v1004 = vunpack.c.l.b16 %v841
    %v1005 = vunpack.c.h.b16 %v841
    %v1006 = vunpack.c.l.b16 %v842
    %v1007 = vunpack.c.h.b16 %v842
    %v1008 = vunpack.c.l.b16 %v843
    %v1009 = vunpack.c.h.b16 %v843
    %v1010 = vunpack.c.l.b16 %v844
    %v1011 = vunpack.c.h.b16 %v844
    %v1012 = vunpack.c.l.b16 %v845
    %v1013 = vunpack.c.h.b16 %v845
    %v1014 = vunpack.c.l.b16 %v846
    %v1015 = vunpack.c.h.b16 %v846
    %v1016 = vunpack.c.l.b16 %v847
    %v1017 = vunpack.c.h.b16 %v847
    %v1018 = vunpack.c.l.b16 %v848
    %v1019 = vunpack.c.h.b16 %v848
    %v1020 = vunpack.c.l.b16 %v849
    %v1021 = vunpack.c.h.b16 %v849
    %v1022 = vunpack.c.l.b16 %v850
    %v1023 = vunpack.c.h.b16 %v850
    %v1024 = vunpack.c.l.b16 %v851
    %v1025 = vunpack.c.h.b16 %v851
    %v1026 = vunpack.c.l.b16 %v852
    %v1027 = vunpack.c.h.b16 %v852
    %v1028 = vunpack.c.l.b16 %v853
    %v1029 = vunpack.c.h.b16 %v853
    %v1030 = vunpack.c.l.b16 %v854
    %v1031 = vunpack.c.h.b16 %v854
    %v1032 = vunpack.c.l.b16 %v855
    %v1033 = vunpack.c.h.b16 %v855
    %v1034 = vunpack.c.l.b16 %v856
    %v1035 = vunpack.c.h.b16 %v856
    %v1036 = vunpack.c.l.b16 %v857
    %v1037 = vunpack.c.h.b16 %v857
    %v1038 = vunpack.c.l.b16 %v858
    %v1039 = vunpack.c.h.b16 %v858
    %v1040 = vunpack.c.l.b16 %v859
    %v1041 = vunpack.c.h.b16 %v859
    %v1042 = vunpack.c.l.b16 %v860
    %v1043 = vunpack.c.h.b16 %v860
    %v1044 = vunpack.c.l.b16 %v861
    %v1045 = vunpack.c.h.b16 %v861
    %v1046 = vunpack.c.l.b16 %v862
    %v1047 = vunpack.c.h.b16 %v862
    %v1048 = vunpack.c.l.b16 %v863
    %v1049 = vunpack.c.h.b16 %v863
    %v1050 = vunpack.c.l.b16 %v864
    %v1051 = vunpack.c.h.b16 %v864
    %v1052 = vunpack.c.l.b16 %v865
    %v1053 = vunpack.c.h.b16 %v865
    %v1054 = vunpack.c.l.b16 %v866
    %v1055 = vunpack.c.h.b16 %v866
    %v1056 = vunpack.c.l.b16 %v867
    %v1057 = vunpack.c.h.b16 %v867
    %v1058 = vunpack.c.l.b16 %v868
    %v1059 = vunpack.c.h.b16 %v868
    %v1060 = vunpack.c.l.b16 %v869
    %v1061 = vunpack.c.h.b16 %v869
    %v1062 = vunpack.c.l.b16 %v870
    %v1063 = vunpack.c.h.b16 %v870
    %v1064 = vunpack.c.l.b16 %v871
    %v1065 = vunpack.c.h.b16 %v871
    %v1066 = vunpack.c.l.b16 %v872
    %v1067 = vunpack.c.h.b16 %v872
    %v1068 = vunpack.c.l.b16 %v873
    %v1069 = vunpack.c.h.b16 %v873
    %v1070 = vunpack.c.l.b16 %v874
    %v1071 = vunpack.c.h.b16 %v874
    %v1072 = vunpack.c.l.b16 %v875
    %v1073 = vunpack.c.h.b16 %v875
    %v1074 = vunpack.c.l.b16 %v876
    %v1075 = vunpack.c.h.b16 %v876
    %v1076 = vunpack.c.l.b16 %v877
    %v1077 = vunpack.c.h.b16 %v877
    %v1078 = vunpack.c.l.b16 %v878
    %v1079 = vunpack.c.h.b16 %v878
    %v1080 = vunpack.c.l.b16 %v879
    %v1081 = vunpack.c.h.b16 %v879
    %v1082 = vunpack.c.l.b16 %v880
    %v1083 = vunpack.c.h.b16 %v880
    %v1084 = vunpack.c.l.b16 %v881
    %v1085 = vunpack.c.h.b16 %v881
    %v1086 = vunpack.c.l.b16 %v882
    %v1087 = vunpack.c.h.b16 %v882
    %v1088 = vunpack.c.l.b16 %v883
    %v1089 = vunpack.c.h.b16 %v883
    %v1090 = vunpack.c.l.b16 %v884
    %v1091 = vunpack.c.h.b16 %v884
    %v1092 = vunpack.c.l.b16 %v885
    %v1093 = vunpack.c.h.b16 %v885
    %v1094 = vunpack.c.l.b16 %v886
    %v1095 = vunpack.c.h.b16 %v886
    %v1096 = vunpack.c.l.b16 %v887
    %v1097 = vunpack.c.h.b16 %v887
    %v1098 = vunpack.c.l.b16 %v888
    %v1099 = vunpack.c.h.b16 %v888
    %v1100 = vunpack.c.l.b16 %v889
    %v1101 = vunpack.c.h.b16 %v889
    %v1102 = vunpack.c.l.b16 %v890
    %v1103 = vunpack.c.h.b16 %v890
    %v1104 = vunpack.c.l.b16 %v891
    %v1105 = vunpack.c.h.b16 %v891
    %v1106 = vpack.c.b16 %v982, %v978
    %v1107 = vpack.c.b16 %v983, %v979
    %v1108 = vpack.c.b16 %v984, %v980
    %v1109 = vpack.c.b16 %v985, %v981
    %v1110 = vpack.c.b16 %v990, %v986
    %v1111 = vpack.c.b16 %v991, %v987
    %v1112 = vpack.c.b16 %v992, %v988
    %v1113 = vpack.c.b16 %v993, %v989
    %v1114 = vpack.c.b16 %v998, %v994
    %v1115 = vpack.c.b16 %v999, %v995
    %v1116 = vpack.c.b16 %v1000, %v996
    %v1117 = vpack.c.b16 %v1001, %v997
    %v1118 = vpack.c.b16 %v1006, %v1002
    %v1119 = vpack.c.b16 %v1007, %v1003
    %v1120 = vpack.c.b16 %v1008, %v1004
    %v1121 = vpack.c.b16 %v1009, %v1005
    %v1122 = vpack.c.b16 %v1014, %v1010
    %v1123 = vpack.c.b16 %v1015, %v1011
    %v1124 = vpack.c.b16 %v1016, %v1012
    %v1125 = vpack.c.b16 %v1017, %v1013
    %v1126 = vpack.c.b16 %v1022, %v1018
    %v1127 = vpack.c.b16 %v1023, %v1019
    %v1128 = vpack.c.b16 %v1024, %v1020
    %v1129 = vpack.c.b16 %v1025, %v1021
    %v1130 = vpack.c.b16 %v1030, %v1026
    %v1131 = vpack.c.b16 %v1031, %v1027
    %v1132 = vpack.c.b16 %v1032, %v1028
    %v1133 = vpack.c.b16 %v1033, %v1029
    %v1134 = vpack.c.b16 %v1038, %v1034
    %v1135 = vpack.c.b16 %v1039, %v1035
    %v1136 = vpack.c.b16 %v1040, %v1036
    %v1137 = vpack.c.b16 %v1041, %v1037
    %v1138 = vpack.c.b16 %v1046, %v1042
    %v1139 = vpack.c.b16 %v1047, %v1043
    %v1140 = vpack.c.b16 %v1048, %v1044
    %v1141 = vpack.c.b16 %v1049, %v1045
    %v1142 = vpack.c.b16 %v1054, %v1050
    %v1143 = vpack.c.b16 %v1055, %v1051
    %v1144 = vpack.c.b16 %v1056, %v1052
    %v1145 = vpack.c.b16 %v1057, %v1053
    %v1146 = vpack.c.b16 %v1062, %v1058
    %v1147 = vpack.c.b16 %v1063, %v1059
    %v1148 = vpack.c.b16 %v1064, %v1060
    %v1149 = vpack.c.b16 %v1065, %v1061
    %v1150 = vpack.c.b16 %v1070, %v1066
    %v1151 = vpack.c.b16 %v1071, %v1067
    %v1152 = vpack.c.b16 %v1072, %v1068
    %v1153 = vpack.c.b16 %v1073, %v1069
    %v1154 = vpack.c.b16 %v1078, %v1074
    %v1155 = vpack.c.b16 %v1079, %v1075
    %v1156 = vpack.c.b16 %v1080, %v1076
    %v1157 = vpack.c.b16 %v1081, %v1077
    %v1158 = vpack.c.b16 %v1086, %v1082
    %v1159 = vpack.c.b16 %v1087, %v1083
    %v1160 = vpack.c.b16 %v1088, %v1084
    %v1161 = vpack.c.b16 %v1089, %v1085
    %v1162 = vpack.c.b16 %v1094, %v1090
    %v1163 = vpack.c.b16 %v1095, %v1091
    %v1164 = vpack.c.b16 %v1096, %v1092
    %v1165 = vpack.c.b16 %v1097, %v1093
    %v1166 = vpack.c.b16 %v1102, %v1098
    %v1167 = vpack.c.b16 %v1103, %v1099
    %v1168 = vpack.c.b16 %v1104, %v1100
    %v1169 = vpack.c.b16 %v1105, %v1101
    %1234 = vmatprep.subr.bf16.mxu0 %v1107
    %1235 = vmatpush1.bf16.msra.mxu0 %v1106
    %1236 = vmatprep.subr.bf16.mxu0 %v1111
    %1237 = vmatpush1.bf16.msra.mxu0 %v1110
    %1238 = vmatprep.subr.bf16.mxu0 %v1115
    %1239 = vmatpush1.bf16.msra.mxu0 %v1114
    %1240 = vmatprep.subr.bf16.mxu0 %v1119
    %1241 = vmatpush1.bf16.msra.mxu0 %v1118
    %1242 = vmatprep.subr.bf16.mxu0 %v1123
    %1243 = vmatpush1.bf16.msra.mxu0 %v1122
    %1244 = vmatprep.subr.bf16.mxu0 %v1127
    %1245 = vmatpush1.bf16.msra.mxu0 %v1126
    %1246 = vmatprep.subr.bf16.mxu0 %v1131
    %1247 = vmatpush1.bf16.msra.mxu0 %v1130
    %1248 = vmatprep.subr.bf16.mxu0 %v1135
    %1249 = vmatpush1.bf16.msra.mxu0 %v1134
    %1250 = vmatprep.subr.bf16.mxu0 %v1139
    %1251 = vmatpush1.bf16.msra.mxu0 %v1138
    %1252 = vmatprep.subr.bf16.mxu0 %v1143
    %1253 = vmatpush1.bf16.msra.mxu0 %v1142
    %1254 = vmatprep.subr.bf16.mxu0 %v1147
    %1255 = vmatpush1.bf16.msra.mxu0 %v1146
    %1256 = vmatprep.subr.bf16.mxu0 %v1151
    %1257 = vmatpush1.bf16.msra.mxu0 %v1150
    %1258 = vmatprep.subr.bf16.mxu0 %v1155
    %1259 = vmatpush1.bf16.msra.mxu0 %v1154
    %1260 = vmatprep.subr.bf16.mxu0 %v1159
    %1261 = vmatpush1.bf16.msra.mxu0 %v1158
    %1262 = vmatprep.subr.bf16.mxu0 %v1163
    %1263 = vmatpush1.bf16.msra.mxu0 %v1162
    %1264 = vmatprep.subr.bf16.mxu0 %v1167
    %1265 = vmatpush1.bf16.msra.mxu0 %v1166
    %1266 = vmatprep.mubr.bf16.mxu0 %v827
    %1267 = vmatmul.mubr.bf16.gmra.mrb[0].mxu0 %v826
    %v1268 = vpop.f32.mrb[0].mxu0
    %v1269 = vadd.f32 %v897, %v1268
    %v1270 = vpop.f32.mrb[0].mxu0
    %v1271 = vadd.f32 %v901, %v1270
    %v1272 = vpop.f32.mrb[0].mxu0
    %v1273 = vpop.f32.mrb[0].mxu0
    %1274 = vdwg.mxu0
    %1275 = vmatprep.subr.bf16.mxu0 %v1109
    %1276 = vmatpush1.bf16.msra.mxu0 %v1108
    %1277 = vmatprep.subr.bf16.mxu0 %v1113
    %1278 = vmatpush1.bf16.msra.mxu0 %v1112
    %1279 = vmatprep.subr.bf16.mxu0 %v1117
    %1280 = vmatpush1.bf16.msra.mxu0 %v1116
    %1281 = vmatprep.subr.bf16.mxu0 %v1121
    %1282 = vmatpush1.bf16.msra.mxu0 %v1120
    %1283 = vmatprep.subr.bf16.mxu0 %v1125
    %1284 = vmatpush1.bf16.msra.mxu0 %v1124
    %1285 = vmatprep.subr.bf16.mxu0 %v1129
    %1286 = vmatpush1.bf16.msra.mxu0 %v1128
    %1287 = vmatprep.subr.bf16.mxu0 %v1133
    %1288 = vmatpush1.bf16.msra.mxu0 %v1132
    %1289 = vmatprep.subr.bf16.mxu0 %v1137
    %1290 = vmatpush1.bf16.msra.mxu0 %v1136
    %1291 = vmatprep.subr.bf16.mxu0 %v1141
    %1292 = vmatpush1.bf16.msra.mxu0 %v1140
    %1293 = vmatprep.subr.bf16.mxu0 %v1145
    %1294 = vmatpush1.bf16.msra.mxu0 %v1144
    %1295 = vmatprep.subr.bf16.mxu0 %v1149
    %1296 = vmatpush1.bf16.msra.mxu0 %v1148
    %1297 = vmatprep.subr.bf16.mxu0 %v1153
    %1298 = vmatpush1.bf16.msra.mxu0 %v1152
    %1299 = vmatprep.subr.bf16.mxu0 %v1157
    %1300 = vmatpush1.bf16.msra.mxu0 %v1156
    %1301 = vmatprep.subr.bf16.mxu0 %v1161
    %1302 = vmatpush1.bf16.msra.mxu0 %v1160
    %1303 = vmatprep.subr.bf16.mxu0 %v1165
    %1304 = vmatpush1.bf16.msra.mxu0 %v1164
    %1305 = vmatprep.subr.bf16.mxu0 %v1169
    %1306 = vmatpush1.bf16.msra.mxu0 %v1168
    %1307 = vmatprep.mubr.bf16.mxu0 %v827
    %1308 = vmatmul.mubr.bf16.gmra.mrb[0].mxu0 %v826
    %v1309 = vpop.f32.mrb[0].mxu0
    %v1310 = vadd.f32 %v905, %v1309
    %v1311 = vpop.f32.mrb[0].mxu0
    %v1312 = vadd.f32 %v909, %v1311
    %v1313 = vpop.f32.mrb[0].mxu0
    %v1314 = vpop.f32.mrb[0].mxu0
    %1315 = vdwg.mxu0
    %v1316 = vrot.slane %v1269, 4
    %v1317 = vadd.f32 %v1269, %v1316
    %v1318 = vrot.slane %v1317, 2
    %v1319 = vadd.f32 %v1317, %v1318
    %v1320 = vrot.slane %v1319, 1
    %v1321 = vadd.f32 %v1319, %v1320
    %v1322 = vrot.slane %v1271, 4
    %v1323 = vadd.f32 %v1271, %v1322
    %v1324 = vrot.slane %v1323, 2
    %v1325 = vadd.f32 %v1323, %v1324
    %v1326 = vrot.slane %v1325, 1
    %v1327 = vadd.f32 %v1325, %v1326
    %v1328 = vrot.slane %v1310, 4
    %v1329 = vadd.f32 %v1310, %v1328
    %v1330 = vrot.slane %v1329, 2
    %v1331 = vadd.f32 %v1329, %v1330
    %v1332 = vrot.slane %v1331, 1
    %v1333 = vadd.f32 %v1331, %v1332
    %v1334 = vrot.slane %v1312, 4
    %v1335 = vadd.f32 %v1312, %v1334
    %v1336 = vrot.slane %v1335, 2
    %v1337 = vadd.f32 %v1335, %v1336
    %v1338 = vrot.slane %v1337, 1
    %v1339 = vadd.f32 %v1337, %v1338
    %v1340 = vmul.f32 %v1321, %v577
    %v1341 = vmul.f32 %v1327, %v577
    %v1342 = vmul.f32 %v1333, %v577
    %v1343 = vmul.f32 %v1339, %v577
    %v1344 = vsub.f32 %v1269, %v1340
    %v1345 = vsub.f32 %v1271, %v1341
    %v1346 = vsub.f32 %v1310, %v1342
    %v1347 = vsub.f32 %v1312, %v1343
    %v1348 = vmul.f32 %v1344, %v1344
    %v1349 = vmul.f32 %v1345, %v1345
    %v1350 = vmul.f32 %v1346, %v1346
    %v1351 = vmul.f32 %v1347, %v1347
    %v1352 = vrot.slane %v1348, 4
    %v1353 = vadd.f32 %v1348, %v1352
    %v1354 = vrot.slane %v1353, 2
    %v1355 = vadd.f32 %v1353, %v1354
    %v1356 = vrot.slane %v1355, 1
    %v1357 = vadd.f32 %v1355, %v1356
    %v1358 = vrot.slane %v1349, 4
    %v1359 = vadd.f32 %v1349, %v1358
    %v1360 = vrot.slane %v1359, 2
    %v1361 = vadd.f32 %v1359, %v1360
    %v1362 = vrot.slane %v1361, 1
    %v1363 = vadd.f32 %v1361, %v1362
    %v1364 = vrot.slane %v1350, 4
    %v1365 = vadd.f32 %v1350, %v1364
    %v1366 = vrot.slane %v1365, 2
    %v1367 = vadd.f32 %v1365, %v1366
    %v1368 = vrot.slane %v1367, 1
    %v1369 = vadd.f32 %v1367, %v1368
    %v1370 = vrot.slane %v1351, 4
    %v1371 = vadd.f32 %v1351, %v1370
    %v1372 = vrot.slane %v1371, 2
    %v1373 = vadd.f32 %v1371, %v1372
    %v1374 = vrot.slane %v1373, 1
    %v1375 = vadd.f32 %v1373, %v1374
    %v1376 = vmul.f32 %v1357, %v577
    %v1377 = vmul.f32 %v1363, %v577
    %v1378 = vmul.f32 %v1369, %v577
    %v1379 = vmul.f32 %v1375, %v577
    %v1380 = vadd.f32 %v1376, 1e-05
    %v1381 = vadd.f32 %v1377, 1e-05
    %v1382 = vadd.f32 %v1378, 1e-05
    %v1383 = vadd.f32 %v1379, 1e-05
    %v1384 = vrsqrt.pop %v1380
    %v1385 = vrsqrt.pop %v1381
    %v1386 = vrsqrt.pop %v1382
    %v1387 = vrsqrt.pop %v1383
    %v1388 = vmul.f32 %v1344, %v1384
    %v1389 = vmul.f32 %v1345, %v1385
    %v1390 = vmul.f32 %v1346, %v1386
    %v1391 = vmul.f32 %v1347, %v1387
    %v1392 = vld [vmem:[#allocation20] sm:$0xf]
    %v1394 = vlaneseq
    %v1395 = vshrl.u32 %v1394, 7
    %v1396 = vsub.s32 0, %v1395
    %v1397 = vrot.slane %v1392, %v1396
    %v1398 = vlaneseq
    %v1399 = vshrl.u32 %v1398, 7
    %v1400 = vsub.s32 1, %v1399
    %v1401 = vrot.slane %v1392, %v1400
    %v1402 = vlaneseq
    %v1403 = vshrl.u32 %v1402, 7
    %v1404 = vsub.s32 2, %v1403
    %v1405 = vrot.slane %v1392, %v1404
    %v1406 = vlaneseq
    %v1407 = vshrl.u32 %v1406, 7
    %v1408 = vsub.s32 3, %v1407
    %v1409 = vrot.slane %v1392, %v1408
    %v1414 = vmul.f32 %v1388, %v1397
    %v1415 = vmul.f32 %v1389, %v1401
    %v1416 = vmul.f32 %v1390, %v1405
    %v1417 = vmul.f32 %v1391, %v1409
    %v1418 = vld [vmem:[#allocation22] sm:$0xf]
    %v1420 = vlaneseq
    %v1421 = vshrl.u32 %v1420, 7
    %v1422 = vsub.s32 0, %v1421
    %v1423 = vrot.slane %v1418, %v1422
    %v1424 = vlaneseq
    %v1425 = vshrl.u32 %v1424, 7
    %v1426 = vsub.s32 1, %v1425
    %v1427 = vrot.slane %v1418, %v1426
    %v1428 = vlaneseq
    %v1429 = vshrl.u32 %v1428, 7
    %v1430 = vsub.s32 2, %v1429
    %v1431 = vrot.slane %v1418, %v1430
    %v1432 = vlaneseq
    %v1433 = vshrl.u32 %v1432, 7
    %v1434 = vsub.s32 3, %v1433
    %v1435 = vrot.slane %v1418, %v1434
    %v1440 = vadd.f32 %v1414, %v1423
    %v1441 = vadd.f32 %v1415, %v1427
    %v1442 = vadd.f32 %v1416, %v1431
    %v1443 = vadd.f32 %v1417, %v1435
    %v1444 = vtanh.pop %v1440
    %v1445 = vtanh.pop %v1441
    %v1446 = vtanh.pop %v1442
    %v1447 = vtanh.pop %v1443
    %v1448 = vpack.c.bf16 %v1444, %v1444
    %v1449 = vpack.c.bf16 %v1445, %v1445
    %v1450 = vpack.c.bf16 %v1446, %v1446
    %v1451 = vpack.c.bf16 %v1447, %v1447
    %v1452 = vld [vmem:[#allocation23] sm:$0xff]
    %v1453 = vld [vmem:[#allocation23 + $0x8] sm:$0xff]
    %v1454 = vld [vmem:[#allocation23 + $0x10] sm:$0xff]
    %v1455 = vld [vmem:[#allocation23 + $0x18] sm:$0xff]
    %v1456 = vld [vmem:[#allocation23 + $0x20] sm:$0xff]
    %v1457 = vld [vmem:[#allocation23 + $0x28] sm:$0xff]
    %v1458 = vld [vmem:[#allocation23 + $0x30] sm:$0xff]
    %v1459 = vld [vmem:[#allocation23 + $0x38] sm:$0xff]
    %v1460 = vld [vmem:[#allocation23 + $0x40] sm:$0xff]
    %v1461 = vld [vmem:[#allocation23 + $0x48] sm:$0xff]
    %v1462 = vld [vmem:[#allocation23 + $0x50] sm:$0xff]
    %v1463 = vld [vmem:[#allocation23 + $0x58] sm:$0xff]
    %v1464 = vld [vmem:[#allocation23 + $0x60] sm:$0xff]
    %v1465 = vld [vmem:[#allocation23 + $0x68] sm:$0xff]
    %v1466 = vld [vmem:[#allocation23 + $0x70] sm:$0xff]
    %v1467 = vld [vmem:[#allocation23 + $0x78] sm:$0xff]
    %v1468 = vld [vmem:[#allocation23 + $0x80] sm:$0xff]
    %v1469 = vld [vmem:[#allocation23 + $0x88] sm:$0xff]
    %v1470 = vld [vmem:[#allocation23 + $0x90] sm:$0xff]
    %v1471 = vld [vmem:[#allocation23 + $0x98] sm:$0xff]
    %v1472 = vld [vmem:[#allocation23 + $0xa0] sm:$0xff]
    %v1473 = vld [vmem:[#allocation23 + $0xa8] sm:$0xff]
    %v1474 = vld [vmem:[#allocation23 + $0xb0] sm:$0xff]
    %v1475 = vld [vmem:[#allocation23 + $0xb8] sm:$0xff]
    %v1476 = vld [vmem:[#allocation23 + $0xc0] sm:$0xff]
    %v1477 = vld [vmem:[#allocation23 + $0xc8] sm:$0xff]
    %v1478 = vld [vmem:[#allocation23 + $0xd0] sm:$0xff]
    %v1479 = vld [vmem:[#allocation23 + $0xd8] sm:$0xff]
    %v1480 = vld [vmem:[#allocation23 + $0xe0] sm:$0xff]
    %v1481 = vld [vmem:[#allocation23 + $0xe8] sm:$0xff]
    %v1482 = vld [vmem:[#allocation23 + $0xf0] sm:$0xff]
    %v1483 = vld [vmem:[#allocation23 + $0xf8] sm:$0xff]
    %v1484 = vld [vmem:[#allocation23 + $0x100] sm:$0xff]
    %v1485 = vld [vmem:[#allocation23 + $0x108] sm:$0xff]
    %v1486 = vld [vmem:[#allocation23 + $0x110] sm:$0xff]
    %v1487 = vld [vmem:[#allocation23 + $0x118] sm:$0xff]
    %v1488 = vld [vmem:[#allocation23 + $0x120] sm:$0xff]
    %v1489 = vld [vmem:[#allocation23 + $0x128] sm:$0xff]
    %v1490 = vld [vmem:[#allocation23 + $0x130] sm:$0xff]
    %v1491 = vld [vmem:[#allocation23 + $0x138] sm:$0xff]
    %v1492 = vld [vmem:[#allocation23 + $0x140] sm:$0xff]
    %v1493 = vld [vmem:[#allocation23 + $0x148] sm:$0xff]
    %v1494 = vld [vmem:[#allocation23 + $0x150] sm:$0xff]
    %v1495 = vld [vmem:[#allocation23 + $0x158] sm:$0xff]
    %v1496 = vld [vmem:[#allocation23 + $0x160] sm:$0xff]
    %v1497 = vld [vmem:[#allocation23 + $0x168] sm:$0xff]
    %v1498 = vld [vmem:[#allocation23 + $0x170] sm:$0xff]
    %v1499 = vld [vmem:[#allocation23 + $0x178] sm:$0xff]
    %v1500 = vld [vmem:[#allocation23 + $0x180] sm:$0xff]
    %v1501 = vld [vmem:[#allocation23 + $0x188] sm:$0xff]
    %v1502 = vld [vmem:[#allocation23 + $0x190] sm:$0xff]
    %v1503 = vld [vmem:[#allocation23 + $0x198] sm:$0xff]
    %v1504 = vld [vmem:[#allocation23 + $0x1a0] sm:$0xff]
    %v1505 = vld [vmem:[#allocation23 + $0x1a8] sm:$0xff]
    %v1506 = vld [vmem:[#allocation23 + $0x1b0] sm:$0xff]
    %v1507 = vld [vmem:[#allocation23 + $0x1b8] sm:$0xff]
    %v1508 = vld [vmem:[#allocation23 + $0x1c0] sm:$0xff]
    %v1509 = vld [vmem:[#allocation23 + $0x1c8] sm:$0xff]
    %v1510 = vld [vmem:[#allocation23 + $0x1d0] sm:$0xff]
    %v1511 = vld [vmem:[#allocation23 + $0x1d8] sm:$0xff]
    %v1512 = vld [vmem:[#allocation23 + $0x1e0] sm:$0xff]
    %v1513 = vld [vmem:[#allocation23 + $0x1e8] sm:$0xff]
    %v1514 = vld [vmem:[#allocation23 + $0x1f0] sm:$0xff]
    %v1515 = vld [vmem:[#allocation23 + $0x1f8] sm:$0xff]
    %v1516 = vld [vmem:[#allocation23 + $0x200] sm:$0xff]
    %v1517 = vld [vmem:[#allocation23 + $0x208] sm:$0xff]
    %v1518 = vld [vmem:[#allocation23 + $0x210] sm:$0xff]
    %v1519 = vld [vmem:[#allocation23 + $0x218] sm:$0xff]
    %v1520 = vld [vmem:[#allocation23 + $0x220] sm:$0xff]
    %v1521 = vld [vmem:[#allocation23 + $0x228] sm:$0xff]
    %v1522 = vld [vmem:[#allocation23 + $0x230] sm:$0xff]
    %v1523 = vld [vmem:[#allocation23 + $0x238] sm:$0xff]
    %v1524 = vld [vmem:[#allocation23 + $0x240] sm:$0xff]
    %v1525 = vld [vmem:[#allocation23 + $0x248] sm:$0xff]
    %v1526 = vld [vmem:[#allocation23 + $0x250] sm:$0xff]
    %v1527 = vld [vmem:[#allocation23 + $0x258] sm:$0xff]
    %v1528 = vld [vmem:[#allocation23 + $0x260] sm:$0xff]
    %v1529 = vld [vmem:[#allocation23 + $0x268] sm:$0xff]
    %v1530 = vld [vmem:[#allocation23 + $0x270] sm:$0xff]
    %v1531 = vld [vmem:[#allocation23 + $0x278] sm:$0xff]
    %v1532 = vld [vmem:[#allocation23 + $0x280] sm:$0xff]
    %v1533 = vld [vmem:[#allocation23 + $0x288] sm:$0xff]
    %v1534 = vld [vmem:[#allocation23 + $0x290] sm:$0xff]
    %v1535 = vld [vmem:[#allocation23 + $0x298] sm:$0xff]
    %v1536 = vld [vmem:[#allocation23 + $0x2a0] sm:$0xff]
    %v1537 = vld [vmem:[#allocation23 + $0x2a8] sm:$0xff]
    %v1538 = vld [vmem:[#allocation23 + $0x2b0] sm:$0xff]
    %v1539 = vld [vmem:[#allocation23 + $0x2b8] sm:$0xff]
    %v1540 = vld [vmem:[#allocation23 + $0x2c0] sm:$0xff]
    %v1541 = vld [vmem:[#allocation23 + $0x2c8] sm:$0xff]
    %v1542 = vld [vmem:[#allocation23 + $0x2d0] sm:$0xff]
    %v1543 = vld [vmem:[#allocation23 + $0x2d8] sm:$0xff]
    %v1544 = vld [vmem:[#allocation23 + $0x2e0] sm:$0xff]
    %v1545 = vld [vmem:[#allocation23 + $0x2e8] sm:$0xff]
    %v1546 = vld [vmem:[#allocation23 + $0x2f0] sm:$0xff]
    %v1547 = vld [vmem:[#allocation23 + $0x2f8] sm:$0xff]
    %v1548 = vld [vmem:[#allocation23 + $0x300] sm:$0xff]
    %v1549 = vld [vmem:[#allocation23 + $0x308] sm:$0xff]
    %v1550 = vld [vmem:[#allocation23 + $0x310] sm:$0xff]
    %v1551 = vld [vmem:[#allocation23 + $0x318] sm:$0xff]
    %v1552 = vld [vmem:[#allocation23 + $0x320] sm:$0xff]
    %v1553 = vld [vmem:[#allocation23 + $0x328] sm:$0xff]
    %v1554 = vld [vmem:[#allocation23 + $0x330] sm:$0xff]
    %v1555 = vld [vmem:[#allocation23 + $0x338] sm:$0xff]
    %v1556 = vld [vmem:[#allocation23 + $0x340] sm:$0xff]
    %v1557 = vld [vmem:[#allocation23 + $0x348] sm:$0xff]
    %v1558 = vld [vmem:[#allocation23 + $0x350] sm:$0xff]
    %v1559 = vld [vmem:[#allocation23 + $0x358] sm:$0xff]
    %v1560 = vld [vmem:[#allocation23 + $0x360] sm:$0xff]
    %v1561 = vld [vmem:[#allocation23 + $0x368] sm:$0xff]
    %v1562 = vld [vmem:[#allocation23 + $0x370] sm:$0xff]
    %v1563 = vld [vmem:[#allocation23 + $0x378] sm:$0xff]
    %v1564 = vld [vmem:[#allocation23 + $0x380] sm:$0xff]
    %v1565 = vld [vmem:[#allocation23 + $0x388] sm:$0xff]
    %v1566 = vld [vmem:[#allocation23 + $0x390] sm:$0xff]
    %v1567 = vld [vmem:[#allocation23 + $0x398] sm:$0xff]
    %v1568 = vld [vmem:[#allocation23 + $0x3a0] sm:$0xff]
    %v1569 = vld [vmem:[#allocation23 + $0x3a8] sm:$0xff]
    %v1570 = vld [vmem:[#allocation23 + $0x3b0] sm:$0xff]
    %v1571 = vld [vmem:[#allocation23 + $0x3b8] sm:$0xff]
    %v1572 = vld [vmem:[#allocation23 + $0x3c0] sm:$0xff]
    %v1573 = vld [vmem:[#allocation23 + $0x3c8] sm:$0xff]
    %v1574 = vld [vmem:[#allocation23 + $0x3d0] sm:$0xff]
    %v1575 = vld [vmem:[#allocation23 + $0x3d8] sm:$0xff]
    %v1576 = vld [vmem:[#allocation23 + $0x3e0] sm:$0xff]
    %v1577 = vld [vmem:[#allocation23 + $0x3e8] sm:$0xff]
    %v1578 = vld [vmem:[#allocation23 + $0x3f0] sm:$0xff]
    %v1579 = vld [vmem:[#allocation23 + $0x3f8] sm:$0xff]
    %v1580 = vld [vmem:[#allocation23 + $0x400] sm:$0xff]
    %v1581 = vld [vmem:[#allocation23 + $0x408] sm:$0xff]
    %v1582 = vld [vmem:[#allocation23 + $0x410] sm:$0xff]
    %v1583 = vld [vmem:[#allocation23 + $0x418] sm:$0xff]
    %v1584 = vld [vmem:[#allocation23 + $0x420] sm:$0xff]
    %v1585 = vld [vmem:[#allocation23 + $0x428] sm:$0xff]
    %v1586 = vld [vmem:[#allocation23 + $0x430] sm:$0xff]
    %v1587 = vld [vmem:[#allocation23 + $0x438] sm:$0xff]
    %v1588 = vld [vmem:[#allocation23 + $0x440] sm:$0xff]
    %v1589 = vld [vmem:[#allocation23 + $0x448] sm:$0xff]
    %v1590 = vld [vmem:[#allocation23 + $0x450] sm:$0xff]
    %v1591 = vld [vmem:[#allocation23 + $0x458] sm:$0xff]
    %v1592 = vld [vmem:[#allocation23 + $0x460] sm:$0xff]
    %v1593 = vld [vmem:[#allocation23 + $0x468] sm:$0xff]
    %v1594 = vld [vmem:[#allocation23 + $0x470] sm:$0xff]
    %v1595 = vld [vmem:[#allocation23 + $0x478] sm:$0xff]
    %v1596 = vld [vmem:[#allocation23 + $0x480] sm:$0xff]
    %v1597 = vld [vmem:[#allocation23 + $0x488] sm:$0xff]
    %v1598 = vld [vmem:[#allocation23 + $0x490] sm:$0xff]
    %v1599 = vld [vmem:[#allocation23 + $0x498] sm:$0xff]
    %v1600 = vld [vmem:[#allocation23 + $0x4a0] sm:$0xff]
    %v1601 = vld [vmem:[#allocation23 + $0x4a8] sm:$0xff]
    %v1602 = vld [vmem:[#allocation23 + $0x4b0] sm:$0xff]
    %v1603 = vld [vmem:[#allocation23 + $0x4b8] sm:$0xff]
    %v1604 = vld [vmem:[#allocation23 + $0x4c0] sm:$0xff]
    %v1605 = vld [vmem:[#allocation23 + $0x4c8] sm:$0xff]
    %v1606 = vld [vmem:[#allocation23 + $0x4d0] sm:$0xff]
    %v1607 = vld [vmem:[#allocation23 + $0x4d8] sm:$0xff]
    %v1608 = vld [vmem:[#allocation23 + $0x4e0] sm:$0xff]
    %v1609 = vld [vmem:[#allocation23 + $0x4e8] sm:$0xff]
    %v1610 = vld [vmem:[#allocation23 + $0x4f0] sm:$0xff]
    %v1611 = vld [vmem:[#allocation23 + $0x4f8] sm:$0xff]
    %v1612 = vld [vmem:[#allocation23 + $0x500] sm:$0xff]
    %v1613 = vld [vmem:[#allocation23 + $0x508] sm:$0xff]
    %v1614 = vld [vmem:[#allocation23 + $0x510] sm:$0xff]
    %v1615 = vld [vmem:[#allocation23 + $0x518] sm:$0xff]
    %v1616 = vld [vmem:[#allocation23 + $0x520] sm:$0xff]
    %v1617 = vld [vmem:[#allocation23 + $0x528] sm:$0xff]
    %v1618 = vld [vmem:[#allocation23 + $0x530] sm:$0xff]
    %v1619 = vld [vmem:[#allocation23 + $0x538] sm:$0xff]
    %v1620 = vld [vmem:[#allocation23 + $0x540] sm:$0xff]
    %v1621 = vld [vmem:[#allocation23 + $0x548] sm:$0xff]
    %v1622 = vld [vmem:[#allocation23 + $0x550] sm:$0xff]
    %v1623 = vld [vmem:[#allocation23 + $0x558] sm:$0xff]
    %v1624 = vld [vmem:[#allocation23 + $0x560] sm:$0xff]
    %v1625 = vld [vmem:[#allocation23 + $0x568] sm:$0xff]
    %v1626 = vld [vmem:[#allocation23 + $0x570] sm:$0xff]
    %v1627 = vld [vmem:[#allocation23 + $0x578] sm:$0xff]
    %v1628 = vld [vmem:[#allocation23 + $0x580] sm:$0xff]
    %v1629 = vld [vmem:[#allocation23 + $0x588] sm:$0xff]
    %v1630 = vld [vmem:[#allocation23 + $0x590] sm:$0xff]
    %v1631 = vld [vmem:[#allocation23 + $0x598] sm:$0xff]
    %v1632 = vld [vmem:[#allocation23 + $0x5a0] sm:$0xff]
    %v1633 = vld [vmem:[#allocation23 + $0x5a8] sm:$0xff]
    %v1634 = vld [vmem:[#allocation23 + $0x5b0] sm:$0xff]
    %v1635 = vld [vmem:[#allocation23 + $0x5b8] sm:$0xff]
    %v1636 = vld [vmem:[#allocation23 + $0x5c0] sm:$0xff]
    %v1637 = vld [vmem:[#allocation23 + $0x5c8] sm:$0xff]
    %v1638 = vld [vmem:[#allocation23 + $0x5d0] sm:$0xff]
    %v1639 = vld [vmem:[#allocation23 + $0x5d8] sm:$0xff]
    %v1640 = vld [vmem:[#allocation23 + $0x5e0] sm:$0xff]
    %v1641 = vld [vmem:[#allocation23 + $0x5e8] sm:$0xff]
    %v1642 = vld [vmem:[#allocation23 + $0x5f0] sm:$0xff]
    %v1643 = vld [vmem:[#allocation23 + $0x5f8] sm:$0xff]
    %v1644 = vld [vmem:[#allocation23 + $0x600] sm:$0xff]
    %v1645 = vld [vmem:[#allocation23 + $0x608] sm:$0xff]
    %v1646 = vld [vmem:[#allocation23 + $0x610] sm:$0xff]
    %v1647 = vld [vmem:[#allocation23 + $0x618] sm:$0xff]
    %v1648 = vld [vmem:[#allocation23 + $0x620] sm:$0xff]
    %v1649 = vld [vmem:[#allocation23 + $0x628] sm:$0xff]
    %v1650 = vld [vmem:[#allocation23 + $0x630] sm:$0xff]
    %v1651 = vld [vmem:[#allocation23 + $0x638] sm:$0xff]
    %v1652 = vld [vmem:[#allocation23 + $0x640] sm:$0xff]
    %v1653 = vld [vmem:[#allocation23 + $0x648] sm:$0xff]
    %v1654 = vld [vmem:[#allocation23 + $0x650] sm:$0xff]
    %v1655 = vld [vmem:[#allocation23 + $0x658] sm:$0xff]
    %v1656 = vld [vmem:[#allocation23 + $0x660] sm:$0xff]
    %v1657 = vld [vmem:[#allocation23 + $0x668] sm:$0xff]
    %v1658 = vld [vmem:[#allocation23 + $0x670] sm:$0xff]
    %v1659 = vld [vmem:[#allocation23 + $0x678] sm:$0xff]
    %v1660 = vld [vmem:[#allocation23 + $0x680] sm:$0xff]
    %v1661 = vld [vmem:[#allocation23 + $0x688] sm:$0xff]
    %v1662 = vld [vmem:[#allocation23 + $0x690] sm:$0xff]
    %v1663 = vld [vmem:[#allocation23 + $0x698] sm:$0xff]
    %v1664 = vld [vmem:[#allocation23 + $0x6a0] sm:$0xff]
    %v1665 = vld [vmem:[#allocation23 + $0x6a8] sm:$0xff]
    %v1666 = vld [vmem:[#allocation23 + $0x6b0] sm:$0xff]
    %v1667 = vld [vmem:[#allocation23 + $0x6b8] sm:$0xff]
    %v1668 = vld [vmem:[#allocation23 + $0x6c0] sm:$0xff]
    %v1669 = vld [vmem:[#allocation23 + $0x6c8] sm:$0xff]
    %v1670 = vld [vmem:[#allocation23 + $0x6d0] sm:$0xff]
    %v1671 = vld [vmem:[#allocation23 + $0x6d8] sm:$0xff]
    %v1672 = vld [vmem:[#allocation23 + $0x6e0] sm:$0xff]
    %v1673 = vld [vmem:[#allocation23 + $0x6e8] sm:$0xff]
    %v1674 = vld [vmem:[#allocation23 + $0x6f0] sm:$0xff]
    %v1675 = vld [vmem:[#allocation23 + $0x6f8] sm:$0xff]
    %v1676 = vld [vmem:[#allocation23 + $0x700] sm:$0xff]
    %v1677 = vld [vmem:[#allocation23 + $0x708] sm:$0xff]
    %v1678 = vld [vmem:[#allocation23 + $0x710] sm:$0xff]
    %v1679 = vld [vmem:[#allocation23 + $0x718] sm:$0xff]
    %v1680 = vld [vmem:[#allocation23 + $0x720] sm:$0xff]
    %v1681 = vld [vmem:[#allocation23 + $0x728] sm:$0xff]
    %v1682 = vld [vmem:[#allocation23 + $0x730] sm:$0xff]
    %v1683 = vld [vmem:[#allocation23 + $0x738] sm:$0xff]
    %v1684 = vld [vmem:[#allocation23 + $0x740] sm:$0xff]
    %v1685 = vld [vmem:[#allocation23 + $0x748] sm:$0xff]
    %v1686 = vld [vmem:[#allocation23 + $0x750] sm:$0xff]
    %v1687 = vld [vmem:[#allocation23 + $0x758] sm:$0xff]
    %v1688 = vld [vmem:[#allocation23 + $0x760] sm:$0xff]
    %v1689 = vld [vmem:[#allocation23 + $0x768] sm:$0xff]
    %v1690 = vld [vmem:[#allocation23 + $0x770] sm:$0xff]
    %v1691 = vld [vmem:[#allocation23 + $0x778] sm:$0xff]
    %v1692 = vld [vmem:[#allocation23 + $0x780] sm:$0xff]
    %v1693 = vld [vmem:[#allocation23 + $0x788] sm:$0xff]
    %v1694 = vld [vmem:[#allocation23 + $0x790] sm:$0xff]
    %v1695 = vld [vmem:[#allocation23 + $0x798] sm:$0xff]
    %v1696 = vld [vmem:[#allocation23 + $0x7a0] sm:$0xff]
    %v1697 = vld [vmem:[#allocation23 + $0x7a8] sm:$0xff]
    %v1698 = vld [vmem:[#allocation23 + $0x7b0] sm:$0xff]
    %v1699 = vld [vmem:[#allocation23 + $0x7b8] sm:$0xff]
    %v1700 = vld [vmem:[#allocation23 + $0x7c0] sm:$0xff]
    %v1701 = vld [vmem:[#allocation23 + $0x7c8] sm:$0xff]
    %v1702 = vld [vmem:[#allocation23 + $0x7d0] sm:$0xff]
    %v1703 = vld [vmem:[#allocation23 + $0x7d8] sm:$0xff]
    %v1704 = vld [vmem:[#allocation23 + $0x7e0] sm:$0xff]
    %v1705 = vld [vmem:[#allocation23 + $0x7e8] sm:$0xff]
    %v1706 = vld [vmem:[#allocation23 + $0x7f0] sm:$0xff]
    %v1707 = vld [vmem:[#allocation23 + $0x7f8] sm:$0xff]
    %v1708 = vld [vmem:[#allocation25] sm:$0xff]
    %v1710 = vlaneseq
    %v1711 = vshrl.u32 %v1710, 7
    %v1712 = vsub.s32 0, %v1711
    %v1713 = vrot.slane %v1708, %v1712
    %v1714 = vlaneseq
    %v1715 = vshrl.u32 %v1714, 7
    %v1716 = vsub.s32 1, %v1715
    %v1717 = vrot.slane %v1708, %v1716
    %v1718 = vlaneseq
    %v1719 = vshrl.u32 %v1718, 7
    %v1720 = vsub.s32 2, %v1719
    %v1721 = vrot.slane %v1708, %v1720
    %v1722 = vlaneseq
    %v1723 = vshrl.u32 %v1722, 7
    %v1724 = vsub.s32 3, %v1723
    %v1725 = vrot.slane %v1708, %v1724
    %v1726 = vlaneseq
    %v1727 = vshrl.u32 %v1726, 7
    %v1728 = vsub.s32 4, %v1727
    %v1729 = vrot.slane %v1708, %v1728
    %v1730 = vlaneseq
    %v1731 = vshrl.u32 %v1730, 7
    %v1732 = vsub.s32 5, %v1731
    %v1733 = vrot.slane %v1708, %v1732
    %v1734 = vlaneseq
    %v1735 = vshrl.u32 %v1734, 7
    %v1736 = vsub.s32 6, %v1735
    %v1737 = vrot.slane %v1708, %v1736
    %v1738 = vlaneseq
    %v1739 = vshrl.u32 %v1738, 7
    %v1740 = vsub.s32 7, %v1739
    %v1741 = vrot.slane %v1708, %v1740
    %v2006 = vunpack.c.l.b16 %v1452
    %v2007 = vunpack.c.h.b16 %v1452
    %v2008 = vunpack.c.l.b16 %v1453
    %v2009 = vunpack.c.h.b16 %v1453
    %v2010 = vunpack.c.l.b16 %v1454
    %v2011 = vunpack.c.h.b16 %v1454
    %v2012 = vunpack.c.l.b16 %v1455
    %v2013 = vunpack.c.h.b16 %v1455
    %v2014 = vunpack.c.l.b16 %v1456
    %v2015 = vunpack.c.h.b16 %v1456
    %v2016 = vunpack.c.l.b16 %v1457
    %v2017 = vunpack.c.h.b16 %v1457
    %v2018 = vunpack.c.l.b16 %v1458
    %v2019 = vunpack.c.h.b16 %v1458
    %v2020 = vunpack.c.l.b16 %v1459
    %v2021 = vunpack.c.h.b16 %v1459
    %v2022 = vunpack.c.l.b16 %v1460
    %v2023 = vunpack.c.h.b16 %v1460
    %v2024 = vunpack.c.l.b16 %v1461
    %v2025 = vunpack.c.h.b16 %v1461
    %v2026 = vunpack.c.l.b16 %v1462
    %v2027 = vunpack.c.h.b16 %v1462
    %v2028 = vunpack.c.l.b16 %v1463
    %v2029 = vunpack.c.h.b16 %v1463
    %v2030 = vunpack.c.l.b16 %v1464
    %v2031 = vunpack.c.h.b16 %v1464
    %v2032 = vunpack.c.l.b16 %v1465
    %v2033 = vunpack.c.h.b16 %v1465
    %v2034 = vunpack.c.l.b16 %v1466
    %v2035 = vunpack.c.h.b16 %v1466
    %v2036 = vunpack.c.l.b16 %v1467
    %v2037 = vunpack.c.h.b16 %v1467
    %v2038 = vunpack.c.l.b16 %v1468
    %v2039 = vunpack.c.h.b16 %v1468
    %v2040 = vunpack.c.l.b16 %v1469
    %v2041 = vunpack.c.h.b16 %v1469
    %v2042 = vunpack.c.l.b16 %v1470
    %v2043 = vunpack.c.h.b16 %v1470
    %v2044 = vunpack.c.l.b16 %v1471
    %v2045 = vunpack.c.h.b16 %v1471
    %v2046 = vunpack.c.l.b16 %v1472
    %v2047 = vunpack.c.h.b16 %v1472
    %v2048 = vunpack.c.l.b16 %v1473
    %v2049 = vunpack.c.h.b16 %v1473
    %v2050 = vunpack.c.l.b16 %v1474
    %v2051 = vunpack.c.h.b16 %v1474
    %v2052 = vunpack.c.l.b16 %v1475
    %v2053 = vunpack.c.h.b16 %v1475
    %v2054 = vunpack.c.l.b16 %v1476
    %v2055 = vunpack.c.h.b16 %v1476
    %v2056 = vunpack.c.l.b16 %v1477
    %v2057 = vunpack.c.h.b16 %v1477
    %v2058 = vunpack.c.l.b16 %v1478
    %v2059 = vunpack.c.h.b16 %v1478
    %v2060 = vunpack.c.l.b16 %v1479
    %v2061 = vunpack.c.h.b16 %v1479
    %v2062 = vunpack.c.l.b16 %v1480
    %v2063 = vunpack.c.h.b16 %v1480
    %v2064 = vunpack.c.l.b16 %v1481
    %v2065 = vunpack.c.h.b16 %v1481
    %v2066 = vunpack.c.l.b16 %v1482
    %v2067 = vunpack.c.h.b16 %v1482
    %v2068 = vunpack.c.l.b16 %v1483
    %v2069 = vunpack.c.h.b16 %v1483
    %v2070 = vunpack.c.l.b16 %v1484
    %v2071 = vunpack.c.h.b16 %v1484
    %v2072 = vunpack.c.l.b16 %v1485
    %v2073 = vunpack.c.h.b16 %v1485
    %v2074 = vunpack.c.l.b16 %v1486
    %v2075 = vunpack.c.h.b16 %v1486
    %v2076 = vunpack.c.l.b16 %v1487
    %v2077 = vunpack.c.h.b16 %v1487
    %v2078 = vunpack.c.l.b16 %v1488
    %v2079 = vunpack.c.h.b16 %v1488
    %v2080 = vunpack.c.l.b16 %v1489
    %v2081 = vunpack.c.h.b16 %v1489
    %v2082 = vunpack.c.l.b16 %v1490
    %v2083 = vunpack.c.h.b16 %v1490
    %v2084 = vunpack.c.l.b16 %v1491
    %v2085 = vunpack.c.h.b16 %v1491
    %v2086 = vunpack.c.l.b16 %v1492
    %v2087 = vunpack.c.h.b16 %v1492
    %v2088 = vunpack.c.l.b16 %v1493
    %v2089 = vunpack.c.h.b16 %v1493
    %v2090 = vunpack.c.l.b16 %v1494
    %v2091 = vunpack.c.h.b16 %v1494
    %v2092 = vunpack.c.l.b16 %v1495
    %v2093 = vunpack.c.h.b16 %v1495
    %v2094 = vunpack.c.l.b16 %v1496
    %v2095 = vunpack.c.h.b16 %v1496
    %v2096 = vunpack.c.l.b16 %v1497
    %v2097 = vunpack.c.h.b16 %v1497
    %v2098 = vunpack.c.l.b16 %v1498
    %v2099 = vunpack.c.h.b16 %v1498
    %v2100 = vunpack.c.l.b16 %v1499
    %v2101 = vunpack.c.h.b16 %v1499
    %v2102 = vunpack.c.l.b16 %v1500
    %v2103 = vunpack.c.h.b16 %v1500
    %v2104 = vunpack.c.l.b16 %v1501
    %v2105 = vunpack.c.h.b16 %v1501
    %v2106 = vunpack.c.l.b16 %v1502
    %v2107 = vunpack.c.h.b16 %v1502
    %v2108 = vunpack.c.l.b16 %v1503
    %v2109 = vunpack.c.h.b16 %v1503
    %v2110 = vunpack.c.l.b16 %v1504
    %v2111 = vunpack.c.h.b16 %v1504
    %v2112 = vunpack.c.l.b16 %v1505
    %v2113 = vunpack.c.h.b16 %v1505
    %v2114 = vunpack.c.l.b16 %v1506
    %v2115 = vunpack.c.h.b16 %v1506
    %v2116 = vunpack.c.l.b16 %v1507
    %v2117 = vunpack.c.h.b16 %v1507
    %v2118 = vunpack.c.l.b16 %v1508
    %v2119 = vunpack.c.h.b16 %v1508
    %v2120 = vunpack.c.l.b16 %v1509
    %v2121 = vunpack.c.h.b16 %v1509
    %v2122 = vunpack.c.l.b16 %v1510
    %v2123 = vunpack.c.h.b16 %v1510
    %v2124 = vunpack.c.l.b16 %v1511
    %v2125 = vunpack.c.h.b16 %v1511
    %v2126 = vunpack.c.l.b16 %v1512
    %v2127 = vunpack.c.h.b16 %v1512
    %v2128 = vunpack.c.l.b16 %v1513
    %v2129 = vunpack.c.h.b16 %v1513
    %v2130 = vunpack.c.l.b16 %v1514
    %v2131 = vunpack.c.h.b16 %v1514
    %v2132 = vunpack.c.l.b16 %v1515
    %v2133 = vunpack.c.h.b16 %v1515
    %v2134 = vunpack.c.l.b16 %v1516
    %v2135 = vunpack.c.h.b16 %v1516
    %v2136 = vunpack.c.l.b16 %v1517
    %v2137 = vunpack.c.h.b16 %v1517
    %v2138 = vunpack.c.l.b16 %v1518
    %v2139 = vunpack.c.h.b16 %v1518
    %v2140 = vunpack.c.l.b16 %v1519
    %v2141 = vunpack.c.h.b16 %v1519
    %v2142 = vunpack.c.l.b16 %v1520
    %v2143 = vunpack.c.h.b16 %v1520
    %v2144 = vunpack.c.l.b16 %v1521
    %v2145 = vunpack.c.h.b16 %v1521
    %v2146 = vunpack.c.l.b16 %v1522
    %v2147 = vunpack.c.h.b16 %v1522
    %v2148 = vunpack.c.l.b16 %v1523
    %v2149 = vunpack.c.h.b16 %v1523
    %v2150 = vunpack.c.l.b16 %v1524
    %v2151 = vunpack.c.h.b16 %v1524
    %v2152 = vunpack.c.l.b16 %v1525
    %v2153 = vunpack.c.h.b16 %v1525
    %v2154 = vunpack.c.l.b16 %v1526
    %v2155 = vunpack.c.h.b16 %v1526
    %v2156 = vunpack.c.l.b16 %v1527
    %v2157 = vunpack.c.h.b16 %v1527
    %v2158 = vunpack.c.l.b16 %v1528
    %v2159 = vunpack.c.h.b16 %v1528
    %v2160 = vunpack.c.l.b16 %v1529
    %v2161 = vunpack.c.h.b16 %v1529
    %v2162 = vunpack.c.l.b16 %v1530
    %v2163 = vunpack.c.h.b16 %v1530
    %v2164 = vunpack.c.l.b16 %v1531
    %v2165 = vunpack.c.h.b16 %v1531
    %v2166 = vunpack.c.l.b16 %v1532
    %v2167 = vunpack.c.h.b16 %v1532
    %v2168 = vunpack.c.l.b16 %v1533
    %v2169 = vunpack.c.h.b16 %v1533
    %v2170 = vunpack.c.l.b16 %v1534
    %v2171 = vunpack.c.h.b16 %v1534
    %v2172 = vunpack.c.l.b16 %v1535
    %v2173 = vunpack.c.h.b16 %v1535
    %v2174 = vunpack.c.l.b16 %v1536
    %v2175 = vunpack.c.h.b16 %v1536
    %v2176 = vunpack.c.l.b16 %v1537
    %v2177 = vunpack.c.h.b16 %v1537
    %v2178 = vunpack.c.l.b16 %v1538
    %v2179 = vunpack.c.h.b16 %v1538
    %v2180 = vunpack.c.l.b16 %v1539
    %v2181 = vunpack.c.h.b16 %v1539
    %v2182 = vunpack.c.l.b16 %v1540
    %v2183 = vunpack.c.h.b16 %v1540
    %v2184 = vunpack.c.l.b16 %v1541
    %v2185 = vunpack.c.h.b16 %v1541
    %v2186 = vunpack.c.l.b16 %v1542
    %v2187 = vunpack.c.h.b16 %v1542
    %v2188 = vunpack.c.l.b16 %v1543
    %v2189 = vunpack.c.h.b16 %v1543
    %v2190 = vunpack.c.l.b16 %v1544
    %v2191 = vunpack.c.h.b16 %v1544
    %v2192 = vunpack.c.l.b16 %v1545
    %v2193 = vunpack.c.h.b16 %v1545
    %v2194 = vunpack.c.l.b16 %v1546
    %v2195 = vunpack.c.h.b16 %v1546
    %v2196 = vunpack.c.l.b16 %v1547
    %v2197 = vunpack.c.h.b16 %v1547
    %v2198 = vunpack.c.l.b16 %v1548
    %v2199 = vunpack.c.h.b16 %v1548
    %v2200 = vunpack.c.l.b16 %v1549
    %v2201 = vunpack.c.h.b16 %v1549
    %v2202 = vunpack.c.l.b16 %v1550
    %v2203 = vunpack.c.h.b16 %v1550
    %v2204 = vunpack.c.l.b16 %v1551
    %v2205 = vunpack.c.h.b16 %v1551
    %v2206 = vunpack.c.l.b16 %v1552
    %v2207 = vunpack.c.h.b16 %v1552
    %v2208 = vunpack.c.l.b16 %v1553
    %v2209 = vunpack.c.h.b16 %v1553
    %v2210 = vunpack.c.l.b16 %v1554
    %v2211 = vunpack.c.h.b16 %v1554
    %v2212 = vunpack.c.l.b16 %v1555
    %v2213 = vunpack.c.h.b16 %v1555
    %v2214 = vunpack.c.l.b16 %v1556
    %v2215 = vunpack.c.h.b16 %v1556
    %v2216 = vunpack.c.l.b16 %v1557
    %v2217 = vunpack.c.h.b16 %v1557
    %v2218 = vunpack.c.l.b16 %v1558
    %v2219 = vunpack.c.h.b16 %v1558
    %v2220 = vunpack.c.l.b16 %v1559
    %v2221 = vunpack.c.h.b16 %v1559
    %v2222 = vunpack.c.l.b16 %v1560
    %v2223 = vunpack.c.h.b16 %v1560
    %v2224 = vunpack.c.l.b16 %v1561
    %v2225 = vunpack.c.h.b16 %v1561
    %v2226 = vunpack.c.l.b16 %v1562
    %v2227 = vunpack.c.h.b16 %v1562
    %v2228 = vunpack.c.l.b16 %v1563
    %v2229 = vunpack.c.h.b16 %v1563
    %v2230 = vunpack.c.l.b16 %v1564
    %v2231 = vunpack.c.h.b16 %v1564
    %v2232 = vunpack.c.l.b16 %v1565
    %v2233 = vunpack.c.h.b16 %v1565
    %v2234 = vunpack.c.l.b16 %v1566
    %v2235 = vunpack.c.h.b16 %v1566
    %v2236 = vunpack.c.l.b16 %v1567
    %v2237 = vunpack.c.h.b16 %v1567
    %v2238 = vunpack.c.l.b16 %v1568
    %v2239 = vunpack.c.h.b16 %v1568
    %v2240 = vunpack.c.l.b16 %v1569
    %v2241 = vunpack.c.h.b16 %v1569
    %v2242 = vunpack.c.l.b16 %v1570
    %v2243 = vunpack.c.h.b16 %v1570
    %v2244 = vunpack.c.l.b16 %v1571
    %v2245 = vunpack.c.h.b16 %v1571
    %v2246 = vunpack.c.l.b16 %v1572
    %v2247 = vunpack.c.h.b16 %v1572
    %v2248 = vunpack.c.l.b16 %v1573
    %v2249 = vunpack.c.h.b16 %v1573
    %v2250 = vunpack.c.l.b16 %v1574
    %v2251 = vunpack.c.h.b16 %v1574
    %v2252 = vunpack.c.l.b16 %v1575
    %v2253 = vunpack.c.h.b16 %v1575
    %v2254 = vunpack.c.l.b16 %v1576
    %v2255 = vunpack.c.h.b16 %v1576
    %v2256 = vunpack.c.l.b16 %v1577
    %v2257 = vunpack.c.h.b16 %v1577
    %v2258 = vunpack.c.l.b16 %v1578
    %v2259 = vunpack.c.h.b16 %v1578
    %v2260 = vunpack.c.l.b16 %v1579
    %v2261 = vunpack.c.h.b16 %v1579
    %v2262 = vunpack.c.l.b16 %v1580
    %v2263 = vunpack.c.h.b16 %v1580
    %v2264 = vunpack.c.l.b16 %v1581
    %v2265 = vunpack.c.h.b16 %v1581
    %v2266 = vunpack.c.l.b16 %v1582
    %v2267 = vunpack.c.h.b16 %v1582
    %v2268 = vunpack.c.l.b16 %v1583
    %v2269 = vunpack.c.h.b16 %v1583
    %v2270 = vunpack.c.l.b16 %v1584
    %v2271 = vunpack.c.h.b16 %v1584
    %v2272 = vunpack.c.l.b16 %v1585
    %v2273 = vunpack.c.h.b16 %v1585
    %v2274 = vunpack.c.l.b16 %v1586
    %v2275 = vunpack.c.h.b16 %v1586
    %v2276 = vunpack.c.l.b16 %v1587
    %v2277 = vunpack.c.h.b16 %v1587
    %v2278 = vunpack.c.l.b16 %v1588
    %v2279 = vunpack.c.h.b16 %v1588
    %v2280 = vunpack.c.l.b16 %v1589
    %v2281 = vunpack.c.h.b16 %v1589
    %v2282 = vunpack.c.l.b16 %v1590
    %v2283 = vunpack.c.h.b16 %v1590
    %v2284 = vunpack.c.l.b16 %v1591
    %v2285 = vunpack.c.h.b16 %v1591
    %v2286 = vunpack.c.l.b16 %v1592
    %v2287 = vunpack.c.h.b16 %v1592
    %v2288 = vunpack.c.l.b16 %v1593
    %v2289 = vunpack.c.h.b16 %v1593
    %v2290 = vunpack.c.l.b16 %v1594
    %v2291 = vunpack.c.h.b16 %v1594
    %v2292 = vunpack.c.l.b16 %v1595
    %v2293 = vunpack.c.h.b16 %v1595
    %v2294 = vunpack.c.l.b16 %v1596
    %v2295 = vunpack.c.h.b16 %v1596
    %v2296 = vunpack.c.l.b16 %v1597
    %v2297 = vunpack.c.h.b16 %v1597
    %v2298 = vunpack.c.l.b16 %v1598
    %v2299 = vunpack.c.h.b16 %v1598
    %v2300 = vunpack.c.l.b16 %v1599
    %v2301 = vunpack.c.h.b16 %v1599
    %v2302 = vunpack.c.l.b16 %v1600
    %v2303 = vunpack.c.h.b16 %v1600
    %v2304 = vunpack.c.l.b16 %v1601
    %v2305 = vunpack.c.h.b16 %v1601
    %v2306 = vunpack.c.l.b16 %v1602
    %v2307 = vunpack.c.h.b16 %v1602
    %v2308 = vunpack.c.l.b16 %v1603
    %v2309 = vunpack.c.h.b16 %v1603
    %v2310 = vunpack.c.l.b16 %v1604
    %v2311 = vunpack.c.h.b16 %v1604
    %v2312 = vunpack.c.l.b16 %v1605
    %v2313 = vunpack.c.h.b16 %v1605
    %v2314 = vunpack.c.l.b16 %v1606
    %v2315 = vunpack.c.h.b16 %v1606
    %v2316 = vunpack.c.l.b16 %v1607
    %v2317 = vunpack.c.h.b16 %v1607
    %v2318 = vunpack.c.l.b16 %v1608
    %v2319 = vunpack.c.h.b16 %v1608
    %v2320 = vunpack.c.l.b16 %v1609
    %v2321 = vunpack.c.h.b16 %v1609
    %v2322 = vunpack.c.l.b16 %v1610
    %v2323 = vunpack.c.h.b16 %v1610
    %v2324 = vunpack.c.l.b16 %v1611
    %v2325 = vunpack.c.h.b16 %v1611
    %v2326 = vunpack.c.l.b16 %v1612
    %v2327 = vunpack.c.h.b16 %v1612
    %v2328 = vunpack.c.l.b16 %v1613
    %v2329 = vunpack.c.h.b16 %v1613
    %v2330 = vunpack.c.l.b16 %v1614
    %v2331 = vunpack.c.h.b16 %v1614
    %v2332 = vunpack.c.l.b16 %v1615
    %v2333 = vunpack.c.h.b16 %v1615
    %v2334 = vunpack.c.l.b16 %v1616
    %v2335 = vunpack.c.h.b16 %v1616
    %v2336 = vunpack.c.l.b16 %v1617
    %v2337 = vunpack.c.h.b16 %v1617
    %v2338 = vunpack.c.l.b16 %v1618
    %v2339 = vunpack.c.h.b16 %v1618
    %v2340 = vunpack.c.l.b16 %v1619
    %v2341 = vunpack.c.h.b16 %v1619
    %v2342 = vunpack.c.l.b16 %v1620
    %v2343 = vunpack.c.h.b16 %v1620
    %v2344 = vunpack.c.l.b16 %v1621
    %v2345 = vunpack.c.h.b16 %v1621
    %v2346 = vunpack.c.l.b16 %v1622
    %v2347 = vunpack.c.h.b16 %v1622
    %v2348 = vunpack.c.l.b16 %v1623
    %v2349 = vunpack.c.h.b16 %v1623
    %v2350 = vunpack.c.l.b16 %v1624
    %v2351 = vunpack.c.h.b16 %v1624
    %v2352 = vunpack.c.l.b16 %v1625
    %v2353 = vunpack.c.h.b16 %v1625
    %v2354 = vunpack.c.l.b16 %v1626
    %v2355 = vunpack.c.h.b16 %v1626
    %v2356 = vunpack.c.l.b16 %v1627
    %v2357 = vunpack.c.h.b16 %v1627
    %v2358 = vunpack.c.l.b16 %v1628
    %v2359 = vunpack.c.h.b16 %v1628
    %v2360 = vunpack.c.l.b16 %v1629
    %v2361 = vunpack.c.h.b16 %v1629
    %v2362 = vunpack.c.l.b16 %v1630
    %v2363 = vunpack.c.h.b16 %v1630
    %v2364 = vunpack.c.l.b16 %v1631
    %v2365 = vunpack.c.h.b16 %v1631
    %v2366 = vunpack.c.l.b16 %v1632
    %v2367 = vunpack.c.h.b16 %v1632
    %v2368 = vunpack.c.l.b16 %v1633
    %v2369 = vunpack.c.h.b16 %v1633
    %v2370 = vunpack.c.l.b16 %v1634
    %v2371 = vunpack.c.h.b16 %v1634
    %v2372 = vunpack.c.l.b16 %v1635
    %v2373 = vunpack.c.h.b16 %v1635
    %v2374 = vunpack.c.l.b16 %v1636
    %v2375 = vunpack.c.h.b16 %v1636
    %v2376 = vunpack.c.l.b16 %v1637
    %v2377 = vunpack.c.h.b16 %v1637
    %v2378 = vunpack.c.l.b16 %v1638
    %v2379 = vunpack.c.h.b16 %v1638
    %v2380 = vunpack.c.l.b16 %v1639
    %v2381 = vunpack.c.h.b16 %v1639
    %v2382 = vunpack.c.l.b16 %v1640
    %v2383 = vunpack.c.h.b16 %v1640
    %v2384 = vunpack.c.l.b16 %v1641
    %v2385 = vunpack.c.h.b16 %v1641
    %v2386 = vunpack.c.l.b16 %v1642
    %v2387 = vunpack.c.h.b16 %v1642
    %v2388 = vunpack.c.l.b16 %v1643
    %v2389 = vunpack.c.h.b16 %v1643
    %v2390 = vunpack.c.l.b16 %v1644
    %v2391 = vunpack.c.h.b16 %v1644
    %v2392 = vunpack.c.l.b16 %v1645
    %v2393 = vunpack.c.h.b16 %v1645
    %v2394 = vunpack.c.l.b16 %v1646
    %v2395 = vunpack.c.h.b16 %v1646
    %v2396 = vunpack.c.l.b16 %v1647
    %v2397 = vunpack.c.h.b16 %v1647
    %v2398 = vunpack.c.l.b16 %v1648
    %v2399 = vunpack.c.h.b16 %v1648
    %v2400 = vunpack.c.l.b16 %v1649
    %v2401 = vunpack.c.h.b16 %v1649
    %v2402 = vunpack.c.l.b16 %v1650
    %v2403 = vunpack.c.h.b16 %v1650
    %v2404 = vunpack.c.l.b16 %v1651
    %v2405 = vunpack.c.h.b16 %v1651
    %v2406 = vunpack.c.l.b16 %v1652
    %v2407 = vunpack.c.h.b16 %v1652
    %v2408 = vunpack.c.l.b16 %v1653
    %v2409 = vunpack.c.h.b16 %v1653
    %v2410 = vunpack.c.l.b16 %v1654
    %v2411 = vunpack.c.h.b16 %v1654
    %v2412 = vunpack.c.l.b16 %v1655
    %v2413 = vunpack.c.h.b16 %v1655
    %v2414 = vunpack.c.l.b16 %v1656
    %v2415 = vunpack.c.h.b16 %v1656
    %v2416 = vunpack.c.l.b16 %v1657
    %v2417 = vunpack.c.h.b16 %v1657
    %v2418 = vunpack.c.l.b16 %v1658
    %v2419 = vunpack.c.h.b16 %v1658
    %v2420 = vunpack.c.l.b16 %v1659
    %v2421 = vunpack.c.h.b16 %v1659
    %v2422 = vunpack.c.l.b16 %v1660
    %v2423 = vunpack.c.h.b16 %v1660
    %v2424 = vunpack.c.l.b16 %v1661
    %v2425 = vunpack.c.h.b16 %v1661
    %v2426 = vunpack.c.l.b16 %v1662
    %v2427 = vunpack.c.h.b16 %v1662
    %v2428 = vunpack.c.l.b16 %v1663
    %v2429 = vunpack.c.h.b16 %v1663
    %v2430 = vunpack.c.l.b16 %v1664
    %v2431 = vunpack.c.h.b16 %v1664
    %v2432 = vunpack.c.l.b16 %v1665
    %v2433 = vunpack.c.h.b16 %v1665
    %v2434 = vunpack.c.l.b16 %v1666
    %v2435 = vunpack.c.h.b16 %v1666
    %v2436 = vunpack.c.l.b16 %v1667
    %v2437 = vunpack.c.h.b16 %v1667
    %v2438 = vunpack.c.l.b16 %v1668
    %v2439 = vunpack.c.h.b16 %v1668
    %v2440 = vunpack.c.l.b16 %v1669
    %v2441 = vunpack.c.h.b16 %v1669
    %v2442 = vunpack.c.l.b16 %v1670
    %v2443 = vunpack.c.h.b16 %v1670
    %v2444 = vunpack.c.l.b16 %v1671
    %v2445 = vunpack.c.h.b16 %v1671
    %v2446 = vunpack.c.l.b16 %v1672
    %v2447 = vunpack.c.h.b16 %v1672
    %v2448 = vunpack.c.l.b16 %v1673
    %v2449 = vunpack.c.h.b16 %v1673
    %v2450 = vunpack.c.l.b16 %v1674
    %v2451 = vunpack.c.h.b16 %v1674
    %v2452 = vunpack.c.l.b16 %v1675
    %v2453 = vunpack.c.h.b16 %v1675
    %v2454 = vunpack.c.l.b16 %v1676
    %v2455 = vunpack.c.h.b16 %v1676
    %v2456 = vunpack.c.l.b16 %v1677
    %v2457 = vunpack.c.h.b16 %v1677
    %v2458 = vunpack.c.l.b16 %v1678
    %v2459 = vunpack.c.h.b16 %v1678
    %v2460 = vunpack.c.l.b16 %v1679
    %v2461 = vunpack.c.h.b16 %v1679
    %v2462 = vunpack.c.l.b16 %v1680
    %v2463 = vunpack.c.h.b16 %v1680
    %v2464 = vunpack.c.l.b16 %v1681
    %v2465 = vunpack.c.h.b16 %v1681
    %v2466 = vunpack.c.l.b16 %v1682
    %v2467 = vunpack.c.h.b16 %v1682
    %v2468 = vunpack.c.l.b16 %v1683
    %v2469 = vunpack.c.h.b16 %v1683
    %v2470 = vunpack.c.l.b16 %v1684
    %v2471 = vunpack.c.h.b16 %v1684
    %v2472 = vunpack.c.l.b16 %v1685
    %v2473 = vunpack.c.h.b16 %v1685
    %v2474 = vunpack.c.l.b16 %v1686
    %v2475 = vunpack.c.h.b16 %v1686
    %v2476 = vunpack.c.l.b16 %v1687
    %v2477 = vunpack.c.h.b16 %v1687
    %v2478 = vunpack.c.l.b16 %v1688
    %v2479 = vunpack.c.h.b16 %v1688
    %v2480 = vunpack.c.l.b16 %v1689
    %v2481 = vunpack.c.h.b16 %v1689
    %v2482 = vunpack.c.l.b16 %v1690
    %v2483 = vunpack.c.h.b16 %v1690
    %v2484 = vunpack.c.l.b16 %v1691
    %v2485 = vunpack.c.h.b16 %v1691
    %v2486 = vunpack.c.l.b16 %v1692
    %v2487 = vunpack.c.h.b16 %v1692
    %v2488 = vunpack.c.l.b16 %v1693
    %v2489 = vunpack.c.h.b16 %v1693
    %v2490 = vunpack.c.l.b16 %v1694
    %v2491 = vunpack.c.h.b16 %v1694
    %v2492 = vunpack.c.l.b16 %v1695
    %v2493 = vunpack.c.h.b16 %v1695
    %v2494 = vunpack.c.l.b16 %v1696
    %v2495 = vunpack.c.h.b16 %v1696
    %v2496 = vunpack.c.l.b16 %v1697
    %v2497 = vunpack.c.h.b16 %v1697
    %v2498 = vunpack.c.l.b16 %v1698
    %v2499 = vunpack.c.h.b16 %v1698
    %v2500 = vunpack.c.l.b16 %v1699
    %v2501 = vunpack.c.h.b16 %v1699
    %v2502 = vunpack.c.l.b16 %v1700
    %v2503 = vunpack.c.h.b16 %v1700
    %v2504 = vunpack.c.l.b16 %v1701
    %v2505 = vunpack.c.h.b16 %v1701
    %v2506 = vunpack.c.l.b16 %v1702
    %v2507 = vunpack.c.h.b16 %v1702
    %v2508 = vunpack.c.l.b16 %v1703
    %v2509 = vunpack.c.h.b16 %v1703
    %v2510 = vunpack.c.l.b16 %v1704
    %v2511 = vunpack.c.h.b16 %v1704
    %v2512 = vunpack.c.l.b16 %v1705
    %v2513 = vunpack.c.h.b16 %v1705
    %v2514 = vunpack.c.l.b16 %v1706
    %v2515 = vunpack.c.h.b16 %v1706
    %v2516 = vunpack.c.l.b16 %v1707
    %v2517 = vunpack.c.h.b16 %v1707
    %v2518 = vpack.c.b16 %v2014, %v2006
    %v2519 = vpack.c.b16 %v2015, %v2007
    %v2520 = vpack.c.b16 %v2016, %v2008
    %v2521 = vpack.c.b16 %v2017, %v2009
    %v2522 = vpack.c.b16 %v2018, %v2010
    %v2523 = vpack.c.b16 %v2019, %v2011
    %v2524 = vpack.c.b16 %v2020, %v2012
    %v2525 = vpack.c.b16 %v2021, %v2013
    %v2526 = vpack.c.b16 %v2030, %v2022
    %v2527 = vpack.c.b16 %v2031, %v2023
    %v2528 = vpack.c.b16 %v2032, %v2024
    %v2529 = vpack.c.b16 %v2033, %v2025
    %v2530 = vpack.c.b16 %v2034, %v2026
    %v2531 = vpack.c.b16 %v2035, %v2027
    %v2532 = vpack.c.b16 %v2036, %v2028
    %v2533 = vpack.c.b16 %v2037, %v2029
    %v2534 = vpack.c.b16 %v2046, %v2038
    %v2535 = vpack.c.b16 %v2047, %v2039
    %v2536 = vpack.c.b16 %v2048, %v2040
    %v2537 = vpack.c.b16 %v2049, %v2041
    %v2538 = vpack.c.b16 %v2050, %v2042
    %v2539 = vpack.c.b16 %v2051, %v2043
    %v2540 = vpack.c.b16 %v2052, %v2044
    %v2541 = vpack.c.b16 %v2053, %v2045
    %v2542 = vpack.c.b16 %v2062, %v2054
    %v2543 = vpack.c.b16 %v2063, %v2055
    %v2544 = vpack.c.b16 %v2064, %v2056
    %v2545 = vpack.c.b16 %v2065, %v2057
    %v2546 = vpack.c.b16 %v2066, %v2058
    %v2547 = vpack.c.b16 %v2067, %v2059
    %v2548 = vpack.c.b16 %v2068, %v2060
    %v2549 = vpack.c.b16 %v2069, %v2061
    %v2550 = vpack.c.b16 %v2078, %v2070
    %v2551 = vpack.c.b16 %v2079, %v2071
    %v2552 = vpack.c.b16 %v2080, %v2072
    %v2553 = vpack.c.b16 %v2081, %v2073
    %v2554 = vpack.c.b16 %v2082, %v2074
    %v2555 = vpack.c.b16 %v2083, %v2075
    %v2556 = vpack.c.b16 %v2084, %v2076
    %v2557 = vpack.c.b16 %v2085, %v2077
    %v2558 = vpack.c.b16 %v2094, %v2086
    %v2559 = vpack.c.b16 %v2095, %v2087
    %v2560 = vpack.c.b16 %v2096, %v2088
    %v2561 = vpack.c.b16 %v2097, %v2089
    %v2562 = vpack.c.b16 %v2098, %v2090
    %v2563 = vpack.c.b16 %v2099, %v2091
    %v2564 = vpack.c.b16 %v2100, %v2092
    %v2565 = vpack.c.b16 %v2101, %v2093
    %v2566 = vpack.c.b16 %v2110, %v2102
    %v2567 = vpack.c.b16 %v2111, %v2103
    %v2568 = vpack.c.b16 %v2112, %v2104
    %v2569 = vpack.c.b16 %v2113, %v2105
    %v2570 = vpack.c.b16 %v2114, %v2106
    %v2571 = vpack.c.b16 %v2115, %v2107
    %v2572 = vpack.c.b16 %v2116, %v2108
    %v2573 = vpack.c.b16 %v2117, %v2109
    %v2574 = vpack.c.b16 %v2126, %v2118
    %v2575 = vpack.c.b16 %v2127, %v2119
    %v2576 = vpack.c.b16 %v2128, %v2120
    %v2577 = vpack.c.b16 %v2129, %v2121
    %v2578 = vpack.c.b16 %v2130, %v2122
    %v2579 = vpack.c.b16 %v2131, %v2123
    %v2580 = vpack.c.b16 %v2132, %v2124
    %v2581 = vpack.c.b16 %v2133, %v2125
    %v2582 = vpack.c.b16 %v2142, %v2134
    %v2583 = vpack.c.b16 %v2143, %v2135
    %v2584 = vpack.c.b16 %v2144, %v2136
    %v2585 = vpack.c.b16 %v2145, %v2137
    %v2586 = vpack.c.b16 %v2146, %v2138
    %v2587 = vpack.c.b16 %v2147, %v2139
    %v2588 = vpack.c.b16 %v2148, %v2140
    %v2589 = vpack.c.b16 %v2149, %v2141
    %v2590 = vpack.c.b16 %v2158, %v2150
    %v2591 = vpack.c.b16 %v2159, %v2151
    %v2592 = vpack.c.b16 %v2160, %v2152
    %v2593 = vpack.c.b16 %v2161, %v2153
    %v2594 = vpack.c.b16 %v2162, %v2154
    %v2595 = vpack.c.b16 %v2163, %v2155
    %v2596 = vpack.c.b16 %v2164, %v2156
    %v2597 = vpack.c.b16 %v2165, %v2157
    %v2598 = vpack.c.b16 %v2174, %v2166
    %v2599 = vpack.c.b16 %v2175, %v2167
    %v2600 = vpack.c.b16 %v2176, %v2168
    %v2601 = vpack.c.b16 %v2177, %v2169
    %v2602 = vpack.c.b16 %v2178, %v2170
    %v2603 = vpack.c.b16 %v2179, %v2171
    %v2604 = vpack.c.b16 %v2180, %v2172
    %v2605 = vpack.c.b16 %v2181, %v2173
    %v2606 = vpack.c.b16 %v2190, %v2182
    %v2607 = vpack.c.b16 %v2191, %v2183
    %v2608 = vpack.c.b16 %v2192, %v2184
    %v2609 = vpack.c.b16 %v2193, %v2185
    %v2610 = vpack.c.b16 %v2194, %v2186
    %v2611 = vpack.c.b16 %v2195, %v2187
    %v2612 = vpack.c.b16 %v2196, %v2188
    %v2613 = vpack.c.b16 %v2197, %v2189
    %v2614 = vpack.c.b16 %v2206, %v2198
    %v2615 = vpack.c.b16 %v2207, %v2199
    %v2616 = vpack.c.b16 %v2208, %v2200
    %v2617 = vpack.c.b16 %v2209, %v2201
    %v2618 = vpack.c.b16 %v2210, %v2202
    %v2619 = vpack.c.b16 %v2211, %v2203
    %v2620 = vpack.c.b16 %v2212, %v2204
    %v2621 = vpack.c.b16 %v2213, %v2205
    %v2622 = vpack.c.b16 %v2222, %v2214
    %v2623 = vpack.c.b16 %v2223, %v2215
    %v2624 = vpack.c.b16 %v2224, %v2216
    %v2625 = vpack.c.b16 %v2225, %v2217
    %v2626 = vpack.c.b16 %v2226, %v2218
    %v2627 = vpack.c.b16 %v2227, %v2219
    %v2628 = vpack.c.b16 %v2228, %v2220
    %v2629 = vpack.c.b16 %v2229, %v2221
    %v2630 = vpack.c.b16 %v2238, %v2230
    %v2631 = vpack.c.b16 %v2239, %v2231
    %v2632 = vpack.c.b16 %v2240, %v2232
    %v2633 = vpack.c.b16 %v2241, %v2233
    %v2634 = vpack.c.b16 %v2242, %v2234
    %v2635 = vpack.c.b16 %v2243, %v2235
    %v2636 = vpack.c.b16 %v2244, %v2236
    %v2637 = vpack.c.b16 %v2245, %v2237
    %v2638 = vpack.c.b16 %v2254, %v2246
    %v2639 = vpack.c.b16 %v2255, %v2247
    %v2640 = vpack.c.b16 %v2256, %v2248
    %v2641 = vpack.c.b16 %v2257, %v2249
    %v2642 = vpack.c.b16 %v2258, %v2250
    %v2643 = vpack.c.b16 %v2259, %v2251
    %v2644 = vpack.c.b16 %v2260, %v2252
    %v2645 = vpack.c.b16 %v2261, %v2253
    %v2646 = vpack.c.b16 %v2270, %v2262
    %v2647 = vpack.c.b16 %v2271, %v2263
    %v2648 = vpack.c.b16 %v2272, %v2264
    %v2649 = vpack.c.b16 %v2273, %v2265
    %v2650 = vpack.c.b16 %v2274, %v2266
    %v2651 = vpack.c.b16 %v2275, %v2267
    %v2652 = vpack.c.b16 %v2276, %v2268
    %v2653 = vpack.c.b16 %v2277, %v2269
    %v2654 = vpack.c.b16 %v2286, %v2278
    %v2655 = vpack.c.b16 %v2287, %v2279
    %v2656 = vpack.c.b16 %v2288, %v2280
    %v2657 = vpack.c.b16 %v2289, %v2281
    %v2658 = vpack.c.b16 %v2290, %v2282
    %v2659 = vpack.c.b16 %v2291, %v2283
    %v2660 = vpack.c.b16 %v2292, %v2284
    %v2661 = vpack.c.b16 %v2293, %v2285
    %v2662 = vpack.c.b16 %v2302, %v2294
    %v2663 = vpack.c.b16 %v2303, %v2295
    %v2664 = vpack.c.b16 %v2304, %v2296
    %v2665 = vpack.c.b16 %v2305, %v2297
    %v2666 = vpack.c.b16 %v2306, %v2298
    %v2667 = vpack.c.b16 %v2307, %v2299
    %v2668 = vpack.c.b16 %v2308, %v2300
    %v2669 = vpack.c.b16 %v2309, %v2301
    %v2670 = vpack.c.b16 %v2318, %v2310
    %v2671 = vpack.c.b16 %v2319, %v2311
    %v2672 = vpack.c.b16 %v2320, %v2312
    %v2673 = vpack.c.b16 %v2321, %v2313
    %v2674 = vpack.c.b16 %v2322, %v2314
    %v2675 = vpack.c.b16 %v2323, %v2315
    %v2676 = vpack.c.b16 %v2324, %v2316
    %v2677 = vpack.c.b16 %v2325, %v2317
    %v2678 = vpack.c.b16 %v2334, %v2326
    %v2679 = vpack.c.b16 %v2335, %v2327
    %v2680 = vpack.c.b16 %v2336, %v2328
    %v2681 = vpack.c.b16 %v2337, %v2329
    %v2682 = vpack.c.b16 %v2338, %v2330
    %v2683 = vpack.c.b16 %v2339, %v2331
    %v2684 = vpack.c.b16 %v2340, %v2332
    %v2685 = vpack.c.b16 %v2341, %v2333
    %v2686 = vpack.c.b16 %v2350, %v2342
    %v2687 = vpack.c.b16 %v2351, %v2343
    %v2688 = vpack.c.b16 %v2352, %v2344
    %v2689 = vpack.c.b16 %v2353, %v2345
    %v2690 = vpack.c.b16 %v2354, %v2346
    %v2691 = vpack.c.b16 %v2355, %v2347
    %v2692 = vpack.c.b16 %v2356, %v2348
    %v2693 = vpack.c.b16 %v2357, %v2349
    %v2694 = vpack.c.b16 %v2366, %v2358
    %v2695 = vpack.c.b16 %v2367, %v2359
    %v2696 = vpack.c.b16 %v2368, %v2360
    %v2697 = vpack.c.b16 %v2369, %v2361
    %v2698 = vpack.c.b16 %v2370, %v2362
    %v2699 = vpack.c.b16 %v2371, %v2363
    %v2700 = vpack.c.b16 %v2372, %v2364
    %v2701 = vpack.c.b16 %v2373, %v2365
    %v2702 = vpack.c.b16 %v2382, %v2374
    %v2703 = vpack.c.b16 %v2383, %v2375
    %v2704 = vpack.c.b16 %v2384, %v2376
    %v2705 = vpack.c.b16 %v2385, %v2377
    %v2706 = vpack.c.b16 %v2386, %v2378
    %v2707 = vpack.c.b16 %v2387, %v2379
    %v2708 = vpack.c.b16 %v2388, %v2380
    %v2709 = vpack.c.b16 %v2389, %v2381
    %v2710 = vpack.c.b16 %v2398, %v2390
    %v2711 = vpack.c.b16 %v2399, %v2391
    %v2712 = vpack.c.b16 %v2400, %v2392
    %v2713 = vpack.c.b16 %v2401, %v2393
    %v2714 = vpack.c.b16 %v2402, %v2394
    %v2715 = vpack.c.b16 %v2403, %v2395
    %v2716 = vpack.c.b16 %v2404, %v2396
    %v2717 = vpack.c.b16 %v2405, %v2397
    %v2718 = vpack.c.b16 %v2414, %v2406
    %v2719 = vpack.c.b16 %v2415, %v2407
    %v2720 = vpack.c.b16 %v2416, %v2408
    %v2721 = vpack.c.b16 %v2417, %v2409
    %v2722 = vpack.c.b16 %v2418, %v2410
    %v2723 = vpack.c.b16 %v2419, %v2411
    %v2724 = vpack.c.b16 %v2420, %v2412
    %v2725 = vpack.c.b16 %v2421, %v2413
    %v2726 = vpack.c.b16 %v2430, %v2422
    %v2727 = vpack.c.b16 %v2431, %v2423
    %v2728 = vpack.c.b16 %v2432, %v2424
    %v2729 = vpack.c.b16 %v2433, %v2425
    %v2730 = vpack.c.b16 %v2434, %v2426
    %v2731 = vpack.c.b16 %v2435, %v2427
    %v2732 = vpack.c.b16 %v2436, %v2428
    %v2733 = vpack.c.b16 %v2437, %v2429
    %v2734 = vpack.c.b16 %v2446, %v2438
    %v2735 = vpack.c.b16 %v2447, %v2439
    %v2736 = vpack.c.b16 %v2448, %v2440
    %v2737 = vpack.c.b16 %v2449, %v2441
    %v2738 = vpack.c.b16 %v2450, %v2442
    %v2739 = vpack.c.b16 %v2451, %v2443
    %v2740 = vpack.c.b16 %v2452, %v2444
    %v2741 = vpack.c.b16 %v2453, %v2445
    %v2742 = vpack.c.b16 %v2462, %v2454
    %v2743 = vpack.c.b16 %v2463, %v2455
    %v2744 = vpack.c.b16 %v2464, %v2456
    %v2745 = vpack.c.b16 %v2465, %v2457
    %v2746 = vpack.c.b16 %v2466, %v2458
    %v2747 = vpack.c.b16 %v2467, %v2459
    %v2748 = vpack.c.b16 %v2468, %v2460
    %v2749 = vpack.c.b16 %v2469, %v2461
    %v2750 = vpack.c.b16 %v2478, %v2470
    %v2751 = vpack.c.b16 %v2479, %v2471
    %v2752 = vpack.c.b16 %v2480, %v2472
    %v2753 = vpack.c.b16 %v2481, %v2473
    %v2754 = vpack.c.b16 %v2482, %v2474
    %v2755 = vpack.c.b16 %v2483, %v2475
    %v2756 = vpack.c.b16 %v2484, %v2476
    %v2757 = vpack.c.b16 %v2485, %v2477
    %v2758 = vpack.c.b16 %v2494, %v2486
    %v2759 = vpack.c.b16 %v2495, %v2487
    %v2760 = vpack.c.b16 %v2496, %v2488
    %v2761 = vpack.c.b16 %v2497, %v2489
    %v2762 = vpack.c.b16 %v2498, %v2490
    %v2763 = vpack.c.b16 %v2499, %v2491
    %v2764 = vpack.c.b16 %v2500, %v2492
    %v2765 = vpack.c.b16 %v2501, %v2493
    %v2766 = vpack.c.b16 %v2510, %v2502
    %v2767 = vpack.c.b16 %v2511, %v2503
    %v2768 = vpack.c.b16 %v2512, %v2504
    %v2769 = vpack.c.b16 %v2513, %v2505
    %v2770 = vpack.c.b16 %v2514, %v2506
    %v2771 = vpack.c.b16 %v2515, %v2507
    %v2772 = vpack.c.b16 %v2516, %v2508
    %v2773 = vpack.c.b16 %v2517, %v2509
    %3030 = vmatprep.subr.bf16.mxu0 %v2519
    %3031 = vmatpush1.bf16.msra.mxu0 %v2518
    %3032 = vmatprep.subr.bf16.mxu0 %v2527
    %3033 = vmatpush1.bf16.msra.mxu0 %v2526
    %3034 = vmatprep.subr.bf16.mxu0 %v2535
    %3035 = vmatpush1.bf16.msra.mxu0 %v2534
    %3036 = vmatprep.subr.bf16.mxu0 %v2543
    %3037 = vmatpush1.bf16.msra.mxu0 %v2542
    %3038 = vmatprep.subr.bf16.mxu0 %v2551
    %3039 = vmatpush1.bf16.msra.mxu0 %v2550
    %3040 = vmatprep.subr.bf16.mxu0 %v2559
    %3041 = vmatpush1.bf16.msra.mxu0 %v2558
    %3042 = vmatprep.subr.bf16.mxu0 %v2567
    %3043 = vmatpush1.bf16.msra.mxu0 %v2566
    %3044 = vmatprep.subr.bf16.mxu0 %v2575
    %3045 = vmatpush1.bf16.msra.mxu0 %v2574
    %3046 = vmatprep.subr.bf16.mxu0 %v2583
    %3047 = vmatpush1.bf16.msra.mxu0 %v2582
    %3048 = vmatprep.subr.bf16.mxu0 %v2591
    %3049 = vmatpush1.bf16.msra.mxu0 %v2590
    %3050 = vmatprep.subr.bf16.mxu0 %v2599
    %3051 = vmatpush1.bf16.msra.mxu0 %v2598
    %3052 = vmatprep.subr.bf16.mxu0 %v2607
    %3053 = vmatpush1.bf16.msra.mxu0 %v2606
    %3054 = vmatprep.subr.bf16.mxu0 %v2615
    %3055 = vmatpush1.bf16.msra.mxu0 %v2614
    %3056 = vmatprep.subr.bf16.mxu0 %v2623
    %3057 = vmatpush1.bf16.msra.mxu0 %v2622
    %3058 = vmatprep.subr.bf16.mxu0 %v2631
    %3059 = vmatpush1.bf16.msra.mxu0 %v2630
    %3060 = vmatprep.subr.bf16.mxu0 %v2639
    %3061 = vmatpush1.bf16.msra.mxu0 %v2638
    %3062 = vmatprep.mubr.bf16.mxu0 %v1449
    %3063 = vmatmul.mubr.bf16.gmra.mrb[0].mxu0 %v1448
    %v3064 = vpop.f32.mrb[0].mxu0
    %v3065 = vadd.f32 %v1713, %v3064
    %v3066 = vpop.f32.mrb[0].mxu0
    %v3067 = vadd.f32 %v1717, %v3066
    %v3068 = vpop.f32.mrb[0].mxu0
    %v3069 = vpop.f32.mrb[0].mxu0
    %3070 = vdwg.mxu0
    %3071 = vmatprep.subr.bf16.mxu0 %v2647
    %3072 = vmatpush1.bf16.msra.mxu0 %v2646
    %3073 = vmatprep.subr.bf16.mxu0 %v2655
    %3074 = vmatpush1.bf16.msra.mxu0 %v2654
    %3075 = vmatprep.subr.bf16.mxu0 %v2663
    %3076 = vmatpush1.bf16.msra.mxu0 %v2662
    %3077 = vmatprep.subr.bf16.mxu0 %v2671
    %3078 = vmatpush1.bf16.msra.mxu0 %v2670
    %3079 = vmatprep.subr.bf16.mxu0 %v2679
    %3080 = vmatpush1.bf16.msra.mxu0 %v2678
    %3081 = vmatprep.subr.bf16.mxu0 %v2687
    %3082 = vmatpush1.bf16.msra.mxu0 %v2686
    %3083 = vmatprep.subr.bf16.mxu0 %v2695
    %3084 = vmatpush1.bf16.msra.mxu0 %v2694
    %3085 = vmatprep.subr.bf16.mxu0 %v2703
    %3086 = vmatpush1.bf16.msra.mxu0 %v2702
    %3087 = vmatprep.subr.bf16.mxu0 %v2711
    %3088 = vmatpush1.bf16.msra.mxu0 %v2710
    %3089 = vmatprep.subr.bf16.mxu0 %v2719
    %3090 = vmatpush1.bf16.msra.mxu0 %v2718
    %3091 = vmatprep.subr.bf16.mxu0 %v2727
    %3092 = vmatpush1.bf16.msra.mxu0 %v2726
    %3093 = vmatprep.subr.bf16.mxu0 %v2735
    %3094 = vmatpush1.bf16.msra.mxu0 %v2734
    %3095 = vmatprep.subr.bf16.mxu0 %v2743
    %3096 = vmatpush1.bf16.msra.mxu0 %v2742
    %3097 = vmatprep.subr.bf16.mxu0 %v2751
    %3098 = vmatpush1.bf16.msra.mxu0 %v2750
    %3099 = vmatprep.subr.bf16.mxu0 %v2759
    %3100 = vmatpush1.bf16.msra.mxu0 %v2758
    %3101 = vmatprep.subr.bf16.mxu0 %v2767
    %3102 = vmatpush1.bf16.msra.mxu0 %v2766
    %3103 = vmatprep.mubr.bf16.mxu0 %v1451
    %3104 = vmatmul.mubr.bf16.gmra.mrb[0].mxu0 %v1450
    %v3105 = vpop.f32.mrb[0].mxu0
    %v3106 = vadd.f32 %v3065, %v3105
    %v3107 = vpop.f32.mrb[0].mxu0
    %v3108 = vadd.f32 %v3067, %v3107
    %v3109 = vpop.f32.mrb[0].mxu0
    %v3110 = vpop.f32.mrb[0].mxu0
    %3111 = vdwg.mxu0
    %3112 = vmatprep.subr.bf16.mxu0 %v2521
    %3113 = vmatpush1.bf16.msra.mxu0 %v2520
    %3114 = vmatprep.subr.bf16.mxu0 %v2529
    %3115 = vmatpush1.bf16.msra.mxu0 %v2528
    %3116 = vmatprep.subr.bf16.mxu0 %v2537
    %3117 = vmatpush1.bf16.msra.mxu0 %v2536
    %3118 = vmatprep.subr.bf16.mxu0 %v2545
    %3119 = vmatpush1.bf16.msra.mxu0 %v2544
    %3120 = vmatprep.subr.bf16.mxu0 %v2553
    %3121 = vmatpush1.bf16.msra.mxu0 %v2552
    %3122 = vmatprep.subr.bf16.mxu0 %v2561
    %3123 = vmatpush1.bf16.msra.mxu0 %v2560
    %3124 = vmatprep.subr.bf16.mxu0 %v2569
    %3125 = vmatpush1.bf16.msra.mxu0 %v2568
    %3126 = vmatprep.subr.bf16.mxu0 %v2577
    %3127 = vmatpush1.bf16.msra.mxu0 %v2576
    %3128 = vmatprep.subr.bf16.mxu0 %v2585
    %3129 = vmatpush1.bf16.msra.mxu0 %v2584
    %3130 = vmatprep.subr.bf16.mxu0 %v2593
    %3131 = vmatpush1.bf16.msra.mxu0 %v2592
    %3132 = vmatprep.subr.bf16.mxu0 %v2601
    %3133 = vmatpush1.bf16.msra.mxu0 %v2600
    %3134 = vmatprep.subr.bf16.mxu0 %v2609
    %3135 = vmatpush1.bf16.msra.mxu0 %v2608
    %3136 = vmatprep.subr.bf16.mxu0 %v2617
    %3137 = vmatpush1.bf16.msra.mxu0 %v2616
    %3138 = vmatprep.subr.bf16.mxu0 %v2625
    %3139 = vmatpush1.bf16.msra.mxu0 %v2624
    %3140 = vmatprep.subr.bf16.mxu0 %v2633
    %3141 = vmatpush1.bf16.msra.mxu0 %v2632
    %3142 = vmatprep.subr.bf16.mxu0 %v2641
    %3143 = vmatpush1.bf16.msra.mxu0 %v2640
    %3144 = vmatprep.mubr.bf16.mxu0 %v1449
    %3145 = vmatmul.mubr.bf16.gmra.mrb[0].mxu0 %v1448
    %v3146 = vpop.f32.mrb[0].mxu0
    %v3147 = vadd.f32 %v1721, %v3146
    %v3148 = vpop.f32.mrb[0].mxu0
    %v3149 = vadd.f32 %v1725, %v3148
    %v3150 = vpop.f32.mrb[0].mxu0
    %v3151 = vpop.f32.mrb[0].mxu0
    %3152 = vdwg.mxu0
    %3153 = vmatprep.subr.bf16.mxu0 %v2649
    %3154 = vmatpush1.bf16.msra.mxu0 %v2648
    %3155 = vmatprep.subr.bf16.mxu0 %v2657
    %3156 = vmatpush1.bf16.msra.mxu0 %v2656
    %3157 = vmatprep.subr.bf16.mxu0 %v2665
    %3158 = vmatpush1.bf16.msra.mxu0 %v2664
    %3159 = vmatprep.subr.bf16.mxu0 %v2673
    %3160 = vmatpush1.bf16.msra.mxu0 %v2672
    %3161 = vmatprep.subr.bf16.mxu0 %v2681
    %3162 = vmatpush1.bf16.msra.mxu0 %v2680
    %3163 = vmatprep.subr.bf16.mxu0 %v2689
    %3164 = vmatpush1.bf16.msra.mxu0 %v2688
    %3165 = vmatprep.subr.bf16.mxu0 %v2697
    %3166 = vmatpush1.bf16.msra.mxu0 %v2696
    %3167 = vmatprep.subr.bf16.mxu0 %v2705
    %3168 = vmatpush1.bf16.msra.mxu0 %v2704
    %3169 = vmatprep.subr.bf16.mxu0 %v2713
    %3170 = vmatpush1.bf16.msra.mxu0 %v2712
    %3171 = vmatprep.subr.bf16.mxu0 %v2721
    %3172 = vmatpush1.bf16.msra.mxu0 %v2720
    %3173 = vmatprep.subr.bf16.mxu0 %v2729
    %3174 = vmatpush1.bf16.msra.mxu0 %v2728
    %3175 = vmatprep.subr.bf16.mxu0 %v2737
    %3176 = vmatpush1.bf16.msra.mxu0 %v2736
    %3177 = vmatprep.subr.bf16.mxu0 %v2745
    %3178 = vmatpush1.bf16.msra.mxu0 %v2744
    %3179 = vmatprep.subr.bf16.mxu0 %v2753
    %3180 = vmatpush1.bf16.msra.mxu0 %v2752
    %3181 = vmatprep.subr.bf16.mxu0 %v2761
    %3182 = vmatpush1.bf16.msra.mxu0 %v2760
    %3183 = vmatprep.subr.bf16.mxu0 %v2769
    %3184 = vmatpush1.bf16.msra.mxu0 %v2768
    %3185 = vmatprep.mubr.bf16.mxu0 %v1451
    %3186 = vmatmul.mubr.bf16.gmra.mrb[0].mxu0 %v1450
    %v3187 = vpop.f32.mrb[0].mxu0
    %v3188 = vadd.f32 %v3147, %v3187
    %v3189 = vpop.f32.mrb[0].mxu0
    %v3190 = vadd.f32 %v3149, %v3189
    %v3191 = vpop.f32.mrb[0].mxu0
    %v3192 = vpop.f32.mrb[0].mxu0
    %3193 = vdwg.mxu0
    %3194 = vmatprep.subr.bf16.mxu0 %v2523
    %3195 = vmatpush1.bf16.msra.mxu0 %v2522
    %3196 = vmatprep.subr.bf16.mxu0 %v2531
    %3197 = vmatpush1.bf16.msra.mxu0 %v2530
    %3198 = vmatprep.subr.bf16.mxu0 %v2539
    %3199 = vmatpush1.bf16.msra.mxu0 %v2538
    %3200 = vmatprep.subr.bf16.mxu0 %v2547
    %3201 = vmatpush1.bf16.msra.mxu0 %v2546
    %3202 = vmatprep.subr.bf16.mxu0 %v2555
    %3203 = vmatpush1.bf16.msra.mxu0 %v2554
    %3204 = vmatprep.subr.bf16.mxu0 %v2563
    %3205 = vmatpush1.bf16.msra.mxu0 %v2562
    %3206 = vmatprep.subr.bf16.mxu0 %v2571
    %3207 = vmatpush1.bf16.msra.mxu0 %v2570
    %3208 = vmatprep.subr.bf16.mxu0 %v2579
    %3209 = vmatpush1.bf16.msra.mxu0 %v2578
    %3210 = vmatprep.subr.bf16.mxu0 %v2587
    %3211 = vmatpush1.bf16.msra.mxu0 %v2586
    %3212 = vmatprep.subr.bf16.mxu0 %v2595
    %3213 = vmatpush1.bf16.msra.mxu0 %v2594
    %3214 = vmatprep.subr.bf16.mxu0 %v2603
    %3215 = vmatpush1.bf16.msra.mxu0 %v2602
    %3216 = vmatprep.subr.bf16.mxu0 %v2611
    %3217 = vmatpush1.bf16.msra.mxu0 %v2610
    %3218 = vmatprep.subr.bf16.mxu0 %v2619
    %3219 = vmatpush1.bf16.msra.mxu0 %v2618
    %3220 = vmatprep.subr.bf16.mxu0 %v2627
    %3221 = vmatpush1.bf16.msra.mxu0 %v2626
    %3222 = vmatprep.subr.bf16.mxu0 %v2635
    %3223 = vmatpush1.bf16.msra.mxu0 %v2634
    %3224 = vmatprep.subr.bf16.mxu0 %v2643
    %3225 = vmatpush1.bf16.msra.mxu0 %v2642
    %3226 = vmatprep.mubr.bf16.mxu0 %v1449
    %3227 = vmatmul.mubr.bf16.gmra.mrb[0].mxu0 %v1448
    %v3228 = vpop.f32.mrb[0].mxu0
    %v3229 = vadd.f32 %v1729, %v3228
    %v3230 = vpop.f32.mrb[0].mxu0
    %v3231 = vadd.f32 %v1733, %v3230
    %v3232 = vpop.f32.mrb[0].mxu0
    %v3233 = vpop.f32.mrb[0].mxu0
    %3234 = vdwg.mxu0
    %3235 = vmatprep.subr.bf16.mxu0 %v2651
    %3236 = vmatpush1.bf16.msra.mxu0 %v2650
    %3237 = vmatprep.subr.bf16.mxu0 %v2659
    %3238 = vmatpush1.bf16.msra.mxu0 %v2658
    %3239 = vmatprep.subr.bf16.mxu0 %v2667
    %3240 = vmatpush1.bf16.msra.mxu0 %v2666
    %3241 = vmatprep.subr.bf16.mxu0 %v2675
    %3242 = vmatpush1.bf16.msra.mxu0 %v2674
    %3243 = vmatprep.subr.bf16.mxu0 %v2683
    %3244 = vmatpush1.bf16.msra.mxu0 %v2682
    %3245 = vmatprep.subr.bf16.mxu0 %v2691
    %3246 = vmatpush1.bf16.msra.mxu0 %v2690
    %3247 = vmatprep.subr.bf16.mxu0 %v2699
    %3248 = vmatpush1.bf16.msra.mxu0 %v2698
    %3249 = vmatprep.subr.bf16.mxu0 %v2707
    %3250 = vmatpush1.bf16.msra.mxu0 %v2706
    %3251 = vmatprep.subr.bf16.mxu0 %v2715
    %3252 = vmatpush1.bf16.msra.mxu0 %v2714
    %3253 = vmatprep.subr.bf16.mxu0 %v2723
    %3254 = vmatpush1.bf16.msra.mxu0 %v2722
    %3255 = vmatprep.subr.bf16.mxu0 %v2731
    %3256 = vmatpush1.bf16.msra.mxu0 %v2730
    %3257 = vmatprep.subr.bf16.mxu0 %v2739
    %3258 = vmatpush1.bf16.msra.mxu0 %v2738
    %3259 = vmatprep.subr.bf16.mxu0 %v2747
    %3260 = vmatpush1.bf16.msra.mxu0 %v2746
    %3261 = vmatprep.subr.bf16.mxu0 %v2755
    %3262 = vmatpush1.bf16.msra.mxu0 %v2754
    %3263 = vmatprep.subr.bf16.mxu0 %v2763
    %3264 = vmatpush1.bf16.msra.mxu0 %v2762
    %3265 = vmatprep.subr.bf16.mxu0 %v2771
    %3266 = vmatpush1.bf16.msra.mxu0 %v2770
    %3267 = vmatprep.mubr.bf16.mxu0 %v1451
    %3268 = vmatmul.mubr.bf16.gmra.mrb[0].mxu0 %v1450
    %v3269 = vpop.f32.mrb[0].mxu0
    %v3270 = vadd.f32 %v3229, %v3269
    %v3271 = vpop.f32.mrb[0].mxu0
    %v3272 = vadd.f32 %v3231, %v3271
    %v3273 = vpop.f32.mrb[0].mxu0
    %v3274 = vpop.f32.mrb[0].mxu0
    %3275 = vdwg.mxu0
    %3276 = vmatprep.subr.bf16.mxu0 %v2525
    %3277 = vmatpush1.bf16.msra.mxu0 %v2524
    %3278 = vmatprep.subr.bf16.mxu0 %v2533
    %3279 = vmatpush1.bf16.msra.mxu0 %v2532
    %3280 = vmatprep.subr.bf16.mxu0 %v2541
    %3281 = vmatpush1.bf16.msra.mxu0 %v2540
    %3282 = vmatprep.subr.bf16.mxu0 %v2549
    %3283 = vmatpush1.bf16.msra.mxu0 %v2548
    %3284 = vmatprep.subr.bf16.mxu0 %v2557
    %3285 = vmatpush1.bf16.msra.mxu0 %v2556
    %3286 = vmatprep.subr.bf16.mxu0 %v2565
    %3287 = vmatpush1.bf16.msra.mxu0 %v2564
    %3288 = vmatprep.subr.bf16.mxu0 %v2573
    %3289 = vmatpush1.bf16.msra.mxu0 %v2572
    %3290 = vmatprep.subr.bf16.mxu0 %v2581
    %3291 = vmatpush1.bf16.msra.mxu0 %v2580
    %3292 = vmatprep.subr.bf16.mxu0 %v2589
    %3293 = vmatpush1.bf16.msra.mxu0 %v2588
    %3294 = vmatprep.subr.bf16.mxu0 %v2597
    %3295 = vmatpush1.bf16.msra.mxu0 %v2596
    %3296 = vmatprep.subr.bf16.mxu0 %v2605
    %3297 = vmatpush1.bf16.msra.mxu0 %v2604
    %3298 = vmatprep.subr.bf16.mxu0 %v2613
    %3299 = vmatpush1.bf16.msra.mxu0 %v2612
    %3300 = vmatprep.subr.bf16.mxu0 %v2621
    %3301 = vmatpush1.bf16.msra.mxu0 %v2620
    %3302 = vmatprep.subr.bf16.mxu0 %v2629
    %3303 = vmatpush1.bf16.msra.mxu0 %v2628
    %3304 = vmatprep.subr.bf16.mxu0 %v2637
    %3305 = vmatpush1.bf16.msra.mxu0 %v2636
    %3306 = vmatprep.subr.bf16.mxu0 %v2645
    %3307 = vmatpush1.bf16.msra.mxu0 %v2644
    %3308 = vmatprep.mubr.bf16.mxu0 %v1449
    %3309 = vmatmul.mubr.bf16.gmra.mrb[0].mxu0 %v1448
    %v3310 = vpop.f32.mrb[0].mxu0
    %v3311 = vadd.f32 %v1737, %v3310
    %v3312 = vpop.f32.mrb[0].mxu0
    %v3313 = vadd.f32 %v1741, %v3312
    %v3314 = vpop.f32.mrb[0].mxu0
    %v3315 = vpop.f32.mrb[0].mxu0
    %3316 = vdwg.mxu0
    %3317 = vmatprep.subr.bf16.mxu0 %v2653
    %3318 = vmatpush1.bf16.msra.mxu0 %v2652
    %3319 = vmatprep.subr.bf16.mxu0 %v2661
    %3320 = vmatpush1.bf16.msra.mxu0 %v2660
    %3321 = vmatprep.subr.bf16.mxu0 %v2669
    %3322 = vmatpush1.bf16.msra.mxu0 %v2668
    %3323 = vmatprep.subr.bf16.mxu0 %v2677
    %3324 = vmatpush1.bf16.msra.mxu0 %v2676
    %3325 = vmatprep.subr.bf16.mxu0 %v2685
    %3326 = vmatpush1.bf16.msra.mxu0 %v2684
    %3327 = vmatprep.subr.bf16.mxu0 %v2693
    %3328 = vmatpush1.bf16.msra.mxu0 %v2692
    %3329 = vmatprep.subr.bf16.mxu0 %v2701
    %3330 = vmatpush1.bf16.msra.mxu0 %v2700
    %3331 = vmatprep.subr.bf16.mxu0 %v2709
    %3332 = vmatpush1.bf16.msra.mxu0 %v2708
    %3333 = vmatprep.subr.bf16.mxu0 %v2717
    %3334 = vmatpush1.bf16.msra.mxu0 %v2716
    %3335 = vmatprep.subr.bf16.mxu0 %v2725
    %3336 = vmatpush1.bf16.msra.mxu0 %v2724
    %3337 = vmatprep.subr.bf16.mxu0 %v2733
    %3338 = vmatpush1.bf16.msra.mxu0 %v2732
    %3339 = vmatprep.subr.bf16.mxu0 %v2741
    %3340 = vmatpush1.bf16.msra.mxu0 %v2740
    %3341 = vmatprep.subr.bf16.mxu0 %v2749
    %3342 = vmatpush1.bf16.msra.mxu0 %v2748
    %3343 = vmatprep.subr.bf16.mxu0 %v2757
    %3344 = vmatpush1.bf16.msra.mxu0 %v2756
    %3345 = vmatprep.subr.bf16.mxu0 %v2765
    %3346 = vmatpush1.bf16.msra.mxu0 %v2764
    %3347 = vmatprep.subr.bf16.mxu0 %v2773
    %3348 = vmatpush1.bf16.msra.mxu0 %v2772
    %3349 = vmatprep.mubr.bf16.mxu0 %v1451
    %3350 = vmatmul.mubr.bf16.gmra.mrb[0].mxu0 %v1450
    %v3351 = vpop.f32.mrb[0].mxu0
    %v3352 = vadd.f32 %v3311, %v3351
    %v3353 = vpop.f32.mrb[0].mxu0
    %v3354 = vadd.f32 %v3313, %v3353
    %v3355 = vpop.f32.mrb[0].mxu0
    %v3356 = vpop.f32.mrb[0].mxu0
    %3357 = vdwg.mxu0
    %v3358 = vrot.slane %v3106, 4
    %v3359 = vadd.f32 %v3106, %v3358
    %v3360 = vrot.slane %v3359, 2
    %v3361 = vadd.f32 %v3359, %v3360
    %v3362 = vrot.slane %v3361, 1
    %v3363 = vadd.f32 %v3361, %v3362
    %v3364 = vrot.slane %v3108, 4
    %v3365 = vadd.f32 %v3108, %v3364
    %v3366 = vrot.slane %v3365, 2
    %v3367 = vadd.f32 %v3365, %v3366
    %v3368 = vrot.slane %v3367, 1
    %v3369 = vadd.f32 %v3367, %v3368
    %v3370 = vrot.slane %v3188, 4
    %v3371 = vadd.f32 %v3188, %v3370
    %v3372 = vrot.slane %v3371, 2
    %v3373 = vadd.f32 %v3371, %v3372
    %v3374 = vrot.slane %v3373, 1
    %v3375 = vadd.f32 %v3373, %v3374
    %v3376 = vrot.slane %v3190, 4
    %v3377 = vadd.f32 %v3190, %v3376
    %v3378 = vrot.slane %v3377, 2
    %v3379 = vadd.f32 %v3377, %v3378
    %v3380 = vrot.slane %v3379, 1
    %v3381 = vadd.f32 %v3379, %v3380
    %v3382 = vrot.slane %v3270, 4
    %v3383 = vadd.f32 %v3270, %v3382
    %v3384 = vrot.slane %v3383, 2
    %v3385 = vadd.f32 %v3383, %v3384
    %v3386 = vrot.slane %v3385, 1
    %v3387 = vadd.f32 %v3385, %v3386
    %v3388 = vrot.slane %v3272, 4
    %v3389 = vadd.f32 %v3272, %v3388
    %v3390 = vrot.slane %v3389, 2
    %v3391 = vadd.f32 %v3389, %v3390
    %v3392 = vrot.slane %v3391, 1
    %v3393 = vadd.f32 %v3391, %v3392
    %v3394 = vrot.slane %v3352, 4
    %v3395 = vadd.f32 %v3352, %v3394
    %v3396 = vrot.slane %v3395, 2
    %v3397 = vadd.f32 %v3395, %v3396
    %v3398 = vrot.slane %v3397, 1
    %v3399 = vadd.f32 %v3397, %v3398
    %v3400 = vrot.slane %v3354, 4
    %v3401 = vadd.f32 %v3354, %v3400
    %v3402 = vrot.slane %v3401, 2
    %v3403 = vadd.f32 %v3401, %v3402
    %v3404 = vrot.slane %v3403, 1
    %v3405 = vadd.f32 %v3403, %v3404
    %v3406 = vmul.f32 %v3363, %v577
    %v3407 = vmul.f32 %v3369, %v577
    %v3408 = vmul.f32 %v3375, %v577
    %v3409 = vmul.f32 %v3381, %v577
    %v3410 = vmul.f32 %v3387, %v577
    %v3411 = vmul.f32 %v3393, %v577
    %v3412 = vmul.f32 %v3399, %v577
    %v3413 = vmul.f32 %v3405, %v577
    %v3414 = vsub.f32 %v3106, %v3406
    %v3415 = vsub.f32 %v3108, %v3407
    %v3416 = vsub.f32 %v3188, %v3408
    %v3417 = vsub.f32 %v3190, %v3409
    %v3418 = vsub.f32 %v3270, %v3410
    %v3419 = vsub.f32 %v3272, %v3411
    %v3420 = vsub.f32 %v3352, %v3412
    %v3421 = vsub.f32 %v3354, %v3413
    %v3422 = vmul.f32 %v3414, %v3414
    %v3423 = vmul.f32 %v3415, %v3415
    %v3424 = vmul.f32 %v3416, %v3416
    %v3425 = vmul.f32 %v3417, %v3417
    %v3426 = vmul.f32 %v3418, %v3418
    %v3427 = vmul.f32 %v3419, %v3419
    %v3428 = vmul.f32 %v3420, %v3420
    %v3429 = vmul.f32 %v3421, %v3421
    %v3430 = vrot.slane %v3422, 4
    %v3431 = vadd.f32 %v3422, %v3430
    %v3432 = vrot.slane %v3431, 2
    %v3433 = vadd.f32 %v3431, %v3432
    %v3434 = vrot.slane %v3433, 1
    %v3435 = vadd.f32 %v3433, %v3434
    %v3436 = vrot.slane %v3423, 4
    %v3437 = vadd.f32 %v3423, %v3436
    %v3438 = vrot.slane %v3437, 2
    %v3439 = vadd.f32 %v3437, %v3438
    %v3440 = vrot.slane %v3439, 1
    %v3441 = vadd.f32 %v3439, %v3440
    %v3442 = vrot.slane %v3424, 4
    %v3443 = vadd.f32 %v3424, %v3442
    %v3444 = vrot.slane %v3443, 2
    %v3445 = vadd.f32 %v3443, %v3444
    %v3446 = vrot.slane %v3445, 1
    %v3447 = vadd.f32 %v3445, %v3446
    %v3448 = vrot.slane %v3425, 4
    %v3449 = vadd.f32 %v3425, %v3448
    %v3450 = vrot.slane %v3449, 2
    %v3451 = vadd.f32 %v3449, %v3450
    %v3452 = vrot.slane %v3451, 1
    %v3453 = vadd.f32 %v3451, %v3452
    %v3454 = vrot.slane %v3426, 4
    %v3455 = vadd.f32 %v3426, %v3454
    %v3456 = vrot.slane %v3455, 2
    %v3457 = vadd.f32 %v3455, %v3456
    %v3458 = vrot.slane %v3457, 1
    %v3459 = vadd.f32 %v3457, %v3458
    %v3460 = vrot.slane %v3427, 4
    %v3461 = vadd.f32 %v3427, %v3460
    %v3462 = vrot.slane %v3461, 2
    %v3463 = vadd.f32 %v3461, %v3462
    %v3464 = vrot.slane %v3463, 1
    %v3465 = vadd.f32 %v3463, %v3464
    %v3466 = vrot.slane %v3428, 4
    %v3467 = vadd.f32 %v3428, %v3466
    %v3468 = vrot.slane %v3467, 2
    %v3469 = vadd.f32 %v3467, %v3468
    %v3470 = vrot.slane %v3469, 1
    %v3471 = vadd.f32 %v3469, %v3470
    %v3472 = vrot.slane %v3429, 4
    %v3473 = vadd.f32 %v3429, %v3472
    %v3474 = vrot.slane %v3473, 2
    %v3475 = vadd.f32 %v3473, %v3474
    %v3476 = vrot.slane %v3475, 1
    %v3477 = vadd.f32 %v3475, %v3476
    %v3478 = vmul.f32 %v3435, %v577
    %v3479 = vmul.f32 %v3441, %v577
    %v3480 = vmul.f32 %v3447, %v577
    %v3481 = vmul.f32 %v3453, %v577
    %v3482 = vmul.f32 %v3459, %v577
    %v3483 = vmul.f32 %v3465, %v577
    %v3484 = vmul.f32 %v3471, %v577
    %v3485 = vmul.f32 %v3477, %v577
    %v3486 = vadd.f32 %v3478, 1e-05
    %v3487 = vadd.f32 %v3479, 1e-05
    %v3488 = vadd.f32 %v3480, 1e-05
    %v3489 = vadd.f32 %v3481, 1e-05
    %v3490 = vadd.f32 %v3482, 1e-05
    %v3491 = vadd.f32 %v3483, 1e-05
    %v3492 = vadd.f32 %v3484, 1e-05
    %v3493 = vadd.f32 %v3485, 1e-05
    %v3494 = vrsqrt.pop %v3486
    %v3495 = vrsqrt.pop %v3487
    %v3496 = vrsqrt.pop %v3488
    %v3497 = vrsqrt.pop %v3489
    %v3498 = vrsqrt.pop %v3490
    %v3499 = vrsqrt.pop %v3491
    %v3500 = vrsqrt.pop %v3492
    %v3501 = vrsqrt.pop %v3493
    %v3502 = vmul.f32 %v3414, %v3494
    %v3503 = vmul.f32 %v3415, %v3495
    %v3504 = vmul.f32 %v3416, %v3496
    %v3505 = vmul.f32 %v3417, %v3497
    %v3506 = vmul.f32 %v3418, %v3498
    %v3507 = vmul.f32 %v3419, %v3499
    %v3508 = vmul.f32 %v3420, %v3500
    %v3509 = vmul.f32 %v3421, %v3501
    %v3510 = vld [vmem:[#allocation26] sm:$0xff]
    %v3512 = vlaneseq
    %v3513 = vshrl.u32 %v3512, 7
    %v3514 = vsub.s32 0, %v3513
    %v3515 = vrot.slane %v3510, %v3514
    %v3516 = vlaneseq
    %v3517 = vshrl.u32 %v3516, 7
    %v3518 = vsub.s32 1, %v3517
    %v3519 = vrot.slane %v3510, %v3518
    %v3520 = vlaneseq
    %v3521 = vshrl.u32 %v3520, 7
    %v3522 = vsub.s32 2, %v3521
    %v3523 = vrot.slane %v3510, %v3522
    %v3524 = vlaneseq
    %v3525 = vshrl.u32 %v3524, 7
    %v3526 = vsub.s32 3, %v3525
    %v3527 = vrot.slane %v3510, %v3526
    %v3528 = vlaneseq
    %v3529 = vshrl.u32 %v3528, 7
    %v3530 = vsub.s32 4, %v3529
    %v3531 = vrot.slane %v3510, %v3530
    %v3532 = vlaneseq
    %v3533 = vshrl.u32 %v3532, 7
    %v3534 = vsub.s32 5, %v3533
    %v3535 = vrot.slane %v3510, %v3534
    %v3536 = vlaneseq
    %v3537 = vshrl.u32 %v3536, 7
    %v3538 = vsub.s32 6, %v3537
    %v3539 = vrot.slane %v3510, %v3538
    %v3540 = vlaneseq
    %v3541 = vshrl.u32 %v3540, 7
    %v3542 = vsub.s32 7, %v3541
    %v3543 = vrot.slane %v3510, %v3542
    %v3552 = vmul.f32 %v3502, %v3515
    %v3553 = vmul.f32 %v3503, %v3519
    %v3554 = vmul.f32 %v3504, %v3523
    %v3555 = vmul.f32 %v3505, %v3527
    %v3556 = vmul.f32 %v3506, %v3531
    %v3557 = vmul.f32 %v3507, %v3535
    %v3558 = vmul.f32 %v3508, %v3539
    %v3559 = vmul.f32 %v3509, %v3543
    %v3560 = vld [vmem:[#allocation28] sm:$0xff]
    %v3562 = vlaneseq
    %v3563 = vshrl.u32 %v3562, 7
    %v3564 = vsub.s32 0, %v3563
    %v3565 = vrot.slane %v3560, %v3564
    %v3566 = vlaneseq
    %v3567 = vshrl.u32 %v3566, 7
    %v3568 = vsub.s32 1, %v3567
    %v3569 = vrot.slane %v3560, %v3568
    %v3570 = vlaneseq
    %v3571 = vshrl.u32 %v3570, 7
    %v3572 = vsub.s32 2, %v3571
    %v3573 = vrot.slane %v3560, %v3572
    %v3574 = vlaneseq
    %v3575 = vshrl.u32 %v3574, 7
    %v3576 = vsub.s32 3, %v3575
    %v3577 = vrot.slane %v3560, %v3576
    %v3578 = vlaneseq
    %v3579 = vshrl.u32 %v3578, 7
    %v3580 = vsub.s32 4, %v3579
    %v3581 = vrot.slane %v3560, %v3580
    %v3582 = vlaneseq
    %v3583 = vshrl.u32 %v3582, 7
    %v3584 = vsub.s32 5, %v3583
    %v3585 = vrot.slane %v3560, %v3584
    %v3586 = vlaneseq
    %v3587 = vshrl.u32 %v3586, 7
    %v3588 = vsub.s32 6, %v3587
    %v3589 = vrot.slane %v3560, %v3588
    %v3590 = vlaneseq
    %v3591 = vshrl.u32 %v3590, 7
    %v3592 = vsub.s32 7, %v3591
    %v3593 = vrot.slane %v3560, %v3592
    %v3602 = vadd.f32 %v3552, %v3565
    %v3603 = vadd.f32 %v3553, %v3569
    %v3604 = vadd.f32 %v3554, %v3573
    %v3605 = vadd.f32 %v3555, %v3577
    %v3606 = vadd.f32 %v3556, %v3581
    %v3607 = vadd.f32 %v3557, %v3585
    %v3608 = vadd.f32 %v3558, %v3589
    %v3609 = vadd.f32 %v3559, %v3593
    %v3610 = vtanh.pop %v3602
    %v3611 = vtanh.pop %v3603
    %v3612 = vtanh.pop %v3604
    %v3613 = vtanh.pop %v3605
    %v3614 = vtanh.pop %v3606
    %v3615 = vtanh.pop %v3607
    %v3616 = vtanh.pop %v3608
    %v3617 = vtanh.pop %v3609
    %v3618 = vpack.c.bf16 %v3610, %v3610
    %v3619 = vpack.c.bf16 %v3611, %v3611
    %v3620 = vpack.c.bf16 %v3612, %v3612
    %v3621 = vpack.c.bf16 %v3613, %v3613
    %v3622 = vpack.c.bf16 %v3614, %v3614
    %v3623 = vpack.c.bf16 %v3615, %v3615
    %v3624 = vpack.c.bf16 %v3616, %v3616
    %v3625 = vpack.c.bf16 %v3617, %v3617
    %v3626 = vld [vmem:[#allocation29] sm:$0xff]
    %v3627 = vld [vmem:[#allocation29 + $0x8] sm:$0xff]
    %v3628 = vld [vmem:[#allocation29 + $0x10] sm:$0xff]
    %v3629 = vld [vmem:[#allocation29 + $0x18] sm:$0xff]
    %v3630 = vld [vmem:[#allocation29 + $0x20] sm:$0xff]
    %v3631 = vld [vmem:[#allocation29 + $0x28] sm:$0xff]
    %v3632 = vld [vmem:[#allocation29 + $0x30] sm:$0xff]
    %v3633 = vld [vmem:[#allocation29 + $0x38] sm:$0xff]
    %v3634 = vld [vmem:[#allocation29 + $0x40] sm:$0xff]
    %v3635 = vld [vmem:[#allocation29 + $0x48] sm:$0xff]
    %v3636 = vld [vmem:[#allocation29 + $0x50] sm:$0xff]
    %v3637 = vld [vmem:[#allocation29 + $0x58] sm:$0xff]
    %v3638 = vld [vmem:[#allocation29 + $0x60] sm:$0xff]
    %v3639 = vld [vmem:[#allocation29 + $0x68] sm:$0xff]
    %v3640 = vld [vmem:[#allocation29 + $0x70] sm:$0xff]
    %v3641 = vld [vmem:[#allocation29 + $0x78] sm:$0xff]
    %v3642 = vld [vmem:[#allocation29 + $0x80] sm:$0xff]
    %v3643 = vld [vmem:[#allocation29 + $0x88] sm:$0xff]
    %v3644 = vld [vmem:[#allocation29 + $0x90] sm:$0xff]
    %v3645 = vld [vmem:[#allocation29 + $0x98] sm:$0xff]
    %v3646 = vld [vmem:[#allocation29 + $0xa0] sm:$0xff]
    %v3647 = vld [vmem:[#allocation29 + $0xa8] sm:$0xff]
    %v3648 = vld [vmem:[#allocation29 + $0xb0] sm:$0xff]
    %v3649 = vld [vmem:[#allocation29 + $0xb8] sm:$0xff]
    %v3650 = vld [vmem:[#allocation29 + $0xc0] sm:$0xff]
    %v3651 = vld [vmem:[#allocation29 + $0xc8] sm:$0xff]
    %v3652 = vld [vmem:[#allocation29 + $0xd0] sm:$0xff]
    %v3653 = vld [vmem:[#allocation29 + $0xd8] sm:$0xff]
    %v3654 = vld [vmem:[#allocation29 + $0xe0] sm:$0xff]
    %v3655 = vld [vmem:[#allocation29 + $0xe8] sm:$0xff]
    %v3656 = vld [vmem:[#allocation29 + $0xf0] sm:$0xff]
    %v3657 = vld [vmem:[#allocation29 + $0xf8] sm:$0xff]
    %v3658 = vld [vmem:[#allocation29 + $0x100] sm:$0xff]
    %v3659 = vld [vmem:[#allocation29 + $0x108] sm:$0xff]
    %v3660 = vld [vmem:[#allocation29 + $0x110] sm:$0xff]
    %v3661 = vld [vmem:[#allocation29 + $0x118] sm:$0xff]
    %v3662 = vld [vmem:[#allocation29 + $0x120] sm:$0xff]
    %v3663 = vld [vmem:[#allocation29 + $0x128] sm:$0xff]
    %v3664 = vld [vmem:[#allocation29 + $0x130] sm:$0xff]
    %v3665 = vld [vmem:[#allocation29 + $0x138] sm:$0xff]
    %v3666 = vld [vmem:[#allocation29 + $0x140] sm:$0xff]
    %v3667 = vld [vmem:[#allocation29 + $0x148] sm:$0xff]
    %v3668 = vld [vmem:[#allocation29 + $0x150] sm:$0xff]
    %v3669 = vld [vmem:[#allocation29 + $0x158] sm:$0xff]
    %v3670 = vld [vmem:[#allocation29 + $0x160] sm:$0xff]
    %v3671 = vld [vmem:[#allocation29 + $0x168] sm:$0xff]
    %v3672 = vld [vmem:[#allocation29 + $0x170] sm:$0xff]
    %v3673 = vld [vmem:[#allocation29 + $0x178] sm:$0xff]
    %v3674 = vld [vmem:[#allocation29 + $0x180] sm:$0xff]
    %v3675 = vld [vmem:[#allocation29 + $0x188] sm:$0xff]
    %v3676 = vld [vmem:[#allocation29 + $0x190] sm:$0xff]
    %v3677 = vld [vmem:[#allocation29 + $0x198] sm:$0xff]
    %v3678 = vld [vmem:[#allocation29 + $0x1a0] sm:$0xff]
    %v3679 = vld [vmem:[#allocation29 + $0x1a8] sm:$0xff]
    %v3680 = vld [vmem:[#allocation29 + $0x1b0] sm:$0xff]
    %v3681 = vld [vmem:[#allocation29 + $0x1b8] sm:$0xff]
    %v3682 = vld [vmem:[#allocation29 + $0x1c0] sm:$0xff]
    %v3683 = vld [vmem:[#allocation29 + $0x1c8] sm:$0xff]
    %v3684 = vld [vmem:[#allocation29 + $0x1d0] sm:$0xff]
    %v3685 = vld [vmem:[#allocation29 + $0x1d8] sm:$0xff]
    %v3686 = vld [vmem:[#allocation29 + $0x1e0] sm:$0xff]
    %v3687 = vld [vmem:[#allocation29 + $0x1e8] sm:$0xff]
    %v3688 = vld [vmem:[#allocation29 + $0x1f0] sm:$0xff]
    %v3689 = vld [vmem:[#allocation29 + $0x1f8] sm:$0xff]
    %v3690 = vld [vmem:[#allocation29 + $0x200] sm:$0xff]
    %v3691 = vld [vmem:[#allocation29 + $0x208] sm:$0xff]
    %v3692 = vld [vmem:[#allocation29 + $0x210] sm:$0xff]
    %v3693 = vld [vmem:[#allocation29 + $0x218] sm:$0xff]
    %v3694 = vld [vmem:[#allocation29 + $0x220] sm:$0xff]
    %v3695 = vld [vmem:[#allocation29 + $0x228] sm:$0xff]
    %v3696 = vld [vmem:[#allocation29 + $0x230] sm:$0xff]
    %v3697 = vld [vmem:[#allocation29 + $0x238] sm:$0xff]
    %v3698 = vld [vmem:[#allocation29 + $0x240] sm:$0xff]
    %v3699 = vld [vmem:[#allocation29 + $0x248] sm:$0xff]
    %v3700 = vld [vmem:[#allocation29 + $0x250] sm:$0xff]
    %v3701 = vld [vmem:[#allocation29 + $0x258] sm:$0xff]
    %v3702 = vld [vmem:[#allocation29 + $0x260] sm:$0xff]
    %v3703 = vld [vmem:[#allocation29 + $0x268] sm:$0xff]
    %v3704 = vld [vmem:[#allocation29 + $0x270] sm:$0xff]
    %v3705 = vld [vmem:[#allocation29 + $0x278] sm:$0xff]
    %v3706 = vld [vmem:[#allocation29 + $0x280] sm:$0xff]
    %v3707 = vld [vmem:[#allocation29 + $0x288] sm:$0xff]
    %v3708 = vld [vmem:[#allocation29 + $0x290] sm:$0xff]
    %v3709 = vld [vmem:[#allocation29 + $0x298] sm:$0xff]
    %v3710 = vld [vmem:[#allocation29 + $0x2a0] sm:$0xff]
    %v3711 = vld [vmem:[#allocation29 + $0x2a8] sm:$0xff]
    %v3712 = vld [vmem:[#allocation29 + $0x2b0] sm:$0xff]
    %v3713 = vld [vmem:[#allocation29 + $0x2b8] sm:$0xff]
    %v3714 = vld [vmem:[#allocation29 + $0x2c0] sm:$0xff]
    %v3715 = vld [vmem:[#allocation29 + $0x2c8] sm:$0xff]
    %v3716 = vld [vmem:[#allocation29 + $0x2d0] sm:$0xff]
    %v3717 = vld [vmem:[#allocation29 + $0x2d8] sm:$0xff]
    %v3718 = vld [vmem:[#allocation29 + $0x2e0] sm:$0xff]
    %v3719 = vld [vmem:[#allocation29 + $0x2e8] sm:$0xff]
    %v3720 = vld [vmem:[#allocation29 + $0x2f0] sm:$0xff]
    %v3721 = vld [vmem:[#allocation29 + $0x2f8] sm:$0xff]
    %v3722 = vld [vmem:[#allocation29 + $0x300] sm:$0xff]
    %v3723 = vld [vmem:[#allocation29 + $0x308] sm:$0xff]
    %v3724 = vld [vmem:[#allocation29 + $0x310] sm:$0xff]
    %v3725 = vld [vmem:[#allocation29 + $0x318] sm:$0xff]
    %v3726 = vld [vmem:[#allocation29 + $0x320] sm:$0xff]
    %v3727 = vld [vmem:[#allocation29 + $0x328] sm:$0xff]
    %v3728 = vld [vmem:[#allocation29 + $0x330] sm:$0xff]
    %v3729 = vld [vmem:[#allocation29 + $0x338] sm:$0xff]
    %v3730 = vld [vmem:[#allocation29 + $0x340] sm:$0xff]
    %v3731 = vld [vmem:[#allocation29 + $0x348] sm:$0xff]
    %v3732 = vld [vmem:[#allocation29 + $0x350] sm:$0xff]
    %v3733 = vld [vmem:[#allocation29 + $0x358] sm:$0xff]
    %v3734 = vld [vmem:[#allocation29 + $0x360] sm:$0xff]
    %v3735 = vld [vmem:[#allocation29 + $0x368] sm:$0xff]
    %v3736 = vld [vmem:[#allocation29 + $0x370] sm:$0xff]
    %v3737 = vld [vmem:[#allocation29 + $0x378] sm:$0xff]
    %v3738 = vld [vmem:[#allocation29 + $0x380] sm:$0xff]
    %v3739 = vld [vmem:[#allocation29 + $0x388] sm:$0xff]
    %v3740 = vld [vmem:[#allocation29 + $0x390] sm:$0xff]
    %v3741 = vld [vmem:[#allocation29 + $0x398] sm:$0xff]
    %v3742 = vld [vmem:[#allocation29 + $0x3a0] sm:$0xff]
    %v3743 = vld [vmem:[#allocation29 + $0x3a8] sm:$0xff]
    %v3744 = vld [vmem:[#allocation29 + $0x3b0] sm:$0xff]
    %v3745 = vld [vmem:[#allocation29 + $0x3b8] sm:$0xff]
    %v3746 = vld [vmem:[#allocation29 + $0x3c0] sm:$0xff]
    %v3747 = vld [vmem:[#allocation29 + $0x3c8] sm:$0xff]
    %v3748 = vld [vmem:[#allocation29 + $0x3d0] sm:$0xff]
    %v3749 = vld [vmem:[#allocation29 + $0x3d8] sm:$0xff]
    %v3750 = vld [vmem:[#allocation29 + $0x3e0] sm:$0xff]
    %v3751 = vld [vmem:[#allocation29 + $0x3e8] sm:$0xff]
    %v3752 = vld [vmem:[#allocation29 + $0x3f0] sm:$0xff]
    %v3753 = vld [vmem:[#allocation29 + $0x3f8] sm:$0xff]
    %v3754 = vld [vmem:[#allocation29 + $0x400] sm:$0xff]
    %v3755 = vld [vmem:[#allocation29 + $0x408] sm:$0xff]
    %v3756 = vld [vmem:[#allocation29 + $0x410] sm:$0xff]
    %v3757 = vld [vmem:[#allocation29 + $0x418] sm:$0xff]
    %v3758 = vld [vmem:[#allocation29 + $0x420] sm:$0xff]
    %v3759 = vld [vmem:[#allocation29 + $0x428] sm:$0xff]
    %v3760 = vld [vmem:[#allocation29 + $0x430] sm:$0xff]
    %v3761 = vld [vmem:[#allocation29 + $0x438] sm:$0xff]
    %v3762 = vld [vmem:[#allocation29 + $0x440] sm:$0xff]
    %v3763 = vld [vmem:[#allocation29 + $0x448] sm:$0xff]
    %v3764 = vld [vmem:[#allocation29 + $0x450] sm:$0xff]
    %v3765 = vld [vmem:[#allocation29 + $0x458] sm:$0xff]
    %v3766 = vld [vmem:[#allocation29 + $0x460] sm:$0xff]
    %v3767 = vld [vmem:[#allocation29 + $0x468] sm:$0xff]
    %v3768 = vld [vmem:[#allocation29 + $0x470] sm:$0xff]
    %v3769 = vld [vmem:[#allocation29 + $0x478] sm:$0xff]
    %v3770 = vld [vmem:[#allocation29 + $0x480] sm:$0xff]
    %v3771 = vld [vmem:[#allocation29 + $0x488] sm:$0xff]
    %v3772 = vld [vmem:[#allocation29 + $0x490] sm:$0xff]
    %v3773 = vld [vmem:[#allocation29 + $0x498] sm:$0xff]
    %v3774 = vld [vmem:[#allocation29 + $0x4a0] sm:$0xff]
    %v3775 = vld [vmem:[#allocation29 + $0x4a8] sm:$0xff]
    %v3776 = vld [vmem:[#allocation29 + $0x4b0] sm:$0xff]
    %v3777 = vld [vmem:[#allocation29 + $0x4b8] sm:$0xff]
    %v3778 = vld [vmem:[#allocation29 + $0x4c0] sm:$0xff]
    %v3779 = vld [vmem:[#allocation29 + $0x4c8] sm:$0xff]
    %v3780 = vld [vmem:[#allocation29 + $0x4d0] sm:$0xff]
    %v3781 = vld [vmem:[#allocation29 + $0x4d8] sm:$0xff]
    %v3782 = vld [vmem:[#allocation29 + $0x4e0] sm:$0xff]
    %v3783 = vld [vmem:[#allocation29 + $0x4e8] sm:$0xff]
    %v3784 = vld [vmem:[#allocation29 + $0x4f0] sm:$0xff]
    %v3785 = vld [vmem:[#allocation29 + $0x4f8] sm:$0xff]
    %v3786 = vld [vmem:[#allocation29 + $0x500] sm:$0xff]
    %v3787 = vld [vmem:[#allocation29 + $0x508] sm:$0xff]
    %v3788 = vld [vmem:[#allocation29 + $0x510] sm:$0xff]
    %v3789 = vld [vmem:[#allocation29 + $0x518] sm:$0xff]
    %v3790 = vld [vmem:[#allocation29 + $0x520] sm:$0xff]
    %v3791 = vld [vmem:[#allocation29 + $0x528] sm:$0xff]
    %v3792 = vld [vmem:[#allocation29 + $0x530] sm:$0xff]
    %v3793 = vld [vmem:[#allocation29 + $0x538] sm:$0xff]
    %v3794 = vld [vmem:[#allocation29 + $0x540] sm:$0xff]
    %v3795 = vld [vmem:[#allocation29 + $0x548] sm:$0xff]
    %v3796 = vld [vmem:[#allocation29 + $0x550] sm:$0xff]
    %v3797 = vld [vmem:[#allocation29 + $0x558] sm:$0xff]
    %v3798 = vld [vmem:[#allocation29 + $0x560] sm:$0xff]
    %v3799 = vld [vmem:[#allocation29 + $0x568] sm:$0xff]
    %v3800 = vld [vmem:[#allocation29 + $0x570] sm:$0xff]
    %v3801 = vld [vmem:[#allocation29 + $0x578] sm:$0xff]
    %v3802 = vld [vmem:[#allocation29 + $0x580] sm:$0xff]
    %v3803 = vld [vmem:[#allocation29 + $0x588] sm:$0xff]
    %v3804 = vld [vmem:[#allocation29 + $0x590] sm:$0xff]
    %v3805 = vld [vmem:[#allocation29 + $0x598] sm:$0xff]
    %v3806 = vld [vmem:[#allocation29 + $0x5a0] sm:$0xff]
    %v3807 = vld [vmem:[#allocation29 + $0x5a8] sm:$0xff]
    %v3808 = vld [vmem:[#allocation29 + $0x5b0] sm:$0xff]
    %v3809 = vld [vmem:[#allocation29 + $0x5b8] sm:$0xff]
    %v3810 = vld [vmem:[#allocation29 + $0x5c0] sm:$0xff]
    %v3811 = vld [vmem:[#allocation29 + $0x5c8] sm:$0xff]
    %v3812 = vld [vmem:[#allocation29 + $0x5d0] sm:$0xff]
    %v3813 = vld [vmem:[#allocation29 + $0x5d8] sm:$0xff]
    %v3814 = vld [vmem:[#allocation29 + $0x5e0] sm:$0xff]
    %v3815 = vld [vmem:[#allocation29 + $0x5e8] sm:$0xff]
    %v3816 = vld [vmem:[#allocation29 + $0x5f0] sm:$0xff]
    %v3817 = vld [vmem:[#allocation29 + $0x5f8] sm:$0xff]
    %v3818 = vld [vmem:[#allocation29 + $0x600] sm:$0xff]
    %v3819 = vld [vmem:[#allocation29 + $0x608] sm:$0xff]
    %v3820 = vld [vmem:[#allocation29 + $0x610] sm:$0xff]
    %v3821 = vld [vmem:[#allocation29 + $0x618] sm:$0xff]
    %v3822 = vld [vmem:[#allocation29 + $0x620] sm:$0xff]
    %v3823 = vld [vmem:[#allocation29 + $0x628] sm:$0xff]
    %v3824 = vld [vmem:[#allocation29 + $0x630] sm:$0xff]
    %v3825 = vld [vmem:[#allocation29 + $0x638] sm:$0xff]
    %v3826 = vld [vmem:[#allocation29 + $0x640] sm:$0xff]
    %v3827 = vld [vmem:[#allocation29 + $0x648] sm:$0xff]
    %v3828 = vld [vmem:[#allocation29 + $0x650] sm:$0xff]
    %v3829 = vld [vmem:[#allocation29 + $0x658] sm:$0xff]
    %v3830 = vld [vmem:[#allocation29 + $0x660] sm:$0xff]
    %v3831 = vld [vmem:[#allocation29 + $0x668] sm:$0xff]
    %v3832 = vld [vmem:[#allocation29 + $0x670] sm:$0xff]
    %v3833 = vld [vmem:[#allocation29 + $0x678] sm:$0xff]
    %v3834 = vld [vmem:[#allocation29 + $0x680] sm:$0xff]
    %v3835 = vld [vmem:[#allocation29 + $0x688] sm:$0xff]
    %v3836 = vld [vmem:[#allocation29 + $0x690] sm:$0xff]
    %v3837 = vld [vmem:[#allocation29 + $0x698] sm:$0xff]
    %v3838 = vld [vmem:[#allocation29 + $0x6a0] sm:$0xff]
    %v3839 = vld [vmem:[#allocation29 + $0x6a8] sm:$0xff]
    %v3840 = vld [vmem:[#allocation29 + $0x6b0] sm:$0xff]
    %v3841 = vld [vmem:[#allocation29 + $0x6b8] sm:$0xff]
    %v3842 = vld [vmem:[#allocation29 + $0x6c0] sm:$0xff]
    %v3843 = vld [vmem:[#allocation29 + $0x6c8] sm:$0xff]
    %v3844 = vld [vmem:[#allocation29 + $0x6d0] sm:$0xff]
    %v3845 = vld [vmem:[#allocation29 + $0x6d8] sm:$0xff]
    %v3846 = vld [vmem:[#allocation29 + $0x6e0] sm:$0xff]
    %v3847 = vld [vmem:[#allocation29 + $0x6e8] sm:$0xff]
    %v3848 = vld [vmem:[#allocation29 + $0x6f0] sm:$0xff]
    %v3849 = vld [vmem:[#allocation29 + $0x6f8] sm:$0xff]
    %v3850 = vld [vmem:[#allocation29 + $0x700] sm:$0xff]
    %v3851 = vld [vmem:[#allocation29 + $0x708] sm:$0xff]
    %v3852 = vld [vmem:[#allocation29 + $0x710] sm:$0xff]
    %v3853 = vld [vmem:[#allocation29 + $0x718] sm:$0xff]
    %v3854 = vld [vmem:[#allocation29 + $0x720] sm:$0xff]
    %v3855 = vld [vmem:[#allocation29 + $0x728] sm:$0xff]
    %v3856 = vld [vmem:[#allocation29 + $0x730] sm:$0xff]
    %v3857 = vld [vmem:[#allocation29 + $0x738] sm:$0xff]
    %v3858 = vld [vmem:[#allocation29 + $0x740] sm:$0xff]
    %v3859 = vld [vmem:[#allocation29 + $0x748] sm:$0xff]
    %v3860 = vld [vmem:[#allocation29 + $0x750] sm:$0xff]
    %v3861 = vld [vmem:[#allocation29 + $0x758] sm:$0xff]
    %v3862 = vld [vmem:[#allocation29 + $0x760] sm:$0xff]
    %v3863 = vld [vmem:[#allocation29 + $0x768] sm:$0xff]
    %v3864 = vld [vmem:[#allocation29 + $0x770] sm:$0xff]
    %v3865 = vld [vmem:[#allocation29 + $0x778] sm:$0xff]
    %v3866 = vld [vmem:[#allocation29 + $0x780] sm:$0xff]
    %v3867 = vld [vmem:[#allocation29 + $0x788] sm:$0xff]
    %v3868 = vld [vmem:[#allocation29 + $0x790] sm:$0xff]
    %v3869 = vld [vmem:[#allocation29 + $0x798] sm:$0xff]
    %v3870 = vld [vmem:[#allocation29 + $0x7a0] sm:$0xff]
    %v3871 = vld [vmem:[#allocation29 + $0x7a8] sm:$0xff]
    %v3872 = vld [vmem:[#allocation29 + $0x7b0] sm:$0xff]
    %v3873 = vld [vmem:[#allocation29 + $0x7b8] sm:$0xff]
    %v3874 = vld [vmem:[#allocation29 + $0x7c0] sm:$0xff]
    %v3875 = vld [vmem:[#allocation29 + $0x7c8] sm:$0xff]
    %v3876 = vld [vmem:[#allocation29 + $0x7d0] sm:$0xff]
    %v3877 = vld [vmem:[#allocation29 + $0x7d8] sm:$0xff]
    %v3878 = vld [vmem:[#allocation29 + $0x7e0] sm:$0xff]
    %v3879 = vld [vmem:[#allocation29 + $0x7e8] sm:$0xff]
    %v3880 = vld [vmem:[#allocation29 + $0x7f0] sm:$0xff]
    %v3881 = vld [vmem:[#allocation29 + $0x7f8] sm:$0xff]
    %v3882 = vld [vmem:[#allocation29 + $0x800] sm:$0xff]
    %v3883 = vld [vmem:[#allocation29 + $0x808] sm:$0xff]
    %v3884 = vld [vmem:[#allocation29 + $0x810] sm:$0xff]
    %v3885 = vld [vmem:[#allocation29 + $0x818] sm:$0xff]
    %v3886 = vld [vmem:[#allocation29 + $0x820] sm:$0xff]
    %v3887 = vld [vmem:[#allocation29 + $0x828] sm:$0xff]
    %v3888 = vld [vmem:[#allocation29 + $0x830] sm:$0xff]
    %v3889 = vld [vmem:[#allocation29 + $0x838] sm:$0xff]
    %v3890 = vld [vmem:[#allocation29 + $0x840] sm:$0xff]
    %v3891 = vld [vmem:[#allocation29 + $0x848] sm:$0xff]
    %v3892 = vld [vmem:[#allocation29 + $0x850] sm:$0xff]
    %v3893 = vld [vmem:[#allocation29 + $0x858] sm:$0xff]
    %v3894 = vld [vmem:[#allocation29 + $0x860] sm:$0xff]
    %v3895 = vld [vmem:[#allocation29 + $0x868] sm:$0xff]
    %v3896 = vld [vmem:[#allocation29 + $0x870] sm:$0xff]
    %v3897 = vld [vmem:[#allocation29 + $0x878] sm:$0xff]
    %v3898 = vld [vmem:[#allocation29 + $0x880] sm:$0xff]
    %v3899 = vld [vmem:[#allocation29 + $0x888] sm:$0xff]
    %v3900 = vld [vmem:[#allocation29 + $0x890] sm:$0xff]
    %v3901 = vld [vmem:[#allocation29 + $0x898] sm:$0xff]
    %v3902 = vld [vmem:[#allocation29 + $0x8a0] sm:$0xff]
    %v3903 = vld [vmem:[#allocation29 + $0x8a8] sm:$0xff]
    %v3904 = vld [vmem:[#allocation29 + $0x8b0] sm:$0xff]
    %v3905 = vld [vmem:[#allocation29 + $0x8b8] sm:$0xff]
    %v3906 = vld [vmem:[#allocation29 + $0x8c0] sm:$0xff]
    %v3907 = vld [vmem:[#allocation29 + $0x8c8] sm:$0xff]
    %v3908 = vld [vmem:[#allocation29 + $0x8d0] sm:$0xff]
    %v3909 = vld [vmem:[#allocation29 + $0x8d8] sm:$0xff]
    %v3910 = vld [vmem:[#allocation29 + $0x8e0] sm:$0xff]
    %v3911 = vld [vmem:[#allocation29 + $0x8e8] sm:$0xff]
    %v3912 = vld [vmem:[#allocation29 + $0x8f0] sm:$0xff]
    %v3913 = vld [vmem:[#allocation29 + $0x8f8] sm:$0xff]
    %v3914 = vld [vmem:[#allocation29 + $0x900] sm:$0xff]
    %v3915 = vld [vmem:[#allocation29 + $0x908] sm:$0xff]
    %v3916 = vld [vmem:[#allocation29 + $0x910] sm:$0xff]
    %v3917 = vld [vmem:[#allocation29 + $0x918] sm:$0xff]
    %v3918 = vld [vmem:[#allocation29 + $0x920] sm:$0xff]
    %v3919 = vld [vmem:[#allocation29 + $0x928] sm:$0xff]
    %v3920 = vld [vmem:[#allocation29 + $0x930] sm:$0xff]
    %v3921 = vld [vmem:[#allocation29 + $0x938] sm:$0xff]
    %v3922 = vld [vmem:[#allocation29 + $0x940] sm:$0xff]
    %v3923 = vld [vmem:[#allocation29 + $0x948] sm:$0xff]
    %v3924 = vld [vmem:[#allocation29 + $0x950] sm:$0xff]
    %v3925 = vld [vmem:[#allocation29 + $0x958] sm:$0xff]
    %v3926 = vld [vmem:[#allocation29 + $0x960] sm:$0xff]
    %v3927 = vld [vmem:[#allocation29 + $0x968] sm:$0xff]
    %v3928 = vld [vmem:[#allocation29 + $0x970] sm:$0xff]
    %v3929 = vld [vmem:[#allocation29 + $0x978] sm:$0xff]
    %v3930 = vld [vmem:[#allocation29 + $0x980] sm:$0xff]
    %v3931 = vld [vmem:[#allocation29 + $0x988] sm:$0xff]
    %v3932 = vld [vmem:[#allocation29 + $0x990] sm:$0xff]
    %v3933 = vld [vmem:[#allocation29 + $0x998] sm:$0xff]
    %v3934 = vld [vmem:[#allocation29 + $0x9a0] sm:$0xff]
    %v3935 = vld [vmem:[#allocation29 + $0x9a8] sm:$0xff]
    %v3936 = vld [vmem:[#allocation29 + $0x9b0] sm:$0xff]
    %v3937 = vld [vmem:[#allocation29 + $0x9b8] sm:$0xff]
    %v3938 = vld [vmem:[#allocation29 + $0x9c0] sm:$0xff]
    %v3939 = vld [vmem:[#allocation29 + $0x9c8] sm:$0xff]
    %v3940 = vld [vmem:[#allocation29 + $0x9d0] sm:$0xff]
    %v3941 = vld [vmem:[#allocation29 + $0x9d8] sm:$0xff]
    %v3942 = vld [vmem:[#allocation29 + $0x9e0] sm:$0xff]
    %v3943 = vld [vmem:[#allocation29 + $0x9e8] sm:$0xff]
    %v3944 = vld [vmem:[#allocation29 + $0x9f0] sm:$0xff]
    %v3945 = vld [vmem:[#allocation29 + $0x9f8] sm:$0xff]
    %v3946 = vld [vmem:[#allocation29 + $0xa00] sm:$0xff]
    %v3947 = vld [vmem:[#allocation29 + $0xa08] sm:$0xff]
    %v3948 = vld [vmem:[#allocation29 + $0xa10] sm:$0xff]
    %v3949 = vld [vmem:[#allocation29 + $0xa18] sm:$0xff]
    %v3950 = vld [vmem:[#allocation29 + $0xa20] sm:$0xff]
    %v3951 = vld [vmem:[#allocation29 + $0xa28] sm:$0xff]
    %v3952 = vld [vmem:[#allocation29 + $0xa30] sm:$0xff]
    %v3953 = vld [vmem:[#allocation29 + $0xa38] sm:$0xff]
    %v3954 = vld [vmem:[#allocation29 + $0xa40] sm:$0xff]
    %v3955 = vld [vmem:[#allocation29 + $0xa48] sm:$0xff]
    %v3956 = vld [vmem:[#allocation29 + $0xa50] sm:$0xff]
    %v3957 = vld [vmem:[#allocation29 + $0xa58] sm:$0xff]
    %v3958 = vld [vmem:[#allocation29 + $0xa60] sm:$0xff]
    %v3959 = vld [vmem:[#allocation29 + $0xa68] sm:$0xff]
    %v3960 = vld [vmem:[#allocation29 + $0xa70] sm:$0xff]
    %v3961 = vld [vmem:[#allocation29 + $0xa78] sm:$0xff]
    %v3962 = vld [vmem:[#allocation29 + $0xa80] sm:$0xff]
    %v3963 = vld [vmem:[#allocation29 + $0xa88] sm:$0xff]
    %v3964 = vld [vmem:[#allocation29 + $0xa90] sm:$0xff]
    %v3965 = vld [vmem:[#allocation29 + $0xa98] sm:$0xff]
    %v3966 = vld [vmem:[#allocation29 + $0xaa0] sm:$0xff]
    %v3967 = vld [vmem:[#allocation29 + $0xaa8] sm:$0xff]
    %v3968 = vld [vmem:[#allocation29 + $0xab0] sm:$0xff]
    %v3969 = vld [vmem:[#allocation29 + $0xab8] sm:$0xff]
    %v3970 = vld [vmem:[#allocation29 + $0xac0] sm:$0xff]
    %v3971 = vld [vmem:[#allocation29 + $0xac8] sm:$0xff]
    %v3972 = vld [vmem:[#allocation29 + $0xad0] sm:$0xff]
    %v3973 = vld [vmem:[#allocation29 + $0xad8] sm:$0xff]
    %v3974 = vld [vmem:[#allocation29 + $0xae0] sm:$0xff]
    %v3975 = vld [vmem:[#allocation29 + $0xae8] sm:$0xff]
    %v3976 = vld [vmem:[#allocation29 + $0xaf0] sm:$0xff]
    %v3977 = vld [vmem:[#allocation29 + $0xaf8] sm:$0xff]
    %v3978 = vld [vmem:[#allocation29 + $0xb00] sm:$0xff]
    %v3979 = vld [vmem:[#allocation29 + $0xb08] sm:$0xff]
    %v3980 = vld [vmem:[#allocation29 + $0xb10] sm:$0xff]
    %v3981 = vld [vmem:[#allocation29 + $0xb18] sm:$0xff]
    %v3982 = vld [vmem:[#allocation29 + $0xb20] sm:$0xff]
    %v3983 = vld [vmem:[#allocation29 + $0xb28] sm:$0xff]
    %v3984 = vld [vmem:[#allocation29 + $0xb30] sm:$0xff]
    %v3985 = vld [vmem:[#allocation29 + $0xb38] sm:$0xff]
    %v3986 = vld [vmem:[#allocation29 + $0xb40] sm:$0xff]
    %v3987 = vld [vmem:[#allocation29 + $0xb48] sm:$0xff]
    %v3988 = vld [vmem:[#allocation29 + $0xb50] sm:$0xff]
    %v3989 = vld [vmem:[#allocation29 + $0xb58] sm:$0xff]
    %v3990 = vld [vmem:[#allocation29 + $0xb60] sm:$0xff]
    %v3991 = vld [vmem:[#allocation29 + $0xb68] sm:$0xff]
    %v3992 = vld [vmem:[#allocation29 + $0xb70] sm:$0xff]
    %v3993 = vld [vmem:[#allocation29 + $0xb78] sm:$0xff]
    %v3994 = vld [vmem:[#allocation29 + $0xb80] sm:$0xff]
    %v3995 = vld [vmem:[#allocation29 + $0xb88] sm:$0xff]
    %v3996 = vld [vmem:[#allocation29 + $0xb90] sm:$0xff]
    %v3997 = vld [vmem:[#allocation29 + $0xb98] sm:$0xff]
    %v3998 = vld [vmem:[#allocation29 + $0xba0] sm:$0xff]
    %v3999 = vld [vmem:[#allocation29 + $0xba8] sm:$0xff]
    %v4000 = vld [vmem:[#allocation29 + $0xbb0] sm:$0xff]
    %v4001 = vld [vmem:[#allocation29 + $0xbb8] sm:$0xff]
    %v4002 = vld [vmem:[#allocation29 + $0xbc0] sm:$0xff]
    %v4003 = vld [vmem:[#allocation29 + $0xbc8] sm:$0xff]
    %v4004 = vld [vmem:[#allocation29 + $0xbd0] sm:$0xff]
    %v4005 = vld [vmem:[#allocation29 + $0xbd8] sm:$0xff]
    %v4006 = vld [vmem:[#allocation29 + $0xbe0] sm:$0xff]
    %v4007 = vld [vmem:[#allocation29 + $0xbe8] sm:$0xff]
    %v4008 = vld [vmem:[#allocation29 + $0xbf0] sm:$0xff]
    %v4009 = vld [vmem:[#allocation29 + $0xbf8] sm:$0xff]
    %v4010 = vld [vmem:[#allocation29 + $0xc00] sm:$0xff]
    %v4011 = vld [vmem:[#allocation29 + $0xc08] sm:$0xff]
    %v4012 = vld [vmem:[#allocation29 + $0xc10] sm:$0xff]
    %v4013 = vld [vmem:[#allocation29 + $0xc18] sm:$0xff]
    %v4014 = vld [vmem:[#allocation29 + $0xc20] sm:$0xff]
    %v4015 = vld [vmem:[#allocation29 + $0xc28] sm:$0xff]
    %v4016 = vld [vmem:[#allocation29 + $0xc30] sm:$0xff]
    %v4017 = vld [vmem:[#allocation29 + $0xc38] sm:$0xff]
    %v4018 = vld [vmem:[#allocation29 + $0xc40] sm:$0xff]
    %v4019 = vld [vmem:[#allocation29 + $0xc48] sm:$0xff]
    %v4020 = vld [vmem:[#allocation29 + $0xc50] sm:$0xff]
    %v4021 = vld [vmem:[#allocation29 + $0xc58] sm:$0xff]
    %v4022 = vld [vmem:[#allocation29 + $0xc60] sm:$0xff]
    %v4023 = vld [vmem:[#allocation29 + $0xc68] sm:$0xff]
    %v4024 = vld [vmem:[#allocation29 + $0xc70] sm:$0xff]
    %v4025 = vld [vmem:[#allocation29 + $0xc78] sm:$0xff]
    %v4026 = vld [vmem:[#allocation29 + $0xc80] sm:$0xff]
    %v4027 = vld [vmem:[#allocation29 + $0xc88] sm:$0xff]
    %v4028 = vld [vmem:[#allocation29 + $0xc90] sm:$0xff]
    %v4029 = vld [vmem:[#allocation29 + $0xc98] sm:$0xff]
    %v4030 = vld [vmem:[#allocation29 + $0xca0] sm:$0xff]
    %v4031 = vld [vmem:[#allocation29 + $0xca8] sm:$0xff]
    %v4032 = vld [vmem:[#allocation29 + $0xcb0] sm:$0xff]
    %v4033 = vld [vmem:[#allocation29 + $0xcb8] sm:$0xff]
    %v4034 = vld [vmem:[#allocation29 + $0xcc0] sm:$0xff]
    %v4035 = vld [vmem:[#allocation29 + $0xcc8] sm:$0xff]
    %v4036 = vld [vmem:[#allocation29 + $0xcd0] sm:$0xff]
    %v4037 = vld [vmem:[#allocation29 + $0xcd8] sm:$0xff]
    %v4038 = vld [vmem:[#allocation29 + $0xce0] sm:$0xff]
    %v4039 = vld [vmem:[#allocation29 + $0xce8] sm:$0xff]
    %v4040 = vld [vmem:[#allocation29 + $0xcf0] sm:$0xff]
    %v4041 = vld [vmem:[#allocation29 + $0xcf8] sm:$0xff]
    %v4042 = vld [vmem:[#allocation29 + $0xd00] sm:$0xff]
    %v4043 = vld [vmem:[#allocation29 + $0xd08] sm:$0xff]
    %v4044 = vld [vmem:[#allocation29 + $0xd10] sm:$0xff]
    %v4045 = vld [vmem:[#allocation29 + $0xd18] sm:$0xff]
    %v4046 = vld [vmem:[#allocation29 + $0xd20] sm:$0xff]
    %v4047 = vld [vmem:[#allocation29 + $0xd28] sm:$0xff]
    %v4048 = vld [vmem:[#allocation29 + $0xd30] sm:$0xff]
    %v4049 = vld [vmem:[#allocation29 + $0xd38] sm:$0xff]
    %v4050 = vld [vmem:[#allocation29 + $0xd40] sm:$0xff]
    %v4051 = vld [vmem:[#allocation29 + $0xd48] sm:$0xff]
    %v4052 = vld [vmem:[#allocation29 + $0xd50] sm:$0xff]
    %v4053 = vld [vmem:[#allocation29 + $0xd58] sm:$0xff]
    %v4054 = vld [vmem:[#allocation29 + $0xd60] sm:$0xff]
    %v4055 = vld [vmem:[#allocation29 + $0xd68] sm:$0xff]
    %v4056 = vld [vmem:[#allocation29 + $0xd70] sm:$0xff]
    %v4057 = vld [vmem:[#allocation29 + $0xd78] sm:$0xff]
    %v4058 = vld [vmem:[#allocation29 + $0xd80] sm:$0xff]
    %v4059 = vld [vmem:[#allocation29 + $0xd88] sm:$0xff]
    %v4060 = vld [vmem:[#allocation29 + $0xd90] sm:$0xff]
    %v4061 = vld [vmem:[#allocation29 + $0xd98] sm:$0xff]
    %v4062 = vld [vmem:[#allocation29 + $0xda0] sm:$0xff]
    %v4063 = vld [vmem:[#allocation29 + $0xda8] sm:$0xff]
    %v4064 = vld [vmem:[#allocation29 + $0xdb0] sm:$0xff]
    %v4065 = vld [vmem:[#allocation29 + $0xdb8] sm:$0xff]
    %v4066 = vld [vmem:[#allocation29 + $0xdc0] sm:$0xff]
    %v4067 = vld [vmem:[#allocation29 + $0xdc8] sm:$0xff]
    %v4068 = vld [vmem:[#allocation29 + $0xdd0] sm:$0xff]
    %v4069 = vld [vmem:[#allocation29 + $0xdd8] sm:$0xff]
    %v4070 = vld [vmem:[#allocation29 + $0xde0] sm:$0xff]
    %v4071 = vld [vmem:[#allocation29 + $0xde8] sm:$0xff]
    %v4072 = vld [vmem:[#allocation29 + $0xdf0] sm:$0xff]
    %v4073 = vld [vmem:[#allocation29 + $0xdf8] sm:$0xff]
    %v4074 = vld [vmem:[#allocation29 + $0xe00] sm:$0xff]
    %v4075 = vld [vmem:[#allocation29 + $0xe08] sm:$0xff]
    %v4076 = vld [vmem:[#allocation29 + $0xe10] sm:$0xff]
    %v4077 = vld [vmem:[#allocation29 + $0xe18] sm:$0xff]
    %v4078 = vld [vmem:[#allocation29 + $0xe20] sm:$0xff]
    %v4079 = vld [vmem:[#allocation29 + $0xe28] sm:$0xff]
    %v4080 = vld [vmem:[#allocation29 + $0xe30] sm:$0xff]
    %v4081 = vld [vmem:[#allocation29 + $0xe38] sm:$0xff]
    %v4082 = vld [vmem:[#allocation29 + $0xe40] sm:$0xff]
    %v4083 = vld [vmem:[#allocation29 + $0xe48] sm:$0xff]
    %v4084 = vld [vmem:[#allocation29 + $0xe50] sm:$0xff]
    %v4085 = vld [vmem:[#allocation29 + $0xe58] sm:$0xff]
    %v4086 = vld [vmem:[#allocation29 + $0xe60] sm:$0xff]
    %v4087 = vld [vmem:[#allocation29 + $0xe68] sm:$0xff]
    %v4088 = vld [vmem:[#allocation29 + $0xe70] sm:$0xff]
    %v4089 = vld [vmem:[#allocation29 + $0xe78] sm:$0xff]
    %v4090 = vld [vmem:[#allocation29 + $0xe80] sm:$0xff]
    %v4091 = vld [vmem:[#allocation29 + $0xe88] sm:$0xff]
    %v4092 = vld [vmem:[#allocation29 + $0xe90] sm:$0xff]
    %v4093 = vld [vmem:[#allocation29 + $0xe98] sm:$0xff]
    %v4094 = vld [vmem:[#allocation29 + $0xea0] sm:$0xff]
    %v4095 = vld [vmem:[#allocation29 + $0xea8] sm:$0xff]
    %v4096 = vld [vmem:[#allocation29 + $0xeb0] sm:$0xff]
    %v4097 = vld [vmem:[#allocation29 + $0xeb8] sm:$0xff]
    %v4098 = vld [vmem:[#allocation29 + $0xec0] sm:$0xff]
    %v4099 = vld [vmem:[#allocation29 + $0xec8] sm:$0xff]
    %v4100 = vld [vmem:[#allocation29 + $0xed0] sm:$0xff]
    %v4101 = vld [vmem:[#allocation29 + $0xed8] sm:$0xff]
    %v4102 = vld [vmem:[#allocation29 + $0xee0] sm:$0xff]
    %v4103 = vld [vmem:[#allocation29 + $0xee8] sm:$0xff]
    %v4104 = vld [vmem:[#allocation29 + $0xef0] sm:$0xff]
    %v4105 = vld [vmem:[#allocation29 + $0xef8] sm:$0xff]
    %v4106 = vld [vmem:[#allocation29 + $0xf00] sm:$0xff]
    %v4107 = vld [vmem:[#allocation29 + $0xf08] sm:$0xff]
    %v4108 = vld [vmem:[#allocation29 + $0xf10] sm:$0xff]
    %v4109 = vld [vmem:[#allocation29 + $0xf18] sm:$0xff]
    %v4110 = vld [vmem:[#allocation29 + $0xf20] sm:$0xff]
    %v4111 = vld [vmem:[#allocation29 + $0xf28] sm:$0xff]
    %v4112 = vld [vmem:[#allocation29 + $0xf30] sm:$0xff]
    %v4113 = vld [vmem:[#allocation29 + $0xf38] sm:$0xff]
    %v4114 = vld [vmem:[#allocation29 + $0xf40] sm:$0xff]
    %v4115 = vld [vmem:[#allocation29 + $0xf48] sm:$0xff]
    %v4116 = vld [vmem:[#allocation29 + $0xf50] sm:$0xff]
    %v4117 = vld [vmem:[#allocation29 + $0xf58] sm:$0xff]
    %v4118 = vld [vmem:[#allocation29 + $0xf60] sm:$0xff]
    %v4119 = vld [vmem:[#allocation29 + $0xf68] sm:$0xff]
    %v4120 = vld [vmem:[#allocation29 + $0xf70] sm:$0xff]
    %v4121 = vld [vmem:[#allocation29 + $0xf78] sm:$0xff]
    %v4122 = vld [vmem:[#allocation29 + $0xf80] sm:$0xff]
    %v4123 = vld [vmem:[#allocation29 + $0xf88] sm:$0xff]
    %v4124 = vld [vmem:[#allocation29 + $0xf90] sm:$0xff]
    %v4125 = vld [vmem:[#allocation29 + $0xf98] sm:$0xff]
    %v4126 = vld [vmem:[#allocation29 + $0xfa0] sm:$0xff]
    %v4127 = vld [vmem:[#allocation29 + $0xfa8] sm:$0xff]
    %v4128 = vld [vmem:[#allocation29 + $0xfb0] sm:$0xff]
    %v4129 = vld [vmem:[#allocation29 + $0xfb8] sm:$0xff]
    %v4130 = vld [vmem:[#allocation29 + $0xfc0] sm:$0xff]
    %v4131 = vld [vmem:[#allocation29 + $0xfc8] sm:$0xff]
    %v4132 = vld [vmem:[#allocation29 + $0xfd0] sm:$0xff]
    %v4133 = vld [vmem:[#allocation29 + $0xfd8] sm:$0xff]
    %v4134 = vld [vmem:[#allocation29 + $0xfe0] sm:$0xff]
    %v4135 = vld [vmem:[#allocation29 + $0xfe8] sm:$0xff]
    %v4136 = vld [vmem:[#allocation29 + $0xff0] sm:$0xff]
    %v4137 = vld [vmem:[#allocation29 + $0xff8] sm:$0xff]
    %v4138 = vld [vmem:[#allocation29 + $0x1000] sm:$0xff]
    %v4139 = vld [vmem:[#allocation29 + $0x1008] sm:$0xff]
    %v4140 = vld [vmem:[#allocation29 + $0x1010] sm:$0xff]
    %v4141 = vld [vmem:[#allocation29 + $0x1018] sm:$0xff]
    %v4142 = vld [vmem:[#allocation29 + $0x1020] sm:$0xff]
    %v4143 = vld [vmem:[#allocation29 + $0x1028] sm:$0xff]
    %v4144 = vld [vmem:[#allocation29 + $0x1030] sm:$0xff]
    %v4145 = vld [vmem:[#allocation29 + $0x1038] sm:$0xff]
    %v4146 = vld [vmem:[#allocation29 + $0x1040] sm:$0xff]
    %v4147 = vld [vmem:[#allocation29 + $0x1048] sm:$0xff]
    %v4148 = vld [vmem:[#allocation29 + $0x1050] sm:$0xff]
    %v4149 = vld [vmem:[#allocation29 + $0x1058] sm:$0xff]
    %v4150 = vld [vmem:[#allocation29 + $0x1060] sm:$0xff]
    %v4151 = vld [vmem:[#allocation29 + $0x1068] sm:$0xff]
    %v4152 = vld [vmem:[#allocation29 + $0x1070] sm:$0xff]
    %v4153 = vld [vmem:[#allocation29 + $0x1078] sm:$0xff]
    %v4154 = vld [vmem:[#allocation29 + $0x1080] sm:$0xff]
    %v4155 = vld [vmem:[#allocation29 + $0x1088] sm:$0xff]
    %v4156 = vld [vmem:[#allocation29 + $0x1090] sm:$0xff]
    %v4157 = vld [vmem:[#allocation29 + $0x1098] sm:$0xff]
    %v4158 = vld [vmem:[#allocation29 + $0x10a0] sm:$0xff]
    %v4159 = vld [vmem:[#allocation29 + $0x10a8] sm:$0xff]
    %v4160 = vld [vmem:[#allocation29 + $0x10b0] sm:$0xff]
    %v4161 = vld [vmem:[#allocation29 + $0x10b8] sm:$0xff]
    %v4162 = vld [vmem:[#allocation29 + $0x10c0] sm:$0xff]
    %v4163 = vld [vmem:[#allocation29 + $0x10c8] sm:$0xff]
    %v4164 = vld [vmem:[#allocation29 + $0x10d0] sm:$0xff]
    %v4165 = vld [vmem:[#allocation29 + $0x10d8] sm:$0xff]
    %v4166 = vld [vmem:[#allocation29 + $0x10e0] sm:$0xff]
    %v4167 = vld [vmem:[#allocation29 + $0x10e8] sm:$0xff]
    %v4168 = vld [vmem:[#allocation29 + $0x10f0] sm:$0xff]
    %v4169 = vld [vmem:[#allocation29 + $0x10f8] sm:$0xff]
    %v4170 = vld [vmem:[#allocation29 + $0x1100] sm:$0xff]
    %v4171 = vld [vmem:[#allocation29 + $0x1108] sm:$0xff]
    %v4172 = vld [vmem:[#allocation29 + $0x1110] sm:$0xff]
    %v4173 = vld [vmem:[#allocation29 + $0x1118] sm:$0xff]
    %v4174 = vld [vmem:[#allocation29 + $0x1120] sm:$0xff]
    %v4175 = vld [vmem:[#allocation29 + $0x1128] sm:$0xff]
    %v4176 = vld [vmem:[#allocation29 + $0x1130] sm:$0xff]
    %v4177 = vld [vmem:[#allocation29 + $0x1138] sm:$0xff]
    %v4178 = vld [vmem:[#allocation29 + $0x1140] sm:$0xff]
    %v4179 = vld [vmem:[#allocation29 + $0x1148] sm:$0xff]
    %v4180 = vld [vmem:[#allocation29 + $0x1150] sm:$0xff]
    %v4181 = vld [vmem:[#allocation29 + $0x1158] sm:$0xff]
    %v4182 = vld [vmem:[#allocation29 + $0x1160] sm:$0xff]
    %v4183 = vld [vmem:[#allocation29 + $0x1168] sm:$0xff]
    %v4184 = vld [vmem:[#allocation29 + $0x1170] sm:$0xff]
    %v4185 = vld [vmem:[#allocation29 + $0x1178] sm:$0xff]
    %v4186 = vld [vmem:[#allocation29 + $0x1180] sm:$0xff]
    %v4187 = vld [vmem:[#allocation29 + $0x1188] sm:$0xff]
    %v4188 = vld [vmem:[#allocation29 + $0x1190] sm:$0xff]
    %v4189 = vld [vmem:[#allocation29 + $0x1198] sm:$0xff]
    %v4190 = vld [vmem:[#allocation29 + $0x11a0] sm:$0xff]
    %v4191 = vld [vmem:[#allocation29 + $0x11a8] sm:$0xff]
    %v4192 = vld [vmem:[#allocation29 + $0x11b0] sm:$0xff]
    %v4193 = vld [vmem:[#allocation29 + $0x11b8] sm:$0xff]
    %v4194 = vld [vmem:[#allocation29 + $0x11c0] sm:$0xff]
    %v4195 = vld [vmem:[#allocation29 + $0x11c8] sm:$0xff]
    %v4196 = vld [vmem:[#allocation29 + $0x11d0] sm:$0xff]
    %v4197 = vld [vmem:[#allocation29 + $0x11d8] sm:$0xff]
    %v4198 = vld [vmem:[#allocation29 + $0x11e0] sm:$0xff]
    %v4199 = vld [vmem:[#allocation29 + $0x11e8] sm:$0xff]
    %v4200 = vld [vmem:[#allocation29 + $0x11f0] sm:$0xff]
    %v4201 = vld [vmem:[#allocation29 + $0x11f8] sm:$0xff]
    %v4202 = vld [vmem:[#allocation29 + $0x1200] sm:$0xff]
    %v4203 = vld [vmem:[#allocation29 + $0x1208] sm:$0xff]
    %v4204 = vld [vmem:[#allocation29 + $0x1210] sm:$0xff]
    %v4205 = vld [vmem:[#allocation29 + $0x1218] sm:$0xff]
    %v4206 = vld [vmem:[#allocation29 + $0x1220] sm:$0xff]
    %v4207 = vld [vmem:[#allocation29 + $0x1228] sm:$0xff]
    %v4208 = vld [vmem:[#allocation29 + $0x1230] sm:$0xff]
    %v4209 = vld [vmem:[#allocation29 + $0x1238] sm:$0xff]
    %v4210 = vld [vmem:[#allocation29 + $0x1240] sm:$0xff]
    %v4211 = vld [vmem:[#allocation29 + $0x1248] sm:$0xff]
    %v4212 = vld [vmem:[#allocation29 + $0x1250] sm:$0xff]
    %v4213 = vld [vmem:[#allocation29 + $0x1258] sm:$0xff]
    %v4214 = vld [vmem:[#allocation29 + $0x1260] sm:$0xff]
    %v4215 = vld [vmem:[#allocation29 + $0x1268] sm:$0xff]
    %v4216 = vld [vmem:[#allocation29 + $0x1270] sm:$0xff]
    %v4217 = vld [vmem:[#allocation29 + $0x1278] sm:$0xff]
    %v4218 = vld [vmem:[#allocation29 + $0x1280] sm:$0xff]
    %v4219 = vld [vmem:[#allocation29 + $0x1288] sm:$0xff]
    %v4220 = vld [vmem:[#allocation29 + $0x1290] sm:$0xff]
    %v4221 = vld [vmem:[#allocation29 + $0x1298] sm:$0xff]
    %v4222 = vld [vmem:[#allocation29 + $0x12a0] sm:$0xff]
    %v4223 = vld [vmem:[#allocation29 + $0x12a8] sm:$0xff]
    %v4224 = vld [vmem:[#allocation29 + $0x12b0] sm:$0xff]
    %v4225 = vld [vmem:[#allocation29 + $0x12b8] sm:$0xff]
    %v4226 = vld [vmem:[#allocation29 + $0x12c0] sm:$0xff]
    %v4227 = vld [vmem:[#allocation29 + $0x12c8] sm:$0xff]
    %v4228 = vld [vmem:[#allocation29 + $0x12d0] sm:$0xff]
    %v4229 = vld [vmem:[#allocation29 + $0x12d8] sm:$0xff]
    %v4230 = vld [vmem:[#allocation29 + $0x12e0] sm:$0xff]
    %v4231 = vld [vmem:[#allocation29 + $0x12e8] sm:$0xff]
    %v4232 = vld [vmem:[#allocation29 + $0x12f0] sm:$0xff]
    %v4233 = vld [vmem:[#allocation29 + $0x12f8] sm:$0xff]
    %v4234 = vld [vmem:[#allocation29 + $0x1300] sm:$0xff]
    %v4235 = vld [vmem:[#allocation29 + $0x1308] sm:$0xff]
    %v4236 = vld [vmem:[#allocation29 + $0x1310] sm:$0xff]
    %v4237 = vld [vmem:[#allocation29 + $0x1318] sm:$0xff]
    %v4238 = vld [vmem:[#allocation29 + $0x1320] sm:$0xff]
    %v4239 = vld [vmem:[#allocation29 + $0x1328] sm:$0xff]
    %v4240 = vld [vmem:[#allocation29 + $0x1330] sm:$0xff]
    %v4241 = vld [vmem:[#allocation29 + $0x1338] sm:$0xff]
    %v4242 = vld [vmem:[#allocation29 + $0x1340] sm:$0xff]
    %v4243 = vld [vmem:[#allocation29 + $0x1348] sm:$0xff]
    %v4244 = vld [vmem:[#allocation29 + $0x1350] sm:$0xff]
    %v4245 = vld [vmem:[#allocation29 + $0x1358] sm:$0xff]
    %v4246 = vld [vmem:[#allocation29 + $0x1360] sm:$0xff]
    %v4247 = vld [vmem:[#allocation29 + $0x1368] sm:$0xff]
    %v4248 = vld [vmem:[#allocation29 + $0x1370] sm:$0xff]
    %v4249 = vld [vmem:[#allocation29 + $0x1378] sm:$0xff]
    %v4250 = vld [vmem:[#allocation29 + $0x1380] sm:$0xff]
    %v4251 = vld [vmem:[#allocation29 + $0x1388] sm:$0xff]
    %v4252 = vld [vmem:[#allocation29 + $0x1390] sm:$0xff]
    %v4253 = vld [vmem:[#allocation29 + $0x1398] sm:$0xff]
    %v4254 = vld [vmem:[#allocation29 + $0x13a0] sm:$0xff]
    %v4255 = vld [vmem:[#allocation29 + $0x13a8] sm:$0xff]
    %v4256 = vld [vmem:[#allocation29 + $0x13b0] sm:$0xff]
    %v4257 = vld [vmem:[#allocation29 + $0x13b8] sm:$0xff]
    %v4258 = vld [vmem:[#allocation29 + $0x13c0] sm:$0xff]
    %v4259 = vld [vmem:[#allocation29 + $0x13c8] sm:$0xff]
    %v4260 = vld [vmem:[#allocation29 + $0x13d0] sm:$0xff]
    %v4261 = vld [vmem:[#allocation29 + $0x13d8] sm:$0xff]
    %v4262 = vld [vmem:[#allocation29 + $0x13e0] sm:$0xff]
    %v4263 = vld [vmem:[#allocation29 + $0x13e8] sm:$0xff]
    %v4264 = vld [vmem:[#allocation29 + $0x13f0] sm:$0xff]
    %v4265 = vld [vmem:[#allocation29 + $0x13f8] sm:$0xff]
    %v4266 = vld [vmem:[#allocation29 + $0x1400] sm:$0xff]
    %v4267 = vld [vmem:[#allocation29 + $0x1408] sm:$0xff]
    %v4268 = vld [vmem:[#allocation29 + $0x1410] sm:$0xff]
    %v4269 = vld [vmem:[#allocation29 + $0x1418] sm:$0xff]
    %v4270 = vld [vmem:[#allocation29 + $0x1420] sm:$0xff]
    %v4271 = vld [vmem:[#allocation29 + $0x1428] sm:$0xff]
    %v4272 = vld [vmem:[#allocation29 + $0x1430] sm:$0xff]
    %v4273 = vld [vmem:[#allocation29 + $0x1438] sm:$0xff]
    %v4274 = vld [vmem:[#allocation29 + $0x1440] sm:$0xff]
    %v4275 = vld [vmem:[#allocation29 + $0x1448] sm:$0xff]
    %v4276 = vld [vmem:[#allocation29 + $0x1450] sm:$0xff]
    %v4277 = vld [vmem:[#allocation29 + $0x1458] sm:$0xff]
    %v4278 = vld [vmem:[#allocation29 + $0x1460] sm:$0xff]
    %v4279 = vld [vmem:[#allocation29 + $0x1468] sm:$0xff]
    %v4280 = vld [vmem:[#allocation29 + $0x1470] sm:$0xff]
    %v4281 = vld [vmem:[#allocation29 + $0x1478] sm:$0xff]
    %v4282 = vld [vmem:[#allocation29 + $0x1480] sm:$0xff]
    %v4283 = vld [vmem:[#allocation29 + $0x1488] sm:$0xff]
    %v4284 = vld [vmem:[#allocation29 + $0x1490] sm:$0xff]
    %v4285 = vld [vmem:[#allocation29 + $0x1498] sm:$0xff]
    %v4286 = vld [vmem:[#allocation29 + $0x14a0] sm:$0xff]
    %v4287 = vld [vmem:[#allocation29 + $0x14a8] sm:$0xff]
    %v4288 = vld [vmem:[#allocation29 + $0x14b0] sm:$0xff]
    %v4289 = vld [vmem:[#allocation29 + $0x14b8] sm:$0xff]
    %v4290 = vld [vmem:[#allocation29 + $0x14c0] sm:$0xff]
    %v4291 = vld [vmem:[#allocation29 + $0x14c8] sm:$0xff]
    %v4292 = vld [vmem:[#allocation29 + $0x14d0] sm:$0xff]
    %v4293 = vld [vmem:[#allocation29 + $0x14d8] sm:$0xff]
    %v4294 = vld [vmem:[#allocation29 + $0x14e0] sm:$0xff]
    %v4295 = vld [vmem:[#allocation29 + $0x14e8] sm:$0xff]
    %v4296 = vld [vmem:[#allocation29 + $0x14f0] sm:$0xff]
    %v4297 = vld [vmem:[#allocation29 + $0x14f8] sm:$0xff]
    %v4298 = vld [vmem:[#allocation29 + $0x1500] sm:$0xff]
    %v4299 = vld [vmem:[#allocation29 + $0x1508] sm:$0xff]
    %v4300 = vld [vmem:[#allocation29 + $0x1510] sm:$0xff]
    %v4301 = vld [vmem:[#allocation29 + $0x1518] sm:$0xff]
    %v4302 = vld [vmem:[#allocation29 + $0x1520] sm:$0xff]
    %v4303 = vld [vmem:[#allocation29 + $0x1528] sm:$0xff]
    %v4304 = vld [vmem:[#allocation29 + $0x1530] sm:$0xff]
    %v4305 = vld [vmem:[#allocation29 + $0x1538] sm:$0xff]
    %v4306 = vld [vmem:[#allocation29 + $0x1540] sm:$0xff]
    %v4307 = vld [vmem:[#allocation29 + $0x1548] sm:$0xff]
    %v4308 = vld [vmem:[#allocation29 + $0x1550] sm:$0xff]
    %v4309 = vld [vmem:[#allocation29 + $0x1558] sm:$0xff]
    %v4310 = vld [vmem:[#allocation29 + $0x1560] sm:$0xff]
    %v4311 = vld [vmem:[#allocation29 + $0x1568] sm:$0xff]
    %v4312 = vld [vmem:[#allocation29 + $0x1570] sm:$0xff]
    %v4313 = vld [vmem:[#allocation29 + $0x1578] sm:$0xff]
    %v4314 = vld [vmem:[#allocation29 + $0x1580] sm:$0xff]
    %v4315 = vld [vmem:[#allocation29 + $0x1588] sm:$0xff]
    %v4316 = vld [vmem:[#allocation29 + $0x1590] sm:$0xff]
    %v4317 = vld [vmem:[#allocation29 + $0x1598] sm:$0xff]
    %v4318 = vld [vmem:[#allocation29 + $0x15a0] sm:$0xff]
    %v4319 = vld [vmem:[#allocation29 + $0x15a8] sm:$0xff]
    %v4320 = vld [vmem:[#allocation29 + $0x15b0] sm:$0xff]
    %v4321 = vld [vmem:[#allocation29 + $0x15b8] sm:$0xff]
    %v4322 = vld [vmem:[#allocation29 + $0x15c0] sm:$0xff]
    %v4323 = vld [vmem:[#allocation29 + $0x15c8] sm:$0xff]
    %v4324 = vld [vmem:[#allocation29 + $0x15d0] sm:$0xff]
    %v4325 = vld [vmem:[#allocation29 + $0x15d8] sm:$0xff]
    %v4326 = vld [vmem:[#allocation29 + $0x15e0] sm:$0xff]
    %v4327 = vld [vmem:[#allocation29 + $0x15e8] sm:$0xff]
    %v4328 = vld [vmem:[#allocation29 + $0x15f0] sm:$0xff]
    %v4329 = vld [vmem:[#allocation29 + $0x15f8] sm:$0xff]
    %v4330 = vld [vmem:[#allocation29 + $0x1600] sm:$0xff]
    %v4331 = vld [vmem:[#allocation29 + $0x1608] sm:$0xff]
    %v4332 = vld [vmem:[#allocation29 + $0x1610] sm:$0xff]
    %v4333 = vld [vmem:[#allocation29 + $0x1618] sm:$0xff]
    %v4334 = vld [vmem:[#allocation29 + $0x1620] sm:$0xff]
    %v4335 = vld [vmem:[#allocation29 + $0x1628] sm:$0xff]
    %v4336 = vld [vmem:[#allocation29 + $0x1630] sm:$0xff]
    %v4337 = vld [vmem:[#allocation29 + $0x1638] sm:$0xff]
    %v4338 = vld [vmem:[#allocation29 + $0x1640] sm:$0xff]
    %v4339 = vld [vmem:[#allocation29 + $0x1648] sm:$0xff]
    %v4340 = vld [vmem:[#allocation29 + $0x1650] sm:$0xff]
    %v4341 = vld [vmem:[#allocation29 + $0x1658] sm:$0xff]
    %v4342 = vld [vmem:[#allocation29 + $0x1660] sm:$0xff]
    %v4343 = vld [vmem:[#allocation29 + $0x1668] sm:$0xff]
    %v4344 = vld [vmem:[#allocation29 + $0x1670] sm:$0xff]
    %v4345 = vld [vmem:[#allocation29 + $0x1678] sm:$0xff]
    %v4346 = vld [vmem:[#allocation29 + $0x1680] sm:$0xff]
    %v4347 = vld [vmem:[#allocation29 + $0x1688] sm:$0xff]
    %v4348 = vld [vmem:[#allocation29 + $0x1690] sm:$0xff]
    %v4349 = vld [vmem:[#allocation29 + $0x1698] sm:$0xff]
    %v4350 = vld [vmem:[#allocation29 + $0x16a0] sm:$0xff]
    %v4351 = vld [vmem:[#allocation29 + $0x16a8] sm:$0xff]
    %v4352 = vld [vmem:[#allocation29 + $0x16b0] sm:$0xff]
    %v4353 = vld [vmem:[#allocation29 + $0x16b8] sm:$0xff]
    %v4354 = vld [vmem:[#allocation29 + $0x16c0] sm:$0xff]
    %v4355 = vld [vmem:[#allocation29 + $0x16c8] sm:$0xff]
    %v4356 = vld [vmem:[#allocation29 + $0x16d0] sm:$0xff]
    %v4357 = vld [vmem:[#allocation29 + $0x16d8] sm:$0xff]
    %v4358 = vld [vmem:[#allocation29 + $0x16e0] sm:$0xff]
    %v4359 = vld [vmem:[#allocation29 + $0x16e8] sm:$0xff]
    %v4360 = vld [vmem:[#allocation29 + $0x16f0] sm:$0xff]
    %v4361 = vld [vmem:[#allocation29 + $0x16f8] sm:$0xff]
    %v4362 = vld [vmem:[#allocation29 + $0x1700] sm:$0xff]
    %v4363 = vld [vmem:[#allocation29 + $0x1708] sm:$0xff]
    %v4364 = vld [vmem:[#allocation29 + $0x1710] sm:$0xff]
    %v4365 = vld [vmem:[#allocation29 + $0x1718] sm:$0xff]
    %v4366 = vld [vmem:[#allocation29 + $0x1720] sm:$0xff]
    %v4367 = vld [vmem:[#allocation29 + $0x1728] sm:$0xff]
    %v4368 = vld [vmem:[#allocation29 + $0x1730] sm:$0xff]
    %v4369 = vld [vmem:[#allocation29 + $0x1738] sm:$0xff]
    %v4370 = vld [vmem:[#allocation29 + $0x1740] sm:$0xff]
    %v4371 = vld [vmem:[#allocation29 + $0x1748] sm:$0xff]
    %v4372 = vld [vmem:[#allocation29 + $0x1750] sm:$0xff]
    %v4373 = vld [vmem:[#allocation29 + $0x1758] sm:$0xff]
    %v4374 = vld [vmem:[#allocation29 + $0x1760] sm:$0xff]
    %v4375 = vld [vmem:[#allocation29 + $0x1768] sm:$0xff]
    %v4376 = vld [vmem:[#allocation29 + $0x1770] sm:$0xff]
    %v4377 = vld [vmem:[#allocation29 + $0x1778] sm:$0xff]
    %v4378 = vld [vmem:[#allocation29 + $0x1780] sm:$0xff]
    %v4379 = vld [vmem:[#allocation29 + $0x1788] sm:$0xff]
    %v4380 = vld [vmem:[#allocation29 + $0x1790] sm:$0xff]
    %v4381 = vld [vmem:[#allocation29 + $0x1798] sm:$0xff]
    %v4382 = vld [vmem:[#allocation29 + $0x17a0] sm:$0xff]
    %v4383 = vld [vmem:[#allocation29 + $0x17a8] sm:$0xff]
    %v4384 = vld [vmem:[#allocation29 + $0x17b0] sm:$0xff]
    %v4385 = vld [vmem:[#allocation29 + $0x17b8] sm:$0xff]
    %v4386 = vld [vmem:[#allocation29 + $0x17c0] sm:$0xff]
    %v4387 = vld [vmem:[#allocation29 + $0x17c8] sm:$0xff]
    %v4388 = vld [vmem:[#allocation29 + $0x17d0] sm:$0xff]
    %v4389 = vld [vmem:[#allocation29 + $0x17d8] sm:$0xff]
    %v4390 = vld [vmem:[#allocation29 + $0x17e0] sm:$0xff]
    %v4391 = vld [vmem:[#allocation29 + $0x17e8] sm:$0xff]
    %v4392 = vld [vmem:[#allocation29 + $0x17f0] sm:$0xff]
    %v4393 = vld [vmem:[#allocation29 + $0x17f8] sm:$0xff]
    %v4394 = vld [vmem:[#allocation29 + $0x1800] sm:$0xff]
    %v4395 = vld [vmem:[#allocation29 + $0x1808] sm:$0xff]
    %v4396 = vld [vmem:[#allocation29 + $0x1810] sm:$0xff]
    %v4397 = vld [vmem:[#allocation29 + $0x1818] sm:$0xff]
    %v4398 = vld [vmem:[#allocation29 + $0x1820] sm:$0xff]
    %v4399 = vld [vmem:[#allocation29 + $0x1828] sm:$0xff]
    %v4400 = vld [vmem:[#allocation29 + $0x1830] sm:$0xff]
    %v4401 = vld [vmem:[#allocation29 + $0x1838] sm:$0xff]
    %v4402 = vld [vmem:[#allocation29 + $0x1840] sm:$0xff]
    %v4403 = vld [vmem:[#allocation29 + $0x1848] sm:$0xff]
    %v4404 = vld [vmem:[#allocation29 + $0x1850] sm:$0xff]
    %v4405 = vld [vmem:[#allocation29 + $0x1858] sm:$0xff]
    %v4406 = vld [vmem:[#allocation29 + $0x1860] sm:$0xff]
    %v4407 = vld [vmem:[#allocation29 + $0x1868] sm:$0xff]
    %v4408 = vld [vmem:[#allocation29 + $0x1870] sm:$0xff]
    %v4409 = vld [vmem:[#allocation29 + $0x1878] sm:$0xff]
    %v4410 = vld [vmem:[#allocation29 + $0x1880] sm:$0xff]
    %v4411 = vld [vmem:[#allocation29 + $0x1888] sm:$0xff]
    %v4412 = vld [vmem:[#allocation29 + $0x1890] sm:$0xff]
    %v4413 = vld [vmem:[#allocation29 + $0x1898] sm:$0xff]
    %v4414 = vld [vmem:[#allocation29 + $0x18a0] sm:$0xff]
    %v4415 = vld [vmem:[#allocation29 + $0x18a8] sm:$0xff]
    %v4416 = vld [vmem:[#allocation29 + $0x18b0] sm:$0xff]
    %v4417 = vld [vmem:[#allocation29 + $0x18b8] sm:$0xff]
    %v4418 = vld [vmem:[#allocation29 + $0x18c0] sm:$0xff]
    %v4419 = vld [vmem:[#allocation29 + $0x18c8] sm:$0xff]
    %v4420 = vld [vmem:[#allocation29 + $0x18d0] sm:$0xff]
    %v4421 = vld [vmem:[#allocation29 + $0x18d8] sm:$0xff]
    %v4422 = vld [vmem:[#allocation29 + $0x18e0] sm:$0xff]
    %v4423 = vld [vmem:[#allocation29 + $0x18e8] sm:$0xff]
    %v4424 = vld [vmem:[#allocation29 + $0x18f0] sm:$0xff]
    %v4425 = vld [vmem:[#allocation29 + $0x18f8] sm:$0xff]
    %v4426 = vld [vmem:[#allocation29 + $0x1900] sm:$0xff]
    %v4427 = vld [vmem:[#allocation29 + $0x1908] sm:$0xff]
    %v4428 = vld [vmem:[#allocation29 + $0x1910] sm:$0xff]
    %v4429 = vld [vmem:[#allocation29 + $0x1918] sm:$0xff]
    %v4430 = vld [vmem:[#allocation29 + $0x1920] sm:$0xff]
    %v4431 = vld [vmem:[#allocation29 + $0x1928] sm:$0xff]
    %v4432 = vld [vmem:[#allocation29 + $0x1930] sm:$0xff]
    %v4433 = vld [vmem:[#allocation29 + $0x1938] sm:$0xff]
    %v4434 = vld [vmem:[#allocation29 + $0x1940] sm:$0xff]
    %v4435 = vld [vmem:[#allocation29 + $0x1948] sm:$0xff]
    %v4436 = vld [vmem:[#allocation29 + $0x1950] sm:$0xff]
    %v4437 = vld [vmem:[#allocation29 + $0x1958] sm:$0xff]
    %v4438 = vld [vmem:[#allocation29 + $0x1960] sm:$0xff]
    %v4439 = vld [vmem:[#allocation29 + $0x1968] sm:$0xff]
    %v4440 = vld [vmem:[#allocation29 + $0x1970] sm:$0xff]
    %v4441 = vld [vmem:[#allocation29 + $0x1978] sm:$0xff]
    %v4442 = vld [vmem:[#allocation29 + $0x1980] sm:$0xff]
    %v4443 = vld [vmem:[#allocation29 + $0x1988] sm:$0xff]
    %v4444 = vld [vmem:[#allocation29 + $0x1990] sm:$0xff]
    %v4445 = vld [vmem:[#allocation29 + $0x1998] sm:$0xff]
    %v4446 = vld [vmem:[#allocation29 + $0x19a0] sm:$0xff]
    %v4447 = vld [vmem:[#allocation29 + $0x19a8] sm:$0xff]
    %v4448 = vld [vmem:[#allocation29 + $0x19b0] sm:$0xff]
    %v4449 = vld [vmem:[#allocation29 + $0x19b8] sm:$0xff]
    %v4450 = vld [vmem:[#allocation29 + $0x19c0] sm:$0xff]
    %v4451 = vld [vmem:[#allocation29 + $0x19c8] sm:$0xff]
    %v4452 = vld [vmem:[#allocation29 + $0x19d0] sm:$0xff]
    %v4453 = vld [vmem:[#allocation29 + $0x19d8] sm:$0xff]
    %v4454 = vld [vmem:[#allocation29 + $0x19e0] sm:$0xff]
    %v4455 = vld [vmem:[#allocation29 + $0x19e8] sm:$0xff]
    %v4456 = vld [vmem:[#allocation29 + $0x19f0] sm:$0xff]
    %v4457 = vld [vmem:[#allocation29 + $0x19f8] sm:$0xff]
    %v4458 = vld [vmem:[#allocation29 + $0x1a00] sm:$0xff]
    %v4459 = vld [vmem:[#allocation29 + $0x1a08] sm:$0xff]
    %v4460 = vld [vmem:[#allocation29 + $0x1a10] sm:$0xff]
    %v4461 = vld [vmem:[#allocation29 + $0x1a18] sm:$0xff]
    %v4462 = vld [vmem:[#allocation29 + $0x1a20] sm:$0xff]
    %v4463 = vld [vmem:[#allocation29 + $0x1a28] sm:$0xff]
    %v4464 = vld [vmem:[#allocation29 + $0x1a30] sm:$0xff]
    %v4465 = vld [vmem:[#allocation29 + $0x1a38] sm:$0xff]
    %v4466 = vld [vmem:[#allocation29 + $0x1a40] sm:$0xff]
    %v4467 = vld [vmem:[#allocation29 + $0x1a48] sm:$0xff]
    %v4468 = vld [vmem:[#allocation29 + $0x1a50] sm:$0xff]
    %v4469 = vld [vmem:[#allocation29 + $0x1a58] sm:$0xff]
    %v4470 = vld [vmem:[#allocation29 + $0x1a60] sm:$0xff]
    %v4471 = vld [vmem:[#allocation29 + $0x1a68] sm:$0xff]
    %v4472 = vld [vmem:[#allocation29 + $0x1a70] sm:$0xff]
    %v4473 = vld [vmem:[#allocation29 + $0x1a78] sm:$0xff]
    %v4474 = vld [vmem:[#allocation29 + $0x1a80] sm:$0xff]
    %v4475 = vld [vmem:[#allocation29 + $0x1a88] sm:$0xff]
    %v4476 = vld [vmem:[#allocation29 + $0x1a90] sm:$0xff]
    %v4477 = vld [vmem:[#allocation29 + $0x1a98] sm:$0xff]
    %v4478 = vld [vmem:[#allocation29 + $0x1aa0] sm:$0xff]
    %v4479 = vld [vmem:[#allocation29 + $0x1aa8] sm:$0xff]
    %v4480 = vld [vmem:[#allocation29 + $0x1ab0] sm:$0xff]
    %v4481 = vld [vmem:[#allocation29 + $0x1ab8] sm:$0xff]
    %v4482 = vld [vmem:[#allocation29 + $0x1ac0] sm:$0xff]
    %v4483 = vld [vmem:[#allocation29 + $0x1ac8] sm:$0xff]
    %v4484 = vld [vmem:[#allocation29 + $0x1ad0] sm:$0xff]
    %v4485 = vld [vmem:[#allocation29 + $0x1ad8] sm:$0xff]
    %v4486 = vld [vmem:[#allocation29 + $0x1ae0] sm:$0xff]
    %v4487 = vld [vmem:[#allocation29 + $0x1ae8] sm:$0xff]
    %v4488 = vld [vmem:[#allocation29 + $0x1af0] sm:$0xff]
    %v4489 = vld [vmem:[#allocation29 + $0x1af8] sm:$0xff]
    %v4490 = vld [vmem:[#allocation29 + $0x1b00] sm:$0xff]
    %v4491 = vld [vmem:[#allocation29 + $0x1b08] sm:$0xff]
    %v4492 = vld [vmem:[#allocation29 + $0x1b10] sm:$0xff]
    %v4493 = vld [vmem:[#allocation29 + $0x1b18] sm:$0xff]
    %v4494 = vld [vmem:[#allocation29 + $0x1b20] sm:$0xff]
    %v4495 = vld [vmem:[#allocation29 + $0x1b28] sm:$0xff]
    %v4496 = vld [vmem:[#allocation29 + $0x1b30] sm:$0xff]
    %v4497 = vld [vmem:[#allocation29 + $0x1b38] sm:$0xff]
    %v4498 = vld [vmem:[#allocation29 + $0x1b40] sm:$0xff]
    %v4499 = vld [vmem:[#allocation29 + $0x1b48] sm:$0xff]
    %v4500 = vld [vmem:[#allocation29 + $0x1b50] sm:$0xff]
    %v4501 = vld [vmem:[#allocation29 + $0x1b58] sm:$0xff]
    %v4502 = vld [vmem:[#allocation29 + $0x1b60] sm:$0xff]
    %v4503 = vld [vmem:[#allocation29 + $0x1b68] sm:$0xff]
    %v4504 = vld [vmem:[#allocation29 + $0x1b70] sm:$0xff]
    %v4505 = vld [vmem:[#allocation29 + $0x1b78] sm:$0xff]
    %v4506 = vld [vmem:[#allocation29 + $0x1b80] sm:$0xff]
    %v4507 = vld [vmem:[#allocation29 + $0x1b88] sm:$0xff]
    %v4508 = vld [vmem:[#allocation29 + $0x1b90] sm:$0xff]
    %v4509 = vld [vmem:[#allocation29 + $0x1b98] sm:$0xff]
    %v4510 = vld [vmem:[#allocation29 + $0x1ba0] sm:$0xff]
    %v4511 = vld [vmem:[#allocation29 + $0x1ba8] sm:$0xff]
    %v4512 = vld [vmem:[#allocation29 + $0x1bb0] sm:$0xff]
    %v4513 = vld [vmem:[#allocation29 + $0x1bb8] sm:$0xff]
    %v4514 = vld [vmem:[#allocation29 + $0x1bc0] sm:$0xff]
    %v4515 = vld [vmem:[#allocation29 + $0x1bc8] sm:$0xff]
    %v4516 = vld [vmem:[#allocation29 + $0x1bd0] sm:$0xff]
    %v4517 = vld [vmem:[#allocation29 + $0x1bd8] sm:$0xff]
    %v4518 = vld [vmem:[#allocation29 + $0x1be0] sm:$0xff]
    %v4519 = vld [vmem:[#allocation29 + $0x1be8] sm:$0xff]
    %v4520 = vld [vmem:[#allocation29 + $0x1bf0] sm:$0xff]
    %v4521 = vld [vmem:[#allocation29 + $0x1bf8] sm:$0xff]
    %v4522 = vld [vmem:[#allocation29 + $0x1c00] sm:$0xff]
    %v4523 = vld [vmem:[#allocation29 + $0x1c08] sm:$0xff]
    %v4524 = vld [vmem:[#allocation29 + $0x1c10] sm:$0xff]
    %v4525 = vld [vmem:[#allocation29 + $0x1c18] sm:$0xff]
    %v4526 = vld [vmem:[#allocation29 + $0x1c20] sm:$0xff]
    %v4527 = vld [vmem:[#allocation29 + $0x1c28] sm:$0xff]
    %v4528 = vld [vmem:[#allocation29 + $0x1c30] sm:$0xff]
    %v4529 = vld [vmem:[#allocation29 + $0x1c38] sm:$0xff]
    %v4530 = vld [vmem:[#allocation29 + $0x1c40] sm:$0xff]
    %v4531 = vld [vmem:[#allocation29 + $0x1c48] sm:$0xff]
    %v4532 = vld [vmem:[#allocation29 + $0x1c50] sm:$0xff]
    %v4533 = vld [vmem:[#allocation29 + $0x1c58] sm:$0xff]
    %v4534 = vld [vmem:[#allocation29 + $0x1c60] sm:$0xff]
    %v4535 = vld [vmem:[#allocation29 + $0x1c68] sm:$0xff]
    %v4536 = vld [vmem:[#allocation29 + $0x1c70] sm:$0xff]
    %v4537 = vld [vmem:[#allocation29 + $0x1c78] sm:$0xff]
    %v4538 = vld [vmem:[#allocation29 + $0x1c80] sm:$0xff]
    %v4539 = vld [vmem:[#allocation29 + $0x1c88] sm:$0xff]
    %v4540 = vld [vmem:[#allocation29 + $0x1c90] sm:$0xff]
    %v4541 = vld [vmem:[#allocation29 + $0x1c98] sm:$0xff]
    %v4542 = vld [vmem:[#allocation29 + $0x1ca0] sm:$0xff]
    %v4543 = vld [vmem:[#allocation29 + $0x1ca8] sm:$0xff]
    %v4544 = vld [vmem:[#allocation29 + $0x1cb0] sm:$0xff]
    %v4545 = vld [vmem:[#allocation29 + $0x1cb8] sm:$0xff]
    %v4546 = vld [vmem:[#allocation29 + $0x1cc0] sm:$0xff]
    %v4547 = vld [vmem:[#allocation29 + $0x1cc8] sm:$0xff]
    %v4548 = vld [vmem:[#allocation29 + $0x1cd0] sm:$0xff]
    %v4549 = vld [vmem:[#allocation29 + $0x1cd8] sm:$0xff]
    %v4550 = vld [vmem:[#allocation29 + $0x1ce0] sm:$0xff]
    %v4551 = vld [vmem:[#allocation29 + $0x1ce8] sm:$0xff]
    %v4552 = vld [vmem:[#allocation29 + $0x1cf0] sm:$0xff]
    %v4553 = vld [vmem:[#allocation29 + $0x1cf8] sm:$0xff]
    %v4554 = vld [vmem:[#allocation29 + $0x1d00] sm:$0xff]
    %v4555 = vld [vmem:[#allocation29 + $0x1d08] sm:$0xff]
    %v4556 = vld [vmem:[#allocation29 + $0x1d10] sm:$0xff]
    %v4557 = vld [vmem:[#allocation29 + $0x1d18] sm:$0xff]
    %v4558 = vld [vmem:[#allocation29 + $0x1d20] sm:$0xff]
    %v4559 = vld [vmem:[#allocation29 + $0x1d28] sm:$0xff]
    %v4560 = vld [vmem:[#allocation29 + $0x1d30] sm:$0xff]
    %v4561 = vld [vmem:[#allocation29 + $0x1d38] sm:$0xff]
    %v4562 = vld [vmem:[#allocation29 + $0x1d40] sm:$0xff]
    %v4563 = vld [vmem:[#allocation29 + $0x1d48] sm:$0xff]
    %v4564 = vld [vmem:[#allocation29 + $0x1d50] sm:$0xff]
    %v4565 = vld [vmem:[#allocation29 + $0x1d58] sm:$0xff]
    %v4566 = vld [vmem:[#allocation29 + $0x1d60] sm:$0xff]
    %v4567 = vld [vmem:[#allocation29 + $0x1d68] sm:$0xff]
    %v4568 = vld [vmem:[#allocation29 + $0x1d70] sm:$0xff]
    %v4569 = vld [vmem:[#allocation29 + $0x1d78] sm:$0xff]
    %v4570 = vld [vmem:[#allocation29 + $0x1d80] sm:$0xff]
    %v4571 = vld [vmem:[#allocation29 + $0x1d88] sm:$0xff]
    %v4572 = vld [vmem:[#allocation29 + $0x1d90] sm:$0xff]
    %v4573 = vld [vmem:[#allocation29 + $0x1d98] sm:$0xff]
    %v4574 = vld [vmem:[#allocation29 + $0x1da0] sm:$0xff]
    %v4575 = vld [vmem:[#allocation29 + $0x1da8] sm:$0xff]
    %v4576 = vld [vmem:[#allocation29 + $0x1db0] sm:$0xff]
    %v4577 = vld [vmem:[#allocation29 + $0x1db8] sm:$0xff]
    %v4578 = vld [vmem:[#allocation29 + $0x1dc0] sm:$0xff]
    %v4579 = vld [vmem:[#allocation29 + $0x1dc8] sm:$0xff]
    %v4580 = vld [vmem:[#allocation29 + $0x1dd0] sm:$0xff]
    %v4581 = vld [vmem:[#allocation29 + $0x1dd8] sm:$0xff]
    %v4582 = vld [vmem:[#allocation29 + $0x1de0] sm:$0xff]
    %v4583 = vld [vmem:[#allocation29 + $0x1de8] sm:$0xff]
    %v4584 = vld [vmem:[#allocation29 + $0x1df0] sm:$0xff]
    %v4585 = vld [vmem:[#allocation29 + $0x1df8] sm:$0xff]
    %v4586 = vld [vmem:[#allocation29 + $0x1e00] sm:$0xff]
    %v4587 = vld [vmem:[#allocation29 + $0x1e08] sm:$0xff]
    %v4588 = vld [vmem:[#allocation29 + $0x1e10] sm:$0xff]
    %v4589 = vld [vmem:[#allocation29 + $0x1e18] sm:$0xff]
    %v4590 = vld [vmem:[#allocation29 + $0x1e20] sm:$0xff]
    %v4591 = vld [vmem:[#allocation29 + $0x1e28] sm:$0xff]
    %v4592 = vld [vmem:[#allocation29 + $0x1e30] sm:$0xff]
    %v4593 = vld [vmem:[#allocation29 + $0x1e38] sm:$0xff]
    %v4594 = vld [vmem:[#allocation29 + $0x1e40] sm:$0xff]
    %v4595 = vld [vmem:[#allocation29 + $0x1e48] sm:$0xff]
    %v4596 = vld [vmem:[#allocation29 + $0x1e50] sm:$0xff]
    %v4597 = vld [vmem:[#allocation29 + $0x1e58] sm:$0xff]
    %v4598 = vld [vmem:[#allocation29 + $0x1e60] sm:$0xff]
    %v4599 = vld [vmem:[#allocation29 + $0x1e68] sm:$0xff]
    %v4600 = vld [vmem:[#allocation29 + $0x1e70] sm:$0xff]
    %v4601 = vld [vmem:[#allocation29 + $0x1e78] sm:$0xff]
    %v4602 = vld [vmem:[#allocation29 + $0x1e80] sm:$0xff]
    %v4603 = vld [vmem:[#allocation29 + $0x1e88] sm:$0xff]
    %v4604 = vld [vmem:[#allocation29 + $0x1e90] sm:$0xff]
    %v4605 = vld [vmem:[#allocation29 + $0x1e98] sm:$0xff]
    %v4606 = vld [vmem:[#allocation29 + $0x1ea0] sm:$0xff]
    %v4607 = vld [vmem:[#allocation29 + $0x1ea8] sm:$0xff]
    %v4608 = vld [vmem:[#allocation29 + $0x1eb0] sm:$0xff]
    %v4609 = vld [vmem:[#allocation29 + $0x1eb8] sm:$0xff]
    %v4610 = vld [vmem:[#allocation29 + $0x1ec0] sm:$0xff]
    %v4611 = vld [vmem:[#allocation29 + $0x1ec8] sm:$0xff]
    %v4612 = vld [vmem:[#allocation29 + $0x1ed0] sm:$0xff]
    %v4613 = vld [vmem:[#allocation29 + $0x1ed8] sm:$0xff]
    %v4614 = vld [vmem:[#allocation29 + $0x1ee0] sm:$0xff]
    %v4615 = vld [vmem:[#allocation29 + $0x1ee8] sm:$0xff]
    %v4616 = vld [vmem:[#allocation29 + $0x1ef0] sm:$0xff]
    %v4617 = vld [vmem:[#allocation29 + $0x1ef8] sm:$0xff]
    %v4618 = vld [vmem:[#allocation29 + $0x1f00] sm:$0xff]
    %v4619 = vld [vmem:[#allocation29 + $0x1f08] sm:$0xff]
    %v4620 = vld [vmem:[#allocation29 + $0x1f10] sm:$0xff]
    %v4621 = vld [vmem:[#allocation29 + $0x1f18] sm:$0xff]
    %v4622 = vld [vmem:[#allocation29 + $0x1f20] sm:$0xff]
    %v4623 = vld [vmem:[#allocation29 + $0x1f28] sm:$0xff]
    %v4624 = vld [vmem:[#allocation29 + $0x1f30] sm:$0xff]
    %v4625 = vld [vmem:[#allocation29 + $0x1f38] sm:$0xff]
    %v4626 = vld [vmem:[#allocation29 + $0x1f40] sm:$0xff]
    %v4627 = vld [vmem:[#allocation29 + $0x1f48] sm:$0xff]
    %v4628 = vld [vmem:[#allocation29 + $0x1f50] sm:$0xff]
    %v4629 = vld [vmem:[#allocation29 + $0x1f58] sm:$0xff]
    %v4630 = vld [vmem:[#allocation29 + $0x1f60] sm:$0xff]
    %v4631 = vld [vmem:[#allocation29 + $0x1f68] sm:$0xff]
    %v4632 = vld [vmem:[#allocation29 + $0x1f70] sm:$0xff]
    %v4633 = vld [vmem:[#allocation29 + $0x1f78] sm:$0xff]
    %v4634 = vld [vmem:[#allocation29 + $0x1f80] sm:$0xff]
    %v4635 = vld [vmem:[#allocation29 + $0x1f88] sm:$0xff]
    %v4636 = vld [vmem:[#allocation29 + $0x1f90] sm:$0xff]
    %v4637 = vld [vmem:[#allocation29 + $0x1f98] sm:$0xff]
    %v4638 = vld [vmem:[#allocation29 + $0x1fa0] sm:$0xff]
    %v4639 = vld [vmem:[#allocation29 + $0x1fa8] sm:$0xff]
    %v4640 = vld [vmem:[#allocation29 + $0x1fb0] sm:$0xff]
    %v4641 = vld [vmem:[#allocation29 + $0x1fb8] sm:$0xff]
    %v4642 = vld [vmem:[#allocation29 + $0x1fc0] sm:$0xff]
    %v4643 = vld [vmem:[#allocation29 + $0x1fc8] sm:$0xff]
    %v4644 = vld [vmem:[#allocation29 + $0x1fd0] sm:$0xff]
    %v4645 = vld [vmem:[#allocation29 + $0x1fd8] sm:$0xff]
    %v4646 = vld [vmem:[#allocation29 + $0x1fe0] sm:$0xff]
    %v4647 = vld [vmem:[#allocation29 + $0x1fe8] sm:$0xff]
    %v4648 = vld [vmem:[#allocation29 + $0x1ff0] sm:$0xff]
    %v4649 = vld [vmem:[#allocation29 + $0x1ff8] sm:$0xff]
    %v4650 = vld [vmem:[#allocation31] sm:$0xff]
    %v4651 = vld [vmem:[#allocation31 + $0x8] sm:$0xff]
    %v4654 = vlaneseq
    %v4655 = vshrl.u32 %v4654, 7
    %v4656 = vsub.s32 0, %v4655
    %v4657 = vrot.slane %v4650, %v4656
    %v4658 = vlaneseq
    %v4659 = vshrl.u32 %v4658, 7
    %v4660 = vsub.s32 1, %v4659
    %v4661 = vrot.slane %v4650, %v4660
    %v4662 = vlaneseq
    %v4663 = vshrl.u32 %v4662, 7
    %v4664 = vsub.s32 2, %v4663
    %v4665 = vrot.slane %v4650, %v4664
    %v4666 = vlaneseq
    %v4667 = vshrl.u32 %v4666, 7
    %v4668 = vsub.s32 3, %v4667
    %v4669 = vrot.slane %v4650, %v4668
    %v4670 = vlaneseq
    %v4671 = vshrl.u32 %v4670, 7
    %v4672 = vsub.s32 4, %v4671
    %v4673 = vrot.slane %v4650, %v4672
    %v4674 = vlaneseq
    %v4675 = vshrl.u32 %v4674, 7
    %v4676 = vsub.s32 5, %v4675
    %v4677 = vrot.slane %v4650, %v4676
    %v4678 = vlaneseq
    %v4679 = vshrl.u32 %v4678, 7
    %v4680 = vsub.s32 6, %v4679
    %v4681 = vrot.slane %v4650, %v4680
    %v4682 = vlaneseq
    %v4683 = vshrl.u32 %v4682, 7
    %v4684 = vsub.s32 7, %v4683
    %v4685 = vrot.slane %v4650, %v4684
    %v4686 = vlaneseq
    %v4687 = vshrl.u32 %v4686, 7
    %v4688 = vsub.s32 0, %v4687
    %v4689 = vrot.slane %v4651, %v4688
    %v4690 = vlaneseq
    %v4691 = vshrl.u32 %v4690, 7
    %v4692 = vsub.s32 1, %v4691
    %v4693 = vrot.slane %v4651, %v4692
    %v4694 = vlaneseq
    %v4695 = vshrl.u32 %v4694, 7
    %v4696 = vsub.s32 2, %v4695
    %v4697 = vrot.slane %v4651, %v4696
    %v4698 = vlaneseq
    %v4699 = vshrl.u32 %v4698, 7
    %v4700 = vsub.s32 3, %v4699
    %v4701 = vrot.slane %v4651, %v4700
    %v4702 = vlaneseq
    %v4703 = vshrl.u32 %v4702, 7
    %v4704 = vsub.s32 4, %v4703
    %v4705 = vrot.slane %v4651, %v4704
    %v4706 = vlaneseq
    %v4707 = vshrl.u32 %v4706, 7
    %v4708 = vsub.s32 5, %v4707
    %v4709 = vrot.slane %v4651, %v4708
    %v4710 = vlaneseq
    %v4711 = vshrl.u32 %v4710, 7
    %v4712 = vsub.s32 6, %v4711
    %v4713 = vrot.slane %v4651, %v4712
    %v4714 = vlaneseq
    %v4715 = vshrl.u32 %v4714, 7
    %v4716 = vsub.s32 7, %v4715
    %v4717 = vrot.slane %v4651, %v4716
    %v5758 = vunpack.c.l.b16 %v3626
    %v5759 = vunpack.c.h.b16 %v3626
    %v5760 = vunpack.c.l.b16 %v3627
    %v5761 = vunpack.c.h.b16 %v3627
    %v5762 = vunpack.c.l.b16 %v3628
    %v5763 = vunpack.c.h.b16 %v3628
    %v5764 = vunpack.c.l.b16 %v3629
    %v5765 = vunpack.c.h.b16 %v3629
    %v5766 = vunpack.c.l.b16 %v3630
    %v5767 = vunpack.c.h.b16 %v3630
    %v5768 = vunpack.c.l.b16 %v3631
    %v5769 = vunpack.c.h.b16 %v3631
    %v5770 = vunpack.c.l.b16 %v3632
    %v5771 = vunpack.c.h.b16 %v3632
    %v5772 = vunpack.c.l.b16 %v3633
    %v5773 = vunpack.c.h.b16 %v3633
    %v5774 = vunpack.c.l.b16 %v3634
    %v5775 = vunpack.c.h.b16 %v3634
    %v5776 = vunpack.c.l.b16 %v3635
    %v5777 = vunpack.c.h.b16 %v3635
    %v5778 = vunpack.c.l.b16 %v3636
    %v5779 = vunpack.c.h.b16 %v3636
    %v5780 = vunpack.c.l.b16 %v3637
    %v5781 = vunpack.c.h.b16 %v3637
    %v5782 = vunpack.c.l.b16 %v3638
    %v5783 = vunpack.c.h.b16 %v3638
    %v5784 = vunpack.c.l.b16 %v3639
    %v5785 = vunpack.c.h.b16 %v3639
    %v5786 = vunpack.c.l.b16 %v3640
    %v5787 = vunpack.c.h.b16 %v3640
    %v5788 = vunpack.c.l.b16 %v3641
    %v5789 = vunpack.c.h.b16 %v3641
    %v5790 = vunpack.c.l.b16 %v3642
    %v5791 = vunpack.c.h.b16 %v3642
    %v5792 = vunpack.c.l.b16 %v3643
    %v5793 = vunpack.c.h.b16 %v3643
    %v5794 = vunpack.c.l.b16 %v3644
    %v5795 = vunpack.c.h.b16 %v3644
    %v5796 = vunpack.c.l.b16 %v3645
    %v5797 = vunpack.c.h.b16 %v3645
    %v5798 = vunpack.c.l.b16 %v3646
    %v5799 = vunpack.c.h.b16 %v3646
    %v5800 = vunpack.c.l.b16 %v3647
    %v5801 = vunpack.c.h.b16 %v3647
    %v5802 = vunpack.c.l.b16 %v3648
    %v5803 = vunpack.c.h.b16 %v3648
    %v5804 = vunpack.c.l.b16 %v3649
    %v5805 = vunpack.c.h.b16 %v3649
    %v5806 = vunpack.c.l.b16 %v3650
    %v5807 = vunpack.c.h.b16 %v3650
    %v5808 = vunpack.c.l.b16 %v3651
    %v5809 = vunpack.c.h.b16 %v3651
    %v5810 = vunpack.c.l.b16 %v3652
    %v5811 = vunpack.c.h.b16 %v3652
    %v5812 = vunpack.c.l.b16 %v3653
    %v5813 = vunpack.c.h.b16 %v3653
    %v5814 = vunpack.c.l.b16 %v3654
    %v5815 = vunpack.c.h.b16 %v3654
    %v5816 = vunpack.c.l.b16 %v3655
    %v5817 = vunpack.c.h.b16 %v3655
    %v5818 = vunpack.c.l.b16 %v3656
    %v5819 = vunpack.c.h.b16 %v3656
    %v5820 = vunpack.c.l.b16 %v3657
    %v5821 = vunpack.c.h.b16 %v3657
    %v5822 = vunpack.c.l.b16 %v3658
    %v5823 = vunpack.c.h.b16 %v3658
    %v5824 = vunpack.c.l.b16 %v3659
    %v5825 = vunpack.c.h.b16 %v3659
    %v5826 = vunpack.c.l.b16 %v3660
    %v5827 = vunpack.c.h.b16 %v3660
    %v5828 = vunpack.c.l.b16 %v3661
    %v5829 = vunpack.c.h.b16 %v3661
    %v5830 = vunpack.c.l.b16 %v3662
    %v5831 = vunpack.c.h.b16 %v3662
    %v5832 = vunpack.c.l.b16 %v3663
    %v5833 = vunpack.c.h.b16 %v3663
    %v5834 = vunpack.c.l.b16 %v3664
    %v5835 = vunpack.c.h.b16 %v3664
    %v5836 = vunpack.c.l.b16 %v3665
    %v5837 = vunpack.c.h.b16 %v3665
    %v5838 = vunpack.c.l.b16 %v3666
    %v5839 = vunpack.c.h.b16 %v3666
    %v5840 = vunpack.c.l.b16 %v3667
    %v5841 = vunpack.c.h.b16 %v3667
    %v5842 = vunpack.c.l.b16 %v3668
    %v5843 = vunpack.c.h.b16 %v3668
    %v5844 = vunpack.c.l.b16 %v3669
    %v5845 = vunpack.c.h.b16 %v3669
    %v5846 = vunpack.c.l.b16 %v3670
    %v5847 = vunpack.c.h.b16 %v3670
    %v5848 = vunpack.c.l.b16 %v3671
    %v5849 = vunpack.c.h.b16 %v3671
    %v5850 = vunpack.c.l.b16 %v3672
    %v5851 = vunpack.c.h.b16 %v3672
    %v5852 = vunpack.c.l.b16 %v3673
    %v5853 = vunpack.c.h.b16 %v3673
    %v5854 = vunpack.c.l.b16 %v3674
    %v5855 = vunpack.c.h.b16 %v3674
    %v5856 = vunpack.c.l.b16 %v3675
    %v5857 = vunpack.c.h.b16 %v3675
    %v5858 = vunpack.c.l.b16 %v3676
    %v5859 = vunpack.c.h.b16 %v3676
    %v5860 = vunpack.c.l.b16 %v3677
    %v5861 = vunpack.c.h.b16 %v3677
    %v5862 = vunpack.c.l.b16 %v3678
    %v5863 = vunpack.c.h.b16 %v3678
    %v5864 = vunpack.c.l.b16 %v3679
    %v5865 = vunpack.c.h.b16 %v3679
    %v5866 = vunpack.c.l.b16 %v3680
    %v5867 = vunpack.c.h.b16 %v3680
    %v5868 = vunpack.c.l.b16 %v3681
    %v5869 = vunpack.c.h.b16 %v3681
    %v5870 = vunpack.c.l.b16 %v3682
    %v5871 = vunpack.c.h.b16 %v3682
    %v5872 = vunpack.c.l.b16 %v3683
    %v5873 = vunpack.c.h.b16 %v3683
    %v5874 = vunpack.c.l.b16 %v3684
    %v5875 = vunpack.c.h.b16 %v3684
    %v5876 = vunpack.c.l.b16 %v3685
    %v5877 = vunpack.c.h.b16 %v3685
    %v5878 = vunpack.c.l.b16 %v3686
    %v5879 = vunpack.c.h.b16 %v3686
    %v5880 = vunpack.c.l.b16 %v3687
    %v5881 = vunpack.c.h.b16 %v3687
    %v5882 = vunpack.c.l.b16 %v3688
    %v5883 = vunpack.c.h.b16 %v3688
    %v5884 = vunpack.c.l.b16 %v3689
    %v5885 = vunpack.c.h.b16 %v3689
    %v5886 = vunpack.c.l.b16 %v3690
    %v5887 = vunpack.c.h.b16 %v3690
    %v5888 = vunpack.c.l.b16 %v3691
    %v5889 = vunpack.c.h.b16 %v3691
    %v5890 = vunpack.c.l.b16 %v3692
    %v5891 = vunpack.c.h.b16 %v3692
    %v5892 = vunpack.c.l.b16 %v3693
    %v5893 = vunpack.c.h.b16 %v3693
    %v5894 = vunpack.c.l.b16 %v3694
    %v5895 = vunpack.c.h.b16 %v3694
    %v5896 = vunpack.c.l.b16 %v3695
    %v5897 = vunpack.c.h.b16 %v3695
    %v5898 = vunpack.c.l.b16 %v3696
    %v5899 = vunpack.c.h.b16 %v3696
    %v5900 = vunpack.c.l.b16 %v3697
    %v5901 = vunpack.c.h.b16 %v3697
    %v5902 = vunpack.c.l.b16 %v3698
    %v5903 = vunpack.c.h.b16 %v3698
    %v5904 = vunpack.c.l.b16 %v3699
    %v5905 = vunpack.c.h.b16 %v3699
    %v5906 = vunpack.c.l.b16 %v3700
    %v5907 = vunpack.c.h.b16 %v3700
    %v5908 = vunpack.c.l.b16 %v3701
    %v5909 = vunpack.c.h.b16 %v3701
    %v5910 = vunpack.c.l.b16 %v3702
    %v5911 = vunpack.c.h.b16 %v3702
    %v5912 = vunpack.c.l.b16 %v3703
    %v5913 = vunpack.c.h.b16 %v3703
    %v5914 = vunpack.c.l.b16 %v3704
    %v5915 = vunpack.c.h.b16 %v3704
    %v5916 = vunpack.c.l.b16 %v3705
    %v5917 = vunpack.c.h.b16 %v3705
    %v5918 = vunpack.c.l.b16 %v3706
    %v5919 = vunpack.c.h.b16 %v3706
    %v5920 = vunpack.c.l.b16 %v3707
    %v5921 = vunpack.c.h.b16 %v3707
    %v5922 = vunpack.c.l.b16 %v3708
    %v5923 = vunpack.c.h.b16 %v3708
    %v5924 = vunpack.c.l.b16 %v3709
    %v5925 = vunpack.c.h.b16 %v3709
    %v5926 = vunpack.c.l.b16 %v3710
    %v5927 = vunpack.c.h.b16 %v3710
    %v5928 = vunpack.c.l.b16 %v3711
    %v5929 = vunpack.c.h.b16 %v3711
    %v5930 = vunpack.c.l.b16 %v3712
    %v5931 = vunpack.c.h.b16 %v3712
    %v5932 = vunpack.c.l.b16 %v3713
    %v5933 = vunpack.c.h.b16 %v3713
    %v5934 = vunpack.c.l.b16 %v3714
    %v5935 = vunpack.c.h.b16 %v3714
    %v5936 = vunpack.c.l.b16 %v3715
    %v5937 = vunpack.c.h.b16 %v3715
    %v5938 = vunpack.c.l.b16 %v3716
    %v5939 = vunpack.c.h.b16 %v3716
    %v5940 = vunpack.c.l.b16 %v3717
    %v5941 = vunpack.c.h.b16 %v3717
    %v5942 = vunpack.c.l.b16 %v3718
    %v5943 = vunpack.c.h.b16 %v3718
    %v5944 = vunpack.c.l.b16 %v3719
    %v5945 = vunpack.c.h.b16 %v3719
    %v5946 = vunpack.c.l.b16 %v3720
    %v5947 = vunpack.c.h.b16 %v3720
    %v5948 = vunpack.c.l.b16 %v3721
    %v5949 = vunpack.c.h.b16 %v3721
    %v5950 = vunpack.c.l.b16 %v3722
    %v5951 = vunpack.c.h.b16 %v3722
    %v5952 = vunpack.c.l.b16 %v3723
    %v5953 = vunpack.c.h.b16 %v3723
    %v5954 = vunpack.c.l.b16 %v3724
    %v5955 = vunpack.c.h.b16 %v3724
    %v5956 = vunpack.c.l.b16 %v3725
    %v5957 = vunpack.c.h.b16 %v3725
    %v5958 = vunpack.c.l.b16 %v3726
    %v5959 = vunpack.c.h.b16 %v3726
    %v5960 = vunpack.c.l.b16 %v3727
    %v5961 = vunpack.c.h.b16 %v3727
    %v5962 = vunpack.c.l.b16 %v3728
    %v5963 = vunpack.c.h.b16 %v3728
    %v5964 = vunpack.c.l.b16 %v3729
    %v5965 = vunpack.c.h.b16 %v3729
    %v5966 = vunpack.c.l.b16 %v3730
    %v5967 = vunpack.c.h.b16 %v3730
    %v5968 = vunpack.c.l.b16 %v3731
    %v5969 = vunpack.c.h.b16 %v3731
    %v5970 = vunpack.c.l.b16 %v3732
    %v5971 = vunpack.c.h.b16 %v3732
    %v5972 = vunpack.c.l.b16 %v3733
    %v5973 = vunpack.c.h.b16 %v3733
    %v5974 = vunpack.c.l.b16 %v3734
    %v5975 = vunpack.c.h.b16 %v3734
    %v5976 = vunpack.c.l.b16 %v3735
    %v5977 = vunpack.c.h.b16 %v3735
    %v5978 = vunpack.c.l.b16 %v3736
    %v5979 = vunpack.c.h.b16 %v3736
    %v5980 = vunpack.c.l.b16 %v3737
    %v5981 = vunpack.c.h.b16 %v3737
    %v5982 = vunpack.c.l.b16 %v3738
    %v5983 = vunpack.c.h.b16 %v3738
    %v5984 = vunpack.c.l.b16 %v3739
    %v5985 = vunpack.c.h.b16 %v3739
    %v5986 = vunpack.c.l.b16 %v3740
    %v5987 = vunpack.c.h.b16 %v3740
    %v5988 = vunpack.c.l.b16 %v3741
    %v5989 = vunpack.c.h.b16 %v3741
    %v5990 = vunpack.c.l.b16 %v3742
    %v5991 = vunpack.c.h.b16 %v3742
    %v5992 = vunpack.c.l.b16 %v3743
    %v5993 = vunpack.c.h.b16 %v3743
    %v5994 = vunpack.c.l.b16 %v3744
    %v5995 = vunpack.c.h.b16 %v3744
    %v5996 = vunpack.c.l.b16 %v3745
    %v5997 = vunpack.c.h.b16 %v3745
    %v5998 = vunpack.c.l.b16 %v3746
    %v5999 = vunpack.c.h.b16 %v3746
    %v6000 = vunpack.c.l.b16 %v3747
    %v6001 = vunpack.c.h.b16 %v3747
    %v6002 = vunpack.c.l.b16 %v3748
    %v6003 = vunpack.c.h.b16 %v3748
    %v6004 = vunpack.c.l.b16 %v3749
    %v6005 = vunpack.c.h.b16 %v3749
    %v6006 = vunpack.c.l.b16 %v3750
    %v6007 = vunpack.c.h.b16 %v3750
    %v6008 = vunpack.c.l.b16 %v3751
    %v6009 = vunpack.c.h.b16 %v3751
    %v6010 = vunpack.c.l.b16 %v3752
    %v6011 = vunpack.c.h.b16 %v3752
    %v6012 = vunpack.c.l.b16 %v3753
    %v6013 = vunpack.c.h.b16 %v3753
    %v6014 = vunpack.c.l.b16 %v3754
    %v6015 = vunpack.c.h.b16 %v3754
    %v6016 = vunpack.c.l.b16 %v3755
    %v6017 = vunpack.c.h.b16 %v3755
    %v6018 = vunpack.c.l.b16 %v3756
    %v6019 = vunpack.c.h.b16 %v3756
    %v6020 = vunpack.c.l.b16 %v3757
    %v6021 = vunpack.c.h.b16 %v3757
    %v6022 = vunpack.c.l.b16 %v3758
    %v6023 = vunpack.c.h.b16 %v3758
    %v6024 = vunpack.c.l.b16 %v3759
    %v6025 = vunpack.c.h.b16 %v3759
    %v6026 = vunpack.c.l.b16 %v3760
    %v6027 = vunpack.c.h.b16 %v3760
    %v6028 = vunpack.c.l.b16 %v3761
    %v6029 = vunpack.c.h.b16 %v3761
    %v6030 = vunpack.c.l.b16 %v3762
    %v6031 = vunpack.c.h.b16 %v3762
    %v6032 = vunpack.c.l.b16 %v3763
    %v6033 = vunpack.c.h.b16 %v3763
    %v6034 = vunpack.c.l.b16 %v3764
    %v6035 = vunpack.c.h.b16 %v3764
    %v6036 = vunpack.c.l.b16 %v3765
    %v6037 = vunpack.c.h.b16 %v3765
    %v6038 = vunpack.c.l.b16 %v3766
    %v6039 = vunpack.c.h.b16 %v3766
    %v6040 = vunpack.c.l.b16 %v3767
    %v6041 = vunpack.c.h.b16 %v3767
    %v6042 = vunpack.c.l.b16 %v3768
    %v6043 = vunpack.c.h.b16 %v3768
    %v6044 = vunpack.c.l.b16 %v3769
    %v6045 = vunpack.c.h.b16 %v3769
    %v6046 = vunpack.c.l.b16 %v3770
    %v6047 = vunpack.c.h.b16 %v3770
    %v6048 = vunpack.c.l.b16 %v3771
    %v6049 = vunpack.c.h.b16 %v3771
    %v6050 = vunpack.c.l.b16 %v3772
    %v6051 = vunpack.c.h.b16 %v3772
    %v6052 = vunpack.c.l.b16 %v3773
    %v6053 = vunpack.c.h.b16 %v3773
    %v6054 = vunpack.c.l.b16 %v3774
    %v6055 = vunpack.c.h.b16 %v3774
    %v6056 = vunpack.c.l.b16 %v3775
    %v6057 = vunpack.c.h.b16 %v3775
    %v6058 = vunpack.c.l.b16 %v3776
    %v6059 = vunpack.c.h.b16 %v3776
    %v6060 = vunpack.c.l.b16 %v3777
    %v6061 = vunpack.c.h.b16 %v3777
    %v6062 = vunpack.c.l.b16 %v3778
    %v6063 = vunpack.c.h.b16 %v3778
    %v6064 = vunpack.c.l.b16 %v3779
    %v6065 = vunpack.c.h.b16 %v3779
    %v6066 = vunpack.c.l.b16 %v3780
    %v6067 = vunpack.c.h.b16 %v3780
    %v6068 = vunpack.c.l.b16 %v3781
    %v6069 = vunpack.c.h.b16 %v3781
    %v6070 = vunpack.c.l.b16 %v3782
    %v6071 = vunpack.c.h.b16 %v3782
    %v6072 = vunpack.c.l.b16 %v3783
    %v6073 = vunpack.c.h.b16 %v3783
    %v6074 = vunpack.c.l.b16 %v3784
    %v6075 = vunpack.c.h.b16 %v3784
    %v6076 = vunpack.c.l.b16 %v3785
    %v6077 = vunpack.c.h.b16 %v3785
    %v6078 = vunpack.c.l.b16 %v3786
    %v6079 = vunpack.c.h.b16 %v3786
    %v6080 = vunpack.c.l.b16 %v3787
    %v6081 = vunpack.c.h.b16 %v3787
    %v6082 = vunpack.c.l.b16 %v3788
    %v6083 = vunpack.c.h.b16 %v3788
    %v6084 = vunpack.c.l.b16 %v3789
    %v6085 = vunpack.c.h.b16 %v3789
    %v6086 = vunpack.c.l.b16 %v3790
    %v6087 = vunpack.c.h.b16 %v3790
    %v6088 = vunpack.c.l.b16 %v3791
    %v6089 = vunpack.c.h.b16 %v3791
    %v6090 = vunpack.c.l.b16 %v3792
    %v6091 = vunpack.c.h.b16 %v3792
    %v6092 = vunpack.c.l.b16 %v3793
    %v6093 = vunpack.c.h.b16 %v3793
    %v6094 = vunpack.c.l.b16 %v3794
    %v6095 = vunpack.c.h.b16 %v3794
    %v6096 = vunpack.c.l.b16 %v3795
    %v6097 = vunpack.c.h.b16 %v3795
    %v6098 = vunpack.c.l.b16 %v3796
    %v6099 = vunpack.c.h.b16 %v3796
    %v6100 = vunpack.c.l.b16 %v3797
    %v6101 = vunpack.c.h.b16 %v3797
    %v6102 = vunpack.c.l.b16 %v3798
    %v6103 = vunpack.c.h.b16 %v3798
    %v6104 = vunpack.c.l.b16 %v3799
    %v6105 = vunpack.c.h.b16 %v3799
    %v6106 = vunpack.c.l.b16 %v3800
    %v6107 = vunpack.c.h.b16 %v3800
    %v6108 = vunpack.c.l.b16 %v3801
    %v6109 = vunpack.c.h.b16 %v3801
    %v6110 = vunpack.c.l.b16 %v3802
    %v6111 = vunpack.c.h.b16 %v3802
    %v6112 = vunpack.c.l.b16 %v3803
    %v6113 = vunpack.c.h.b16 %v3803
    %v6114 = vunpack.c.l.b16 %v3804
    %v6115 = vunpack.c.h.b16 %v3804
    %v6116 = vunpack.c.l.b16 %v3805
    %v6117 = vunpack.c.h.b16 %v3805
    %v6118 = vunpack.c.l.b16 %v3806
    %v6119 = vunpack.c.h.b16 %v3806
    %v6120 = vunpack.c.l.b16 %v3807
    %v6121 = vunpack.c.h.b16 %v3807
    %v6122 = vunpack.c.l.b16 %v3808
    %v6123 = vunpack.c.h.b16 %v3808
    %v6124 = vunpack.c.l.b16 %v3809
    %v6125 = vunpack.c.h.b16 %v3809
    %v6126 = vunpack.c.l.b16 %v3810
    %v6127 = vunpack.c.h.b16 %v3810
    %v6128 = vunpack.c.l.b16 %v3811
    %v6129 = vunpack.c.h.b16 %v3811
    %v6130 = vunpack.c.l.b16 %v3812
    %v6131 = vunpack.c.h.b16 %v3812
    %v6132 = vunpack.c.l.b16 %v3813
    %v6133 = vunpack.c.h.b16 %v3813
    %v6134 = vunpack.c.l.b16 %v3814
    %v6135 = vunpack.c.h.b16 %v3814
    %v6136 = vunpack.c.l.b16 %v3815
    %v6137 = vunpack.c.h.b16 %v3815
    %v6138 = vunpack.c.l.b16 %v3816
    %v6139 = vunpack.c.h.b16 %v3816
    %v6140 = vunpack.c.l.b16 %v3817
    %v6141 = vunpack.c.h.b16 %v3817
    %v6142 = vunpack.c.l.b16 %v3818
    %v6143 = vunpack.c.h.b16 %v3818
    %v6144 = vunpack.c.l.b16 %v3819
    %v6145 = vunpack.c.h.b16 %v3819
    %v6146 = vunpack.c.l.b16 %v3820
    %v6147 = vunpack.c.h.b16 %v3820
    %v6148 = vunpack.c.l.b16 %v3821
    %v6149 = vunpack.c.h.b16 %v3821
    %v6150 = vunpack.c.l.b16 %v3822
    %v6151 = vunpack.c.h.b16 %v3822
    %v6152 = vunpack.c.l.b16 %v3823
    %v6153 = vunpack.c.h.b16 %v3823
    %v6154 = vunpack.c.l.b16 %v3824
    %v6155 = vunpack.c.h.b16 %v3824
    %v6156 = vunpack.c.l.b16 %v3825
    %v6157 = vunpack.c.h.b16 %v3825
    %v6158 = vunpack.c.l.b16 %v3826
    %v6159 = vunpack.c.h.b16 %v3826
    %v6160 = vunpack.c.l.b16 %v3827
    %v6161 = vunpack.c.h.b16 %v3827
    %v6162 = vunpack.c.l.b16 %v3828
    %v6163 = vunpack.c.h.b16 %v3828
    %v6164 = vunpack.c.l.b16 %v3829
    %v6165 = vunpack.c.h.b16 %v3829
    %v6166 = vunpack.c.l.b16 %v3830
    %v6167 = vunpack.c.h.b16 %v3830
    %v6168 = vunpack.c.l.b16 %v3831
    %v6169 = vunpack.c.h.b16 %v3831
    %v6170 = vunpack.c.l.b16 %v3832
    %v6171 = vunpack.c.h.b16 %v3832
    %v6172 = vunpack.c.l.b16 %v3833
    %v6173 = vunpack.c.h.b16 %v3833
    %v6174 = vunpack.c.l.b16 %v3834
    %v6175 = vunpack.c.h.b16 %v3834
    %v6176 = vunpack.c.l.b16 %v3835
    %v6177 = vunpack.c.h.b16 %v3835
    %v6178 = vunpack.c.l.b16 %v3836
    %v6179 = vunpack.c.h.b16 %v3836
    %v6180 = vunpack.c.l.b16 %v3837
    %v6181 = vunpack.c.h.b16 %v3837
    %v6182 = vunpack.c.l.b16 %v3838
    %v6183 = vunpack.c.h.b16 %v3838
    %v6184 = vunpack.c.l.b16 %v3839
    %v6185 = vunpack.c.h.b16 %v3839
    %v6186 = vunpack.c.l.b16 %v3840
    %v6187 = vunpack.c.h.b16 %v3840
    %v6188 = vunpack.c.l.b16 %v3841
    %v6189 = vunpack.c.h.b16 %v3841
    %v6190 = vunpack.c.l.b16 %v3842
    %v6191 = vunpack.c.h.b16 %v3842
    %v6192 = vunpack.c.l.b16 %v3843
    %v6193 = vunpack.c.h.b16 %v3843
    %v6194 = vunpack.c.l.b16 %v3844
    %v6195 = vunpack.c.h.b16 %v3844
    %v6196 = vunpack.c.l.b16 %v3845
    %v6197 = vunpack.c.h.b16 %v3845
    %v6198 = vunpack.c.l.b16 %v3846
    %v6199 = vunpack.c.h.b16 %v3846
    %v6200 = vunpack.c.l.b16 %v3847
    %v6201 = vunpack.c.h.b16 %v3847
    %v6202 = vunpack.c.l.b16 %v3848
    %v6203 = vunpack.c.h.b16 %v3848
    %v6204 = vunpack.c.l.b16 %v3849
    %v6205 = vunpack.c.h.b16 %v3849
    %v6206 = vunpack.c.l.b16 %v3850
    %v6207 = vunpack.c.h.b16 %v3850
    %v6208 = vunpack.c.l.b16 %v3851
    %v6209 = vunpack.c.h.b16 %v3851
    %v6210 = vunpack.c.l.b16 %v3852
    %v6211 = vunpack.c.h.b16 %v3852
    %v6212 = vunpack.c.l.b16 %v3853
    %v6213 = vunpack.c.h.b16 %v3853
    %v6214 = vunpack.c.l.b16 %v3854
    %v6215 = vunpack.c.h.b16 %v3854
    %v6216 = vunpack.c.l.b16 %v3855
    %v6217 = vunpack.c.h.b16 %v3855
    %v6218 = vunpack.c.l.b16 %v3856
    %v6219 = vunpack.c.h.b16 %v3856
    %v6220 = vunpack.c.l.b16 %v3857
    %v6221 = vunpack.c.h.b16 %v3857
    %v6222 = vunpack.c.l.b16 %v3858
    %v6223 = vunpack.c.h.b16 %v3858
    %v6224 = vunpack.c.l.b16 %v3859
    %v6225 = vunpack.c.h.b16 %v3859
    %v6226 = vunpack.c.l.b16 %v3860
    %v6227 = vunpack.c.h.b16 %v3860
    %v6228 = vunpack.c.l.b16 %v3861
    %v6229 = vunpack.c.h.b16 %v3861
    %v6230 = vunpack.c.l.b16 %v3862
    %v6231 = vunpack.c.h.b16 %v3862
    %v6232 = vunpack.c.l.b16 %v3863
    %v6233 = vunpack.c.h.b16 %v3863
    %v6234 = vunpack.c.l.b16 %v3864
    %v6235 = vunpack.c.h.b16 %v3864
    %v6236 = vunpack.c.l.b16 %v3865
    %v6237 = vunpack.c.h.b16 %v3865
    %v6238 = vunpack.c.l.b16 %v3866
    %v6239 = vunpack.c.h.b16 %v3866
    %v6240 = vunpack.c.l.b16 %v3867
    %v6241 = vunpack.c.h.b16 %v3867
    %v6242 = vunpack.c.l.b16 %v3868
    %v6243 = vunpack.c.h.b16 %v3868
    %v6244 = vunpack.c.l.b16 %v3869
    %v6245 = vunpack.c.h.b16 %v3869
    %v6246 = vunpack.c.l.b16 %v3870
    %v6247 = vunpack.c.h.b16 %v3870
    %v6248 = vunpack.c.l.b16 %v3871
    %v6249 = vunpack.c.h.b16 %v3871
    %v6250 = vunpack.c.l.b16 %v3872
    %v6251 = vunpack.c.h.b16 %v3872
    %v6252 = vunpack.c.l.b16 %v3873
    %v6253 = vunpack.c.h.b16 %v3873
    %v6254 = vunpack.c.l.b16 %v3874
    %v6255 = vunpack.c.h.b16 %v3874
    %v6256 = vunpack.c.l.b16 %v3875
    %v6257 = vunpack.c.h.b16 %v3875
    %v6258 = vunpack.c.l.b16 %v3876
    %v6259 = vunpack.c.h.b16 %v3876
    %v6260 = vunpack.c.l.b16 %v3877
    %v6261 = vunpack.c.h.b16 %v3877
    %v6262 = vunpack.c.l.b16 %v3878
    %v6263 = vunpack.c.h.b16 %v3878
    %v6264 = vunpack.c.l.b16 %v3879
    %v6265 = vunpack.c.h.b16 %v3879
    %v6266 = vunpack.c.l.b16 %v3880
    %v6267 = vunpack.c.h.b16 %v3880
    %v6268 = vunpack.c.l.b16 %v3881
    %v6269 = vunpack.c.h.b16 %v3881
    %v6270 = vunpack.c.l.b16 %v3882
    %v6271 = vunpack.c.h.b16 %v3882
    %v6272 = vunpack.c.l.b16 %v3883
    %v6273 = vunpack.c.h.b16 %v3883
    %v6274 = vunpack.c.l.b16 %v3884
    %v6275 = vunpack.c.h.b16 %v3884
    %v6276 = vunpack.c.l.b16 %v3885
    %v6277 = vunpack.c.h.b16 %v3885
    %v6278 = vunpack.c.l.b16 %v3886
    %v6279 = vunpack.c.h.b16 %v3886
    %v6280 = vunpack.c.l.b16 %v3887
    %v6281 = vunpack.c.h.b16 %v3887
    %v6282 = vunpack.c.l.b16 %v3888
    %v6283 = vunpack.c.h.b16 %v3888
    %v6284 = vunpack.c.l.b16 %v3889
    %v6285 = vunpack.c.h.b16 %v3889
    %v6286 = vunpack.c.l.b16 %v3890
    %v6287 = vunpack.c.h.b16 %v3890
    %v6288 = vunpack.c.l.b16 %v3891
    %v6289 = vunpack.c.h.b16 %v3891
    %v6290 = vunpack.c.l.b16 %v3892
    %v6291 = vunpack.c.h.b16 %v3892
    %v6292 = vunpack.c.l.b16 %v3893
    %v6293 = vunpack.c.h.b16 %v3893
    %v6294 = vunpack.c.l.b16 %v3894
    %v6295 = vunpack.c.h.b16 %v3894
    %v6296 = vunpack.c.l.b16 %v3895
    %v6297 = vunpack.c.h.b16 %v3895
    %v6298 = vunpack.c.l.b16 %v3896
    %v6299 = vunpack.c.h.b16 %v3896
    %v6300 = vunpack.c.l.b16 %v3897
    %v6301 = vunpack.c.h.b16 %v3897
    %v6302 = vunpack.c.l.b16 %v3898
    %v6303 = vunpack.c.h.b16 %v3898
    %v6304 = vunpack.c.l.b16 %v3899
    %v6305 = vunpack.c.h.b16 %v3899
    %v6306 = vunpack.c.l.b16 %v3900
    %v6307 = vunpack.c.h.b16 %v3900
    %v6308 = vunpack.c.l.b16 %v3901
    %v6309 = vunpack.c.h.b16 %v3901
    %v6310 = vunpack.c.l.b16 %v3902
    %v6311 = vunpack.c.h.b16 %v3902
    %v6312 = vunpack.c.l.b16 %v3903
    %v6313 = vunpack.c.h.b16 %v3903
    %v6314 = vunpack.c.l.b16 %v3904
    %v6315 = vunpack.c.h.b16 %v3904
    %v6316 = vunpack.c.l.b16 %v3905
    %v6317 = vunpack.c.h.b16 %v3905
    %v6318 = vunpack.c.l.b16 %v3906
    %v6319 = vunpack.c.h.b16 %v3906
    %v6320 = vunpack.c.l.b16 %v3907
    %v6321 = vunpack.c.h.b16 %v3907
    %v6322 = vunpack.c.l.b16 %v3908
    %v6323 = vunpack.c.h.b16 %v3908
    %v6324 = vunpack.c.l.b16 %v3909
    %v6325 = vunpack.c.h.b16 %v3909
    %v6326 = vunpack.c.l.b16 %v3910
    %v6327 = vunpack.c.h.b16 %v3910
    %v6328 = vunpack.c.l.b16 %v3911
    %v6329 = vunpack.c.h.b16 %v3911
    %v6330 = vunpack.c.l.b16 %v3912
    %v6331 = vunpack.c.h.b16 %v3912
    %v6332 = vunpack.c.l.b16 %v3913
    %v6333 = vunpack.c.h.b16 %v3913
    %v6334 = vunpack.c.l.b16 %v3914
    %v6335 = vunpack.c.h.b16 %v3914
    %v6336 = vunpack.c.l.b16 %v3915
    %v6337 = vunpack.c.h.b16 %v3915
    %v6338 = vunpack.c.l.b16 %v3916
    %v6339 = vunpack.c.h.b16 %v3916
    %v6340 = vunpack.c.l.b16 %v3917
    %v6341 = vunpack.c.h.b16 %v3917
    %v6342 = vunpack.c.l.b16 %v3918
    %v6343 = vunpack.c.h.b16 %v3918
    %v6344 = vunpack.c.l.b16 %v3919
    %v6345 = vunpack.c.h.b16 %v3919
    %v6346 = vunpack.c.l.b16 %v3920
    %v6347 = vunpack.c.h.b16 %v3920
    %v6348 = vunpack.c.l.b16 %v3921
    %v6349 = vunpack.c.h.b16 %v3921
    %v6350 = vunpack.c.l.b16 %v3922
    %v6351 = vunpack.c.h.b16 %v3922
    %v6352 = vunpack.c.l.b16 %v3923
    %v6353 = vunpack.c.h.b16 %v3923
    %v6354 = vunpack.c.l.b16 %v3924
    %v6355 = vunpack.c.h.b16 %v3924
    %v6356 = vunpack.c.l.b16 %v3925
    %v6357 = vunpack.c.h.b16 %v3925
    %v6358 = vunpack.c.l.b16 %v3926
    %v6359 = vunpack.c.h.b16 %v3926
    %v6360 = vunpack.c.l.b16 %v3927
    %v6361 = vunpack.c.h.b16 %v3927
    %v6362 = vunpack.c.l.b16 %v3928
    %v6363 = vunpack.c.h.b16 %v3928
    %v6364 = vunpack.c.l.b16 %v3929
    %v6365 = vunpack.c.h.b16 %v3929
    %v6366 = vunpack.c.l.b16 %v3930
    %v6367 = vunpack.c.h.b16 %v3930
    %v6368 = vunpack.c.l.b16 %v3931
    %v6369 = vunpack.c.h.b16 %v3931
    %v6370 = vunpack.c.l.b16 %v3932
    %v6371 = vunpack.c.h.b16 %v3932
    %v6372 = vunpack.c.l.b16 %v3933
    %v6373 = vunpack.c.h.b16 %v3933
    %v6374 = vunpack.c.l.b16 %v3934
    %v6375 = vunpack.c.h.b16 %v3934
    %v6376 = vunpack.c.l.b16 %v3935
    %v6377 = vunpack.c.h.b16 %v3935
    %v6378 = vunpack.c.l.b16 %v3936
    %v6379 = vunpack.c.h.b16 %v3936
    %v6380 = vunpack.c.l.b16 %v3937
    %v6381 = vunpack.c.h.b16 %v3937
    %v6382 = vunpack.c.l.b16 %v3938
    %v6383 = vunpack.c.h.b16 %v3938
    %v6384 = vunpack.c.l.b16 %v3939
    %v6385 = vunpack.c.h.b16 %v3939
    %v6386 = vunpack.c.l.b16 %v3940
    %v6387 = vunpack.c.h.b16 %v3940
    %v6388 = vunpack.c.l.b16 %v3941
    %v6389 = vunpack.c.h.b16 %v3941
    %v6390 = vunpack.c.l.b16 %v3942
    %v6391 = vunpack.c.h.b16 %v3942
    %v6392 = vunpack.c.l.b16 %v3943
    %v6393 = vunpack.c.h.b16 %v3943
    %v6394 = vunpack.c.l.b16 %v3944
    %v6395 = vunpack.c.h.b16 %v3944
    %v6396 = vunpack.c.l.b16 %v3945
    %v6397 = vunpack.c.h.b16 %v3945
    %v6398 = vunpack.c.l.b16 %v3946
    %v6399 = vunpack.c.h.b16 %v3946
    %v6400 = vunpack.c.l.b16 %v3947
    %v6401 = vunpack.c.h.b16 %v3947
    %v6402 = vunpack.c.l.b16 %v3948
    %v6403 = vunpack.c.h.b16 %v3948
    %v6404 = vunpack.c.l.b16 %v3949
    %v6405 = vunpack.c.h.b16 %v3949
    %v6406 = vunpack.c.l.b16 %v3950
    %v6407 = vunpack.c.h.b16 %v3950
    %v6408 = vunpack.c.l.b16 %v3951
    %v6409 = vunpack.c.h.b16 %v3951
    %v6410 = vunpack.c.l.b16 %v3952
    %v6411 = vunpack.c.h.b16 %v3952
    %v6412 = vunpack.c.l.b16 %v3953
    %v6413 = vunpack.c.h.b16 %v3953
    %v6414 = vunpack.c.l.b16 %v3954
    %v6415 = vunpack.c.h.b16 %v3954
    %v6416 = vunpack.c.l.b16 %v3955
    %v6417 = vunpack.c.h.b16 %v3955
    %v6418 = vunpack.c.l.b16 %v3956
    %v6419 = vunpack.c.h.b16 %v3956
    %v6420 = vunpack.c.l.b16 %v3957
    %v6421 = vunpack.c.h.b16 %v3957
    %v6422 = vunpack.c.l.b16 %v3958
    %v6423 = vunpack.c.h.b16 %v3958
    %v6424 = vunpack.c.l.b16 %v3959
    %v6425 = vunpack.c.h.b16 %v3959
    %v6426 = vunpack.c.l.b16 %v3960
    %v6427 = vunpack.c.h.b16 %v3960
    %v6428 = vunpack.c.l.b16 %v3961
    %v6429 = vunpack.c.h.b16 %v3961
    %v6430 = vunpack.c.l.b16 %v3962
    %v6431 = vunpack.c.h.b16 %v3962
    %v6432 = vunpack.c.l.b16 %v3963
    %v6433 = vunpack.c.h.b16 %v3963
    %v6434 = vunpack.c.l.b16 %v3964
    %v6435 = vunpack.c.h.b16 %v3964
    %v6436 = vunpack.c.l.b16 %v3965
    %v6437 = vunpack.c.h.b16 %v3965
    %v6438 = vunpack.c.l.b16 %v3966
    %v6439 = vunpack.c.h.b16 %v3966
    %v6440 = vunpack.c.l.b16 %v3967
    %v6441 = vunpack.c.h.b16 %v3967
    %v6442 = vunpack.c.l.b16 %v3968
    %v6443 = vunpack.c.h.b16 %v3968
    %v6444 = vunpack.c.l.b16 %v3969
    %v6445 = vunpack.c.h.b16 %v3969
    %v6446 = vunpack.c.l.b16 %v3970
    %v6447 = vunpack.c.h.b16 %v3970
    %v6448 = vunpack.c.l.b16 %v3971
    %v6449 = vunpack.c.h.b16 %v3971
    %v6450 = vunpack.c.l.b16 %v3972
    %v6451 = vunpack.c.h.b16 %v3972
    %v6452 = vunpack.c.l.b16 %v3973
    %v6453 = vunpack.c.h.b16 %v3973
    %v6454 = vunpack.c.l.b16 %v3974
    %v6455 = vunpack.c.h.b16 %v3974
    %v6456 = vunpack.c.l.b16 %v3975
    %v6457 = vunpack.c.h.b16 %v3975
    %v6458 = vunpack.c.l.b16 %v3976
    %v6459 = vunpack.c.h.b16 %v3976
    %v6460 = vunpack.c.l.b16 %v3977
    %v6461 = vunpack.c.h.b16 %v3977
    %v6462 = vunpack.c.l.b16 %v3978
    %v6463 = vunpack.c.h.b16 %v3978
    %v6464 = vunpack.c.l.b16 %v3979
    %v6465 = vunpack.c.h.b16 %v3979
    %v6466 = vunpack.c.l.b16 %v3980
    %v6467 = vunpack.c.h.b16 %v3980
    %v6468 = vunpack.c.l.b16 %v3981
    %v6469 = vunpack.c.h.b16 %v3981
    %v6470 = vunpack.c.l.b16 %v3982
    %v6471 = vunpack.c.h.b16 %v3982
    %v6472 = vunpack.c.l.b16 %v3983
    %v6473 = vunpack.c.h.b16 %v3983
    %v6474 = vunpack.c.l.b16 %v3984
    %v6475 = vunpack.c.h.b16 %v3984
    %v6476 = vunpack.c.l.b16 %v3985
    %v6477 = vunpack.c.h.b16 %v3985
    %v6478 = vunpack.c.l.b16 %v3986
    %v6479 = vunpack.c.h.b16 %v3986
    %v6480 = vunpack.c.l.b16 %v3987
    %v6481 = vunpack.c.h.b16 %v3987
    %v6482 = vunpack.c.l.b16 %v3988
    %v6483 = vunpack.c.h.b16 %v3988
    %v6484 = vunpack.c.l.b16 %v3989
    %v6485 = vunpack.c.h.b16 %v3989
    %v6486 = vunpack.c.l.b16 %v3990
    %v6487 = vunpack.c.h.b16 %v3990
    %v6488 = vunpack.c.l.b16 %v3991
    %v6489 = vunpack.c.h.b16 %v3991
    %v6490 = vunpack.c.l.b16 %v3992
    %v6491 = vunpack.c.h.b16 %v3992
    %v6492 = vunpack.c.l.b16 %v3993
    %v6493 = vunpack.c.h.b16 %v3993
    %v6494 = vunpack.c.l.b16 %v3994
    %v6495 = vunpack.c.h.b16 %v3994
    %v6496 = vunpack.c.l.b16 %v3995
    %v6497 = vunpack.c.h.b16 %v3995
    %v6498 = vunpack.c.l.b16 %v3996
    %v6499 = vunpack.c.h.b16 %v3996
    %v6500 = vunpack.c.l.b16 %v3997
    %v6501 = vunpack.c.h.b16 %v3997
    %v6502 = vunpack.c.l.b16 %v3998
    %v6503 = vunpack.c.h.b16 %v3998
    %v6504 = vunpack.c.l.b16 %v3999
    %v6505 = vunpack.c.h.b16 %v3999
    %v6506 = vunpack.c.l.b16 %v4000
    %v6507 = vunpack.c.h.b16 %v4000
    %v6508 = vunpack.c.l.b16 %v4001
    %v6509 = vunpack.c.h.b16 %v4001
    %v6510 = vunpack.c.l.b16 %v4002
    %v6511 = vunpack.c.h.b16 %v4002
    %v6512 = vunpack.c.l.b16 %v4003
    %v6513 = vunpack.c.h.b16 %v4003
    %v6514 = vunpack.c.l.b16 %v4004
    %v6515 = vunpack.c.h.b16 %v4004
    %v6516 = vunpack.c.l.b16 %v4005
    %v6517 = vunpack.c.h.b16 %v4005
    %v6518 = vunpack.c.l.b16 %v4006
    %v6519 = vunpack.c.h.b16 %v4006
    %v6520 = vunpack.c.l.b16 %v4007
    %v6521 = vunpack.c.h.b16 %v4007
    %v6522 = vunpack.c.l.b16 %v4008
    %v6523 = vunpack.c.h.b16 %v4008
    %v6524 = vunpack.c.l.b16 %v4009
    %v6525 = vunpack.c.h.b16 %v4009
    %v6526 = vunpack.c.l.b16 %v4010
    %v6527 = vunpack.c.h.b16 %v4010
    %v6528 = vunpack.c.l.b16 %v4011
    %v6529 = vunpack.c.h.b16 %v4011
    %v6530 = vunpack.c.l.b16 %v4012
    %v6531 = vunpack.c.h.b16 %v4012
    %v6532 = vunpack.c.l.b16 %v4013
    %v6533 = vunpack.c.h.b16 %v4013
    %v6534 = vunpack.c.l.b16 %v4014
    %v6535 = vunpack.c.h.b16 %v4014
    %v6536 = vunpack.c.l.b16 %v4015
    %v6537 = vunpack.c.h.b16 %v4015
    %v6538 = vunpack.c.l.b16 %v4016
    %v6539 = vunpack.c.h.b16 %v4016
    %v6540 = vunpack.c.l.b16 %v4017
    %v6541 = vunpack.c.h.b16 %v4017
    %v6542 = vunpack.c.l.b16 %v4018
    %v6543 = vunpack.c.h.b16 %v4018
    %v6544 = vunpack.c.l.b16 %v4019
    %v6545 = vunpack.c.h.b16 %v4019
    %v6546 = vunpack.c.l.b16 %v4020
    %v6547 = vunpack.c.h.b16 %v4020
    %v6548 = vunpack.c.l.b16 %v4021
    %v6549 = vunpack.c.h.b16 %v4021
    %v6550 = vunpack.c.l.b16 %v4022
    %v6551 = vunpack.c.h.b16 %v4022
    %v6552 = vunpack.c.l.b16 %v4023
    %v6553 = vunpack.c.h.b16 %v4023
    %v6554 = vunpack.c.l.b16 %v4024
    %v6555 = vunpack.c.h.b16 %v4024
    %v6556 = vunpack.c.l.b16 %v4025
    %v6557 = vunpack.c.h.b16 %v4025
    %v6558 = vunpack.c.l.b16 %v4026
    %v6559 = vunpack.c.h.b16 %v4026
    %v6560 = vunpack.c.l.b16 %v4027
    %v6561 = vunpack.c.h.b16 %v4027
    %v6562 = vunpack.c.l.b16 %v4028
    %v6563 = vunpack.c.h.b16 %v4028
    %v6564 = vunpack.c.l.b16 %v4029
    %v6565 = vunpack.c.h.b16 %v4029
    %v6566 = vunpack.c.l.b16 %v4030
    %v6567 = vunpack.c.h.b16 %v4030
    %v6568 = vunpack.c.l.b16 %v4031
    %v6569 = vunpack.c.h.b16 %v4031
    %v6570 = vunpack.c.l.b16 %v4032
    %v6571 = vunpack.c.h.b16 %v4032
    %v6572 = vunpack.c.l.b16 %v4033
    %v6573 = vunpack.c.h.b16 %v4033
    %v6574 = vunpack.c.l.b16 %v4034
    %v6575 = vunpack.c.h.b16 %v4034
    %v6576 = vunpack.c.l.b16 %v4035
    %v6577 = vunpack.c.h.b16 %v4035
    %v6578 = vunpack.c.l.b16 %v4036
    %v6579 = vunpack.c.h.b16 %v4036
    %v6580 = vunpack.c.l.b16 %v4037
    %v6581 = vunpack.c.h.b16 %v4037
    %v6582 = vunpack.c.l.b16 %v4038
    %v6583 = vunpack.c.h.b16 %v4038
    %v6584 = vunpack.c.l.b16 %v4039
    %v6585 = vunpack.c.h.b16 %v4039
    %v6586 = vunpack.c.l.b16 %v4040
    %v6587 = vunpack.c.h.b16 %v4040
    %v6588 = vunpack.c.l.b16 %v4041
    %v6589 = vunpack.c.h.b16 %v4041
    %v6590 = vunpack.c.l.b16 %v4042
    %v6591 = vunpack.c.h.b16 %v4042
    %v6592 = vunpack.c.l.b16 %v4043
    %v6593 = vunpack.c.h.b16 %v4043
    %v6594 = vunpack.c.l.b16 %v4044
    %v6595 = vunpack.c.h.b16 %v4044
    %v6596 = vunpack.c.l.b16 %v4045
    %v6597 = vunpack.c.h.b16 %v4045
    %v6598 = vunpack.c.l.b16 %v4046
    %v6599 = vunpack.c.h.b16 %v4046
    %v6600 = vunpack.c.l.b16 %v4047
    %v6601 = vunpack.c.h.b16 %v4047
    %v6602 = vunpack.c.l.b16 %v4048
    %v6603 = vunpack.c.h.b16 %v4048
    %v6604 = vunpack.c.l.b16 %v4049
    %v6605 = vunpack.c.h.b16 %v4049
    %v6606 = vunpack.c.l.b16 %v4050
    %v6607 = vunpack.c.h.b16 %v4050
    %v6608 = vunpack.c.l.b16 %v4051
    %v6609 = vunpack.c.h.b16 %v4051
    %v6610 = vunpack.c.l.b16 %v4052
    %v6611 = vunpack.c.h.b16 %v4052
    %v6612 = vunpack.c.l.b16 %v4053
    %v6613 = vunpack.c.h.b16 %v4053
    %v6614 = vunpack.c.l.b16 %v4054
    %v6615 = vunpack.c.h.b16 %v4054
    %v6616 = vunpack.c.l.b16 %v4055
    %v6617 = vunpack.c.h.b16 %v4055
    %v6618 = vunpack.c.l.b16 %v4056
    %v6619 = vunpack.c.h.b16 %v4056
    %v6620 = vunpack.c.l.b16 %v4057
    %v6621 = vunpack.c.h.b16 %v4057
    %v6622 = vunpack.c.l.b16 %v4058
    %v6623 = vunpack.c.h.b16 %v4058
    %v6624 = vunpack.c.l.b16 %v4059
    %v6625 = vunpack.c.h.b16 %v4059
    %v6626 = vunpack.c.l.b16 %v4060
    %v6627 = vunpack.c.h.b16 %v4060
    %v6628 = vunpack.c.l.b16 %v4061
    %v6629 = vunpack.c.h.b16 %v4061
    %v6630 = vunpack.c.l.b16 %v4062
    %v6631 = vunpack.c.h.b16 %v4062
    %v6632 = vunpack.c.l.b16 %v4063
    %v6633 = vunpack.c.h.b16 %v4063
    %v6634 = vunpack.c.l.b16 %v4064
    %v6635 = vunpack.c.h.b16 %v4064
    %v6636 = vunpack.c.l.b16 %v4065
    %v6637 = vunpack.c.h.b16 %v4065
    %v6638 = vunpack.c.l.b16 %v4066
    %v6639 = vunpack.c.h.b16 %v4066
    %v6640 = vunpack.c.l.b16 %v4067
    %v6641 = vunpack.c.h.b16 %v4067
    %v6642 = vunpack.c.l.b16 %v4068
    %v6643 = vunpack.c.h.b16 %v4068
    %v6644 = vunpack.c.l.b16 %v4069
    %v6645 = vunpack.c.h.b16 %v4069
    %v6646 = vunpack.c.l.b16 %v4070
    %v6647 = vunpack.c.h.b16 %v4070
    %v6648 = vunpack.c.l.b16 %v4071
    %v6649 = vunpack.c.h.b16 %v4071
    %v6650 = vunpack.c.l.b16 %v4072
    %v6651 = vunpack.c.h.b16 %v4072
    %v6652 = vunpack.c.l.b16 %v4073
    %v6653 = vunpack.c.h.b16 %v4073
    %v6654 = vunpack.c.l.b16 %v4074
    %v6655 = vunpack.c.h.b16 %v4074
    %v6656 = vunpack.c.l.b16 %v4075
    %v6657 = vunpack.c.h.b16 %v4075
    %v6658 = vunpack.c.l.b16 %v4076
    %v6659 = vunpack.c.h.b16 %v4076
    %v6660 = vunpack.c.l.b16 %v4077
    %v6661 = vunpack.c.h.b16 %v4077
    %v6662 = vunpack.c.l.b16 %v4078
    %v6663 = vunpack.c.h.b16 %v4078
    %v6664 = vunpack.c.l.b16 %v4079
    %v6665 = vunpack.c.h.b16 %v4079
    %v6666 = vunpack.c.l.b16 %v4080
    %v6667 = vunpack.c.h.b16 %v4080
    %v6668 = vunpack.c.l.b16 %v4081
    %v6669 = vunpack.c.h.b16 %v4081
    %v6670 = vunpack.c.l.b16 %v4082
    %v6671 = vunpack.c.h.b16 %v4082
    %v6672 = vunpack.c.l.b16 %v4083
    %v6673 = vunpack.c.h.b16 %v4083
    %v6674 = vunpack.c.l.b16 %v4084
    %v6675 = vunpack.c.h.b16 %v4084
    %v6676 = vunpack.c.l.b16 %v4085
    %v6677 = vunpack.c.h.b16 %v4085
    %v6678 = vunpack.c.l.b16 %v4086
    %v6679 = vunpack.c.h.b16 %v4086
    %v6680 = vunpack.c.l.b16 %v4087
    %v6681 = vunpack.c.h.b16 %v4087
    %v6682 = vunpack.c.l.b16 %v4088
    %v6683 = vunpack.c.h.b16 %v4088
    %v6684 = vunpack.c.l.b16 %v4089
    %v6685 = vunpack.c.h.b16 %v4089
    %v6686 = vunpack.c.l.b16 %v4090
    %v6687 = vunpack.c.h.b16 %v4090
    %v6688 = vunpack.c.l.b16 %v4091
    %v6689 = vunpack.c.h.b16 %v4091
    %v6690 = vunpack.c.l.b16 %v4092
    %v6691 = vunpack.c.h.b16 %v4092
    %v6692 = vunpack.c.l.b16 %v4093
    %v6693 = vunpack.c.h.b16 %v4093
    %v6694 = vunpack.c.l.b16 %v4094
    %v6695 = vunpack.c.h.b16 %v4094
    %v6696 = vunpack.c.l.b16 %v4095
    %v6697 = vunpack.c.h.b16 %v4095
    %v6698 = vunpack.c.l.b16 %v4096
    %v6699 = vunpack.c.h.b16 %v4096
    %v6700 = vunpack.c.l.b16 %v4097
    %v6701 = vunpack.c.h.b16 %v4097
    %v6702 = vunpack.c.l.b16 %v4098
    %v6703 = vunpack.c.h.b16 %v4098
    %v6704 = vunpack.c.l.b16 %v4099
    %v6705 = vunpack.c.h.b16 %v4099
    %v6706 = vunpack.c.l.b16 %v4100
    %v6707 = vunpack.c.h.b16 %v4100
    %v6708 = vunpack.c.l.b16 %v4101
    %v6709 = vunpack.c.h.b16 %v4101
    %v6710 = vunpack.c.l.b16 %v4102
    %v6711 = vunpack.c.h.b16 %v4102
    %v6712 = vunpack.c.l.b16 %v4103
    %v6713 = vunpack.c.h.b16 %v4103
    %v6714 = vunpack.c.l.b16 %v4104
    %v6715 = vunpack.c.h.b16 %v4104
    %v6716 = vunpack.c.l.b16 %v4105
    %v6717 = vunpack.c.h.b16 %v4105
    %v6718 = vunpack.c.l.b16 %v4106
    %v6719 = vunpack.c.h.b16 %v4106
    %v6720 = vunpack.c.l.b16 %v4107
    %v6721 = vunpack.c.h.b16 %v4107
    %v6722 = vunpack.c.l.b16 %v4108
    %v6723 = vunpack.c.h.b16 %v4108
    %v6724 = vunpack.c.l.b16 %v4109
    %v6725 = vunpack.c.h.b16 %v4109
    %v6726 = vunpack.c.l.b16 %v4110
    %v6727 = vunpack.c.h.b16 %v4110
    %v6728 = vunpack.c.l.b16 %v4111
    %v6729 = vunpack.c.h.b16 %v4111
    %v6730 = vunpack.c.l.b16 %v4112
    %v6731 = vunpack.c.h.b16 %v4112
    %v6732 = vunpack.c.l.b16 %v4113
    %v6733 = vunpack.c.h.b16 %v4113
    %v6734 = vunpack.c.l.b16 %v4114
    %v6735 = vunpack.c.h.b16 %v4114
    %v6736 = vunpack.c.l.b16 %v4115
    %v6737 = vunpack.c.h.b16 %v4115
    %v6738 = vunpack.c.l.b16 %v4116
    %v6739 = vunpack.c.h.b16 %v4116
    %v6740 = vunpack.c.l.b16 %v4117
    %v6741 = vunpack.c.h.b16 %v4117
    %v6742 = vunpack.c.l.b16 %v4118
    %v6743 = vunpack.c.h.b16 %v4118
    %v6744 = vunpack.c.l.b16 %v4119
    %v6745 = vunpack.c.h.b16 %v4119
    %v6746 = vunpack.c.l.b16 %v4120
    %v6747 = vunpack.c.h.b16 %v4120
    %v6748 = vunpack.c.l.b16 %v4121
    %v6749 = vunpack.c.h.b16 %v4121
    %v6750 = vunpack.c.l.b16 %v4122
    %v6751 = vunpack.c.h.b16 %v4122
    %v6752 = vunpack.c.l.b16 %v4123
    %v6753 = vunpack.c.h.b16 %v4123
    %v6754 = vunpack.c.l.b16 %v4124
    %v6755 = vunpack.c.h.b16 %v4124
    %v6756 = vunpack.c.l.b16 %v4125
    %v6757 = vunpack.c.h.b16 %v4125
    %v6758 = vunpack.c.l.b16 %v4126
    %v6759 = vunpack.c.h.b16 %v4126
    %v6760 = vunpack.c.l.b16 %v4127
    %v6761 = vunpack.c.h.b16 %v4127
    %v6762 = vunpack.c.l.b16 %v4128
    %v6763 = vunpack.c.h.b16 %v4128
    %v6764 = vunpack.c.l.b16 %v4129
    %v6765 = vunpack.c.h.b16 %v4129
    %v6766 = vunpack.c.l.b16 %v4130
    %v6767 = vunpack.c.h.b16 %v4130
    %v6768 = vunpack.c.l.b16 %v4131
    %v6769 = vunpack.c.h.b16 %v4131
    %v6770 = vunpack.c.l.b16 %v4132
    %v6771 = vunpack.c.h.b16 %v4132
    %v6772 = vunpack.c.l.b16 %v4133
    %v6773 = vunpack.c.h.b16 %v4133
    %v6774 = vunpack.c.l.b16 %v4134
    %v6775 = vunpack.c.h.b16 %v4134
    %v6776 = vunpack.c.l.b16 %v4135
    %v6777 = vunpack.c.h.b16 %v4135
    %v6778 = vunpack.c.l.b16 %v4136
    %v6779 = vunpack.c.h.b16 %v4136
    %v6780 = vunpack.c.l.b16 %v4137
    %v6781 = vunpack.c.h.b16 %v4137
    %v6782 = vunpack.c.l.b16 %v4138
    %v6783 = vunpack.c.h.b16 %v4138
    %v6784 = vunpack.c.l.b16 %v4139
    %v6785 = vunpack.c.h.b16 %v4139
    %v6786 = vunpack.c.l.b16 %v4140
    %v6787 = vunpack.c.h.b16 %v4140
    %v6788 = vunpack.c.l.b16 %v4141
    %v6789 = vunpack.c.h.b16 %v4141
    %v6790 = vunpack.c.l.b16 %v4142
    %v6791 = vunpack.c.h.b16 %v4142
    %v6792 = vunpack.c.l.b16 %v4143
    %v6793 = vunpack.c.h.b16 %v4143
    %v6794 = vunpack.c.l.b16 %v4144
    %v6795 = vunpack.c.h.b16 %v4144
    %v6796 = vunpack.c.l.b16 %v4145
    %v6797 = vunpack.c.h.b16 %v4145
    %v6798 = vunpack.c.l.b16 %v4146
    %v6799 = vunpack.c.h.b16 %v4146
    %v6800 = vunpack.c.l.b16 %v4147
    %v6801 = vunpack.c.h.b16 %v4147
    %v6802 = vunpack.c.l.b16 %v4148
    %v6803 = vunpack.c.h.b16 %v4148
    %v6804 = vunpack.c.l.b16 %v4149
    %v6805 = vunpack.c.h.b16 %v4149
    %v6806 = vunpack.c.l.b16 %v4150
    %v6807 = vunpack.c.h.b16 %v4150
    %v6808 = vunpack.c.l.b16 %v4151
    %v6809 = vunpack.c.h.b16 %v4151
    %v6810 = vunpack.c.l.b16 %v4152
    %v6811 = vunpack.c.h.b16 %v4152
    %v6812 = vunpack.c.l.b16 %v4153
    %v6813 = vunpack.c.h.b16 %v4153
    %v6814 = vunpack.c.l.b16 %v4154
    %v6815 = vunpack.c.h.b16 %v4154
    %v6816 = vunpack.c.l.b16 %v4155
    %v6817 = vunpack.c.h.b16 %v4155
    %v6818 = vunpack.c.l.b16 %v4156
    %v6819 = vunpack.c.h.b16 %v4156
    %v6820 = vunpack.c.l.b16 %v4157
    %v6821 = vunpack.c.h.b16 %v4157
    %v6822 = vunpack.c.l.b16 %v4158
    %v6823 = vunpack.c.h.b16 %v4158
    %v6824 = vunpack.c.l.b16 %v4159
    %v6825 = vunpack.c.h.b16 %v4159
    %v6826 = vunpack.c.l.b16 %v4160
    %v6827 = vunpack.c.h.b16 %v4160
    %v6828 = vunpack.c.l.b16 %v4161
    %v6829 = vunpack.c.h.b16 %v4161
    %v6830 = vunpack.c.l.b16 %v4162
    %v6831 = vunpack.c.h.b16 %v4162
    %v6832 = vunpack.c.l.b16 %v4163
    %v6833 = vunpack.c.h.b16 %v4163
    %v6834 = vunpack.c.l.b16 %v4164
    %v6835 = vunpack.c.h.b16 %v4164
    %v6836 = vunpack.c.l.b16 %v4165
    %v6837 = vunpack.c.h.b16 %v4165
    %v6838 = vunpack.c.l.b16 %v4166
    %v6839 = vunpack.c.h.b16 %v4166
    %v6840 = vunpack.c.l.b16 %v4167
    %v6841 = vunpack.c.h.b16 %v4167
    %v6842 = vunpack.c.l.b16 %v4168
    %v6843 = vunpack.c.h.b16 %v4168
    %v6844 = vunpack.c.l.b16 %v4169
    %v6845 = vunpack.c.h.b16 %v4169
    %v6846 = vunpack.c.l.b16 %v4170
    %v6847 = vunpack.c.h.b16 %v4170
    %v6848 = vunpack.c.l.b16 %v4171
    %v6849 = vunpack.c.h.b16 %v4171
    %v6850 = vunpack.c.l.b16 %v4172
    %v6851 = vunpack.c.h.b16 %v4172
    %v6852 = vunpack.c.l.b16 %v4173
    %v6853 = vunpack.c.h.b16 %v4173
    %v6854 = vunpack.c.l.b16 %v4174
    %v6855 = vunpack.c.h.b16 %v4174
    %v6856 = vunpack.c.l.b16 %v4175
    %v6857 = vunpack.c.h.b16 %v4175
    %v6858 = vunpack.c.l.b16 %v4176
    %v6859 = vunpack.c.h.b16 %v4176
    %v6860 = vunpack.c.l.b16 %v4177
    %v6861 = vunpack.c.h.b16 %v4177
    %v6862 = vunpack.c.l.b16 %v4178
    %v6863 = vunpack.c.h.b16 %v4178
    %v6864 = vunpack.c.l.b16 %v4179
    %v6865 = vunpack.c.h.b16 %v4179
    %v6866 = vunpack.c.l.b16 %v4180
    %v6867 = vunpack.c.h.b16 %v4180
    %v6868 = vunpack.c.l.b16 %v4181
    %v6869 = vunpack.c.h.b16 %v4181
    %v6870 = vunpack.c.l.b16 %v4182
    %v6871 = vunpack.c.h.b16 %v4182
    %v6872 = vunpack.c.l.b16 %v4183
    %v6873 = vunpack.c.h.b16 %v4183
    %v6874 = vunpack.c.l.b16 %v4184
    %v6875 = vunpack.c.h.b16 %v4184
    %v6876 = vunpack.c.l.b16 %v4185
    %v6877 = vunpack.c.h.b16 %v4185
    %v6878 = vunpack.c.l.b16 %v4186
    %v6879 = vunpack.c.h.b16 %v4186
    %v6880 = vunpack.c.l.b16 %v4187
    %v6881 = vunpack.c.h.b16 %v4187
    %v6882 = vunpack.c.l.b16 %v4188
    %v6883 = vunpack.c.h.b16 %v4188
    %v6884 = vunpack.c.l.b16 %v4189
    %v6885 = vunpack.c.h.b16 %v4189
    %v6886 = vunpack.c.l.b16 %v4190
    %v6887 = vunpack.c.h.b16 %v4190
    %v6888 = vunpack.c.l.b16 %v4191
    %v6889 = vunpack.c.h.b16 %v4191
    %v6890 = vunpack.c.l.b16 %v4192
    %v6891 = vunpack.c.h.b16 %v4192
    %v6892 = vunpack.c.l.b16 %v4193
    %v6893 = vunpack.c.h.b16 %v4193
    %v6894 = vunpack.c.l.b16 %v4194
    %v6895 = vunpack.c.h.b16 %v4194
    %v6896 = vunpack.c.l.b16 %v4195
    %v6897 = vunpack.c.h.b16 %v4195
    %v6898 = vunpack.c.l.b16 %v4196
    %v6899 = vunpack.c.h.b16 %v4196
    %v6900 = vunpack.c.l.b16 %v4197
    %v6901 = vunpack.c.h.b16 %v4197
    %v6902 = vunpack.c.l.b16 %v4198
    %v6903 = vunpack.c.h.b16 %v4198
    %v6904 = vunpack.c.l.b16 %v4199
    %v6905 = vunpack.c.h.b16 %v4199
    %v6906 = vunpack.c.l.b16 %v4200
    %v6907 = vunpack.c.h.b16 %v4200
    %v6908 = vunpack.c.l.b16 %v4201
    %v6909 = vunpack.c.h.b16 %v4201
    %v6910 = vunpack.c.l.b16 %v4202
    %v6911 = vunpack.c.h.b16 %v4202
    %v6912 = vunpack.c.l.b16 %v4203
    %v6913 = vunpack.c.h.b16 %v4203
    %v6914 = vunpack.c.l.b16 %v4204
    %v6915 = vunpack.c.h.b16 %v4204
    %v6916 = vunpack.c.l.b16 %v4205
    %v6917 = vunpack.c.h.b16 %v4205
    %v6918 = vunpack.c.l.b16 %v4206
    %v6919 = vunpack.c.h.b16 %v4206
    %v6920 = vunpack.c.l.b16 %v4207
    %v6921 = vunpack.c.h.b16 %v4207
    %v6922 = vunpack.c.l.b16 %v4208
    %v6923 = vunpack.c.h.b16 %v4208
    %v6924 = vunpack.c.l.b16 %v4209
    %v6925 = vunpack.c.h.b16 %v4209
    %v6926 = vunpack.c.l.b16 %v4210
    %v6927 = vunpack.c.h.b16 %v4210
    %v6928 = vunpack.c.l.b16 %v4211
    %v6929 = vunpack.c.h.b16 %v4211
    %v6930 = vunpack.c.l.b16 %v4212
    %v6931 = vunpack.c.h.b16 %v4212
    %v6932 = vunpack.c.l.b16 %v4213
    %v6933 = vunpack.c.h.b16 %v4213
    %v6934 = vunpack.c.l.b16 %v4214
    %v6935 = vunpack.c.h.b16 %v4214
    %v6936 = vunpack.c.l.b16 %v4215
    %v6937 = vunpack.c.h.b16 %v4215
    %v6938 = vunpack.c.l.b16 %v4216
    %v6939 = vunpack.c.h.b16 %v4216
    %v6940 = vunpack.c.l.b16 %v4217
    %v6941 = vunpack.c.h.b16 %v4217
    %v6942 = vunpack.c.l.b16 %v4218
    %v6943 = vunpack.c.h.b16 %v4218
    %v6944 = vunpack.c.l.b16 %v4219
    %v6945 = vunpack.c.h.b16 %v4219
    %v6946 = vunpack.c.l.b16 %v4220
    %v6947 = vunpack.c.h.b16 %v4220
    %v6948 = vunpack.c.l.b16 %v4221
    %v6949 = vunpack.c.h.b16 %v4221
    %v6950 = vunpack.c.l.b16 %v4222
    %v6951 = vunpack.c.h.b16 %v4222
    %v6952 = vunpack.c.l.b16 %v4223
    %v6953 = vunpack.c.h.b16 %v4223
    %v6954 = vunpack.c.l.b16 %v4224
    %v6955 = vunpack.c.h.b16 %v4224
    %v6956 = vunpack.c.l.b16 %v4225
    %v6957 = vunpack.c.h.b16 %v4225
    %v6958 = vunpack.c.l.b16 %v4226
    %v6959 = vunpack.c.h.b16 %v4226
    %v6960 = vunpack.c.l.b16 %v4227
    %v6961 = vunpack.c.h.b16 %v4227
    %v6962 = vunpack.c.l.b16 %v4228
    %v6963 = vunpack.c.h.b16 %v4228
    %v6964 = vunpack.c.l.b16 %v4229
    %v6965 = vunpack.c.h.b16 %v4229
    %v6966 = vunpack.c.l.b16 %v4230
    %v6967 = vunpack.c.h.b16 %v4230
    %v6968 = vunpack.c.l.b16 %v4231
    %v6969 = vunpack.c.h.b16 %v4231
    %v6970 = vunpack.c.l.b16 %v4232
    %v6971 = vunpack.c.h.b16 %v4232
    %v6972 = vunpack.c.l.b16 %v4233
    %v6973 = vunpack.c.h.b16 %v4233
    %v6974 = vunpack.c.l.b16 %v4234
    %v6975 = vunpack.c.h.b16 %v4234
    %v6976 = vunpack.c.l.b16 %v4235
    %v6977 = vunpack.c.h.b16 %v4235
    %v6978 = vunpack.c.l.b16 %v4236
    %v6979 = vunpack.c.h.b16 %v4236
    %v6980 = vunpack.c.l.b16 %v4237
    %v6981 = vunpack.c.h.b16 %v4237
    %v6982 = vunpack.c.l.b16 %v4238
    %v6983 = vunpack.c.h.b16 %v4238
    %v6984 = vunpack.c.l.b16 %v4239
    %v6985 = vunpack.c.h.b16 %v4239
    %v6986 = vunpack.c.l.b16 %v4240
    %v6987 = vunpack.c.h.b16 %v4240
    %v6988 = vunpack.c.l.b16 %v4241
    %v6989 = vunpack.c.h.b16 %v4241
    %v6990 = vunpack.c.l.b16 %v4242
    %v6991 = vunpack.c.h.b16 %v4242
    %v6992 = vunpack.c.l.b16 %v4243
    %v6993 = vunpack.c.h.b16 %v4243
    %v6994 = vunpack.c.l.b16 %v4244
    %v6995 = vunpack.c.h.b16 %v4244
    %v6996 = vunpack.c.l.b16 %v4245
    %v6997 = vunpack.c.h.b16 %v4245
    %v6998 = vunpack.c.l.b16 %v4246
    %v6999 = vunpack.c.h.b16 %v4246
    %v7000 = vunpack.c.l.b16 %v4247
    %v7001 = vunpack.c.h.b16 %v4247
    %v7002 = vunpack.c.l.b16 %v4248
    %v7003 = vunpack.c.h.b16 %v4248
    %v7004 = vunpack.c.l.b16 %v4249
    %v7005 = vunpack.c.h.b16 %v4249
    %v7006 = vunpack.c.l.b16 %v4250
    %v7007 = vunpack.c.h.b16 %v4250
    %v7008 = vunpack.c.l.b16 %v4251
    %v7009 = vunpack.c.h.b16 %v4251
    %v7010 = vunpack.c.l.b16 %v4252
    %v7011 = vunpack.c.h.b16 %v4252
    %v7012 = vunpack.c.l.b16 %v4253
    %v7013 = vunpack.c.h.b16 %v4253
    %v7014 = vunpack.c.l.b16 %v4254
    %v7015 = vunpack.c.h.b16 %v4254
    %v7016 = vunpack.c.l.b16 %v4255
    %v7017 = vunpack.c.h.b16 %v4255
    %v7018 = vunpack.c.l.b16 %v4256
    %v7019 = vunpack.c.h.b16 %v4256
    %v7020 = vunpack.c.l.b16 %v4257
    %v7021 = vunpack.c.h.b16 %v4257
    %v7022 = vunpack.c.l.b16 %v4258
    %v7023 = vunpack.c.h.b16 %v4258
    %v7024 = vunpack.c.l.b16 %v4259
    %v7025 = vunpack.c.h.b16 %v4259
    %v7026 = vunpack.c.l.b16 %v4260
    %v7027 = vunpack.c.h.b16 %v4260
    %v7028 = vunpack.c.l.b16 %v4261
    %v7029 = vunpack.c.h.b16 %v4261
    %v7030 = vunpack.c.l.b16 %v4262
    %v7031 = vunpack.c.h.b16 %v4262
    %v7032 = vunpack.c.l.b16 %v4263
    %v7033 = vunpack.c.h.b16 %v4263
    %v7034 = vunpack.c.l.b16 %v4264
    %v7035 = vunpack.c.h.b16 %v4264
    %v7036 = vunpack.c.l.b16 %v4265
    %v7037 = vunpack.c.h.b16 %v4265
    %v7038 = vunpack.c.l.b16 %v4266
    %v7039 = vunpack.c.h.b16 %v4266
    %v7040 = vunpack.c.l.b16 %v4267
    %v7041 = vunpack.c.h.b16 %v4267
    %v7042 = vunpack.c.l.b16 %v4268
    %v7043 = vunpack.c.h.b16 %v4268
    %v7044 = vunpack.c.l.b16 %v4269
    %v7045 = vunpack.c.h.b16 %v4269
    %v7046 = vunpack.c.l.b16 %v4270
    %v7047 = vunpack.c.h.b16 %v4270
    %v7048 = vunpack.c.l.b16 %v4271
    %v7049 = vunpack.c.h.b16 %v4271
    %v7050 = vunpack.c.l.b16 %v4272
    %v7051 = vunpack.c.h.b16 %v4272
    %v7052 = vunpack.c.l.b16 %v4273
    %v7053 = vunpack.c.h.b16 %v4273
    %v7054 = vunpack.c.l.b16 %v4274
    %v7055 = vunpack.c.h.b16 %v4274
    %v7056 = vunpack.c.l.b16 %v4275
    %v7057 = vunpack.c.h.b16 %v4275
    %v7058 = vunpack.c.l.b16 %v4276
    %v7059 = vunpack.c.h.b16 %v4276
    %v7060 = vunpack.c.l.b16 %v4277
    %v7061 = vunpack.c.h.b16 %v4277
    %v7062 = vunpack.c.l.b16 %v4278
    %v7063 = vunpack.c.h.b16 %v4278
    %v7064 = vunpack.c.l.b16 %v4279
    %v7065 = vunpack.c.h.b16 %v4279
    %v7066 = vunpack.c.l.b16 %v4280
    %v7067 = vunpack.c.h.b16 %v4280
    %v7068 = vunpack.c.l.b16 %v4281
    %v7069 = vunpack.c.h.b16 %v4281
    %v7070 = vunpack.c.l.b16 %v4282
    %v7071 = vunpack.c.h.b16 %v4282
    %v7072 = vunpack.c.l.b16 %v4283
    %v7073 = vunpack.c.h.b16 %v4283
    %v7074 = vunpack.c.l.b16 %v4284
    %v7075 = vunpack.c.h.b16 %v4284
    %v7076 = vunpack.c.l.b16 %v4285
    %v7077 = vunpack.c.h.b16 %v4285
    %v7078 = vunpack.c.l.b16 %v4286
    %v7079 = vunpack.c.h.b16 %v4286
    %v7080 = vunpack.c.l.b16 %v4287
    %v7081 = vunpack.c.h.b16 %v4287
    %v7082 = vunpack.c.l.b16 %v4288
    %v7083 = vunpack.c.h.b16 %v4288
    %v7084 = vunpack.c.l.b16 %v4289
    %v7085 = vunpack.c.h.b16 %v4289
    %v7086 = vunpack.c.l.b16 %v4290
    %v7087 = vunpack.c.h.b16 %v4290
    %v7088 = vunpack.c.l.b16 %v4291
    %v7089 = vunpack.c.h.b16 %v4291
    %v7090 = vunpack.c.l.b16 %v4292
    %v7091 = vunpack.c.h.b16 %v4292
    %v7092 = vunpack.c.l.b16 %v4293
    %v7093 = vunpack.c.h.b16 %v4293
    %v7094 = vunpack.c.l.b16 %v4294
    %v7095 = vunpack.c.h.b16 %v4294
    %v7096 = vunpack.c.l.b16 %v4295
    %v7097 = vunpack.c.h.b16 %v4295
    %v7098 = vunpack.c.l.b16 %v4296
    %v7099 = vunpack.c.h.b16 %v4296
    %v7100 = vunpack.c.l.b16 %v4297
    %v7101 = vunpack.c.h.b16 %v4297
    %v7102 = vunpack.c.l.b16 %v4298
    %v7103 = vunpack.c.h.b16 %v4298
    %v7104 = vunpack.c.l.b16 %v4299
    %v7105 = vunpack.c.h.b16 %v4299
    %v7106 = vunpack.c.l.b16 %v4300
    %v7107 = vunpack.c.h.b16 %v4300
    %v7108 = vunpack.c.l.b16 %v4301
    %v7109 = vunpack.c.h.b16 %v4301
    %v7110 = vunpack.c.l.b16 %v4302
    %v7111 = vunpack.c.h.b16 %v4302
    %v7112 = vunpack.c.l.b16 %v4303
    %v7113 = vunpack.c.h.b16 %v4303
    %v7114 = vunpack.c.l.b16 %v4304
    %v7115 = vunpack.c.h.b16 %v4304
    %v7116 = vunpack.c.l.b16 %v4305
    %v7117 = vunpack.c.h.b16 %v4305
    %v7118 = vunpack.c.l.b16 %v4306
    %v7119 = vunpack.c.h.b16 %v4306
    %v7120 = vunpack.c.l.b16 %v4307
    %v7121 = vunpack.c.h.b16 %v4307
    %v7122 = vunpack.c.l.b16 %v4308
    %v7123 = vunpack.c.h.b16 %v4308
    %v7124 = vunpack.c.l.b16 %v4309
    %v7125 = vunpack.c.h.b16 %v4309
    %v7126 = vunpack.c.l.b16 %v4310
    %v7127 = vunpack.c.h.b16 %v4310
    %v7128 = vunpack.c.l.b16 %v4311
    %v7129 = vunpack.c.h.b16 %v4311
    %v7130 = vunpack.c.l.b16 %v4312
    %v7131 = vunpack.c.h.b16 %v4312
    %v7132 = vunpack.c.l.b16 %v4313
    %v7133 = vunpack.c.h.b16 %v4313
    %v7134 = vunpack.c.l.b16 %v4314
    %v7135 = vunpack.c.h.b16 %v4314
    %v7136 = vunpack.c.l.b16 %v4315
    %v7137 = vunpack.c.h.b16 %v4315
    %v7138 = vunpack.c.l.b16 %v4316
    %v7139 = vunpack.c.h.b16 %v4316
    %v7140 = vunpack.c.l.b16 %v4317
    %v7141 = vunpack.c.h.b16 %v4317
    %v7142 = vunpack.c.l.b16 %v4318
    %v7143 = vunpack.c.h.b16 %v4318
    %v7144 = vunpack.c.l.b16 %v4319
    %v7145 = vunpack.c.h.b16 %v4319
    %v7146 = vunpack.c.l.b16 %v4320
    %v7147 = vunpack.c.h.b16 %v4320
    %v7148 = vunpack.c.l.b16 %v4321
    %v7149 = vunpack.c.h.b16 %v4321
    %v7150 = vunpack.c.l.b16 %v4322
    %v7151 = vunpack.c.h.b16 %v4322
    %v7152 = vunpack.c.l.b16 %v4323
    %v7153 = vunpack.c.h.b16 %v4323
    %v7154 = vunpack.c.l.b16 %v4324
    %v7155 = vunpack.c.h.b16 %v4324
    %v7156 = vunpack.c.l.b16 %v4325
    %v7157 = vunpack.c.h.b16 %v4325
    %v7158 = vunpack.c.l.b16 %v4326
    %v7159 = vunpack.c.h.b16 %v4326
    %v7160 = vunpack.c.l.b16 %v4327
    %v7161 = vunpack.c.h.b16 %v4327
    %v7162 = vunpack.c.l.b16 %v4328
    %v7163 = vunpack.c.h.b16 %v4328
    %v7164 = vunpack.c.l.b16 %v4329
    %v7165 = vunpack.c.h.b16 %v4329
    %v7166 = vunpack.c.l.b16 %v4330
    %v7167 = vunpack.c.h.b16 %v4330
    %v7168 = vunpack.c.l.b16 %v4331
    %v7169 = vunpack.c.h.b16 %v4331
    %v7170 = vunpack.c.l.b16 %v4332
    %v7171 = vunpack.c.h.b16 %v4332
    %v7172 = vunpack.c.l.b16 %v4333
    %v7173 = vunpack.c.h.b16 %v4333
    %v7174 = vunpack.c.l.b16 %v4334
    %v7175 = vunpack.c.h.b16 %v4334
    %v7176 = vunpack.c.l.b16 %v4335
    %v7177 = vunpack.c.h.b16 %v4335
    %v7178 = vunpack.c.l.b16 %v4336
    %v7179 = vunpack.c.h.b16 %v4336
    %v7180 = vunpack.c.l.b16 %v4337
    %v7181 = vunpack.c.h.b16 %v4337
    %v7182 = vunpack.c.l.b16 %v4338
    %v7183 = vunpack.c.h.b16 %v4338
    %v7184 = vunpack.c.l.b16 %v4339
    %v7185 = vunpack.c.h.b16 %v4339
    %v7186 = vunpack.c.l.b16 %v4340
    %v7187 = vunpack.c.h.b16 %v4340
    %v7188 = vunpack.c.l.b16 %v4341
    %v7189 = vunpack.c.h.b16 %v4341
    %v7190 = vunpack.c.l.b16 %v4342
    %v7191 = vunpack.c.h.b16 %v4342
    %v7192 = vunpack.c.l.b16 %v4343
    %v7193 = vunpack.c.h.b16 %v4343
    %v7194 = vunpack.c.l.b16 %v4344
    %v7195 = vunpack.c.h.b16 %v4344
    %v7196 = vunpack.c.l.b16 %v4345
    %v7197 = vunpack.c.h.b16 %v4345
    %v7198 = vunpack.c.l.b16 %v4346
    %v7199 = vunpack.c.h.b16 %v4346
    %v7200 = vunpack.c.l.b16 %v4347
    %v7201 = vunpack.c.h.b16 %v4347
    %v7202 = vunpack.c.l.b16 %v4348
    %v7203 = vunpack.c.h.b16 %v4348
    %v7204 = vunpack.c.l.b16 %v4349
    %v7205 = vunpack.c.h.b16 %v4349
    %v7206 = vunpack.c.l.b16 %v4350
    %v7207 = vunpack.c.h.b16 %v4350
    %v7208 = vunpack.c.l.b16 %v4351
    %v7209 = vunpack.c.h.b16 %v4351
    %v7210 = vunpack.c.l.b16 %v4352
    %v7211 = vunpack.c.h.b16 %v4352
    %v7212 = vunpack.c.l.b16 %v4353
    %v7213 = vunpack.c.h.b16 %v4353
    %v7214 = vunpack.c.l.b16 %v4354
    %v7215 = vunpack.c.h.b16 %v4354
    %v7216 = vunpack.c.l.b16 %v4355
    %v7217 = vunpack.c.h.b16 %v4355
    %v7218 = vunpack.c.l.b16 %v4356
    %v7219 = vunpack.c.h.b16 %v4356
    %v7220 = vunpack.c.l.b16 %v4357
    %v7221 = vunpack.c.h.b16 %v4357
    %v7222 = vunpack.c.l.b16 %v4358
    %v7223 = vunpack.c.h.b16 %v4358
    %v7224 = vunpack.c.l.b16 %v4359
    %v7225 = vunpack.c.h.b16 %v4359
    %v7226 = vunpack.c.l.b16 %v4360
    %v7227 = vunpack.c.h.b16 %v4360
    %v7228 = vunpack.c.l.b16 %v4361
    %v7229 = vunpack.c.h.b16 %v4361
    %v7230 = vunpack.c.l.b16 %v4362
    %v7231 = vunpack.c.h.b16 %v4362
    %v7232 = vunpack.c.l.b16 %v4363
    %v7233 = vunpack.c.h.b16 %v4363
    %v7234 = vunpack.c.l.b16 %v4364
    %v7235 = vunpack.c.h.b16 %v4364
    %v7236 = vunpack.c.l.b16 %v4365
    %v7237 = vunpack.c.h.b16 %v4365
    %v7238 = vunpack.c.l.b16 %v4366
    %v7239 = vunpack.c.h.b16 %v4366
    %v7240 = vunpack.c.l.b16 %v4367
    %v7241 = vunpack.c.h.b16 %v4367
    %v7242 = vunpack.c.l.b16 %v4368
    %v7243 = vunpack.c.h.b16 %v4368
    %v7244 = vunpack.c.l.b16 %v4369
    %v7245 = vunpack.c.h.b16 %v4369
    %v7246 = vunpack.c.l.b16 %v4370
    %v7247 = vunpack.c.h.b16 %v4370
    %v7248 = vunpack.c.l.b16 %v4371
    %v7249 = vunpack.c.h.b16 %v4371
    %v7250 = vunpack.c.l.b16 %v4372
    %v7251 = vunpack.c.h.b16 %v4372
    %v7252 = vunpack.c.l.b16 %v4373
    %v7253 = vunpack.c.h.b16 %v4373
    %v7254 = vunpack.c.l.b16 %v4374
    %v7255 = vunpack.c.h.b16 %v4374
    %v7256 = vunpack.c.l.b16 %v4375
    %v7257 = vunpack.c.h.b16 %v4375
    %v7258 = vunpack.c.l.b16 %v4376
    %v7259 = vunpack.c.h.b16 %v4376
    %v7260 = vunpack.c.l.b16 %v4377
    %v7261 = vunpack.c.h.b16 %v4377
    %v7262 = vunpack.c.l.b16 %v4378
    %v7263 = vunpack.c.h.b16 %v4378
    %v7264 = vunpack.c.l.b16 %v4379
    %v7265 = vunpack.c.h.b16 %v4379
    %v7266 = vunpack.c.l.b16 %v4380
    %v7267 = vunpack.c.h.b16 %v4380
    %v7268 = vunpack.c.l.b16 %v4381
    %v7269 = vunpack.c.h.b16 %v4381
    %v7270 = vunpack.c.l.b16 %v4382
    %v7271 = vunpack.c.h.b16 %v4382
    %v7272 = vunpack.c.l.b16 %v4383
    %v7273 = vunpack.c.h.b16 %v4383
    %v7274 = vunpack.c.l.b16 %v4384
    %v7275 = vunpack.c.h.b16 %v4384
    %v7276 = vunpack.c.l.b16 %v4385
    %v7277 = vunpack.c.h.b16 %v4385
    %v7278 = vunpack.c.l.b16 %v4386
    %v7279 = vunpack.c.h.b16 %v4386
    %v7280 = vunpack.c.l.b16 %v4387
    %v7281 = vunpack.c.h.b16 %v4387
    %v7282 = vunpack.c.l.b16 %v4388
    %v7283 = vunpack.c.h.b16 %v4388
    %v7284 = vunpack.c.l.b16 %v4389
    %v7285 = vunpack.c.h.b16 %v4389
    %v7286 = vunpack.c.l.b16 %v4390
    %v7287 = vunpack.c.h.b16 %v4390
    %v7288 = vunpack.c.l.b16 %v4391
    %v7289 = vunpack.c.h.b16 %v4391
    %v7290 = vunpack.c.l.b16 %v4392
    %v7291 = vunpack.c.h.b16 %v4392
    %v7292 = vunpack.c.l.b16 %v4393
    %v7293 = vunpack.c.h.b16 %v4393
    %v7294 = vunpack.c.l.b16 %v4394
    %v7295 = vunpack.c.h.b16 %v4394
    %v7296 = vunpack.c.l.b16 %v4395
    %v7297 = vunpack.c.h.b16 %v4395
    %v7298 = vunpack.c.l.b16 %v4396
    %v7299 = vunpack.c.h.b16 %v4396
    %v7300 = vunpack.c.l.b16 %v4397
    %v7301 = vunpack.c.h.b16 %v4397
    %v7302 = vunpack.c.l.b16 %v4398
    %v7303 = vunpack.c.h.b16 %v4398
    %v7304 = vunpack.c.l.b16 %v4399
    %v7305 = vunpack.c.h.b16 %v4399
    %v7306 = vunpack.c.l.b16 %v4400
    %v7307 = vunpack.c.h.b16 %v4400
    %v7308 = vunpack.c.l.b16 %v4401
    %v7309 = vunpack.c.h.b16 %v4401
    %v7310 = vunpack.c.l.b16 %v4402
    %v7311 = vunpack.c.h.b16 %v4402
    %v7312 = vunpack.c.l.b16 %v4403
    %v7313 = vunpack.c.h.b16 %v4403
    %v7314 = vunpack.c.l.b16 %v4404
    %v7315 = vunpack.c.h.b16 %v4404
    %v7316 = vunpack.c.l.b16 %v4405
    %v7317 = vunpack.c.h.b16 %v4405
    %v7318 = vunpack.c.l.b16 %v4406
    %v7319 = vunpack.c.h.b16 %v4406
    %v7320 = vunpack.c.l.b16 %v4407
    %v7321 = vunpack.c.h.b16 %v4407
    %v7322 = vunpack.c.l.b16 %v4408
    %v7323 = vunpack.c.h.b16 %v4408
    %v7324 = vunpack.c.l.b16 %v4409
    %v7325 = vunpack.c.h.b16 %v4409
    %v7326 = vunpack.c.l.b16 %v4410
    %v7327 = vunpack.c.h.b16 %v4410
    %v7328 = vunpack.c.l.b16 %v4411
    %v7329 = vunpack.c.h.b16 %v4411
    %v7330 = vunpack.c.l.b16 %v4412
    %v7331 = vunpack.c.h.b16 %v4412
    %v7332 = vunpack.c.l.b16 %v4413
    %v7333 = vunpack.c.h.b16 %v4413
    %v7334 = vunpack.c.l.b16 %v4414
    %v7335 = vunpack.c.h.b16 %v4414
    %v7336 = vunpack.c.l.b16 %v4415
    %v7337 = vunpack.c.h.b16 %v4415
    %v7338 = vunpack.c.l.b16 %v4416
    %v7339 = vunpack.c.h.b16 %v4416
    %v7340 = vunpack.c.l.b16 %v4417
    %v7341 = vunpack.c.h.b16 %v4417
    %v7342 = vunpack.c.l.b16 %v4418
    %v7343 = vunpack.c.h.b16 %v4418
    %v7344 = vunpack.c.l.b16 %v4419
    %v7345 = vunpack.c.h.b16 %v4419
    %v7346 = vunpack.c.l.b16 %v4420
    %v7347 = vunpack.c.h.b16 %v4420
    %v7348 = vunpack.c.l.b16 %v4421
    %v7349 = vunpack.c.h.b16 %v4421
    %v7350 = vunpack.c.l.b16 %v4422
    %v7351 = vunpack.c.h.b16 %v4422
    %v7352 = vunpack.c.l.b16 %v4423
    %v7353 = vunpack.c.h.b16 %v4423
    %v7354 = vunpack.c.l.b16 %v4424
    %v7355 = vunpack.c.h.b16 %v4424
    %v7356 = vunpack.c.l.b16 %v4425
    %v7357 = vunpack.c.h.b16 %v4425
    %v7358 = vunpack.c.l.b16 %v4426
    %v7359 = vunpack.c.h.b16 %v4426
    %v7360 = vunpack.c.l.b16 %v4427
    %v7361 = vunpack.c.h.b16 %v4427
    %v7362 = vunpack.c.l.b16 %v4428
    %v7363 = vunpack.c.h.b16 %v4428
    %v7364 = vunpack.c.l.b16 %v4429
    %v7365 = vunpack.c.h.b16 %v4429
    %v7366 = vunpack.c.l.b16 %v4430
    %v7367 = vunpack.c.h.b16 %v4430
    %v7368 = vunpack.c.l.b16 %v4431
    %v7369 = vunpack.c.h.b16 %v4431
    %v7370 = vunpack.c.l.b16 %v4432
    %v7371 = vunpack.c.h.b16 %v4432
    %v7372 = vunpack.c.l.b16 %v4433
    %v7373 = vunpack.c.h.b16 %v4433
    %v7374 = vunpack.c.l.b16 %v4434
    %v7375 = vunpack.c.h.b16 %v4434
    %v7376 = vunpack.c.l.b16 %v4435
    %v7377 = vunpack.c.h.b16 %v4435
    %v7378 = vunpack.c.l.b16 %v4436
    %v7379 = vunpack.c.h.b16 %v4436
    %v7380 = vunpack.c.l.b16 %v4437
    %v7381 = vunpack.c.h.b16 %v4437
    %v7382 = vunpack.c.l.b16 %v4438
    %v7383 = vunpack.c.h.b16 %v4438
    %v7384 = vunpack.c.l.b16 %v4439
    %v7385 = vunpack.c.h.b16 %v4439
    %v7386 = vunpack.c.l.b16 %v4440
    %v7387 = vunpack.c.h.b16 %v4440
    %v7388 = vunpack.c.l.b16 %v4441
    %v7389 = vunpack.c.h.b16 %v4441
    %v7390 = vunpack.c.l.b16 %v4442
    %v7391 = vunpack.c.h.b16 %v4442
    %v7392 = vunpack.c.l.b16 %v4443
    %v7393 = vunpack.c.h.b16 %v4443
    %v7394 = vunpack.c.l.b16 %v4444
    %v7395 = vunpack.c.h.b16 %v4444
    %v7396 = vunpack.c.l.b16 %v4445
    %v7397 = vunpack.c.h.b16 %v4445
    %v7398 = vunpack.c.l.b16 %v4446
    %v7399 = vunpack.c.h.b16 %v4446
    %v7400 = vunpack.c.l.b16 %v4447
    %v7401 = vunpack.c.h.b16 %v4447
    %v7402 = vunpack.c.l.b16 %v4448
    %v7403 = vunpack.c.h.b16 %v4448
    %v7404 = vunpack.c.l.b16 %v4449
    %v7405 = vunpack.c.h.b16 %v4449
    %v7406 = vunpack.c.l.b16 %v4450
    %v7407 = vunpack.c.h.b16 %v4450
    %v7408 = vunpack.c.l.b16 %v4451
    %v7409 = vunpack.c.h.b16 %v4451
    %v7410 = vunpack.c.l.b16 %v4452
    %v7411 = vunpack.c.h.b16 %v4452
    %v7412 = vunpack.c.l.b16 %v4453
    %v7413 = vunpack.c.h.b16 %v4453
    %v7414 = vunpack.c.l.b16 %v4454
    %v7415 = vunpack.c.h.b16 %v4454
    %v7416 = vunpack.c.l.b16 %v4455
    %v7417 = vunpack.c.h.b16 %v4455
    %v7418 = vunpack.c.l.b16 %v4456
    %v7419 = vunpack.c.h.b16 %v4456
    %v7420 = vunpack.c.l.b16 %v4457
    %v7421 = vunpack.c.h.b16 %v4457
    %v7422 = vunpack.c.l.b16 %v4458
    %v7423 = vunpack.c.h.b16 %v4458
    %v7424 = vunpack.c.l.b16 %v4459
    %v7425 = vunpack.c.h.b16 %v4459
    %v7426 = vunpack.c.l.b16 %v4460
    %v7427 = vunpack.c.h.b16 %v4460
    %v7428 = vunpack.c.l.b16 %v4461
    %v7429 = vunpack.c.h.b16 %v4461
    %v7430 = vunpack.c.l.b16 %v4462
    %v7431 = vunpack.c.h.b16 %v4462
    %v7432 = vunpack.c.l.b16 %v4463
    %v7433 = vunpack.c.h.b16 %v4463
    %v7434 = vunpack.c.l.b16 %v4464
    %v7435 = vunpack.c.h.b16 %v4464
    %v7436 = vunpack.c.l.b16 %v4465
    %v7437 = vunpack.c.h.b16 %v4465
    %v7438 = vunpack.c.l.b16 %v4466
    %v7439 = vunpack.c.h.b16 %v4466
    %v7440 = vunpack.c.l.b16 %v4467
    %v7441 = vunpack.c.h.b16 %v4467
    %v7442 = vunpack.c.l.b16 %v4468
    %v7443 = vunpack.c.h.b16 %v4468
    %v7444 = vunpack.c.l.b16 %v4469
    %v7445 = vunpack.c.h.b16 %v4469
    %v7446 = vunpack.c.l.b16 %v4470
    %v7447 = vunpack.c.h.b16 %v4470
    %v7448 = vunpack.c.l.b16 %v4471
    %v7449 = vunpack.c.h.b16 %v4471
    %v7450 = vunpack.c.l.b16 %v4472
    %v7451 = vunpack.c.h.b16 %v4472
    %v7452 = vunpack.c.l.b16 %v4473
    %v7453 = vunpack.c.h.b16 %v4473
    %v7454 = vunpack.c.l.b16 %v4474
    %v7455 = vunpack.c.h.b16 %v4474
    %v7456 = vunpack.c.l.b16 %v4475
    %v7457 = vunpack.c.h.b16 %v4475
    %v7458 = vunpack.c.l.b16 %v4476
    %v7459 = vunpack.c.h.b16 %v4476
    %v7460 = vunpack.c.l.b16 %v4477
    %v7461 = vunpack.c.h.b16 %v4477
    %v7462 = vunpack.c.l.b16 %v4478
    %v7463 = vunpack.c.h.b16 %v4478
    %v7464 = vunpack.c.l.b16 %v4479
    %v7465 = vunpack.c.h.b16 %v4479
    %v7466 = vunpack.c.l.b16 %v4480
    %v7467 = vunpack.c.h.b16 %v4480
    %v7468 = vunpack.c.l.b16 %v4481
    %v7469 = vunpack.c.h.b16 %v4481
    %v7470 = vunpack.c.l.b16 %v4482
    %v7471 = vunpack.c.h.b16 %v4482
    %v7472 = vunpack.c.l.b16 %v4483
    %v7473 = vunpack.c.h.b16 %v4483
    %v7474 = vunpack.c.l.b16 %v4484
    %v7475 = vunpack.c.h.b16 %v4484
    %v7476 = vunpack.c.l.b16 %v4485
    %v7477 = vunpack.c.h.b16 %v4485
    %v7478 = vunpack.c.l.b16 %v4486
    %v7479 = vunpack.c.h.b16 %v4486
    %v7480 = vunpack.c.l.b16 %v4487
    %v7481 = vunpack.c.h.b16 %v4487
    %v7482 = vunpack.c.l.b16 %v4488
    %v7483 = vunpack.c.h.b16 %v4488
    %v7484 = vunpack.c.l.b16 %v4489
    %v7485 = vunpack.c.h.b16 %v4489
    %v7486 = vunpack.c.l.b16 %v4490
    %v7487 = vunpack.c.h.b16 %v4490
    %v7488 = vunpack.c.l.b16 %v4491
    %v7489 = vunpack.c.h.b16 %v4491
    %v7490 = vunpack.c.l.b16 %v4492
    %v7491 = vunpack.c.h.b16 %v4492
    %v7492 = vunpack.c.l.b16 %v4493
    %v7493 = vunpack.c.h.b16 %v4493
    %v7494 = vunpack.c.l.b16 %v4494
    %v7495 = vunpack.c.h.b16 %v4494
    %v7496 = vunpack.c.l.b16 %v4495
    %v7497 = vunpack.c.h.b16 %v4495
    %v7498 = vunpack.c.l.b16 %v4496
    %v7499 = vunpack.c.h.b16 %v4496
    %v7500 = vunpack.c.l.b16 %v4497
    %v7501 = vunpack.c.h.b16 %v4497
    %v7502 = vunpack.c.l.b16 %v4498
    %v7503 = vunpack.c.h.b16 %v4498
    %v7504 = vunpack.c.l.b16 %v4499
    %v7505 = vunpack.c.h.b16 %v4499
    %v7506 = vunpack.c.l.b16 %v4500
    %v7507 = vunpack.c.h.b16 %v4500
    %v7508 = vunpack.c.l.b16 %v4501
    %v7509 = vunpack.c.h.b16 %v4501
    %v7510 = vunpack.c.l.b16 %v4502
    %v7511 = vunpack.c.h.b16 %v4502
    %v7512 = vunpack.c.l.b16 %v4503
    %v7513 = vunpack.c.h.b16 %v4503
    %v7514 = vunpack.c.l.b16 %v4504
    %v7515 = vunpack.c.h.b16 %v4504
    %v7516 = vunpack.c.l.b16 %v4505
    %v7517 = vunpack.c.h.b16 %v4505
    %v7518 = vunpack.c.l.b16 %v4506
    %v7519 = vunpack.c.h.b16 %v4506
    %v7520 = vunpack.c.l.b16 %v4507
    %v7521 = vunpack.c.h.b16 %v4507
    %v7522 = vunpack.c.l.b16 %v4508
    %v7523 = vunpack.c.h.b16 %v4508
    %v7524 = vunpack.c.l.b16 %v4509
    %v7525 = vunpack.c.h.b16 %v4509
    %v7526 = vunpack.c.l.b16 %v4510
    %v7527 = vunpack.c.h.b16 %v4510
    %v7528 = vunpack.c.l.b16 %v4511
    %v7529 = vunpack.c.h.b16 %v4511
    %v7530 = vunpack.c.l.b16 %v4512
    %v7531 = vunpack.c.h.b16 %v4512
    %v7532 = vunpack.c.l.b16 %v4513
    %v7533 = vunpack.c.h.b16 %v4513
    %v7534 = vunpack.c.l.b16 %v4514
    %v7535 = vunpack.c.h.b16 %v4514
    %v7536 = vunpack.c.l.b16 %v4515
    %v7537 = vunpack.c.h.b16 %v4515
    %v7538 = vunpack.c.l.b16 %v4516
    %v7539 = vunpack.c.h.b16 %v4516
    %v7540 = vunpack.c.l.b16 %v4517
    %v7541 = vunpack.c.h.b16 %v4517
    %v7542 = vunpack.c.l.b16 %v4518
    %v7543 = vunpack.c.h.b16 %v4518
    %v7544 = vunpack.c.l.b16 %v4519
    %v7545 = vunpack.c.h.b16 %v4519
    %v7546 = vunpack.c.l.b16 %v4520
    %v7547 = vunpack.c.h.b16 %v4520
    %v7548 = vunpack.c.l.b16 %v4521
    %v7549 = vunpack.c.h.b16 %v4521
    %v7550 = vunpack.c.l.b16 %v4522
    %v7551 = vunpack.c.h.b16 %v4522
    %v7552 = vunpack.c.l.b16 %v4523
    %v7553 = vunpack.c.h.b16 %v4523
    %v7554 = vunpack.c.l.b16 %v4524
    %v7555 = vunpack.c.h.b16 %v4524
    %v7556 = vunpack.c.l.b16 %v4525
    %v7557 = vunpack.c.h.b16 %v4525
    %v7558 = vunpack.c.l.b16 %v4526
    %v7559 = vunpack.c.h.b16 %v4526
    %v7560 = vunpack.c.l.b16 %v4527
    %v7561 = vunpack.c.h.b16 %v4527
    %v7562 = vunpack.c.l.b16 %v4528
    %v7563 = vunpack.c.h.b16 %v4528
    %v7564 = vunpack.c.l.b16 %v4529
    %v7565 = vunpack.c.h.b16 %v4529
    %v7566 = vunpack.c.l.b16 %v4530
    %v7567 = vunpack.c.h.b16 %v4530
    %v7568 = vunpack.c.l.b16 %v4531
    %v7569 = vunpack.c.h.b16 %v4531
    %v7570 = vunpack.c.l.b16 %v4532
    %v7571 = vunpack.c.h.b16 %v4532
    %v7572 = vunpack.c.l.b16 %v4533
    %v7573 = vunpack.c.h.b16 %v4533
    %v7574 = vunpack.c.l.b16 %v4534
    %v7575 = vunpack.c.h.b16 %v4534
    %v7576 = vunpack.c.l.b16 %v4535
    %v7577 = vunpack.c.h.b16 %v4535
    %v7578 = vunpack.c.l.b16 %v4536
    %v7579 = vunpack.c.h.b16 %v4536
    %v7580 = vunpack.c.l.b16 %v4537
    %v7581 = vunpack.c.h.b16 %v4537
    %v7582 = vunpack.c.l.b16 %v4538
    %v7583 = vunpack.c.h.b16 %v4538
    %v7584 = vunpack.c.l.b16 %v4539
    %v7585 = vunpack.c.h.b16 %v4539
    %v7586 = vunpack.c.l.b16 %v4540
    %v7587 = vunpack.c.h.b16 %v4540
    %v7588 = vunpack.c.l.b16 %v4541
    %v7589 = vunpack.c.h.b16 %v4541
    %v7590 = vunpack.c.l.b16 %v4542
    %v7591 = vunpack.c.h.b16 %v4542
    %v7592 = vunpack.c.l.b16 %v4543
    %v7593 = vunpack.c.h.b16 %v4543
    %v7594 = vunpack.c.l.b16 %v4544
    %v7595 = vunpack.c.h.b16 %v4544
    %v7596 = vunpack.c.l.b16 %v4545
    %v7597 = vunpack.c.h.b16 %v4545
    %v7598 = vunpack.c.l.b16 %v4546
    %v7599 = vunpack.c.h.b16 %v4546
    %v7600 = vunpack.c.l.b16 %v4547
    %v7601 = vunpack.c.h.b16 %v4547
    %v7602 = vunpack.c.l.b16 %v4548
    %v7603 = vunpack.c.h.b16 %v4548
    %v7604 = vunpack.c.l.b16 %v4549
    %v7605 = vunpack.c.h.b16 %v4549
    %v7606 = vunpack.c.l.b16 %v4550
    %v7607 = vunpack.c.h.b16 %v4550
    %v7608 = vunpack.c.l.b16 %v4551
    %v7609 = vunpack.c.h.b16 %v4551
    %v7610 = vunpack.c.l.b16 %v4552
    %v7611 = vunpack.c.h.b16 %v4552
    %v7612 = vunpack.c.l.b16 %v4553
    %v7613 = vunpack.c.h.b16 %v4553
    %v7614 = vunpack.c.l.b16 %v4554
    %v7615 = vunpack.c.h.b16 %v4554
    %v7616 = vunpack.c.l.b16 %v4555
    %v7617 = vunpack.c.h.b16 %v4555
    %v7618 = vunpack.c.l.b16 %v4556
    %v7619 = vunpack.c.h.b16 %v4556
    %v7620 = vunpack.c.l.b16 %v4557
    %v7621 = vunpack.c.h.b16 %v4557
    %v7622 = vunpack.c.l.b16 %v4558
    %v7623 = vunpack.c.h.b16 %v4558
    %v7624 = vunpack.c.l.b16 %v4559
    %v7625 = vunpack.c.h.b16 %v4559
    %v7626 = vunpack.c.l.b16 %v4560
    %v7627 = vunpack.c.h.b16 %v4560
    %v7628 = vunpack.c.l.b16 %v4561
    %v7629 = vunpack.c.h.b16 %v4561
    %v7630 = vunpack.c.l.b16 %v4562
    %v7631 = vunpack.c.h.b16 %v4562
    %v7632 = vunpack.c.l.b16 %v4563
    %v7633 = vunpack.c.h.b16 %v4563
    %v7634 = vunpack.c.l.b16 %v4564
    %v7635 = vunpack.c.h.b16 %v4564
    %v7636 = vunpack.c.l.b16 %v4565
    %v7637 = vunpack.c.h.b16 %v4565
    %v7638 = vunpack.c.l.b16 %v4566
    %v7639 = vunpack.c.h.b16 %v4566
    %v7640 = vunpack.c.l.b16 %v4567
    %v7641 = vunpack.c.h.b16 %v4567
    %v7642 = vunpack.c.l.b16 %v4568
    %v7643 = vunpack.c.h.b16 %v4568
    %v7644 = vunpack.c.l.b16 %v4569
    %v7645 = vunpack.c.h.b16 %v4569
    %v7646 = vunpack.c.l.b16 %v4570
    %v7647 = vunpack.c.h.b16 %v4570
    %v7648 = vunpack.c.l.b16 %v4571
    %v7649 = vunpack.c.h.b16 %v4571
    %v7650 = vunpack.c.l.b16 %v4572
    %v7651 = vunpack.c.h.b16 %v4572
    %v7652 = vunpack.c.l.b16 %v4573
    %v7653 = vunpack.c.h.b16 %v4573
    %v7654 = vunpack.c.l.b16 %v4574
    %v7655 = vunpack.c.h.b16 %v4574
    %v7656 = vunpack.c.l.b16 %v4575
    %v7657 = vunpack.c.h.b16 %v4575
    %v7658 = vunpack.c.l.b16 %v4576
    %v7659 = vunpack.c.h.b16 %v4576
    %v7660 = vunpack.c.l.b16 %v4577
    %v7661 = vunpack.c.h.b16 %v4577
    %v7662 = vunpack.c.l.b16 %v4578
    %v7663 = vunpack.c.h.b16 %v4578
    %v7664 = vunpack.c.l.b16 %v4579
    %v7665 = vunpack.c.h.b16 %v4579
    %v7666 = vunpack.c.l.b16 %v4580
    %v7667 = vunpack.c.h.b16 %v4580
    %v7668 = vunpack.c.l.b16 %v4581
    %v7669 = vunpack.c.h.b16 %v4581
    %v7670 = vunpack.c.l.b16 %v4582
    %v7671 = vunpack.c.h.b16 %v4582
    %v7672 = vunpack.c.l.b16 %v4583
    %v7673 = vunpack.c.h.b16 %v4583
    %v7674 = vunpack.c.l.b16 %v4584
    %v7675 = vunpack.c.h.b16 %v4584
    %v7676 = vunpack.c.l.b16 %v4585
    %v7677 = vunpack.c.h.b16 %v4585
    %v7678 = vunpack.c.l.b16 %v4586
    %v7679 = vunpack.c.h.b16 %v4586
    %v7680 = vunpack.c.l.b16 %v4587
    %v7681 = vunpack.c.h.b16 %v4587
    %v7682 = vunpack.c.l.b16 %v4588
    %v7683 = vunpack.c.h.b16 %v4588
    %v7684 = vunpack.c.l.b16 %v4589
    %v7685 = vunpack.c.h.b16 %v4589
    %v7686 = vunpack.c.l.b16 %v4590
    %v7687 = vunpack.c.h.b16 %v4590
    %v7688 = vunpack.c.l.b16 %v4591
    %v7689 = vunpack.c.h.b16 %v4591
    %v7690 = vunpack.c.l.b16 %v4592
    %v7691 = vunpack.c.h.b16 %v4592
    %v7692 = vunpack.c.l.b16 %v4593
    %v7693 = vunpack.c.h.b16 %v4593
    %v7694 = vunpack.c.l.b16 %v4594
    %v7695 = vunpack.c.h.b16 %v4594
    %v7696 = vunpack.c.l.b16 %v4595
    %v7697 = vunpack.c.h.b16 %v4595
    %v7698 = vunpack.c.l.b16 %v4596
    %v7699 = vunpack.c.h.b16 %v4596
    %v7700 = vunpack.c.l.b16 %v4597
    %v7701 = vunpack.c.h.b16 %v4597
    %v7702 = vunpack.c.l.b16 %v4598
    %v7703 = vunpack.c.h.b16 %v4598
    %v7704 = vunpack.c.l.b16 %v4599
    %v7705 = vunpack.c.h.b16 %v4599
    %v7706 = vunpack.c.l.b16 %v4600
    %v7707 = vunpack.c.h.b16 %v4600
    %v7708 = vunpack.c.l.b16 %v4601
    %v7709 = vunpack.c.h.b16 %v4601
    %v7710 = vunpack.c.l.b16 %v4602
    %v7711 = vunpack.c.h.b16 %v4602
    %v7712 = vunpack.c.l.b16 %v4603
    %v7713 = vunpack.c.h.b16 %v4603
    %v7714 = vunpack.c.l.b16 %v4604
    %v7715 = vunpack.c.h.b16 %v4604
    %v7716 = vunpack.c.l.b16 %v4605
    %v7717 = vunpack.c.h.b16 %v4605
    %v7718 = vunpack.c.l.b16 %v4606
    %v7719 = vunpack.c.h.b16 %v4606
    %v7720 = vunpack.c.l.b16 %v4607
    %v7721 = vunpack.c.h.b16 %v4607
    %v7722 = vunpack.c.l.b16 %v4608
    %v7723 = vunpack.c.h.b16 %v4608
    %v7724 = vunpack.c.l.b16 %v4609
    %v7725 = vunpack.c.h.b16 %v4609
    %v7726 = vunpack.c.l.b16 %v4610
    %v7727 = vunpack.c.h.b16 %v4610
    %v7728 = vunpack.c.l.b16 %v4611
    %v7729 = vunpack.c.h.b16 %v4611
    %v7730 = vunpack.c.l.b16 %v4612
    %v7731 = vunpack.c.h.b16 %v4612
    %v7732 = vunpack.c.l.b16 %v4613
    %v7733 = vunpack.c.h.b16 %v4613
    %v7734 = vunpack.c.l.b16 %v4614
    %v7735 = vunpack.c.h.b16 %v4614
    %v7736 = vunpack.c.l.b16 %v4615
    %v7737 = vunpack.c.h.b16 %v4615
    %v7738 = vunpack.c.l.b16 %v4616
    %v7739 = vunpack.c.h.b16 %v4616
    %v7740 = vunpack.c.l.b16 %v4617
    %v7741 = vunpack.c.h.b16 %v4617
    %v7742 = vunpack.c.l.b16 %v4618
    %v7743 = vunpack.c.h.b16 %v4618
    %v7744 = vunpack.c.l.b16 %v4619
    %v7745 = vunpack.c.h.b16 %v4619
    %v7746 = vunpack.c.l.b16 %v4620
    %v7747 = vunpack.c.h.b16 %v4620
    %v7748 = vunpack.c.l.b16 %v4621
    %v7749 = vunpack.c.h.b16 %v4621
    %v7750 = vunpack.c.l.b16 %v4622
    %v7751 = vunpack.c.h.b16 %v4622
    %v7752 = vunpack.c.l.b16 %v4623
    %v7753 = vunpack.c.h.b16 %v4623
    %v7754 = vunpack.c.l.b16 %v4624
    %v7755 = vunpack.c.h.b16 %v4624
    %v7756 = vunpack.c.l.b16 %v4625
    %v7757 = vunpack.c.h.b16 %v4625
    %v7758 = vunpack.c.l.b16 %v4626
    %v7759 = vunpack.c.h.b16 %v4626
    %v7760 = vunpack.c.l.b16 %v4627
    %v7761 = vunpack.c.h.b16 %v4627
    %v7762 = vunpack.c.l.b16 %v4628
    %v7763 = vunpack.c.h.b16 %v4628
    %v7764 = vunpack.c.l.b16 %v4629
    %v7765 = vunpack.c.h.b16 %v4629
    %v7766 = vunpack.c.l.b16 %v4630
    %v7767 = vunpack.c.h.b16 %v4630
    %v7768 = vunpack.c.l.b16 %v4631
    %v7769 = vunpack.c.h.b16 %v4631
    %v7770 = vunpack.c.l.b16 %v4632
    %v7771 = vunpack.c.h.b16 %v4632
    %v7772 = vunpack.c.l.b16 %v4633
    %v7773 = vunpack.c.h.b16 %v4633
    %v7774 = vunpack.c.l.b16 %v4634
    %v7775 = vunpack.c.h.b16 %v4634
    %v7776 = vunpack.c.l.b16 %v4635
    %v7777 = vunpack.c.h.b16 %v4635
    %v7778 = vunpack.c.l.b16 %v4636
    %v7779 = vunpack.c.h.b16 %v4636
    %v7780 = vunpack.c.l.b16 %v4637
    %v7781 = vunpack.c.h.b16 %v4637
    %v7782 = vunpack.c.l.b16 %v4638
    %v7783 = vunpack.c.h.b16 %v4638
    %v7784 = vunpack.c.l.b16 %v4639
    %v7785 = vunpack.c.h.b16 %v4639
    %v7786 = vunpack.c.l.b16 %v4640
    %v7787 = vunpack.c.h.b16 %v4640
    %v7788 = vunpack.c.l.b16 %v4641
    %v7789 = vunpack.c.h.b16 %v4641
    %v7790 = vunpack.c.l.b16 %v4642
    %v7791 = vunpack.c.h.b16 %v4642
    %v7792 = vunpack.c.l.b16 %v4643
    %v7793 = vunpack.c.h.b16 %v4643
    %v7794 = vunpack.c.l.b16 %v4644
    %v7795 = vunpack.c.h.b16 %v4644
    %v7796 = vunpack.c.l.b16 %v4645
    %v7797 = vunpack.c.h.b16 %v4645
    %v7798 = vunpack.c.l.b16 %v4646
    %v7799 = vunpack.c.h.b16 %v4646
    %v7800 = vunpack.c.l.b16 %v4647
    %v7801 = vunpack.c.h.b16 %v4647
    %v7802 = vunpack.c.l.b16 %v4648
    %v7803 = vunpack.c.h.b16 %v4648
    %v7804 = vunpack.c.l.b16 %v4649
    %v7805 = vunpack.c.h.b16 %v4649
    %v7806 = vpack.c.b16 %v5774, %v5758
    %v7807 = vpack.c.b16 %v5775, %v5759
    %v7808 = vpack.c.b16 %v5776, %v5760
    %v7809 = vpack.c.b16 %v5777, %v5761
    %v7810 = vpack.c.b16 %v5778, %v5762
    %v7811 = vpack.c.b16 %v5779, %v5763
    %v7812 = vpack.c.b16 %v5780, %v5764
    %v7813 = vpack.c.b16 %v5781, %v5765
    %v7814 = vpack.c.b16 %v5782, %v5766
    %v7815 = vpack.c.b16 %v5783, %v5767
    %v7816 = vpack.c.b16 %v5784, %v5768
    %v7817 = vpack.c.b16 %v5785, %v5769
    %v7818 = vpack.c.b16 %v5786, %v5770
    %v7819 = vpack.c.b16 %v5787, %v5771
    %v7820 = vpack.c.b16 %v5788, %v5772
    %v7821 = vpack.c.b16 %v5789, %v5773
    %v7822 = vpack.c.b16 %v5806, %v5790
    %v7823 = vpack.c.b16 %v5807, %v5791
    %v7824 = vpack.c.b16 %v5808, %v5792
    %v7825 = vpack.c.b16 %v5809, %v5793
    %v7826 = vpack.c.b16 %v5810, %v5794
    %v7827 = vpack.c.b16 %v5811, %v5795
    %v7828 = vpack.c.b16 %v5812, %v5796
    %v7829 = vpack.c.b16 %v5813, %v5797
    %v7830 = vpack.c.b16 %v5814, %v5798
    %v7831 = vpack.c.b16 %v5815, %v5799
    %v7832 = vpack.c.b16 %v5816, %v5800
    %v7833 = vpack.c.b16 %v5817, %v5801
    %v7834 = vpack.c.b16 %v5818, %v5802
    %v7835 = vpack.c.b16 %v5819, %v5803
    %v7836 = vpack.c.b16 %v5820, %v5804
    %v7837 = vpack.c.b16 %v5821, %v5805
    %v7838 = vpack.c.b16 %v5838, %v5822
    %v7839 = vpack.c.b16 %v5839, %v5823
    %v7840 = vpack.c.b16 %v5840, %v5824
    %v7841 = vpack.c.b16 %v5841, %v5825
    %v7842 = vpack.c.b16 %v5842, %v5826
    %v7843 = vpack.c.b16 %v5843, %v5827
    %v7844 = vpack.c.b16 %v5844, %v5828
    %v7845 = vpack.c.b16 %v5845, %v5829
    %v7846 = vpack.c.b16 %v5846, %v5830
    %v7847 = vpack.c.b16 %v5847, %v5831
    %v7848 = vpack.c.b16 %v5848, %v5832
    %v7849 = vpack.c.b16 %v5849, %v5833
    %v7850 = vpack.c.b16 %v5850, %v5834
    %v7851 = vpack.c.b16 %v5851, %v5835
    %v7852 = vpack.c.b16 %v5852, %v5836
    %v7853 = vpack.c.b16 %v5853, %v5837
    %v7854 = vpack.c.b16 %v5870, %v5854
    %v7855 = vpack.c.b16 %v5871, %v5855
    %v7856 = vpack.c.b16 %v5872, %v5856
    %v7857 = vpack.c.b16 %v5873, %v5857
    %v7858 = vpack.c.b16 %v5874, %v5858
    %v7859 = vpack.c.b16 %v5875, %v5859
    %v7860 = vpack.c.b16 %v5876, %v5860
    %v7861 = vpack.c.b16 %v5877, %v5861
    %v7862 = vpack.c.b16 %v5878, %v5862
    %v7863 = vpack.c.b16 %v5879, %v5863
    %v7864 = vpack.c.b16 %v5880, %v5864
    %v7865 = vpack.c.b16 %v5881, %v5865
    %v7866 = vpack.c.b16 %v5882, %v5866
    %v7867 = vpack.c.b16 %v5883, %v5867
    %v7868 = vpack.c.b16 %v5884, %v5868
    %v7869 = vpack.c.b16 %v5885, %v5869
    %v7870 = vpack.c.b16 %v5902, %v5886
    %v7871 = vpack.c.b16 %v5903, %v5887
    %v7872 = vpack.c.b16 %v5904, %v5888
    %v7873 = vpack.c.b16 %v5905, %v5889
    %v7874 = vpack.c.b16 %v5906, %v5890
    %v7875 = vpack.c.b16 %v5907, %v5891
    %v7876 = vpack.c.b16 %v5908, %v5892
    %v7877 = vpack.c.b16 %v5909, %v5893
    %v7878 = vpack.c.b16 %v5910, %v5894
    %v7879 = vpack.c.b16 %v5911, %v5895
    %v7880 = vpack.c.b16 %v5912, %v5896
    %v7881 = vpack.c.b16 %v5913, %v5897
    %v7882 = vpack.c.b16 %v5914, %v5898
    %v7883 = vpack.c.b16 %v5915, %v5899
    %v7884 = vpack.c.b16 %v5916, %v5900
    %v7885 = vpack.c.b16 %v5917, %v5901
    %v7886 = vpack.c.b16 %v5934, %v5918
    %v7887 = vpack.c.b16 %v5935, %v5919
    %v7888 = vpack.c.b16 %v5936, %v5920
    %v7889 = vpack.c.b16 %v5937, %v5921
    %v7890 = vpack.c.b16 %v5938, %v5922
    %v7891 = vpack.c.b16 %v5939, %v5923
    %v7892 = vpack.c.b16 %v5940, %v5924
    %v7893 = vpack.c.b16 %v5941, %v5925
    %v7894 = vpack.c.b16 %v5942, %v5926
    %v7895 = vpack.c.b16 %v5943, %v5927
    %v7896 = vpack.c.b16 %v5944, %v5928
    %v7897 = vpack.c.b16 %v5945, %v5929
    %v7898 = vpack.c.b16 %v5946, %v5930
    %v7899 = vpack.c.b16 %v5947, %v5931
    %v7900 = vpack.c.b16 %v5948, %v5932
    %v7901 = vpack.c.b16 %v5949, %v5933
    %v7902 = vpack.c.b16 %v5966, %v5950
    %v7903 = vpack.c.b16 %v5967, %v5951
    %v7904 = vpack.c.b16 %v5968, %v5952
    %v7905 = vpack.c.b16 %v5969, %v5953
    %v7906 = vpack.c.b16 %v5970, %v5954
    %v7907 = vpack.c.b16 %v5971, %v5955
    %v7908 = vpack.c.b16 %v5972, %v5956
    %v7909 = vpack.c.b16 %v5973, %v5957
    %v7910 = vpack.c.b16 %v5974, %v5958
    %v7911 = vpack.c.b16 %v5975, %v5959
    %v7912 = vpack.c.b16 %v5976, %v5960
    %v7913 = vpack.c.b16 %v5977, %v5961
    %v7914 = vpack.c.b16 %v5978, %v5962
    %v7915 = vpack.c.b16 %v5979, %v5963
    %v7916 = vpack.c.b16 %v5980, %v5964
    %v7917 = vpack.c.b16 %v5981, %v5965
    %v7918 = vpack.c.b16 %v5998, %v5982
    %v7919 = vpack.c.b16 %v5999, %v5983
    %v7920 = vpack.c.b16 %v6000, %v5984
    %v7921 = vpack.c.b16 %v6001, %v5985
    %v7922 = vpack.c.b16 %v6002, %v5986
    %v7923 = vpack.c.b16 %v6003, %v5987
    %v7924 = vpack.c.b16 %v6004, %v5988
    %v7925 = vpack.c.b16 %v6005, %v5989
    %v7926 = vpack.c.b16 %v6006, %v5990
    %v7927 = vpack.c.b16 %v6007, %v5991
    %v7928 = vpack.c.b16 %v6008, %v5992
    %v7929 = vpack.c.b16 %v6009, %v5993
    %v7930 = vpack.c.b16 %v6010, %v5994
    %v7931 = vpack.c.b16 %v6011, %v5995
    %v7932 = vpack.c.b16 %v6012, %v5996
    %v7933 = vpack.c.b16 %v6013, %v5997
    %v7934 = vpack.c.b16 %v6030, %v6014
    %v7935 = vpack.c.b16 %v6031, %v6015
    %v7936 = vpack.c.b16 %v6032, %v6016
    %v7937 = vpack.c.b16 %v6033, %v6017
    %v7938 = vpack.c.b16 %v6034, %v6018
    %v7939 = vpack.c.b16 %v6035, %v6019
    %v7940 = vpack.c.b16 %v6036, %v6020
    %v7941 = vpack.c.b16 %v6037, %v6021
    %v7942 = vpack.c.b16 %v6038, %v6022
    %v7943 = vpack.c.b16 %v6039, %v6023
    %v7944 = vpack.c.b16 %v6040, %v6024
    %v7945 = vpack.c.b16 %v6041, %v6025
    %v7946 = vpack.c.b16 %v6042, %v6026
    %v7947 = vpack.c.b16 %v6043, %v6027
    %v7948 = vpack.c.b16 %v6044, %v6028
    %v7949 = vpack.c.b16 %v6045, %v6029
    %v7950 = vpack.c.b16 %v6062, %v6046
    %v7951 = vpack.c.b16 %v6063, %v6047
    %v7952 = vpack.c.b16 %v6064, %v6048
    %v7953 = vpack.c.b16 %v6065, %v6049
    %v7954 = vpack.c.b16 %v6066, %v6050
    %v7955 = vpack.c.b16 %v6067, %v6051
    %v7956 = vpack.c.b16 %v6068, %v6052
    %v7957 = vpack.c.b16 %v6069, %v6053
    %v7958 = vpack.c.b16 %v6070, %v6054
    %v7959 = vpack.c.b16 %v6071, %v6055
    %v7960 = vpack.c.b16 %v6072, %v6056
    %v7961 = vpack.c.b16 %v6073, %v6057
    %v7962 = vpack.c.b16 %v6074, %v6058
    %v7963 = vpack.c.b16 %v6075, %v6059
    %v7964 = vpack.c.b16 %v6076, %v6060
    %v7965 = vpack.c.b16 %v6077, %v6061
    %v7966 = vpack.c.b16 %v6094, %v6078
    %v7967 = vpack.c.b16 %v6095, %v6079
    %v7968 = vpack.c.b16 %v6096, %v6080
    %v7969 = vpack.c.b16 %v6097, %v6081
    %v7970 = vpack.c.b16 %v6098, %v6082
    %v7971 = vpack.c.b16 %v6099, %v6083
    %v7972 = vpack.c.b16 %v6100, %v6084
    %v7973 = vpack.c.b16 %v6101, %v6085
    %v7974 = vpack.c.b16 %v6102, %v6086
    %v7975 = vpack.c.b16 %v6103, %v6087
    %v7976 = vpack.c.b16 %v6104, %v6088
    %v7977 = vpack.c.b16 %v6105, %v6089
    %v7978 = vpack.c.b16 %v6106, %v6090
    %v7979 = vpack.c.b16 %v6107, %v6091
    %v7980 = vpack.c.b16 %v6108, %v6092
    %v7981 = vpack.c.b16 %v6109, %v6093
    %v7982 = vpack.c.b16 %v6126, %v6110
    %v7983 = vpack.c.b16 %v6127, %v6111
    %v7984 = vpack.c.b16 %v6128, %v6112
    %v7985 = vpack.c.b16 %v6129, %v6113
    %v7986 = vpack.c.b16 %v6130, %v6114
    %v7987 = vpack.c.b16 %v6131, %v6115
    %v7988 = vpack.c.b16 %v6132, %v6116
    %v7989 = vpack.c.b16 %v6133, %v6117
    %v7990 = vpack.c.b16 %v6134, %v6118
    %v7991 = vpack.c.b16 %v6135, %v6119
    %v7992 = vpack.c.b16 %v6136, %v6120
    %v7993 = vpack.c.b16 %v6137, %v6121
    %v7994 = vpack.c.b16 %v6138, %v6122
    %v7995 = vpack.c.b16 %v6139, %v6123
    %v7996 = vpack.c.b16 %v6140, %v6124
    %v7997 = vpack.c.b16 %v6141, %v6125
    %v7998 = vpack.c.b16 %v6158, %v6142
    %v7999 = vpack.c.b16 %v6159, %v6143
    %v8000 = vpack.c.b16 %v6160, %v6144
    %v8001 = vpack.c.b16 %v6161, %v6145
    %v8002 = vpack.c.b16 %v6162, %v6146
    %v8003 = vpack.c.b16 %v6163, %v6147
    %v8004 = vpack.c.b16 %v6164, %v6148
    %v8005 = vpack.c.b16 %v6165, %v6149
    %v8006 = vpack.c.b16 %v6166, %v6150
    %v8007 = vpack.c.b16 %v6167, %v6151
    %v8008 = vpack.c.b16 %v6168, %v6152
    %v8009 = vpack.c.b16 %v6169, %v6153
    %v8010 = vpack.c.b16 %v6170, %v6154
    %v8011 = vpack.c.b16 %v6171, %v6155
    %v8012 = vpack.c.b16 %v6172, %v6156
    %v8013 = vpack.c.b16 %v6173, %v6157
    %v8014 = vpack.c.b16 %v6190, %v6174
    %v8015 = vpack.c.b16 %v6191, %v6175
    %v8016 = vpack.c.b16 %v6192, %v6176
    %v8017 = vpack.c.b16 %v6193, %v6177
    %v8018 = vpack.c.b16 %v6194, %v6178
    %v8019 = vpack.c.b16 %v6195, %v6179
    %v8020 = vpack.c.b16 %v6196, %v6180
    %v8021 = vpack.c.b16 %v6197, %v6181
    %v8022 = vpack.c.b16 %v6198, %v6182
    %v8023 = vpack.c.b16 %v6199, %v6183
    %v8024 = vpack.c.b16 %v6200, %v6184
    %v8025 = vpack.c.b16 %v6201, %v6185
    %v8026 = vpack.c.b16 %v6202, %v6186
    %v8027 = vpack.c.b16 %v6203, %v6187
    %v8028 = vpack.c.b16 %v6204, %v6188
    %v8029 = vpack.c.b16 %v6205, %v6189
    %v8030 = vpack.c.b16 %v6222, %v6206
    %v8031 = vpack.c.b16 %v6223, %v6207
    %v8032 = vpack.c.b16 %v6224, %v6208
    %v8033 = vpack.c.b16 %v6225, %v6209
    %v8034 = vpack.c.b16 %v6226, %v6210
    %v8035 = vpack.c.b16 %v6227, %v6211
    %v8036 = vpack.c.b16 %v6228, %v6212
    %v8037 = vpack.c.b16 %v6229, %v6213
    %v8038 = vpack.c.b16 %v6230, %v6214
    %v8039 = vpack.c.b16 %v6231, %v6215
    %v8040 = vpack.c.b16 %v6232, %v6216
    %v8041 = vpack.c.b16 %v6233, %v6217
    %v8042 = vpack.c.b16 %v6234, %v6218
    %v8043 = vpack.c.b16 %v6235, %v6219
    %v8044 = vpack.c.b16 %v6236, %v6220
    %v8045 = vpack.c.b16 %v6237, %v6221
    %v8046 = vpack.c.b16 %v6254, %v6238
    %v8047 = vpack.c.b16 %v6255, %v6239
    %v8048 = vpack.c.b16 %v6256, %v6240
    %v8049 = vpack.c.b16 %v6257, %v6241
    %v8050 = vpack.c.b16 %v6258, %v6242
    %v8051 = vpack.c.b16 %v6259, %v6243
    %v8052 = vpack.c.b16 %v6260, %v6244
    %v8053 = vpack.c.b16 %v6261, %v6245
    %v8054 = vpack.c.b16 %v6262, %v6246
    %v8055 = vpack.c.b16 %v6263, %v6247
    %v8056 = vpack.c.b16 %v6264, %v6248
    %v8057 = vpack.c.b16 %v6265, %v6249
    %v8058 = vpack.c.b16 %v6266, %v6250
    %v8059 = vpack.c.b16 %v6267, %v6251
    %v8060 = vpack.c.b16 %v6268, %v6252
    %v8061 = vpack.c.b16 %v6269, %v6253
    %v8062 = vpack.c.b16 %v6286, %v6270
    %v8063 = vpack.c.b16 %v6287, %v6271
    %v8064 = vpack.c.b16 %v6288, %v6272
    %v8065 = vpack.c.b16 %v6289, %v6273
    %v8066 = vpack.c.b16 %v6290, %v6274
    %v8067 = vpack.c.b16 %v6291, %v6275
    %v8068 = vpack.c.b16 %v6292, %v6276
    %v8069 = vpack.c.b16 %v6293, %v6277
    %v8070 = vpack.c.b16 %v6294, %v6278
    %v8071 = vpack.c.b16 %v6295, %v6279
    %v8072 = vpack.c.b16 %v6296, %v6280
    %v8073 = vpack.c.b16 %v6297, %v6281
    %v8074 = vpack.c.b16 %v6298, %v6282
    %v8075 = vpack.c.b16 %v6299, %v6283
    %v8076 = vpack.c.b16 %v6300, %v6284
    %v8077 = vpack.c.b16 %v6301, %v6285
    %v8078 = vpack.c.b16 %v6318, %v6302
    %v8079 = vpack.c.b16 %v6319, %v6303
    %v8080 = vpack.c.b16 %v6320, %v6304
    %v8081 = vpack.c.b16 %v6321, %v6305
    %v8082 = vpack.c.b16 %v6322, %v6306
    %v8083 = vpack.c.b16 %v6323, %v6307
    %v8084 = vpack.c.b16 %v6324, %v6308
    %v8085 = vpack.c.b16 %v6325, %v6309
    %v8086 = vpack.c.b16 %v6326, %v6310
    %v8087 = vpack.c.b16 %v6327, %v6311
    %v8088 = vpack.c.b16 %v6328, %v6312
    %v8089 = vpack.c.b16 %v6329, %v6313
    %v8090 = vpack.c.b16 %v6330, %v6314
    %v8091 = vpack.c.b16 %v6331, %v6315
    %v8092 = vpack.c.b16 %v6332, %v6316
    %v8093 = vpack.c.b16 %v6333, %v6317
    %v8094 = vpack.c.b16 %v6350, %v6334
    %v8095 = vpack.c.b16 %v6351, %v6335
    %v8096 = vpack.c.b16 %v6352, %v6336
    %v8097 = vpack.c.b16 %v6353, %v6337
    %v8098 = vpack.c.b16 %v6354, %v6338
    %v8099 = vpack.c.b16 %v6355, %v6339
    %v8100 = vpack.c.b16 %v6356, %v6340
    %v8101 = vpack.c.b16 %v6357, %v6341
    %v8102 = vpack.c.b16 %v6358, %v6342
    %v8103 = vpack.c.b16 %v6359, %v6343
    %v8104 = vpack.c.b16 %v6360, %v6344
    %v8105 = vpack.c.b16 %v6361, %v6345
    %v8106 = vpack.c.b16 %v6362, %v6346
    %v8107 = vpack.c.b16 %v6363, %v6347
    %v8108 = vpack.c.b16 %v6364, %v6348
    %v8109 = vpack.c.b16 %v6365, %v6349
    %v8110 = vpack.c.b16 %v6382, %v6366
    %v8111 = vpack.c.b16 %v6383, %v6367
    %v8112 = vpack.c.b16 %v6384, %v6368
    %v8113 = vpack.c.b16 %v6385, %v6369
    %v8114 = vpack.c.b16 %v6386, %v6370
    %v8115 = vpack.c.b16 %v6387, %v6371
    %v8116 = vpack.c.b16 %v6388, %v6372
    %v8117 = vpack.c.b16 %v6389, %v6373
    %v8118 = vpack.c.b16 %v6390, %v6374
    %v8119 = vpack.c.b16 %v6391, %v6375
    %v8120 = vpack.c.b16 %v6392, %v6376
    %v8121 = vpack.c.b16 %v6393, %v6377
    %v8122 = vpack.c.b16 %v6394, %v6378
    %v8123 = vpack.c.b16 %v6395, %v6379
    %v8124 = vpack.c.b16 %v6396, %v6380
    %v8125 = vpack.c.b16 %v6397, %v6381
    %v8126 = vpack.c.b16 %v6414, %v6398
    %v8127 = vpack.c.b16 %v6415, %v6399
    %v8128 = vpack.c.b16 %v6416, %v6400
    %v8129 = vpack.c.b16 %v6417, %v6401
    %v8130 = vpack.c.b16 %v6418, %v6402
    %v8131 = vpack.c.b16 %v6419, %v6403
    %v8132 = vpack.c.b16 %v6420, %v6404
    %v8133 = vpack.c.b16 %v6421, %v6405
    %v8134 = vpack.c.b16 %v6422, %v6406
    %v8135 = vpack.c.b16 %v6423, %v6407
    %v8136 = vpack.c.b16 %v6424, %v6408
    %v8137 = vpack.c.b16 %v6425, %v6409
    %v8138 = vpack.c.b16 %v6426, %v6410
    %v8139 = vpack.c.b16 %v6427, %v6411
    %v8140 = vpack.c.b16 %v6428, %v6412
    %v8141 = vpack.c.b16 %v6429, %v6413
    %v8142 = vpack.c.b16 %v6446, %v6430
    %v8143 = vpack.c.b16 %v6447, %v6431
    %v8144 = vpack.c.b16 %v6448, %v6432
    %v8145 = vpack.c.b16 %v6449, %v6433
    %v8146 = vpack.c.b16 %v6450, %v6434
    %v8147 = vpack.c.b16 %v6451, %v6435
    %v8148 = vpack.c.b16 %v6452, %v6436
    %v8149 = vpack.c.b16 %v6453, %v6437
    %v8150 = vpack.c.b16 %v6454, %v6438
    %v8151 = vpack.c.b16 %v6455, %v6439
    %v8152 = vpack.c.b16 %v6456, %v6440
    %v8153 = vpack.c.b16 %v6457, %v6441
    %v8154 = vpack.c.b16 %v6458, %v6442
    %v8155 = vpack.c.b16 %v6459, %v6443
    %v8156 = vpack.c.b16 %v6460, %v6444
    %v8157 = vpack.c.b16 %v6461, %v6445
    %v8158 = vpack.c.b16 %v6478, %v6462
    %v8159 = vpack.c.b16 %v6479, %v6463
    %v8160 = vpack.c.b16 %v6480, %v6464
    %v8161 = vpack.c.b16 %v6481, %v6465
    %v8162 = vpack.c.b16 %v6482, %v6466
    %v8163 = vpack.c.b16 %v6483, %v6467
    %v8164 = vpack.c.b16 %v6484, %v6468
    %v8165 = vpack.c.b16 %v6485, %v6469
    %v8166 = vpack.c.b16 %v6486, %v6470
    %v8167 = vpack.c.b16 %v6487, %v6471
    %v8168 = vpack.c.b16 %v6488, %v6472
    %v8169 = vpack.c.b16 %v6489, %v6473
    %v8170 = vpack.c.b16 %v6490, %v6474
    %v8171 = vpack.c.b16 %v6491, %v6475
    %v8172 = vpack.c.b16 %v6492, %v6476
    %v8173 = vpack.c.b16 %v6493, %v6477
    %v8174 = vpack.c.b16 %v6510, %v6494
    %v8175 = vpack.c.b16 %v6511, %v6495
    %v8176 = vpack.c.b16 %v6512, %v6496
    %v8177 = vpack.c.b16 %v6513, %v6497
    %v8178 = vpack.c.b16 %v6514, %v6498
    %v8179 = vpack.c.b16 %v6515, %v6499
    %v8180 = vpack.c.b16 %v6516, %v6500
    %v8181 = vpack.c.b16 %v6517, %v6501
    %v8182 = vpack.c.b16 %v6518, %v6502
    %v8183 = vpack.c.b16 %v6519, %v6503
    %v8184 = vpack.c.b16 %v6520, %v6504
    %v8185 = vpack.c.b16 %v6521, %v6505
    %v8186 = vpack.c.b16 %v6522, %v6506
    %v8187 = vpack.c.b16 %v6523, %v6507
    %v8188 = vpack.c.b16 %v6524, %v6508
    %v8189 = vpack.c.b16 %v6525, %v6509
    %v8190 = vpack.c.b16 %v6542, %v6526
    %v8191 = vpack.c.b16 %v6543, %v6527
    %v8192 = vpack.c.b16 %v6544, %v6528
    %v8193 = vpack.c.b16 %v6545, %v6529
    %v8194 = vpack.c.b16 %v6546, %v6530
    %v8195 = vpack.c.b16 %v6547, %v6531
    %v8196 = vpack.c.b16 %v6548, %v6532
    %v8197 = vpack.c.b16 %v6549, %v6533
    %v8198 = vpack.c.b16 %v6550, %v6534
    %v8199 = vpack.c.b16 %v6551, %v6535
    %v8200 = vpack.c.b16 %v6552, %v6536
    %v8201 = vpack.c.b16 %v6553, %v6537
    %v8202 = vpack.c.b16 %v6554, %v6538
    %v8203 = vpack.c.b16 %v6555, %v6539
    %v8204 = vpack.c.b16 %v6556, %v6540
    %v8205 = vpack.c.b16 %v6557, %v6541
    %v8206 = vpack.c.b16 %v6574, %v6558
    %v8207 = vpack.c.b16 %v6575, %v6559
    %v8208 = vpack.c.b16 %v6576, %v6560
    %v8209 = vpack.c.b16 %v6577, %v6561
    %v8210 = vpack.c.b16 %v6578, %v6562
    %v8211 = vpack.c.b16 %v6579, %v6563
    %v8212 = vpack.c.b16 %v6580, %v6564
    %v8213 = vpack.c.b16 %v6581, %v6565
    %v8214 = vpack.c.b16 %v6582, %v6566
    %v8215 = vpack.c.b16 %v6583, %v6567
    %v8216 = vpack.c.b16 %v6584, %v6568
    %v8217 = vpack.c.b16 %v6585, %v6569
    %v8218 = vpack.c.b16 %v6586, %v6570
    %v8219 = vpack.c.b16 %v6587, %v6571
    %v8220 = vpack.c.b16 %v6588, %v6572
    %v8221 = vpack.c.b16 %v6589, %v6573
    %v8222 = vpack.c.b16 %v6606, %v6590
    %v8223 = vpack.c.b16 %v6607, %v6591
    %v8224 = vpack.c.b16 %v6608, %v6592
    %v8225 = vpack.c.b16 %v6609, %v6593
    %v8226 = vpack.c.b16 %v6610, %v6594
    %v8227 = vpack.c.b16 %v6611, %v6595
    %v8228 = vpack.c.b16 %v6612, %v6596
    %v8229 = vpack.c.b16 %v6613, %v6597
    %v8230 = vpack.c.b16 %v6614, %v6598
    %v8231 = vpack.c.b16 %v6615, %v6599
    %v8232 = vpack.c.b16 %v6616, %v6600
    %v8233 = vpack.c.b16 %v6617, %v6601
    %v8234 = vpack.c.b16 %v6618, %v6602
    %v8235 = vpack.c.b16 %v6619, %v6603
    %v8236 = vpack.c.b16 %v6620, %v6604
    %v8237 = vpack.c.b16 %v6621, %v6605
    %v8238 = vpack.c.b16 %v6638, %v6622
    %v8239 = vpack.c.b16 %v6639, %v6623
    %v8240 = vpack.c.b16 %v6640, %v6624
    %v8241 = vpack.c.b16 %v6641, %v6625
    %v8242 = vpack.c.b16 %v6642, %v6626
    %v8243 = vpack.c.b16 %v6643, %v6627
    %v8244 = vpack.c.b16 %v6644, %v6628
    %v8245 = vpack.c.b16 %v6645, %v6629
    %v8246 = vpack.c.b16 %v6646, %v6630
    %v8247 = vpack.c.b16 %v6647, %v6631
    %v8248 = vpack.c.b16 %v6648, %v6632
    %v8249 = vpack.c.b16 %v6649, %v6633
    %v8250 = vpack.c.b16 %v6650, %v6634
    %v8251 = vpack.c.b16 %v6651, %v6635
    %v8252 = vpack.c.b16 %v6652, %v6636
    %v8253 = vpack.c.b16 %v6653, %v6637
    %v8254 = vpack.c.b16 %v6670, %v6654
    %v8255 = vpack.c.b16 %v6671, %v6655
    %v8256 = vpack.c.b16 %v6672, %v6656
    %v8257 = vpack.c.b16 %v6673, %v6657
    %v8258 = vpack.c.b16 %v6674, %v6658
    %v8259 = vpack.c.b16 %v6675, %v6659
    %v8260 = vpack.c.b16 %v6676, %v6660
    %v8261 = vpack.c.b16 %v6677, %v6661
    %v8262 = vpack.c.b16 %v6678, %v6662
    %v8263 = vpack.c.b16 %v6679, %v6663
    %v8264 = vpack.c.b16 %v6680, %v6664
    %v8265 = vpack.c.b16 %v6681, %v6665
    %v8266 = vpack.c.b16 %v6682, %v6666
    %v8267 = vpack.c.b16 %v6683, %v6667
    %v8268 = vpack.c.b16 %v6684, %v6668
    %v8269 = vpack.c.b16 %v6685, %v6669
    %v8270 = vpack.c.b16 %v6702, %v6686
    %v8271 = vpack.c.b16 %v6703, %v6687
    %v8272 = vpack.c.b16 %v6704, %v6688
    %v8273 = vpack.c.b16 %v6705, %v6689
    %v8274 = vpack.c.b16 %v6706, %v6690
    %v8275 = vpack.c.b16 %v6707, %v6691
    %v8276 = vpack.c.b16 %v6708, %v6692
    %v8277 = vpack.c.b16 %v6709, %v6693
    %v8278 = vpack.c.b16 %v6710, %v6694
    %v8279 = vpack.c.b16 %v6711, %v6695
    %v8280 = vpack.c.b16 %v6712, %v6696
    %v8281 = vpack.c.b16 %v6713, %v6697
    %v8282 = vpack.c.b16 %v6714, %v6698
    %v8283 = vpack.c.b16 %v6715, %v6699
    %v8284 = vpack.c.b16 %v6716, %v6700
    %v8285 = vpack.c.b16 %v6717, %v6701
    %v8286 = vpack.c.b16 %v6734, %v6718
    %v8287 = vpack.c.b16 %v6735, %v6719
    %v8288 = vpack.c.b16 %v6736, %v6720
    %v8289 = vpack.c.b16 %v6737, %v6721
    %v8290 = vpack.c.b16 %v6738, %v6722
    %v8291 = vpack.c.b16 %v6739, %v6723
    %v8292 = vpack.c.b16 %v6740, %v6724
    %v8293 = vpack.c.b16 %v6741, %v6725
    %v8294 = vpack.c.b16 %v6742, %v6726
    %v8295 = vpack.c.b16 %v6743, %v6727
    %v8296 = vpack.c.b16 %v6744, %v6728
    %v8297 = vpack.c.b16 %v6745, %v6729
    %v8298 = vpack.c.b16 %v6746, %v6730
    %v8299 = vpack.c.b16 %v6747, %v6731
    %v8300 = vpack.c.b16 %v6748, %v6732
    %v8301 = vpack.c.b16 %v6749, %v6733
    %v8302 = vpack.c.b16 %v6766, %v6750
    %v8303 = vpack.c.b16 %v6767, %v6751
    %v8304 = vpack.c.b16 %v6768, %v6752
    %v8305 = vpack.c.b16 %v6769, %v6753
    %v8306 = vpack.c.b16 %v6770, %v6754
    %v8307 = vpack.c.b16 %v6771, %v6755
    %v8308 = vpack.c.b16 %v6772, %v6756
    %v8309 = vpack.c.b16 %v6773, %v6757
    %v8310 = vpack.c.b16 %v6774, %v6758
    %v8311 = vpack.c.b16 %v6775, %v6759
    %v8312 = vpack.c.b16 %v6776, %v6760
    %v8313 = vpack.c.b16 %v6777, %v6761
    %v8314 = vpack.c.b16 %v6778, %v6762
    %v8315 = vpack.c.b16 %v6779, %v6763
    %v8316 = vpack.c.b16 %v6780, %v6764
    %v8317 = vpack.c.b16 %v6781, %v6765
    %v8318 = vpack.c.b16 %v6798, %v6782
    %v8319 = vpack.c.b16 %v6799, %v6783
    %v8320 = vpack.c.b16 %v6800, %v6784
    %v8321 = vpack.c.b16 %v6801, %v6785
    %v8322 = vpack.c.b16 %v6802, %v6786
    %v8323 = vpack.c.b16 %v6803, %v6787
    %v8324 = vpack.c.b16 %v6804, %v6788
    %v8325 = vpack.c.b16 %v6805, %v6789
    %v8326 = vpack.c.b16 %v6806, %v6790
    %v8327 = vpack.c.b16 %v6807, %v6791
    %v8328 = vpack.c.b16 %v6808, %v6792
    %v8329 = vpack.c.b16 %v6809, %v6793
    %v8330 = vpack.c.b16 %v6810, %v6794
    %v8331 = vpack.c.b16 %v6811, %v6795
    %v8332 = vpack.c.b16 %v6812, %v6796
    %v8333 = vpack.c.b16 %v6813, %v6797
    %v8334 = vpack.c.b16 %v6830, %v6814
    %v8335 = vpack.c.b16 %v6831, %v6815
    %v8336 = vpack.c.b16 %v6832, %v6816
    %v8337 = vpack.c.b16 %v6833, %v6817
    %v8338 = vpack.c.b16 %v6834, %v6818
    %v8339 = vpack.c.b16 %v6835, %v6819
    %v8340 = vpack.c.b16 %v6836, %v6820
    %v8341 = vpack.c.b16 %v6837, %v6821
    %v8342 = vpack.c.b16 %v6838, %v6822
    %v8343 = vpack.c.b16 %v6839, %v6823
    %v8344 = vpack.c.b16 %v6840, %v6824
    %v8345 = vpack.c.b16 %v6841, %v6825
    %v8346 = vpack.c.b16 %v6842, %v6826
    %v8347 = vpack.c.b16 %v6843, %v6827
    %v8348 = vpack.c.b16 %v6844, %v6828
    %v8349 = vpack.c.b16 %v6845, %v6829
    %v8350 = vpack.c.b16 %v6862, %v6846
    %v8351 = vpack.c.b16 %v6863, %v6847
    %v8352 = vpack.c.b16 %v6864, %v6848
    %v8353 = vpack.c.b16 %v6865, %v6849
    %v8354 = vpack.c.b16 %v6866, %v6850
    %v8355 = vpack.c.b16 %v6867, %v6851
    %v8356 = vpack.c.b16 %v6868, %v6852
    %v8357 = vpack.c.b16 %v6869, %v6853
    %v8358 = vpack.c.b16 %v6870, %v6854
    %v8359 = vpack.c.b16 %v6871, %v6855
    %v8360 = vpack.c.b16 %v6872, %v6856
    %v8361 = vpack.c.b16 %v6873, %v6857
    %v8362 = vpack.c.b16 %v6874, %v6858
    %v8363 = vpack.c.b16 %v6875, %v6859
    %v8364 = vpack.c.b16 %v6876, %v6860
    %v8365 = vpack.c.b16 %v6877, %v6861
    %v8366 = vpack.c.b16 %v6894, %v6878
    %v8367 = vpack.c.b16 %v6895, %v6879
    %v8368 = vpack.c.b16 %v6896, %v6880
    %v8369 = vpack.c.b16 %v6897, %v6881
    %v8370 = vpack.c.b16 %v6898, %v6882
    %v8371 = vpack.c.b16 %v6899, %v6883
    %v8372 = vpack.c.b16 %v6900, %v6884
    %v8373 = vpack.c.b16 %v6901, %v6885
    %v8374 = vpack.c.b16 %v6902, %v6886
    %v8375 = vpack.c.b16 %v6903, %v6887
    %v8376 = vpack.c.b16 %v6904, %v6888
    %v8377 = vpack.c.b16 %v6905, %v6889
    %v8378 = vpack.c.b16 %v6906, %v6890
    %v8379 = vpack.c.b16 %v6907, %v6891
    %v8380 = vpack.c.b16 %v6908, %v6892
    %v8381 = vpack.c.b16 %v6909, %v6893
    %v8382 = vpack.c.b16 %v6926, %v6910
    %v8383 = vpack.c.b16 %v6927, %v6911
    %v8384 = vpack.c.b16 %v6928, %v6912
    %v8385 = vpack.c.b16 %v6929, %v6913
    %v8386 = vpack.c.b16 %v6930, %v6914
    %v8387 = vpack.c.b16 %v6931, %v6915
    %v8388 = vpack.c.b16 %v6932, %v6916
    %v8389 = vpack.c.b16 %v6933, %v6917
    %v8390 = vpack.c.b16 %v6934, %v6918
    %v8391 = vpack.c.b16 %v6935, %v6919
    %v8392 = vpack.c.b16 %v6936, %v6920
    %v8393 = vpack.c.b16 %v6937, %v6921
    %v8394 = vpack.c.b16 %v6938, %v6922
    %v8395 = vpack.c.b16 %v6939, %v6923
    %v8396 = vpack.c.b16 %v6940, %v6924
    %v8397 = vpack.c.b16 %v6941, %v6925
    %v8398 = vpack.c.b16 %v6958, %v6942
    %v8399 = vpack.c.b16 %v6959, %v6943
    %v8400 = vpack.c.b16 %v6960, %v6944
    %v8401 = vpack.c.b16 %v6961, %v6945
    %v8402 = vpack.c.b16 %v6962, %v6946
    %v8403 = vpack.c.b16 %v6963, %v6947
    %v8404 = vpack.c.b16 %v6964, %v6948
    %v8405 = vpack.c.b16 %v6965, %v6949
    %v8406 = vpack.c.b16 %v6966, %v6950
    %v8407 = vpack.c.b16 %v6967, %v6951
    %v8408 = vpack.c.b16 %v6968, %v6952
    %v8409 = vpack.c.b16 %v6969, %v6953
    %v8410 = vpack.c.b16 %v6970, %v6954
    %v8411 = vpack.c.b16 %v6971, %v6955
    %v8412 = vpack.c.b16 %v6972, %v6956
    %v8413 = vpack.c.b16 %v6973, %v6957
    %v8414 = vpack.c.b16 %v6990, %v6974
    %v8415 = vpack.c.b16 %v6991, %v6975
    %v8416 = vpack.c.b16 %v6992, %v6976
    %v8417 = vpack.c.b16 %v6993, %v6977
    %v8418 = vpack.c.b16 %v6994, %v6978
    %v8419 = vpack.c.b16 %v6995, %v6979
    %v8420 = vpack.c.b16 %v6996, %v6980
    %v8421 = vpack.c.b16 %v6997, %v6981
    %v8422 = vpack.c.b16 %v6998, %v6982
    %v8423 = vpack.c.b16 %v6999, %v6983
    %v8424 = vpack.c.b16 %v7000, %v6984
    %v8425 = vpack.c.b16 %v7001, %v6985
    %v8426 = vpack.c.b16 %v7002, %v6986
    %v8427 = vpack.c.b16 %v7003, %v6987
    %v8428 = vpack.c.b16 %v7004, %v6988
    %v8429 = vpack.c.b16 %v7005, %v6989
    %v8430 = vpack.c.b16 %v7022, %v7006
    %v8431 = vpack.c.b16 %v7023, %v7007
    %v8432 = vpack.c.b16 %v7024, %v7008
    %v8433 = vpack.c.b16 %v7025, %v7009
    %v8434 = vpack.c.b16 %v7026, %v7010
    %v8435 = vpack.c.b16 %v7027, %v7011
    %v8436 = vpack.c.b16 %v7028, %v7012
    %v8437 = vpack.c.b16 %v7029, %v7013
    %v8438 = vpack.c.b16 %v7030, %v7014
    %v8439 = vpack.c.b16 %v7031, %v7015
    %v8440 = vpack.c.b16 %v7032, %v7016
    %v8441 = vpack.c.b16 %v7033, %v7017
    %v8442 = vpack.c.b16 %v7034, %v7018
    %v8443 = vpack.c.b16 %v7035, %v7019
    %v8444 = vpack.c.b16 %v7036, %v7020
    %v8445 = vpack.c.b16 %v7037, %v7021
    %v8446 = vpack.c.b16 %v7054, %v7038
    %v8447 = vpack.c.b16 %v7055, %v7039
    %v8448 = vpack.c.b16 %v7056, %v7040
    %v8449 = vpack.c.b16 %v7057, %v7041
    %v8450 = vpack.c.b16 %v7058, %v7042
    %v8451 = vpack.c.b16 %v7059, %v7043
    %v8452 = vpack.c.b16 %v7060, %v7044
    %v8453 = vpack.c.b16 %v7061, %v7045
    %v8454 = vpack.c.b16 %v7062, %v7046
    %v8455 = vpack.c.b16 %v7063, %v7047
    %v8456 = vpack.c.b16 %v7064, %v7048
    %v8457 = vpack.c.b16 %v7065, %v7049
    %v8458 = vpack.c.b16 %v7066, %v7050
    %v8459 = vpack.c.b16 %v7067, %v7051
    %v8460 = vpack.c.b16 %v7068, %v7052
    %v8461 = vpack.c.b16 %v7069, %v7053
    %v8462 = vpack.c.b16 %v7086, %v7070
    %v8463 = vpack.c.b16 %v7087, %v7071
    %v8464 = vpack.c.b16 %v7088, %v7072
    %v8465 = vpack.c.b16 %v7089, %v7073
    %v8466 = vpack.c.b16 %v7090, %v7074
    %v8467 = vpack.c.b16 %v7091, %v7075
    %v8468 = vpack.c.b16 %v7092, %v7076
    %v8469 = vpack.c.b16 %v7093, %v7077
    %v8470 = vpack.c.b16 %v7094, %v7078
    %v8471 = vpack.c.b16 %v7095, %v7079
    %v8472 = vpack.c.b16 %v7096, %v7080
    %v8473 = vpack.c.b16 %v7097, %v7081
    %v8474 = vpack.c.b16 %v7098, %v7082
    %v8475 = vpack.c.b16 %v7099, %v7083
    %v8476 = vpack.c.b16 %v7100, %v7084
    %v8477 = vpack.c.b16 %v7101, %v7085
    %v8478 = vpack.c.b16 %v7118, %v7102
    %v8479 = vpack.c.b16 %v7119, %v7103
    %v8480 = vpack.c.b16 %v7120, %v7104
    %v8481 = vpack.c.b16 %v7121, %v7105
    %v8482 = vpack.c.b16 %v7122, %v7106
    %v8483 = vpack.c.b16 %v7123, %v7107
    %v8484 = vpack.c.b16 %v7124, %v7108
    %v8485 = vpack.c.b16 %v7125, %v7109
    %v8486 = vpack.c.b16 %v7126, %v7110
    %v8487 = vpack.c.b16 %v7127, %v7111
    %v8488 = vpack.c.b16 %v7128, %v7112
    %v8489 = vpack.c.b16 %v7129, %v7113
    %v8490 = vpack.c.b16 %v7130, %v7114
    %v8491 = vpack.c.b16 %v7131, %v7115
    %v8492 = vpack.c.b16 %v7132, %v7116
    %v8493 = vpack.c.b16 %v7133, %v7117
    %v8494 = vpack.c.b16 %v7150, %v7134
    %v8495 = vpack.c.b16 %v7151, %v7135
    %v8496 = vpack.c.b16 %v7152, %v7136
    %v8497 = vpack.c.b16 %v7153, %v7137
    %v8498 = vpack.c.b16 %v7154, %v7138
    %v8499 = vpack.c.b16 %v7155, %v7139
    %v8500 = vpack.c.b16 %v7156, %v7140
    %v8501 = vpack.c.b16 %v7157, %v7141
    %v8502 = vpack.c.b16 %v7158, %v7142
    %v8503 = vpack.c.b16 %v7159, %v7143
    %v8504 = vpack.c.b16 %v7160, %v7144
    %v8505 = vpack.c.b16 %v7161, %v7145
    %v8506 = vpack.c.b16 %v7162, %v7146
    %v8507 = vpack.c.b16 %v7163, %v7147
    %v8508 = vpack.c.b16 %v7164, %v7148
    %v8509 = vpack.c.b16 %v7165, %v7149
    %v8510 = vpack.c.b16 %v7182, %v7166
    %v8511 = vpack.c.b16 %v7183, %v7167
    %v8512 = vpack.c.b16 %v7184, %v7168
    %v8513 = vpack.c.b16 %v7185, %v7169
    %v8514 = vpack.c.b16 %v7186, %v7170
    %v8515 = vpack.c.b16 %v7187, %v7171
    %v8516 = vpack.c.b16 %v7188, %v7172
    %v8517 = vpack.c.b16 %v7189, %v7173
    %v8518 = vpack.c.b16 %v7190, %v7174
    %v8519 = vpack.c.b16 %v7191, %v7175
    %v8520 = vpack.c.b16 %v7192, %v7176
    %v8521 = vpack.c.b16 %v7193, %v7177
    %v8522 = vpack.c.b16 %v7194, %v7178
    %v8523 = vpack.c.b16 %v7195, %v7179
    %v8524 = vpack.c.b16 %v7196, %v7180
    %v8525 = vpack.c.b16 %v7197, %v7181
    %v8526 = vpack.c.b16 %v7214, %v7198
    %v8527 = vpack.c.b16 %v7215, %v7199
    %v8528 = vpack.c.b16 %v7216, %v7200
    %v8529 = vpack.c.b16 %v7217, %v7201
    %v8530 = vpack.c.b16 %v7218, %v7202
    %v8531 = vpack.c.b16 %v7219, %v7203
    %v8532 = vpack.c.b16 %v7220, %v7204
    %v8533 = vpack.c.b16 %v7221, %v7205
    %v8534 = vpack.c.b16 %v7222, %v7206
    %v8535 = vpack.c.b16 %v7223, %v7207
    %v8536 = vpack.c.b16 %v7224, %v7208
    %v8537 = vpack.c.b16 %v7225, %v7209
    %v8538 = vpack.c.b16 %v7226, %v7210
    %v8539 = vpack.c.b16 %v7227, %v7211
    %v8540 = vpack.c.b16 %v7228, %v7212
    %v8541 = vpack.c.b16 %v7229, %v7213
    %v8542 = vpack.c.b16 %v7246, %v7230
    %v8543 = vpack.c.b16 %v7247, %v7231
    %v8544 = vpack.c.b16 %v7248, %v7232
    %v8545 = vpack.c.b16 %v7249, %v7233
    %v8546 = vpack.c.b16 %v7250, %v7234
    %v8547 = vpack.c.b16 %v7251, %v7235
    %v8548 = vpack.c.b16 %v7252, %v7236
    %v8549 = vpack.c.b16 %v7253, %v7237
    %v8550 = vpack.c.b16 %v7254, %v7238
    %v8551 = vpack.c.b16 %v7255, %v7239
    %v8552 = vpack.c.b16 %v7256, %v7240
    %v8553 = vpack.c.b16 %v7257, %v7241
    %v8554 = vpack.c.b16 %v7258, %v7242
    %v8555 = vpack.c.b16 %v7259, %v7243
    %v8556 = vpack.c.b16 %v7260, %v7244
    %v8557 = vpack.c.b16 %v7261, %v7245
    %v8558 = vpack.c.b16 %v7278, %v7262
    %v8559 = vpack.c.b16 %v7279, %v7263
    %v8560 = vpack.c.b16 %v7280, %v7264
    %v8561 = vpack.c.b16 %v7281, %v7265
    %v8562 = vpack.c.b16 %v7282, %v7266
    %v8563 = vpack.c.b16 %v7283, %v7267
    %v8564 = vpack.c.b16 %v7284, %v7268
    %v8565 = vpack.c.b16 %v7285, %v7269
    %v8566 = vpack.c.b16 %v7286, %v7270
    %v8567 = vpack.c.b16 %v7287, %v7271
    %v8568 = vpack.c.b16 %v7288, %v7272
    %v8569 = vpack.c.b16 %v7289, %v7273
    %v8570 = vpack.c.b16 %v7290, %v7274
    %v8571 = vpack.c.b16 %v7291, %v7275
    %v8572 = vpack.c.b16 %v7292, %v7276
    %v8573 = vpack.c.b16 %v7293, %v7277
    %v8574 = vpack.c.b16 %v7310, %v7294
    %v8575 = vpack.c.b16 %v7311, %v7295
    %v8576 = vpack.c.b16 %v7312, %v7296
    %v8577 = vpack.c.b16 %v7313, %v7297
    %v8578 = vpack.c.b16 %v7314, %v7298
    %v8579 = vpack.c.b16 %v7315, %v7299
    %v8580 = vpack.c.b16 %v7316, %v7300
    %v8581 = vpack.c.b16 %v7317, %v7301
    %v8582 = vpack.c.b16 %v7318, %v7302
    %v8583 = vpack.c.b16 %v7319, %v7303
    %v8584 = vpack.c.b16 %v7320, %v7304
    %v8585 = vpack.c.b16 %v7321, %v7305
    %v8586 = vpack.c.b16 %v7322, %v7306
    %v8587 = vpack.c.b16 %v7323, %v7307
    %v8588 = vpack.c.b16 %v7324, %v7308
    %v8589 = vpack.c.b16 %v7325, %v7309
    %v8590 = vpack.c.b16 %v7342, %v7326
    %v8591 = vpack.c.b16 %v7343, %v7327
    %v8592 = vpack.c.b16 %v7344, %v7328
    %v8593 = vpack.c.b16 %v7345, %v7329
    %v8594 = vpack.c.b16 %v7346, %v7330
    %v8595 = vpack.c.b16 %v7347, %v7331
    %v8596 = vpack.c.b16 %v7348, %v7332
    %v8597 = vpack.c.b16 %v7349, %v7333
    %v8598 = vpack.c.b16 %v7350, %v7334
    %v8599 = vpack.c.b16 %v7351, %v7335
    %v8600 = vpack.c.b16 %v7352, %v7336
    %v8601 = vpack.c.b16 %v7353, %v7337
    %v8602 = vpack.c.b16 %v7354, %v7338
    %v8603 = vpack.c.b16 %v7355, %v7339
    %v8604 = vpack.c.b16 %v7356, %v7340
    %v8605 = vpack.c.b16 %v7357, %v7341
    %v8606 = vpack.c.b16 %v7374, %v7358
    %v8607 = vpack.c.b16 %v7375, %v7359
    %v8608 = vpack.c.b16 %v7376, %v7360
    %v8609 = vpack.c.b16 %v7377, %v7361
    %v8610 = vpack.c.b16 %v7378, %v7362
    %v8611 = vpack.c.b16 %v7379, %v7363
    %v8612 = vpack.c.b16 %v7380, %v7364
    %v8613 = vpack.c.b16 %v7381, %v7365
    %v8614 = vpack.c.b16 %v7382, %v7366
    %v8615 = vpack.c.b16 %v7383, %v7367
    %v8616 = vpack.c.b16 %v7384, %v7368
    %v8617 = vpack.c.b16 %v7385, %v7369
    %v8618 = vpack.c.b16 %v7386, %v7370
    %v8619 = vpack.c.b16 %v7387, %v7371
    %v8620 = vpack.c.b16 %v7388, %v7372
    %v8621 = vpack.c.b16 %v7389, %v7373
    %v8622 = vpack.c.b16 %v7406, %v7390
    %v8623 = vpack.c.b16 %v7407, %v7391
    %v8624 = vpack.c.b16 %v7408, %v7392
    %v8625 = vpack.c.b16 %v7409, %v7393
    %v8626 = vpack.c.b16 %v7410, %v7394
    %v8627 = vpack.c.b16 %v7411, %v7395
    %v8628 = vpack.c.b16 %v7412, %v7396
    %v8629 = vpack.c.b16 %v7413, %v7397
    %v8630 = vpack.c.b16 %v7414, %v7398
    %v8631 = vpack.c.b16 %v7415, %v7399
    %v8632 = vpack.c.b16 %v7416, %v7400
    %v8633 = vpack.c.b16 %v7417, %v7401
    %v8634 = vpack.c.b16 %v7418, %v7402
    %v8635 = vpack.c.b16 %v7419, %v7403
    %v8636 = vpack.c.b16 %v7420, %v7404
    %v8637 = vpack.c.b16 %v7421, %v7405
    %v8638 = vpack.c.b16 %v7438, %v7422
    %v8639 = vpack.c.b16 %v7439, %v7423
    %v8640 = vpack.c.b16 %v7440, %v7424
    %v8641 = vpack.c.b16 %v7441, %v7425
    %v8642 = vpack.c.b16 %v7442, %v7426
    %v8643 = vpack.c.b16 %v7443, %v7427
    %v8644 = vpack.c.b16 %v7444, %v7428
    %v8645 = vpack.c.b16 %v7445, %v7429
    %v8646 = vpack.c.b16 %v7446, %v7430
    %v8647 = vpack.c.b16 %v7447, %v7431
    %v8648 = vpack.c.b16 %v7448, %v7432
    %v8649 = vpack.c.b16 %v7449, %v7433
    %v8650 = vpack.c.b16 %v7450, %v7434
    %v8651 = vpack.c.b16 %v7451, %v7435
    %v8652 = vpack.c.b16 %v7452, %v7436
    %v8653 = vpack.c.b16 %v7453, %v7437
    %v8654 = vpack.c.b16 %v7470, %v7454
    %v8655 = vpack.c.b16 %v7471, %v7455
    %v8656 = vpack.c.b16 %v7472, %v7456
    %v8657 = vpack.c.b16 %v7473, %v7457
    %v8658 = vpack.c.b16 %v7474, %v7458
    %v8659 = vpack.c.b16 %v7475, %v7459
    %v8660 = vpack.c.b16 %v7476, %v7460
    %v8661 = vpack.c.b16 %v7477, %v7461
    %v8662 = vpack.c.b16 %v7478, %v7462
    %v8663 = vpack.c.b16 %v7479, %v7463
    %v8664 = vpack.c.b16 %v7480, %v7464
    %v8665 = vpack.c.b16 %v7481, %v7465
    %v8666 = vpack.c.b16 %v7482, %v7466
    %v8667 = vpack.c.b16 %v7483, %v7467
    %v8668 = vpack.c.b16 %v7484, %v7468
    %v8669 = vpack.c.b16 %v7485, %v7469
    %v8670 = vpack.c.b16 %v7502, %v7486
    %v8671 = vpack.c.b16 %v7503, %v7487
    %v8672 = vpack.c.b16 %v7504, %v7488
    %v8673 = vpack.c.b16 %v7505, %v7489
    %v8674 = vpack.c.b16 %v7506, %v7490
    %v8675 = vpack.c.b16 %v7507, %v7491
    %v8676 = vpack.c.b16 %v7508, %v7492
    %v8677 = vpack.c.b16 %v7509, %v7493
    %v8678 = vpack.c.b16 %v7510, %v7494
    %v8679 = vpack.c.b16 %v7511, %v7495
    %v8680 = vpack.c.b16 %v7512, %v7496
    %v8681 = vpack.c.b16 %v7513, %v7497
    %v8682 = vpack.c.b16 %v7514, %v7498
    %v8683 = vpack.c.b16 %v7515, %v7499
    %v8684 = vpack.c.b16 %v7516, %v7500
    %v8685 = vpack.c.b16 %v7517, %v7501
    %v8686 = vpack.c.b16 %v7534, %v7518
    %v8687 = vpack.c.b16 %v7535, %v7519
    %v8688 = vpack.c.b16 %v7536, %v7520
    %v8689 = vpack.c.b16 %v7537, %v7521
    %v8690 = vpack.c.b16 %v7538, %v7522
    %v8691 = vpack.c.b16 %v7539, %v7523
    %v8692 = vpack.c.b16 %v7540, %v7524
    %v8693 = vpack.c.b16 %v7541, %v7525
    %v8694 = vpack.c.b16 %v7542, %v7526
    %v8695 = vpack.c.b16 %v7543, %v7527
    %v8696 = vpack.c.b16 %v7544, %v7528
    %v8697 = vpack.c.b16 %v7545, %v7529
    %v8698 = vpack.c.b16 %v7546, %v7530
    %v8699 = vpack.c.b16 %v7547, %v7531
    %v8700 = vpack.c.b16 %v7548, %v7532
    %v8701 = vpack.c.b16 %v7549, %v7533
    %v8702 = vpack.c.b16 %v7566, %v7550
    %v8703 = vpack.c.b16 %v7567, %v7551
    %v8704 = vpack.c.b16 %v7568, %v7552
    %v8705 = vpack.c.b16 %v7569, %v7553
    %v8706 = vpack.c.b16 %v7570, %v7554
    %v8707 = vpack.c.b16 %v7571, %v7555
    %v8708 = vpack.c.b16 %v7572, %v7556
    %v8709 = vpack.c.b16 %v7573, %v7557
    %v8710 = vpack.c.b16 %v7574, %v7558
    %v8711 = vpack.c.b16 %v7575, %v7559
    %v8712 = vpack.c.b16 %v7576, %v7560
    %v8713 = vpack.c.b16 %v7577, %v7561
    %v8714 = vpack.c.b16 %v7578, %v7562
    %v8715 = vpack.c.b16 %v7579, %v7563
    %v8716 = vpack.c.b16 %v7580, %v7564
    %v8717 = vpack.c.b16 %v7581, %v7565
    %v8718 = vpack.c.b16 %v7598, %v7582
    %v8719 = vpack.c.b16 %v7599, %v7583
    %v8720 = vpack.c.b16 %v7600, %v7584
    %v8721 = vpack.c.b16 %v7601, %v7585
    %v8722 = vpack.c.b16 %v7602, %v7586
    %v8723 = vpack.c.b16 %v7603, %v7587
    %v8724 = vpack.c.b16 %v7604, %v7588
    %v8725 = vpack.c.b16 %v7605, %v7589
    %v8726 = vpack.c.b16 %v7606, %v7590
    %v8727 = vpack.c.b16 %v7607, %v7591
    %v8728 = vpack.c.b16 %v7608, %v7592
    %v8729 = vpack.c.b16 %v7609, %v7593
    %v8730 = vpack.c.b16 %v7610, %v7594
    %v8731 = vpack.c.b16 %v7611, %v7595
    %v8732 = vpack.c.b16 %v7612, %v7596
    %v8733 = vpack.c.b16 %v7613, %v7597
    %v8734 = vpack.c.b16 %v7630, %v7614
    %v8735 = vpack.c.b16 %v7631, %v7615
    %v8736 = vpack.c.b16 %v7632, %v7616
    %v8737 = vpack.c.b16 %v7633, %v7617
    %v8738 = vpack.c.b16 %v7634, %v7618
    %v8739 = vpack.c.b16 %v7635, %v7619
    %v8740 = vpack.c.b16 %v7636, %v7620
    %v8741 = vpack.c.b16 %v7637, %v7621
    %v8742 = vpack.c.b16 %v7638, %v7622
    %v8743 = vpack.c.b16 %v7639, %v7623
    %v8744 = vpack.c.b16 %v7640, %v7624
    %v8745 = vpack.c.b16 %v7641, %v7625
    %v8746 = vpack.c.b16 %v7642, %v7626
    %v8747 = vpack.c.b16 %v7643, %v7627
    %v8748 = vpack.c.b16 %v7644, %v7628
    %v8749 = vpack.c.b16 %v7645, %v7629
    %v8750 = vpack.c.b16 %v7662, %v7646
    %v8751 = vpack.c.b16 %v7663, %v7647
    %v8752 = vpack.c.b16 %v7664, %v7648
    %v8753 = vpack.c.b16 %v7665, %v7649
    %v8754 = vpack.c.b16 %v7666, %v7650
    %v8755 = vpack.c.b16 %v7667, %v7651
    %v8756 = vpack.c.b16 %v7668, %v7652
    %v8757 = vpack.c.b16 %v7669, %v7653
    %v8758 = vpack.c.b16 %v7670, %v7654
    %v8759 = vpack.c.b16 %v7671, %v7655
    %v8760 = vpack.c.b16 %v7672, %v7656
    %v8761 = vpack.c.b16 %v7673, %v7657
    %v8762 = vpack.c.b16 %v7674, %v7658
    %v8763 = vpack.c.b16 %v7675, %v7659
    %v8764 = vpack.c.b16 %v7676, %v7660
    %v8765 = vpack.c.b16 %v7677, %v7661
    %v8766 = vpack.c.b16 %v7694, %v7678
    %v8767 = vpack.c.b16 %v7695, %v7679
    %v8768 = vpack.c.b16 %v7696, %v7680
    %v8769 = vpack.c.b16 %v7697, %v7681
    %v8770 = vpack.c.b16 %v7698, %v7682
    %v8771 = vpack.c.b16 %v7699, %v7683
    %v8772 = vpack.c.b16 %v7700, %v7684
    %v8773 = vpack.c.b16 %v7701, %v7685
    %v8774 = vpack.c.b16 %v7702, %v7686
    %v8775 = vpack.c.b16 %v7703, %v7687
    %v8776 = vpack.c.b16 %v7704, %v7688
    %v8777 = vpack.c.b16 %v7705, %v7689
    %v8778 = vpack.c.b16 %v7706, %v7690
    %v8779 = vpack.c.b16 %v7707, %v7691
    %v8780 = vpack.c.b16 %v7708, %v7692
    %v8781 = vpack.c.b16 %v7709, %v7693
    %v8782 = vpack.c.b16 %v7726, %v7710
    %v8783 = vpack.c.b16 %v7727, %v7711
    %v8784 = vpack.c.b16 %v7728, %v7712
    %v8785 = vpack.c.b16 %v7729, %v7713
    %v8786 = vpack.c.b16 %v7730, %v7714
    %v8787 = vpack.c.b16 %v7731, %v7715
    %v8788 = vpack.c.b16 %v7732, %v7716
    %v8789 = vpack.c.b16 %v7733, %v7717
    %v8790 = vpack.c.b16 %v7734, %v7718
    %v8791 = vpack.c.b16 %v7735, %v7719
    %v8792 = vpack.c.b16 %v7736, %v7720
    %v8793 = vpack.c.b16 %v7737, %v7721
    %v8794 = vpack.c.b16 %v7738, %v7722
    %v8795 = vpack.c.b16 %v7739, %v7723
    %v8796 = vpack.c.b16 %v7740, %v7724
    %v8797 = vpack.c.b16 %v7741, %v7725
    %v8798 = vpack.c.b16 %v7758, %v7742
    %v8799 = vpack.c.b16 %v7759, %v7743
    %v8800 = vpack.c.b16 %v7760, %v7744
    %v8801 = vpack.c.b16 %v7761, %v7745
    %v8802 = vpack.c.b16 %v7762, %v7746
    %v8803 = vpack.c.b16 %v7763, %v7747
    %v8804 = vpack.c.b16 %v7764, %v7748
    %v8805 = vpack.c.b16 %v7765, %v7749
    %v8806 = vpack.c.b16 %v7766, %v7750
    %v8807 = vpack.c.b16 %v7767, %v7751
    %v8808 = vpack.c.b16 %v7768, %v7752
    %v8809 = vpack.c.b16 %v7769, %v7753
    %v8810 = vpack.c.b16 %v7770, %v7754
    %v8811 = vpack.c.b16 %v7771, %v7755
    %v8812 = vpack.c.b16 %v7772, %v7756
    %v8813 = vpack.c.b16 %v7773, %v7757
    %v8814 = vpack.c.b16 %v7790, %v7774
    %v8815 = vpack.c.b16 %v7791, %v7775
    %v8816 = vpack.c.b16 %v7792, %v7776
    %v8817 = vpack.c.b16 %v7793, %v7777
    %v8818 = vpack.c.b16 %v7794, %v7778
    %v8819 = vpack.c.b16 %v7795, %v7779
    %v8820 = vpack.c.b16 %v7796, %v7780
    %v8821 = vpack.c.b16 %v7797, %v7781
    %v8822 = vpack.c.b16 %v7798, %v7782
    %v8823 = vpack.c.b16 %v7799, %v7783
    %v8824 = vpack.c.b16 %v7800, %v7784
    %v8825 = vpack.c.b16 %v7801, %v7785
    %v8826 = vpack.c.b16 %v7802, %v7786
    %v8827 = vpack.c.b16 %v7803, %v7787
    %v8828 = vpack.c.b16 %v7804, %v7788
    %v8829 = vpack.c.b16 %v7805, %v7789
    %9854 = vmatprep.subr.bf16.mxu0 %v7807
    %9855 = vmatpush1.bf16.msra.mxu0 %v7806
    %9856 = vmatprep.subr.bf16.mxu0 %v7823
    %9857 = vmatpush1.bf16.msra.mxu0 %v7822
    %9858 = vmatprep.subr.bf16.mxu0 %v7839
    %9859 = vmatpush1.bf16.msra.mxu0 %v7838
    %9860 = vmatprep.subr.bf16.mxu0 %v7855
    %9861 = vmatpush1.bf16.msra.mxu0 %v7854
    %9862 = vmatprep.subr.bf16.mxu0 %v7871
    %9863 = vmatpush1.bf16.msra.mxu0 %v7870
    %9864 = vmatprep.subr.bf16.mxu0 %v7887
    %9865 = vmatpush1.bf16.msra.mxu0 %v7886
    %9866 = vmatprep.subr.bf16.mxu0 %v7903
    %9867 = vmatpush1.bf16.msra.mxu0 %v7902
    %9868 = vmatprep.subr.bf16.mxu0 %v7919
    %9869 = vmatpush1.bf16.msra.mxu0 %v7918
    %9870 = vmatprep.subr.bf16.mxu0 %v7935
    %9871 = vmatpush1.bf16.msra.mxu0 %v7934
    %9872 = vmatprep.subr.bf16.mxu0 %v7951
    %9873 = vmatpush1.bf16.msra.mxu0 %v7950
    %9874 = vmatprep.subr.bf16.mxu0 %v7967
    %9875 = vmatpush1.bf16.msra.mxu0 %v7966
    %9876 = vmatprep.subr.bf16.mxu0 %v7983
    %9877 = vmatpush1.bf16.msra.mxu0 %v7982
    %9878 = vmatprep.subr.bf16.mxu0 %v7999
    %9879 = vmatpush1.bf16.msra.mxu0 %v7998
    %9880 = vmatprep.subr.bf16.mxu0 %v8015
    %9881 = vmatpush1.bf16.msra.mxu0 %v8014
    %9882 = vmatprep.subr.bf16.mxu0 %v8031
    %9883 = vmatpush1.bf16.msra.mxu0 %v8030
    %9884 = vmatprep.subr.bf16.mxu0 %v8047
    %9885 = vmatpush1.bf16.msra.mxu0 %v8046
    %9886 = vmatprep.mubr.bf16.mxu0 %v3619
    %9887 = vmatmul.mubr.bf16.gmra.mrb[0].mxu0 %v3618
    %v9888 = vpop.f32.mrb[0].mxu0
    %v9889 = vadd.f32 %v4657, %v9888
    %v9890 = vpop.f32.mrb[0].mxu0
    %v9891 = vadd.f32 %v4661, %v9890
    %v9892 = vpop.f32.mrb[0].mxu0
    %v9893 = vpop.f32.mrb[0].mxu0
    %9894 = vdwg.mxu0
    %9895 = vmatprep.subr.bf16.mxu0 %v8063
    %9896 = vmatpush1.bf16.msra.mxu0 %v8062
    %9897 = vmatprep.subr.bf16.mxu0 %v8079
    %9898 = vmatpush1.bf16.msra.mxu0 %v8078
    %9899 = vmatprep.subr.bf16.mxu0 %v8095
    %9900 = vmatpush1.bf16.msra.mxu0 %v8094
    %9901 = vmatprep.subr.bf16.mxu0 %v8111
    %9902 = vmatpush1.bf16.msra.mxu0 %v8110
    %9903 = vmatprep.subr.bf16.mxu0 %v8127
    %9904 = vmatpush1.bf16.msra.mxu0 %v8126
    %9905 = vmatprep.subr.bf16.mxu0 %v8143
    %9906 = vmatpush1.bf16.msra.mxu0 %v8142
    %9907 = vmatprep.subr.bf16.mxu0 %v8159
    %9908 = vmatpush1.bf16.msra.mxu0 %v8158
    %9909 = vmatprep.subr.bf16.mxu0 %v8175
    %9910 = vmatpush1.bf16.msra.mxu0 %v8174
    %9911 = vmatprep.subr.bf16.mxu0 %v8191
    %9912 = vmatpush1.bf16.msra.mxu0 %v8190
    %9913 = vmatprep.subr.bf16.mxu0 %v8207
    %9914 = vmatpush1.bf16.msra.mxu0 %v8206
    %9915 = vmatprep.subr.bf16.mxu0 %v8223
    %9916 = vmatpush1.bf16.msra.mxu0 %v8222
    %9917 = vmatprep.subr.bf16.mxu0 %v8239
    %9918 = vmatpush1.bf16.msra.mxu0 %v8238
    %9919 = vmatprep.subr.bf16.mxu0 %v8255
    %9920 = vmatpush1.bf16.msra.mxu0 %v8254
    %9921 = vmatprep.subr.bf16.mxu0 %v8271
    %9922 = vmatpush1.bf16.msra.mxu0 %v8270
    %9923 = vmatprep.subr.bf16.mxu0 %v8287
    %9924 = vmatpush1.bf16.msra.mxu0 %v8286
    %9925 = vmatprep.subr.bf16.mxu0 %v8303
    %9926 = vmatpush1.bf16.msra.mxu0 %v8302
    %9927 = vmatprep.mubr.bf16.mxu0 %v3621
    %9928 = vmatmul.mubr.bf16.gmra.mrb[0].mxu0 %v3620
    %v9929 = vpop.f32.mrb[0].mxu0
    %v9930 = vadd.f32 %v9889, %v9929
    %v9931 = vpop.f32.mrb[0].mxu0
    %v9932 = vadd.f32 %v9891, %v9931
    %v9933 = vpop.f32.mrb[0].mxu0
    %v9934 = vpop.f32.mrb[0].mxu0
    %9935 = vdwg.mxu0
    %9936 = vmatprep.subr.bf16.mxu0 %v8319
    %9937 = vmatpush1.bf16.msra.mxu0 %v8318
    %9938 = vmatprep.subr.bf16.mxu0 %v8335
    %9939 = vmatpush1.bf16.msra.mxu0 %v8334
    %9940 = vmatprep.subr.bf16.mxu0 %v8351
    %9941 = vmatpush1.bf16.msra.mxu0 %v8350
    %9942 = vmatprep.subr.bf16.mxu0 %v8367
    %9943 = vmatpush1.bf16.msra.mxu0 %v8366
    %9944 = vmatprep.subr.bf16.mxu0 %v8383
    %9945 = vmatpush1.bf16.msra.mxu0 %v8382
    %9946 = vmatprep.subr.bf16.mxu0 %v8399
    %9947 = vmatpush1.bf16.msra.mxu0 %v8398
    %9948 = vmatprep.subr.bf16.mxu0 %v8415
    %9949 = vmatpush1.bf16.msra.mxu0 %v8414
    %9950 = vmatprep.subr.bf16.mxu0 %v8431
    %9951 = vmatpush1.bf16.msra.mxu0 %v8430
    %9952 = vmatprep.subr.bf16.mxu0 %v8447
    %9953 = vmatpush1.bf16.msra.mxu0 %v8446
    %9954 = vmatprep.subr.bf16.mxu0 %v8463
    %9955 = vmatpush1.bf16.msra.mxu0 %v8462
    %9956 = vmatprep.subr.bf16.mxu0 %v8479
    %9957 = vmatpush1.bf16.msra.mxu0 %v8478
    %9958 = vmatprep.subr.bf16.mxu0 %v8495
    %9959 = vmatpush1.bf16.msra.mxu0 %v8494
    %9960 = vmatprep.subr.bf16.mxu0 %v8511
    %9961 = vmatpush1.bf16.msra.mxu0 %v8510
    %9962 = vmatprep.subr.bf16.mxu0 %v8527
    %9963 = vmatpush1.bf16.msra.mxu0 %v8526
    %9964 = vmatprep.subr.bf16.mxu0 %v8543
    %9965 = vmatpush1.bf16.msra.mxu0 %v8542
    %9966 = vmatprep.subr.bf16.mxu0 %v8559
    %9967 = vmatpush1.bf16.msra.mxu0 %v8558
    %9968 = vmatprep.mubr.bf16.mxu0 %v3623
    %9969 = vmatmul.mubr.bf16.gmra.mrb[0].mxu0 %v3622
    %v9970 = vpop.f32.mrb[0].mxu0
    %v9971 = vadd.f32 %v9930, %v9970
    %v9972 = vpop.f32.mrb[0].mxu0
    %v9973 = vadd.f32 %v9932, %v9972
    %v9974 = vpop.f32.mrb[0].mxu0
    %v9975 = vpop.f32.mrb[0].mxu0
    %9976 = vdwg.mxu0
    %9977 = vmatprep.subr.bf16.mxu0 %v8575
    %9978 = vmatpush1.bf16.msra.mxu0 %v8574
    %9979 = vmatprep.subr.bf16.mxu0 %v8591
    %9980 = vmatpush1.bf16.msra.mxu0 %v8590
    %9981 = vmatprep.subr.bf16.mxu0 %v8607
    %9982 = vmatpush1.bf16.msra.mxu0 %v8606
    %9983 = vmatprep.subr.bf16.mxu0 %v8623
    %9984 = vmatpush1.bf16.msra.mxu0 %v8622
    %9985 = vmatprep.subr.bf16.mxu0 %v8639
    %9986 = vmatpush1.bf16.msra.mxu0 %v8638
    %9987 = vmatprep.subr.bf16.mxu0 %v8655
    %9988 = vmatpush1.bf16.msra.mxu0 %v8654
    %9989 = vmatprep.subr.bf16.mxu0 %v8671
    %9990 = vmatpush1.bf16.msra.mxu0 %v8670
    %9991 = vmatprep.subr.bf16.mxu0 %v8687
    %9992 = vmatpush1.bf16.msra.mxu0 %v8686
    %9993 = vmatprep.subr.bf16.mxu0 %v8703
    %9994 = vmatpush1.bf16.msra.mxu0 %v8702
    %9995 = vmatprep.subr.bf16.mxu0 %v8719
    %9996 = vmatpush1.bf16.msra.mxu0 %v8718
    %9997 = vmatprep.subr.bf16.mxu0 %v8735
    %9998 = vmatpush1.bf16.msra.mxu0 %v8734
    %9999 = vmatprep.subr.bf16.mxu0 %v8751
    %10000 = vmatpush1.bf16.msra.mxu0 %v8750
    %10001 = vmatprep.subr.bf16.mxu0 %v8767
    %10002 = vmatpush1.bf16.msra.mxu0 %v8766
    %10003 = vmatprep.subr.bf16.mxu0 %v8783
    %10004 = vmatpush1.bf16.msra.mxu0 %v8782
    %10005 = vmatprep.subr.bf16.mxu0 %v8799
    %10006 = vmatpush1.bf16.msra.mxu0 %v8798
    %10007 = vmatprep.subr.bf16.mxu0 %v8815
    %10008 = vmatpush1.bf16.msra.mxu0 %v8814
    %10009 = vmatprep.mubr.bf16.mxu0 %v3625
    %10010 = vmatmul.mubr.bf16.gmra.mrb[0].mxu0 %v3624
    %v10011 = vpop.f32.mrb[0].mxu0
    %v10012 = vadd.f32 %v9971, %v10011
    %v10013 = vpop.f32.mrb[0].mxu0
    %v10014 = vadd.f32 %v9973, %v10013
    %v10015 = vpop.f32.mrb[0].mxu0
    %v10016 = vpop.f32.mrb[0].mxu0
    %10017 = vdwg.mxu0
    %10018 = vmatprep.subr.bf16.mxu0 %v7809
    %10019 = vmatpush1.bf16.msra.mxu0 %v7808
    %10020 = vmatprep.subr.bf16.mxu0 %v7825
    %10021 = vmatpush1.bf16.msra.mxu0 %v7824
    %10022 = vmatprep.subr.bf16.mxu0 %v7841
    %10023 = vmatpush1.bf16.msra.mxu0 %v7840
    %10024 = vmatprep.subr.bf16.mxu0 %v7857
    %10025 = vmatpush1.bf16.msra.mxu0 %v7856
    %10026 = vmatprep.subr.bf16.mxu0 %v7873
    %10027 = vmatpush1.bf16.msra.mxu0 %v7872
    %10028 = vmatprep.subr.bf16.mxu0 %v7889
    %10029 = vmatpush1.bf16.msra.mxu0 %v7888
    %10030 = vmatprep.subr.bf16.mxu0 %v7905
    %10031 = vmatpush1.bf16.msra.mxu0 %v7904
    %10032 = vmatprep.subr.bf16.mxu0 %v7921
    %10033 = vmatpush1.bf16.msra.mxu0 %v7920
    %10034 = vmatprep.subr.bf16.mxu0 %v7937
    %10035 = vmatpush1.bf16.msra.mxu0 %v7936
    %10036 = vmatprep.subr.bf16.mxu0 %v7953
    %10037 = vmatpush1.bf16.msra.mxu0 %v7952
    %10038 = vmatprep.subr.bf16.mxu0 %v7969
    %10039 = vmatpush1.bf16.msra.mxu0 %v7968
    %10040 = vmatprep.subr.bf16.mxu0 %v7985
    %10041 = vmatpush1.bf16.msra.mxu0 %v7984
    %10042 = vmatprep.subr.bf16.mxu0 %v8001
    %10043 = vmatpush1.bf16.msra.mxu0 %v8000
    %10044 = vmatprep.subr.bf16.mxu0 %v8017
    %10045 = vmatpush1.bf16.msra.mxu0 %v8016
    %10046 = vmatprep.subr.bf16.mxu0 %v8033
    %10047 = vmatpush1.bf16.msra.mxu0 %v8032
    %10048 = vmatprep.subr.bf16.mxu0 %v8049
    %10049 = vmatpush1.bf16.msra.mxu0 %v8048
    %10050 = vmatprep.mubr.bf16.mxu0 %v3619
    %10051 = vmatmul.mubr.bf16.gmra.mrb[0].mxu0 %v3618
    %v10052 = vpop.f32.mrb[0].mxu0
    %v10053 = vadd.f32 %v4665, %v10052
    %v10054 = vpop.f32.mrb[0].mxu0
    %v10055 = vadd.f32 %v4669, %v10054
    %v10056 = vpop.f32.mrb[0].mxu0
    %v10057 = vpop.f32.mrb[0].mxu0
    %10058 = vdwg.mxu0
    %10059 = vmatprep.subr.bf16.mxu0 %v8065
    %10060 = vmatpush1.bf16.msra.mxu0 %v8064
    %10061 = vmatprep.subr.bf16.mxu0 %v8081
    %10062 = vmatpush1.bf16.msra.mxu0 %v8080
    %10063 = vmatprep.subr.bf16.mxu0 %v8097
    %10064 = vmatpush1.bf16.msra.mxu0 %v8096
    %10065 = vmatprep.subr.bf16.mxu0 %v8113
    %10066 = vmatpush1.bf16.msra.mxu0 %v8112
    %10067 = vmatprep.subr.bf16.mxu0 %v8129
    %10068 = vmatpush1.bf16.msra.mxu0 %v8128
    %10069 = vmatprep.subr.bf16.mxu0 %v8145
    %10070 = vmatpush1.bf16.msra.mxu0 %v8144
    %10071 = vmatprep.subr.bf16.mxu0 %v8161
    %10072 = vmatpush1.bf16.msra.mxu0 %v8160
    %10073 = vmatprep.subr.bf16.mxu0 %v8177
    %10074 = vmatpush1.bf16.msra.mxu0 %v8176
    %10075 = vmatprep.subr.bf16.mxu0 %v8193
    %10076 = vmatpush1.bf16.msra.mxu0 %v8192
    %10077 = vmatprep.subr.bf16.mxu0 %v8209
    %10078 = vmatpush1.bf16.msra.mxu0 %v8208
    %10079 = vmatprep.subr.bf16.mxu0 %v8225
    %10080 = vmatpush1.bf16.msra.mxu0 %v8224
    %10081 = vmatprep.subr.bf16.mxu0 %v8241
    %10082 = vmatpush1.bf16.msra.mxu0 %v8240
    %10083 = vmatprep.subr.bf16.mxu0 %v8257
    %10084 = vmatpush1.bf16.msra.mxu0 %v8256
    %10085 = vmatprep.subr.bf16.mxu0 %v8273
    %10086 = vmatpush1.bf16.msra.mxu0 %v8272
    %10087 = vmatprep.subr.bf16.mxu0 %v8289
    %10088 = vmatpush1.bf16.msra.mxu0 %v8288
    %10089 = vmatprep.subr.bf16.mxu0 %v8305
    %10090 = vmatpush1.bf16.msra.mxu0 %v8304
    %10091 = vmatprep.mubr.bf16.mxu0 %v3621
    %10092 = vmatmul.mubr.bf16.gmra.mrb[0].mxu0 %v3620
    %v10093 = vpop.f32.mrb[0].mxu0
    %v10094 = vadd.f32 %v10053, %v10093
    %v10095 = vpop.f32.mrb[0].mxu0
    %v10096 = vadd.f32 %v10055, %v10095
    %v10097 = vpop.f32.mrb[0].mxu0
    %v10098 = vpop.f32.mrb[0].mxu0
    %10099 = vdwg.mxu0
    %10100 = vmatprep.subr.bf16.mxu0 %v8321
    %10101 = vmatpush1.bf16.msra.mxu0 %v8320
    %10102 = vmatprep.subr.bf16.mxu0 %v8337
    %10103 = vmatpush1.bf16.msra.mxu0 %v8336
    %10104 = vmatprep.subr.bf16.mxu0 %v8353
    %10105 = vmatpush1.bf16.msra.mxu0 %v8352
    %10106 = vmatprep.subr.bf16.mxu0 %v8369
    %10107 = vmatpush1.bf16.msra.mxu0 %v8368
    %10108 = vmatprep.subr.bf16.mxu0 %v8385
    %10109 = vmatpush1.bf16.msra.mxu0 %v8384
    %10110 = vmatprep.subr.bf16.mxu0 %v8401
    %10111 = vmatpush1.bf16.msra.mxu0 %v8400
    %10112 = vmatprep.subr.bf16.mxu0 %v8417
    %10113 = vmatpush1.bf16.msra.mxu0 %v8416
    %10114 = vmatprep.subr.bf16.mxu0 %v8433
    %10115 = vmatpush1.bf16.msra.mxu0 %v8432
    %10116 = vmatprep.subr.bf16.mxu0 %v8449
    %10117 = vmatpush1.bf16.msra.mxu0 %v8448
    %10118 = vmatprep.subr.bf16.mxu0 %v8465
    %10119 = vmatpush1.bf16.msra.mxu0 %v8464
    %10120 = vmatprep.subr.bf16.mxu0 %v8481
    %10121 = vmatpush1.bf16.msra.mxu0 %v8480
    %10122 = vmatprep.subr.bf16.mxu0 %v8497
    %10123 = vmatpush1.bf16.msra.mxu0 %v8496
    %10124 = vmatprep.subr.bf16.mxu0 %v8513
    %10125 = vmatpush1.bf16.msra.mxu0 %v8512
    %10126 = vmatprep.subr.bf16.mxu0 %v8529
    %10127 = vmatpush1.bf16.msra.mxu0 %v8528
    %10128 = vmatprep.subr.bf16.mxu0 %v8545
    %10129 = vmatpush1.bf16.msra.mxu0 %v8544
    %10130 = vmatprep.subr.bf16.mxu0 %v8561
    %10131 = vmatpush1.bf16.msra.mxu0 %v8560
    %10132 = vmatprep.mubr.bf16.mxu0 %v3623
    %10133 = vmatmul.mubr.bf16.gmra.mrb[0].mxu0 %v3622
    %v10134 = vpop.f32.mrb[0].mxu0
    %v10135 = vadd.f32 %v10094, %v10134
    %v10136 = vpop.f32.mrb[0].mxu0
    %v10137 = vadd.f32 %v10096, %v10136
    %v10138 = vpop.f32.mrb[0].mxu0
    %v10139 = vpop.f32.mrb[0].mxu0
    %10140 = vdwg.mxu0
    %10141 = vmatprep.subr.bf16.mxu0 %v8577
    %10142 = vmatpush1.bf16.msra.mxu0 %v8576
    %10143 = vmatprep.subr.bf16.mxu0 %v8593
    %10144 = vmatpush1.bf16.msra.mxu0 %v8592
    %10145 = vmatprep.subr.bf16.mxu0 %v8609
    %10146 = vmatpush1.bf16.msra.mxu0 %v8608
    %10147 = vmatprep.subr.bf16.mxu0 %v8625
    %10148 = vmatpush1.bf16.msra.mxu0 %v8624
    %10149 = vmatprep.subr.bf16.mxu0 %v8641
    %10150 = vmatpush1.bf16.msra.mxu0 %v8640
    %10151 = vmatprep.subr.bf16.mxu0 %v8657
    %10152 = vmatpush1.bf16.msra.mxu0 %v8656
    %10153 = vmatprep.subr.bf16.mxu0 %v8673
    %10154 = vmatpush1.bf16.msra.mxu0 %v8672
    %10155 = vmatprep.subr.bf16.mxu0 %v8689
    %10156 = vmatpush1.bf16.msra.mxu0 %v8688
    %10157 = vmatprep.subr.bf16.mxu0 %v8705
    %10158 = vmatpush1.bf16.msra.mxu0 %v8704
    %10159 = vmatprep.subr.bf16.mxu0 %v8721
    %10160 = vmatpush1.bf16.msra.mxu0 %v8720
    %10161 = vmatprep.subr.bf16.mxu0 %v8737
    %10162 = vmatpush1.bf16.msra.mxu0 %v8736
    %10163 = vmatprep.subr.bf16.mxu0 %v8753
    %10164 = vmatpush1.bf16.msra.mxu0 %v8752
    %10165 = vmatprep.subr.bf16.mxu0 %v8769
    %10166 = vmatpush1.bf16.msra.mxu0 %v8768
    %10167 = vmatprep.subr.bf16.mxu0 %v8785
    %10168 = vmatpush1.bf16.msra.mxu0 %v8784
    %10169 = vmatprep.subr.bf16.mxu0 %v8801
    %10170 = vmatpush1.bf16.msra.mxu0 %v8800
    %10171 = vmatprep.subr.bf16.mxu0 %v8817
    %10172 = vmatpush1.bf16.msra.mxu0 %v8816
    %10173 = vmatprep.mubr.bf16.mxu0 %v3625
    %10174 = vmatmul.mubr.bf16.gmra.mrb[0].mxu0 %v3624
    %v10175 = vpop.f32.mrb[0].mxu0
    %v10176 = vadd.f32 %v10135, %v10175
    %v10177 = vpop.f32.mrb[0].mxu0
    %v10178 = vadd.f32 %v10137, %v10177
    %v10179 = vpop.f32.mrb[0].mxu0
    %v10180 = vpop.f32.mrb[0].mxu0
    %10181 = vdwg.mxu0
    %10182 = vmatprep.subr.bf16.mxu0 %v7811
    %10183 = vmatpush1.bf16.msra.mxu0 %v7810
    %10184 = vmatprep.subr.bf16.mxu0 %v7827
    %10185 = vmatpush1.bf16.msra.mxu0 %v7826
    %10186 = vmatprep.subr.bf16.mxu0 %v7843
    %10187 = vmatpush1.bf16.msra.mxu0 %v7842
    %10188 = vmatprep.subr.bf16.mxu0 %v7859
    %10189 = vmatpush1.bf16.msra.mxu0 %v7858
    %10190 = vmatprep.subr.bf16.mxu0 %v7875
    %10191 = vmatpush1.bf16.msra.mxu0 %v7874
    %10192 = vmatprep.subr.bf16.mxu0 %v7891
    %10193 = vmatpush1.bf16.msra.mxu0 %v7890
    %10194 = vmatprep.subr.bf16.mxu0 %v7907
    %10195 = vmatpush1.bf16.msra.mxu0 %v7906
    %10196 = vmatprep.subr.bf16.mxu0 %v7923
    %10197 = vmatpush1.bf16.msra.mxu0 %v7922
    %10198 = vmatprep.subr.bf16.mxu0 %v7939
    %10199 = vmatpush1.bf16.msra.mxu0 %v7938
    %10200 = vmatprep.subr.bf16.mxu0 %v7955
    %10201 = vmatpush1.bf16.msra.mxu0 %v7954
    %10202 = vmatprep.subr.bf16.mxu0 %v7971
    %10203 = vmatpush1.bf16.msra.mxu0 %v7970
    %10204 = vmatprep.subr.bf16.mxu0 %v7987
    %10205 = vmatpush1.bf16.msra.mxu0 %v7986
    %10206 = vmatprep.subr.bf16.mxu0 %v8003
    %10207 = vmatpush1.bf16.msra.mxu0 %v8002
    %10208 = vmatprep.subr.bf16.mxu0 %v8019
    %10209 = vmatpush1.bf16.msra.mxu0 %v8018
    %10210 = vmatprep.subr.bf16.mxu0 %v8035
    %10211 = vmatpush1.bf16.msra.mxu0 %v8034
    %10212 = vmatprep.subr.bf16.mxu0 %v8051
    %10213 = vmatpush1.bf16.msra.mxu0 %v8050
    %10214 = vmatprep.mubr.bf16.mxu0 %v3619
    %10215 = vmatmul.mubr.bf16.gmra.mrb[0].mxu0 %v3618
    %v10216 = vpop.f32.mrb[0].mxu0
    %v10217 = vadd.f32 %v4673, %v10216
    %v10218 = vpop.f32.mrb[0].mxu0
    %v10219 = vadd.f32 %v4677, %v10218
    %v10220 = vpop.f32.mrb[0].mxu0
    %v10221 = vpop.f32.mrb[0].mxu0
    %10222 = vdwg.mxu0
    %10223 = vmatprep.subr.bf16.mxu0 %v8067
    %10224 = vmatpush1.bf16.msra.mxu0 %v8066
    %10225 = vmatprep.subr.bf16.mxu0 %v8083
    %10226 = vmatpush1.bf16.msra.mxu0 %v8082
    %10227 = vmatprep.subr.bf16.mxu0 %v8099
    %10228 = vmatpush1.bf16.msra.mxu0 %v8098
    %10229 = vmatprep.subr.bf16.mxu0 %v8115
    %10230 = vmatpush1.bf16.msra.mxu0 %v8114
    %10231 = vmatprep.subr.bf16.mxu0 %v8131
    %10232 = vmatpush1.bf16.msra.mxu0 %v8130
    %10233 = vmatprep.subr.bf16.mxu0 %v8147
    %10234 = vmatpush1.bf16.msra.mxu0 %v8146
    %10235 = vmatprep.subr.bf16.mxu0 %v8163
    %10236 = vmatpush1.bf16.msra.mxu0 %v8162
    %10237 = vmatprep.subr.bf16.mxu0 %v8179
    %10238 = vmatpush1.bf16.msra.mxu0 %v8178
    %10239 = vmatprep.subr.bf16.mxu0 %v8195
    %10240 = vmatpush1.bf16.msra.mxu0 %v8194
    %10241 = vmatprep.subr.bf16.mxu0 %v8211
    %10242 = vmatpush1.bf16.msra.mxu0 %v8210
    %10243 = vmatprep.subr.bf16.mxu0 %v8227
    %10244 = vmatpush1.bf16.msra.mxu0 %v8226
    %10245 = vmatprep.subr.bf16.mxu0 %v8243
    %10246 = vmatpush1.bf16.msra.mxu0 %v8242
    %10247 = vmatprep.subr.bf16.mxu0 %v8259
    %10248 = vmatpush1.bf16.msra.mxu0 %v8258
    %10249 = vmatprep.subr.bf16.mxu0 %v8275
    %10250 = vmatpush1.bf16.msra.mxu0 %v8274
    %10251 = vmatprep.subr.bf16.mxu0 %v8291
    %10252 = vmatpush1.bf16.msra.mxu0 %v8290
    %10253 = vmatprep.subr.bf16.mxu0 %v8307
    %10254 = vmatpush1.bf16.msra.mxu0 %v8306
    %10255 = vmatprep.mubr.bf16.mxu0 %v3621
    %10256 = vmatmul.mubr.bf16.gmra.mrb[0].mxu0 %v3620
    %v10257 = vpop.f32.mrb[0].mxu0
    %v10258 = vadd.f32 %v10217, %v10257
    %v10259 = vpop.f32.mrb[0].mxu0
    %v10260 = vadd.f32 %v10219, %v10259
    %v10261 = vpop.f32.mrb[0].mxu0
    %v10262 = vpop.f32.mrb[0].mxu0
    %10263 = vdwg.mxu0
    %10264 = vmatprep.subr.bf16.mxu0 %v8323
    %10265 = vmatpush1.bf16.msra.mxu0 %v8322
    %10266 = vmatprep.subr.bf16.mxu0 %v8339
    %10267 = vmatpush1.bf16.msra.mxu0 %v8338
    %10268 = vmatprep.subr.bf16.mxu0 %v8355
    %10269 = vmatpush1.bf16.msra.mxu0 %v8354
    %10270 = vmatprep.subr.bf16.mxu0 %v8371
    %10271 = vmatpush1.bf16.msra.mxu0 %v8370
    %10272 = vmatprep.subr.bf16.mxu0 %v8387
    %10273 = vmatpush1.bf16.msra.mxu0 %v8386
    %10274 = vmatprep.subr.bf16.mxu0 %v8403
    %10275 = vmatpush1.bf16.msra.mxu0 %v8402
    %10276 = vmatprep.subr.bf16.mxu0 %v8419
    %10277 = vmatpush1.bf16.msra.mxu0 %v8418
    %10278 = vmatprep.subr.bf16.mxu0 %v8435
    %10279 = vmatpush1.bf16.msra.mxu0 %v8434
    %10280 = vmatprep.subr.bf16.mxu0 %v8451
    %10281 = vmatpush1.bf16.msra.mxu0 %v8450
    %10282 = vmatprep.subr.bf16.mxu0 %v8467
    %10283 = vmatpush1.bf16.msra.mxu0 %v8466
    %10284 = vmatprep.subr.bf16.mxu0 %v8483
    %10285 = vmatpush1.bf16.msra.mxu0 %v8482
    %10286 = vmatprep.subr.bf16.mxu0 %v8499
    %10287 = vmatpush1.bf16.msra.mxu0 %v8498
    %10288 = vmatprep.subr.bf16.mxu0 %v8515
    %10289 = vmatpush1.bf16.msra.mxu0 %v8514
    %10290 = vmatprep.subr.bf16.mxu0 %v8531
    %10291 = vmatpush1.bf16.msra.mxu0 %v8530
    %10292 = vmatprep.subr.bf16.mxu0 %v8547
    %10293 = vmatpush1.bf16.msra.mxu0 %v8546
    %10294 = vmatprep.subr.bf16.mxu0 %v8563
    %10295 = vmatpush1.bf16.msra.mxu0 %v8562
    %10296 = vmatprep.mubr.bf16.mxu0 %v3623
    %10297 = vmatmul.mubr.bf16.gmra.mrb[0].mxu0 %v3622
    %v10298 = vpop.f32.mrb[0].mxu0
    %v10299 = vadd.f32 %v10258, %v10298
    %v10300 = vpop.f32.mrb[0].mxu0
    %v10301 = vadd.f32 %v10260, %v10300
    %v10302 = vpop.f32.mrb[0].mxu0
    %v10303 = vpop.f32.mrb[0].mxu0
    %10304 = vdwg.mxu0
    %10305 = vmatprep.subr.bf16.mxu0 %v8579
    %10306 = vmatpush1.bf16.msra.mxu0 %v8578
    %10307 = vmatprep.subr.bf16.mxu0 %v8595
    %10308 = vmatpush1.bf16.msra.mxu0 %v8594
    %10309 = vmatprep.subr.bf16.mxu0 %v8611
    %10310 = vmatpush1.bf16.msra.mxu0 %v8610
    %10311 = vmatprep.subr.bf16.mxu0 %v8627
    %10312 = vmatpush1.bf16.msra.mxu0 %v8626
    %10313 = vmatprep.subr.bf16.mxu0 %v8643
    %10314 = vmatpush1.bf16.msra.mxu0 %v8642
    %10315 = vmatprep.subr.bf16.mxu0 %v8659
    %10316 = vmatpush1.bf16.msra.mxu0 %v8658
    %10317 = vmatprep.subr.bf16.mxu0 %v8675
    %10318 = vmatpush1.bf16.msra.mxu0 %v8674
    %10319 = vmatprep.subr.bf16.mxu0 %v8691
    %10320 = vmatpush1.bf16.msra.mxu0 %v8690
    %10321 = vmatprep.subr.bf16.mxu0 %v8707
    %10322 = vmatpush1.bf16.msra.mxu0 %v8706
    %10323 = vmatprep.subr.bf16.mxu0 %v8723
    %10324 = vmatpush1.bf16.msra.mxu0 %v8722
    %10325 = vmatprep.subr.bf16.mxu0 %v8739
    %10326 = vmatpush1.bf16.msra.mxu0 %v8738
    %10327 = vmatprep.subr.bf16.mxu0 %v8755
    %10328 = vmatpush1.bf16.msra.mxu0 %v8754
    %10329 = vmatprep.subr.bf16.mxu0 %v8771
    %10330 = vmatpush1.bf16.msra.mxu0 %v8770
    %10331 = vmatprep.subr.bf16.mxu0 %v8787
    %10332 = vmatpush1.bf16.msra.mxu0 %v8786
    %10333 = vmatprep.subr.bf16.mxu0 %v8803
    %10334 = vmatpush1.bf16.msra.mxu0 %v8802
    %10335 = vmatprep.subr.bf16.mxu0 %v8819
    %10336 = vmatpush1.bf16.msra.mxu0 %v8818
    %10337 = vmatprep.mubr.bf16.mxu0 %v3625
    %10338 = vmatmul.mubr.bf16.gmra.mrb[0].mxu0 %v3624
    %v10339 = vpop.f32.mrb[0].mxu0
    %v10340 = vadd.f32 %v10299, %v10339
    %v10341 = vpop.f32.mrb[0].mxu0
    %v10342 = vadd.f32 %v10301, %v10341
    %v10343 = vpop.f32.mrb[0].mxu0
    %v10344 = vpop.f32.mrb[0].mxu0
    %10345 = vdwg.mxu0
    %10346 = vmatprep.subr.bf16.mxu0 %v7813
    %10347 = vmatpush1.bf16.msra.mxu0 %v7812
    %10348 = vmatprep.subr.bf16.mxu0 %v7829
    %10349 = vmatpush1.bf16.msra.mxu0 %v7828
    %10350 = vmatprep.subr.bf16.mxu0 %v7845
    %10351 = vmatpush1.bf16.msra.mxu0 %v7844
    %10352 = vmatprep.subr.bf16.mxu0 %v7861
    %10353 = vmatpush1.bf16.msra.mxu0 %v7860
    %10354 = vmatprep.subr.bf16.mxu0 %v7877
    %10355 = vmatpush1.bf16.msra.mxu0 %v7876
    %10356 = vmatprep.subr.bf16.mxu0 %v7893
    %10357 = vmatpush1.bf16.msra.mxu0 %v7892
    %10358 = vmatprep.subr.bf16.mxu0 %v7909
    %10359 = vmatpush1.bf16.msra.mxu0 %v7908
    %10360 = vmatprep.subr.bf16.mxu0 %v7925
    %10361 = vmatpush1.bf16.msra.mxu0 %v7924
    %10362 = vmatprep.subr.bf16.mxu0 %v7941
    %10363 = vmatpush1.bf16.msra.mxu0 %v7940
    %10364 = vmatprep.subr.bf16.mxu0 %v7957
    %10365 = vmatpush1.bf16.msra.mxu0 %v7956
    %10366 = vmatprep.subr.bf16.mxu0 %v7973
    %10367 = vmatpush1.bf16.msra.mxu0 %v7972
    %10368 = vmatprep.subr.bf16.mxu0 %v7989
    %10369 = vmatpush1.bf16.msra.mxu0 %v7988
    %10370 = vmatprep.subr.bf16.mxu0 %v8005
    %10371 = vmatpush1.bf16.msra.mxu0 %v8004
    %10372 = vmatprep.subr.bf16.mxu0 %v8021
    %10373 = vmatpush1.bf16.msra.mxu0 %v8020
    %10374 = vmatprep.subr.bf16.mxu0 %v8037
    %10375 = vmatpush1.bf16.msra.mxu0 %v8036
    %10376 = vmatprep.subr.bf16.mxu0 %v8053
    %10377 = vmatpush1.bf16.msra.mxu0 %v8052
    %10378 = vmatprep.mubr.bf16.mxu0 %v3619
    %10379 = vmatmul.mubr.bf16.gmra.mrb[0].mxu0 %v3618
    %v10380 = vpop.f32.mrb[0].mxu0
    %v10381 = vadd.f32 %v4681, %v10380
    %v10382 = vpop.f32.mrb[0].mxu0
    %v10383 = vadd.f32 %v4685, %v10382
    %v10384 = vpop.f32.mrb[0].mxu0
    %v10385 = vpop.f32.mrb[0].mxu0
    %10386 = vdwg.mxu0
    %10387 = vmatprep.subr.bf16.mxu0 %v8069
    %10388 = vmatpush1.bf16.msra.mxu0 %v8068
    %10389 = vmatprep.subr.bf16.mxu0 %v8085
    %10390 = vmatpush1.bf16.msra.mxu0 %v8084
    %10391 = vmatprep.subr.bf16.mxu0 %v8101
    %10392 = vmatpush1.bf16.msra.mxu0 %v8100
    %10393 = vmatprep.subr.bf16.mxu0 %v8117
    %10394 = vmatpush1.bf16.msra.mxu0 %v8116
    %10395 = vmatprep.subr.bf16.mxu0 %v8133
    %10396 = vmatpush1.bf16.msra.mxu0 %v8132
    %10397 = vmatprep.subr.bf16.mxu0 %v8149
    %10398 = vmatpush1.bf16.msra.mxu0 %v8148
    %10399 = vmatprep.subr.bf16.mxu0 %v8165
    %10400 = vmatpush1.bf16.msra.mxu0 %v8164
    %10401 = vmatprep.subr.bf16.mxu0 %v8181
    %10402 = vmatpush1.bf16.msra.mxu0 %v8180
    %10403 = vmatprep.subr.bf16.mxu0 %v8197
    %10404 = vmatpush1.bf16.msra.mxu0 %v8196
    %10405 = vmatprep.subr.bf16.mxu0 %v8213
    %10406 = vmatpush1.bf16.msra.mxu0 %v8212
    %10407 = vmatprep.subr.bf16.mxu0 %v8229
    %10408 = vmatpush1.bf16.msra.mxu0 %v8228
    %10409 = vmatprep.subr.bf16.mxu0 %v8245
    %10410 = vmatpush1.bf16.msra.mxu0 %v8244
    %10411 = vmatprep.subr.bf16.mxu0 %v8261
    %10412 = vmatpush1.bf16.msra.mxu0 %v8260
    %10413 = vmatprep.subr.bf16.mxu0 %v8277
    %10414 = vmatpush1.bf16.msra.mxu0 %v8276
    %10415 = vmatprep.subr.bf16.mxu0 %v8293
    %10416 = vmatpush1.bf16.msra.mxu0 %v8292
    %10417 = vmatprep.subr.bf16.mxu0 %v8309
    %10418 = vmatpush1.bf16.msra.mxu0 %v8308
    %10419 = vmatprep.mubr.bf16.mxu0 %v3621
    %10420 = vmatmul.mubr.bf16.gmra.mrb[0].mxu0 %v3620
    %v10421 = vpop.f32.mrb[0].mxu0
    %v10422 = vadd.f32 %v10381, %v10421
    %v10423 = vpop.f32.mrb[0].mxu0
    %v10424 = vadd.f32 %v10383, %v10423
    %v10425 = vpop.f32.mrb[0].mxu0
    %v10426 = vpop.f32.mrb[0].mxu0
    %10427 = vdwg.mxu0
    %10428 = vmatprep.subr.bf16.mxu0 %v8325
    %10429 = vmatpush1.bf16.msra.mxu0 %v8324
    %10430 = vmatprep.subr.bf16.mxu0 %v8341
    %10431 = vmatpush1.bf16.msra.mxu0 %v8340
    %10432 = vmatprep.subr.bf16.mxu0 %v8357
    %10433 = vmatpush1.bf16.msra.mxu0 %v8356
    %10434 = vmatprep.subr.bf16.mxu0 %v8373
    %10435 = vmatpush1.bf16.msra.mxu0 %v8372
    %10436 = vmatprep.subr.bf16.mxu0 %v8389
    %10437 = vmatpush1.bf16.msra.mxu0 %v8388
    %10438 = vmatprep.subr.bf16.mxu0 %v8405
    %10439 = vmatpush1.bf16.msra.mxu0 %v8404
    %10440 = vmatprep.subr.bf16.mxu0 %v8421
    %10441 = vmatpush1.bf16.msra.mxu0 %v8420
    %10442 = vmatprep.subr.bf16.mxu0 %v8437
    %10443 = vmatpush1.bf16.msra.mxu0 %v8436
    %10444 = vmatprep.subr.bf16.mxu0 %v8453
    %10445 = vmatpush1.bf16.msra.mxu0 %v8452
    %10446 = vmatprep.subr.bf16.mxu0 %v8469
    %10447 = vmatpush1.bf16.msra.mxu0 %v8468
    %10448 = vmatprep.subr.bf16.mxu0 %v8485
    %10449 = vmatpush1.bf16.msra.mxu0 %v8484
    %10450 = vmatprep.subr.bf16.mxu0 %v8501
    %10451 = vmatpush1.bf16.msra.mxu0 %v8500
    %10452 = vmatprep.subr.bf16.mxu0 %v8517
    %10453 = vmatpush1.bf16.msra.mxu0 %v8516
    %10454 = vmatprep.subr.bf16.mxu0 %v8533
    %10455 = vmatpush1.bf16.msra.mxu0 %v8532
    %10456 = vmatprep.subr.bf16.mxu0 %v8549
    %10457 = vmatpush1.bf16.msra.mxu0 %v8548
    %10458 = vmatprep.subr.bf16.mxu0 %v8565
    %10459 = vmatpush1.bf16.msra.mxu0 %v8564
    %10460 = vmatprep.mubr.bf16.mxu0 %v3623
    %10461 = vmatmul.mubr.bf16.gmra.mrb[0].mxu0 %v3622
    %v10462 = vpop.f32.mrb[0].mxu0
    %v10463 = vadd.f32 %v10422, %v10462
    %v10464 = vpop.f32.mrb[0].mxu0
    %v10465 = vadd.f32 %v10424, %v10464
    %v10466 = vpop.f32.mrb[0].mxu0
    %v10467 = vpop.f32.mrb[0].mxu0
    %10468 = vdwg.mxu0
    %10469 = vmatprep.subr.bf16.mxu0 %v8581
    %10470 = vmatpush1.bf16.msra.mxu0 %v8580
    %10471 = vmatprep.subr.bf16.mxu0 %v8597
    %10472 = vmatpush1.bf16.msra.mxu0 %v8596
    %10473 = vmatprep.subr.bf16.mxu0 %v8613
    %10474 = vmatpush1.bf16.msra.mxu0 %v8612
    %10475 = vmatprep.subr.bf16.mxu0 %v8629
    %10476 = vmatpush1.bf16.msra.mxu0 %v8628
    %10477 = vmatprep.subr.bf16.mxu0 %v8645
    %10478 = vmatpush1.bf16.msra.mxu0 %v8644
    %10479 = vmatprep.subr.bf16.mxu0 %v8661
    %10480 = vmatpush1.bf16.msra.mxu0 %v8660
    %10481 = vmatprep.subr.bf16.mxu0 %v8677
    %10482 = vmatpush1.bf16.msra.mxu0 %v8676
    %10483 = vmatprep.subr.bf16.mxu0 %v8693
    %10484 = vmatpush1.bf16.msra.mxu0 %v8692
    %10485 = vmatprep.subr.bf16.mxu0 %v8709
    %10486 = vmatpush1.bf16.msra.mxu0 %v8708
    %10487 = vmatprep.subr.bf16.mxu0 %v8725
    %10488 = vmatpush1.bf16.msra.mxu0 %v8724
    %10489 = vmatprep.subr.bf16.mxu0 %v8741
    %10490 = vmatpush1.bf16.msra.mxu0 %v8740
    %10491 = vmatprep.subr.bf16.mxu0 %v8757
    %10492 = vmatpush1.bf16.msra.mxu0 %v8756
    %10493 = vmatprep.subr.bf16.mxu0 %v8773
    %10494 = vmatpush1.bf16.msra.mxu0 %v8772
    %10495 = vmatprep.subr.bf16.mxu0 %v8789
    %10496 = vmatpush1.bf16.msra.mxu0 %v8788
    %10497 = vmatprep.subr.bf16.mxu0 %v8805
    %10498 = vmatpush1.bf16.msra.mxu0 %v8804
    %10499 = vmatprep.subr.bf16.mxu0 %v8821
    %10500 = vmatpush1.bf16.msra.mxu0 %v8820
    %10501 = vmatprep.mubr.bf16.mxu0 %v3625
    %10502 = vmatmul.mubr.bf16.gmra.mrb[0].mxu0 %v3624
    %v10503 = vpop.f32.mrb[0].mxu0
    %v10504 = vadd.f32 %v10463, %v10503
    %v10505 = vpop.f32.mrb[0].mxu0
    %v10506 = vadd.f32 %v10465, %v10505
    %v10507 = vpop.f32.mrb[0].mxu0
    %v10508 = vpop.f32.mrb[0].mxu0
    %10509 = vdwg.mxu0
    %10510 = vmatprep.subr.bf16.mxu0 %v7815
    %10511 = vmatpush1.bf16.msra.mxu0 %v7814
    %10512 = vmatprep.subr.bf16.mxu0 %v7831
    %10513 = vmatpush1.bf16.msra.mxu0 %v7830
    %10514 = vmatprep.subr.bf16.mxu0 %v7847
    %10515 = vmatpush1.bf16.msra.mxu0 %v7846
    %10516 = vmatprep.subr.bf16.mxu0 %v7863
    %10517 = vmatpush1.bf16.msra.mxu0 %v7862
    %10518 = vmatprep.subr.bf16.mxu0 %v7879
    %10519 = vmatpush1.bf16.msra.mxu0 %v7878
    %10520 = vmatprep.subr.bf16.mxu0 %v7895
    %10521 = vmatpush1.bf16.msra.mxu0 %v7894
    %10522 = vmatprep.subr.bf16.mxu0 %v7911
    %10523 = vmatpush1.bf16.msra.mxu0 %v7910
    %10524 = vmatprep.subr.bf16.mxu0 %v7927
    %10525 = vmatpush1.bf16.msra.mxu0 %v7926
    %10526 = vmatprep.subr.bf16.mxu0 %v7943
    %10527 = vmatpush1.bf16.msra.mxu0 %v7942
    %10528 = vmatprep.subr.bf16.mxu0 %v7959
    %10529 = vmatpush1.bf16.msra.mxu0 %v7958
    %10530 = vmatprep.subr.bf16.mxu0 %v7975
    %10531 = vmatpush1.bf16.msra.mxu0 %v7974
    %10532 = vmatprep.subr.bf16.mxu0 %v7991
    %10533 = vmatpush1.bf16.msra.mxu0 %v7990
    %10534 = vmatprep.subr.bf16.mxu0 %v8007
    %10535 = vmatpush1.bf16.msra.mxu0 %v8006
    %10536 = vmatprep.subr.bf16.mxu0 %v8023
    %10537 = vmatpush1.bf16.msra.mxu0 %v8022
    %10538 = vmatprep.subr.bf16.mxu0 %v8039
    %10539 = vmatpush1.bf16.msra.mxu0 %v8038
    %10540 = vmatprep.subr.bf16.mxu0 %v8055
    %10541 = vmatpush1.bf16.msra.mxu0 %v8054
    %10542 = vmatprep.mubr.bf16.mxu0 %v3619
    %10543 = vmatmul.mubr.bf16.gmra.mrb[0].mxu0 %v3618
    %v10544 = vpop.f32.mrb[0].mxu0
    %v10545 = vadd.f32 %v4689, %v10544
    %v10546 = vpop.f32.mrb[0].mxu0
    %v10547 = vadd.f32 %v4693, %v10546
    %v10548 = vpop.f32.mrb[0].mxu0
    %v10549 = vpop.f32.mrb[0].mxu0
    %10550 = vdwg.mxu0
    %10551 = vmatprep.subr.bf16.mxu0 %v8071
    %10552 = vmatpush1.bf16.msra.mxu0 %v8070
    %10553 = vmatprep.subr.bf16.mxu0 %v8087
    %10554 = vmatpush1.bf16.msra.mxu0 %v8086
    %10555 = vmatprep.subr.bf16.mxu0 %v8103
    %10556 = vmatpush1.bf16.msra.mxu0 %v8102
    %10557 = vmatprep.subr.bf16.mxu0 %v8119
    %10558 = vmatpush1.bf16.msra.mxu0 %v8118
    %10559 = vmatprep.subr.bf16.mxu0 %v8135
    %10560 = vmatpush1.bf16.msra.mxu0 %v8134
    %10561 = vmatprep.subr.bf16.mxu0 %v8151
    %10562 = vmatpush1.bf16.msra.mxu0 %v8150
    %10563 = vmatprep.subr.bf16.mxu0 %v8167
    %10564 = vmatpush1.bf16.msra.mxu0 %v8166
    %10565 = vmatprep.subr.bf16.mxu0 %v8183
    %10566 = vmatpush1.bf16.msra.mxu0 %v8182
    %10567 = vmatprep.subr.bf16.mxu0 %v8199
    %10568 = vmatpush1.bf16.msra.mxu0 %v8198
    %10569 = vmatprep.subr.bf16.mxu0 %v8215
    %10570 = vmatpush1.bf16.msra.mxu0 %v8214
    %10571 = vmatprep.subr.bf16.mxu0 %v8231
    %10572 = vmatpush1.bf16.msra.mxu0 %v8230
    %10573 = vmatprep.subr.bf16.mxu0 %v8247
    %10574 = vmatpush1.bf16.msra.mxu0 %v8246
    %10575 = vmatprep.subr.bf16.mxu0 %v8263
    %10576 = vmatpush1.bf16.msra.mxu0 %v8262
    %10577 = vmatprep.subr.bf16.mxu0 %v8279
    %10578 = vmatpush1.bf16.msra.mxu0 %v8278
    %10579 = vmatprep.subr.bf16.mxu0 %v8295
    %10580 = vmatpush1.bf16.msra.mxu0 %v8294
    %10581 = vmatprep.subr.bf16.mxu0 %v8311
    %10582 = vmatpush1.bf16.msra.mxu0 %v8310
    %10583 = vmatprep.mubr.bf16.mxu0 %v3621
    %10584 = vmatmul.mubr.bf16.gmra.mrb[0].mxu0 %v3620
    %v10585 = vpop.f32.mrb[0].mxu0
    %v10586 = vadd.f32 %v10545, %v10585
    %v10587 = vpop.f32.mrb[0].mxu0
    %v10588 = vadd.f32 %v10547, %v10587
    %v10589 = vpop.f32.mrb[0].mxu0
    %v10590 = vpop.f32.mrb[0].mxu0
    %10591 = vdwg.mxu0
    %10592 = vmatprep.subr.bf16.mxu0 %v8327
    %10593 = vmatpush1.bf16.msra.mxu0 %v8326
    %10594 = vmatprep.subr.bf16.mxu0 %v8343
    %10595 = vmatpush1.bf16.msra.mxu0 %v8342
    %10596 = vmatprep.subr.bf16.mxu0 %v8359
    %10597 = vmatpush1.bf16.msra.mxu0 %v8358
    %10598 = vmatprep.subr.bf16.mxu0 %v8375
    %10599 = vmatpush1.bf16.msra.mxu0 %v8374
    %10600 = vmatprep.subr.bf16.mxu0 %v8391
    %10601 = vmatpush1.bf16.msra.mxu0 %v8390
    %10602 = vmatprep.subr.bf16.mxu0 %v8407
    %10603 = vmatpush1.bf16.msra.mxu0 %v8406
    %10604 = vmatprep.subr.bf16.mxu0 %v8423
    %10605 = vmatpush1.bf16.msra.mxu0 %v8422
    %10606 = vmatprep.subr.bf16.mxu0 %v8439
    %10607 = vmatpush1.bf16.msra.mxu0 %v8438
    %10608 = vmatprep.subr.bf16.mxu0 %v8455
    %10609 = vmatpush1.bf16.msra.mxu0 %v8454
    %10610 = vmatprep.subr.bf16.mxu0 %v8471
    %10611 = vmatpush1.bf16.msra.mxu0 %v8470
    %10612 = vmatprep.subr.bf16.mxu0 %v8487
    %10613 = vmatpush1.bf16.msra.mxu0 %v8486
    %10614 = vmatprep.subr.bf16.mxu0 %v8503
    %10615 = vmatpush1.bf16.msra.mxu0 %v8502
    %10616 = vmatprep.subr.bf16.mxu0 %v8519
    %10617 = vmatpush1.bf16.msra.mxu0 %v8518
    %10618 = vmatprep.subr.bf16.mxu0 %v8535
    %10619 = vmatpush1.bf16.msra.mxu0 %v8534
    %10620 = vmatprep.subr.bf16.mxu0 %v8551
    %10621 = vmatpush1.bf16.msra.mxu0 %v8550
    %10622 = vmatprep.subr.bf16.mxu0 %v8567
    %10623 = vmatpush1.bf16.msra.mxu0 %v8566
    %10624 = vmatprep.mubr.bf16.mxu0 %v3623
    %10625 = vmatmul.mubr.bf16.gmra.mrb[0].mxu0 %v3622
    %v10626 = vpop.f32.mrb[0].mxu0
    %v10627 = vadd.f32 %v10586, %v10626
    %v10628 = vpop.f32.mrb[0].mxu0
    %v10629 = vadd.f32 %v10588, %v10628
    %v10630 = vpop.f32.mrb[0].mxu0
    %v10631 = vpop.f32.mrb[0].mxu0
    %10632 = vdwg.mxu0
    %10633 = vmatprep.subr.bf16.mxu0 %v8583
    %10634 = vmatpush1.bf16.msra.mxu0 %v8582
    %10635 = vmatprep.subr.bf16.mxu0 %v8599
    %10636 = vmatpush1.bf16.msra.mxu0 %v8598
    %10637 = vmatprep.subr.bf16.mxu0 %v8615
    %10638 = vmatpush1.bf16.msra.mxu0 %v8614
    %10639 = vmatprep.subr.bf16.mxu0 %v8631
    %10640 = vmatpush1.bf16.msra.mxu0 %v8630
    %10641 = vmatprep.subr.bf16.mxu0 %v8647
    %10642 = vmatpush1.bf16.msra.mxu0 %v8646
    %10643 = vmatprep.subr.bf16.mxu0 %v8663
    %10644 = vmatpush1.bf16.msra.mxu0 %v8662
    %10645 = vmatprep.subr.bf16.mxu0 %v8679
    %10646 = vmatpush1.bf16.msra.mxu0 %v8678
    %10647 = vmatprep.subr.bf16.mxu0 %v8695
    %10648 = vmatpush1.bf16.msra.mxu0 %v8694
    %10649 = vmatprep.subr.bf16.mxu0 %v8711
    %10650 = vmatpush1.bf16.msra.mxu0 %v8710
    %10651 = vmatprep.subr.bf16.mxu0 %v8727
    %10652 = vmatpush1.bf16.msra.mxu0 %v8726
    %10653 = vmatprep.subr.bf16.mxu0 %v8743
    %10654 = vmatpush1.bf16.msra.mxu0 %v8742
    %10655 = vmatprep.subr.bf16.mxu0 %v8759
    %10656 = vmatpush1.bf16.msra.mxu0 %v8758
    %10657 = vmatprep.subr.bf16.mxu0 %v8775
    %10658 = vmatpush1.bf16.msra.mxu0 %v8774
    %10659 = vmatprep.subr.bf16.mxu0 %v8791
    %10660 = vmatpush1.bf16.msra.mxu0 %v8790
    %10661 = vmatprep.subr.bf16.mxu0 %v8807
    %10662 = vmatpush1.bf16.msra.mxu0 %v8806
    %10663 = vmatprep.subr.bf16.mxu0 %v8823
    %10664 = vmatpush1.bf16.msra.mxu0 %v8822
    %10665 = vmatprep.mubr.bf16.mxu0 %v3625
    %10666 = vmatmul.mubr.bf16.gmra.mrb[0].mxu0 %v3624
    %v10667 = vpop.f32.mrb[0].mxu0
    %v10668 = vadd.f32 %v10627, %v10667
    %v10669 = vpop.f32.mrb[0].mxu0
    %v10670 = vadd.f32 %v10629, %v10669
    %v10671 = vpop.f32.mrb[0].mxu0
    %v10672 = vpop.f32.mrb[0].mxu0
    %10673 = vdwg.mxu0
    %10674 = vmatprep.subr.bf16.mxu0 %v7817
    %10675 = vmatpush1.bf16.msra.mxu0 %v7816
    %10676 = vmatprep.subr.bf16.mxu0 %v7833
    %10677 = vmatpush1.bf16.msra.mxu0 %v7832
    %10678 = vmatprep.subr.bf16.mxu0 %v7849
    %10679 = vmatpush1.bf16.msra.mxu0 %v7848
    %10680 = vmatprep.subr.bf16.mxu0 %v7865
    %10681 = vmatpush1.bf16.msra.mxu0 %v7864
    %10682 = vmatprep.subr.bf16.mxu0 %v7881
    %10683 = vmatpush1.bf16.msra.mxu0 %v7880
    %10684 = vmatprep.subr.bf16.mxu0 %v7897
    %10685 = vmatpush1.bf16.msra.mxu0 %v7896
    %10686 = vmatprep.subr.bf16.mxu0 %v7913
    %10687 = vmatpush1.bf16.msra.mxu0 %v7912
    %10688 = vmatprep.subr.bf16.mxu0 %v7929
    %10689 = vmatpush1.bf16.msra.mxu0 %v7928
    %10690 = vmatprep.subr.bf16.mxu0 %v7945
    %10691 = vmatpush1.bf16.msra.mxu0 %v7944
    %10692 = vmatprep.subr.bf16.mxu0 %v7961
    %10693 = vmatpush1.bf16.msra.mxu0 %v7960
    %10694 = vmatprep.subr.bf16.mxu0 %v7977
    %10695 = vmatpush1.bf16.msra.mxu0 %v7976
    %10696 = vmatprep.subr.bf16.mxu0 %v7993
    %10697 = vmatpush1.bf16.msra.mxu0 %v7992
    %10698 = vmatprep.subr.bf16.mxu0 %v8009
    %10699 = vmatpush1.bf16.msra.mxu0 %v8008
    %10700 = vmatprep.subr.bf16.mxu0 %v8025
    %10701 = vmatpush1.bf16.msra.mxu0 %v8024
    %10702 = vmatprep.subr.bf16.mxu0 %v8041
    %10703 = vmatpush1.bf16.msra.mxu0 %v8040
    %10704 = vmatprep.subr.bf16.mxu0 %v8057
    %10705 = vmatpush1.bf16.msra.mxu0 %v8056
    %10706 = vmatprep.mubr.bf16.mxu0 %v3619
    %10707 = vmatmul.mubr.bf16.gmra.mrb[0].mxu0 %v3618
    %v10708 = vpop.f32.mrb[0].mxu0
    %v10709 = vadd.f32 %v4697, %v10708
    %v10710 = vpop.f32.mrb[0].mxu0
    %v10711 = vadd.f32 %v4701, %v10710
    %v10712 = vpop.f32.mrb[0].mxu0
    %v10713 = vpop.f32.mrb[0].mxu0
    %10714 = vdwg.mxu0
    %10715 = vmatprep.subr.bf16.mxu0 %v8073
    %10716 = vmatpush1.bf16.msra.mxu0 %v8072
    %10717 = vmatprep.subr.bf16.mxu0 %v8089
    %10718 = vmatpush1.bf16.msra.mxu0 %v8088
    %10719 = vmatprep.subr.bf16.mxu0 %v8105
    %10720 = vmatpush1.bf16.msra.mxu0 %v8104
    %10721 = vmatprep.subr.bf16.mxu0 %v8121
    %10722 = vmatpush1.bf16.msra.mxu0 %v8120
    %10723 = vmatprep.subr.bf16.mxu0 %v8137
    %10724 = vmatpush1.bf16.msra.mxu0 %v8136
    %10725 = vmatprep.subr.bf16.mxu0 %v8153
    %10726 = vmatpush1.bf16.msra.mxu0 %v8152
    %10727 = vmatprep.subr.bf16.mxu0 %v8169
    %10728 = vmatpush1.bf16.msra.mxu0 %v8168
    %10729 = vmatprep.subr.bf16.mxu0 %v8185
    %10730 = vmatpush1.bf16.msra.mxu0 %v8184
    %10731 = vmatprep.subr.bf16.mxu0 %v8201
    %10732 = vmatpush1.bf16.msra.mxu0 %v8200
    %10733 = vmatprep.subr.bf16.mxu0 %v8217
    %10734 = vmatpush1.bf16.msra.mxu0 %v8216
    %10735 = vmatprep.subr.bf16.mxu0 %v8233
    %10736 = vmatpush1.bf16.msra.mxu0 %v8232
    %10737 = vmatprep.subr.bf16.mxu0 %v8249
    %10738 = vmatpush1.bf16.msra.mxu0 %v8248
    %10739 = vmatprep.subr.bf16.mxu0 %v8265
    %10740 = vmatpush1.bf16.msra.mxu0 %v8264
    %10741 = vmatprep.subr.bf16.mxu0 %v8281
    %10742 = vmatpush1.bf16.msra.mxu0 %v8280
    %10743 = vmatprep.subr.bf16.mxu0 %v8297
    %10744 = vmatpush1.bf16.msra.mxu0 %v8296
    %10745 = vmatprep.subr.bf16.mxu0 %v8313
    %10746 = vmatpush1.bf16.msra.mxu0 %v8312
    %10747 = vmatprep.mubr.bf16.mxu0 %v3621
    %10748 = vmatmul.mubr.bf16.gmra.mrb[0].mxu0 %v3620
    %v10749 = vpop.f32.mrb[0].mxu0
    %v10750 = vadd.f32 %v10709, %v10749
    %v10751 = vpop.f32.mrb[0].mxu0
    %v10752 = vadd.f32 %v10711, %v10751
    %v10753 = vpop.f32.mrb[0].mxu0
    %v10754 = vpop.f32.mrb[0].mxu0
    %10755 = vdwg.mxu0
    %10756 = vmatprep.subr.bf16.mxu0 %v8329
    %10757 = vmatpush1.bf16.msra.mxu0 %v8328
    %10758 = vmatprep.subr.bf16.mxu0 %v8345
    %10759 = vmatpush1.bf16.msra.mxu0 %v8344
    %10760 = vmatprep.subr.bf16.mxu0 %v8361
    %10761 = vmatpush1.bf16.msra.mxu0 %v8360
    %10762 = vmatprep.subr.bf16.mxu0 %v8377
    %10763 = vmatpush1.bf16.msra.mxu0 %v8376
    %10764 = vmatprep.subr.bf16.mxu0 %v8393
    %10765 = vmatpush1.bf16.msra.mxu0 %v8392
    %10766 = vmatprep.subr.bf16.mxu0 %v8409
    %10767 = vmatpush1.bf16.msra.mxu0 %v8408
    %10768 = vmatprep.subr.bf16.mxu0 %v8425
    %10769 = vmatpush1.bf16.msra.mxu0 %v8424
    %10770 = vmatprep.subr.bf16.mxu0 %v8441
    %10771 = vmatpush1.bf16.msra.mxu0 %v8440
    %10772 = vmatprep.subr.bf16.mxu0 %v8457
    %10773 = vmatpush1.bf16.msra.mxu0 %v8456
    %10774 = vmatprep.subr.bf16.mxu0 %v8473
    %10775 = vmatpush1.bf16.msra.mxu0 %v8472
    %10776 = vmatprep.subr.bf16.mxu0 %v8489
    %10777 = vmatpush1.bf16.msra.mxu0 %v8488
    %10778 = vmatprep.subr.bf16.mxu0 %v8505
    %10779 = vmatpush1.bf16.msra.mxu0 %v8504
    %10780 = vmatprep.subr.bf16.mxu0 %v8521
    %10781 = vmatpush1.bf16.msra.mxu0 %v8520
    %10782 = vmatprep.subr.bf16.mxu0 %v8537
    %10783 = vmatpush1.bf16.msra.mxu0 %v8536
    %10784 = vmatprep.subr.bf16.mxu0 %v8553
    %10785 = vmatpush1.bf16.msra.mxu0 %v8552
    %10786 = vmatprep.subr.bf16.mxu0 %v8569
    %10787 = vmatpush1.bf16.msra.mxu0 %v8568
    %10788 = vmatprep.mubr.bf16.mxu0 %v3623
    %10789 = vmatmul.mubr.bf16.gmra.mrb[0].mxu0 %v3622
    %v10790 = vpop.f32.mrb[0].mxu0
    %v10791 = vadd.f32 %v10750, %v10790
    %v10792 = vpop.f32.mrb[0].mxu0
    %v10793 = vadd.f32 %v10752, %v10792
    %v10794 = vpop.f32.mrb[0].mxu0
    %v10795 = vpop.f32.mrb[0].mxu0
    %10796 = vdwg.mxu0
    %10797 = vmatprep.subr.bf16.mxu0 %v8585
    %10798 = vmatpush1.bf16.msra.mxu0 %v8584
    %10799 = vmatprep.subr.bf16.mxu0 %v8601
    %10800 = vmatpush1.bf16.msra.mxu0 %v8600
    %10801 = vmatprep.subr.bf16.mxu0 %v8617
    %10802 = vmatpush1.bf16.msra.mxu0 %v8616
    %10803 = vmatprep.subr.bf16.mxu0 %v8633
    %10804 = vmatpush1.bf16.msra.mxu0 %v8632
    %10805 = vmatprep.subr.bf16.mxu0 %v8649
    %10806 = vmatpush1.bf16.msra.mxu0 %v8648
    %10807 = vmatprep.subr.bf16.mxu0 %v8665
    %10808 = vmatpush1.bf16.msra.mxu0 %v8664
    %10809 = vmatprep.subr.bf16.mxu0 %v8681
    %10810 = vmatpush1.bf16.msra.mxu0 %v8680
    %10811 = vmatprep.subr.bf16.mxu0 %v8697
    %10812 = vmatpush1.bf16.msra.mxu0 %v8696
    %10813 = vmatprep.subr.bf16.mxu0 %v8713
    %10814 = vmatpush1.bf16.msra.mxu0 %v8712
    %10815 = vmatprep.subr.bf16.mxu0 %v8729
    %10816 = vmatpush1.bf16.msra.mxu0 %v8728
    %10817 = vmatprep.subr.bf16.mxu0 %v8745
    %10818 = vmatpush1.bf16.msra.mxu0 %v8744
    %10819 = vmatprep.subr.bf16.mxu0 %v8761
    %10820 = vmatpush1.bf16.msra.mxu0 %v8760
    %10821 = vmatprep.subr.bf16.mxu0 %v8777
    %10822 = vmatpush1.bf16.msra.mxu0 %v8776
    %10823 = vmatprep.subr.bf16.mxu0 %v8793
    %10824 = vmatpush1.bf16.msra.mxu0 %v8792
    %10825 = vmatprep.subr.bf16.mxu0 %v8809
    %10826 = vmatpush1.bf16.msra.mxu0 %v8808
    %10827 = vmatprep.subr.bf16.mxu0 %v8825
    %10828 = vmatpush1.bf16.msra.mxu0 %v8824
    %10829 = vmatprep.mubr.bf16.mxu0 %v3625
    %10830 = vmatmul.mubr.bf16.gmra.mrb[0].mxu0 %v3624
    %v10831 = vpop.f32.mrb[0].mxu0
    %v10832 = vadd.f32 %v10791, %v10831
    %v10833 = vpop.f32.mrb[0].mxu0
    %v10834 = vadd.f32 %v10793, %v10833
    %v10835 = vpop.f32.mrb[0].mxu0
    %v10836 = vpop.f32.mrb[0].mxu0
    %10837 = vdwg.mxu0
    %10838 = vmatprep.subr.bf16.mxu0 %v7819
    %10839 = vmatpush1.bf16.msra.mxu0 %v7818
    %10840 = vmatprep.subr.bf16.mxu0 %v7835
    %10841 = vmatpush1.bf16.msra.mxu0 %v7834
    %10842 = vmatprep.subr.bf16.mxu0 %v7851
    %10843 = vmatpush1.bf16.msra.mxu0 %v7850
    %10844 = vmatprep.subr.bf16.mxu0 %v7867
    %10845 = vmatpush1.bf16.msra.mxu0 %v7866
    %10846 = vmatprep.subr.bf16.mxu0 %v7883
    %10847 = vmatpush1.bf16.msra.mxu0 %v7882
    %10848 = vmatprep.subr.bf16.mxu0 %v7899
    %10849 = vmatpush1.bf16.msra.mxu0 %v7898
    %10850 = vmatprep.subr.bf16.mxu0 %v7915
    %10851 = vmatpush1.bf16.msra.mxu0 %v7914
    %10852 = vmatprep.subr.bf16.mxu0 %v7931
    %10853 = vmatpush1.bf16.msra.mxu0 %v7930
    %10854 = vmatprep.subr.bf16.mxu0 %v7947
    %10855 = vmatpush1.bf16.msra.mxu0 %v7946
    %10856 = vmatprep.subr.bf16.mxu0 %v7963
    %10857 = vmatpush1.bf16.msra.mxu0 %v7962
    %10858 = vmatprep.subr.bf16.mxu0 %v7979
    %10859 = vmatpush1.bf16.msra.mxu0 %v7978
    %10860 = vmatprep.subr.bf16.mxu0 %v7995
    %10861 = vmatpush1.bf16.msra.mxu0 %v7994
    %10862 = vmatprep.subr.bf16.mxu0 %v8011
    %10863 = vmatpush1.bf16.msra.mxu0 %v8010
    %10864 = vmatprep.subr.bf16.mxu0 %v8027
    %10865 = vmatpush1.bf16.msra.mxu0 %v8026
    %10866 = vmatprep.subr.bf16.mxu0 %v8043
    %10867 = vmatpush1.bf16.msra.mxu0 %v8042
    %10868 = vmatprep.subr.bf16.mxu0 %v8059
    %10869 = vmatpush1.bf16.msra.mxu0 %v8058
    %10870 = vmatprep.mubr.bf16.mxu0 %v3619
    %10871 = vmatmul.mubr.bf16.gmra.mrb[0].mxu0 %v3618
    %v10872 = vpop.f32.mrb[0].mxu0
    %v10873 = vadd.f32 %v4705, %v10872
    %v10874 = vpop.f32.mrb[0].mxu0
    %v10875 = vadd.f32 %v4709, %v10874
    %v10876 = vpop.f32.mrb[0].mxu0
    %v10877 = vpop.f32.mrb[0].mxu0
    %10878 = vdwg.mxu0
    %10879 = vmatprep.subr.bf16.mxu0 %v8075
    %10880 = vmatpush1.bf16.msra.mxu0 %v8074
    %10881 = vmatprep.subr.bf16.mxu0 %v8091
    %10882 = vmatpush1.bf16.msra.mxu0 %v8090
    %10883 = vmatprep.subr.bf16.mxu0 %v8107
    %10884 = vmatpush1.bf16.msra.mxu0 %v8106
    %10885 = vmatprep.subr.bf16.mxu0 %v8123
    %10886 = vmatpush1.bf16.msra.mxu0 %v8122
    %10887 = vmatprep.subr.bf16.mxu0 %v8139
    %10888 = vmatpush1.bf16.msra.mxu0 %v8138
    %10889 = vmatprep.subr.bf16.mxu0 %v8155
    %10890 = vmatpush1.bf16.msra.mxu0 %v8154
    %10891 = vmatprep.subr.bf16.mxu0 %v8171
    %10892 = vmatpush1.bf16.msra.mxu0 %v8170
    %10893 = vmatprep.subr.bf16.mxu0 %v8187
    %10894 = vmatpush1.bf16.msra.mxu0 %v8186
    %10895 = vmatprep.subr.bf16.mxu0 %v8203
    %10896 = vmatpush1.bf16.msra.mxu0 %v8202
    %10897 = vmatprep.subr.bf16.mxu0 %v8219
    %10898 = vmatpush1.bf16.msra.mxu0 %v8218
    %10899 = vmatprep.subr.bf16.mxu0 %v8235
    %10900 = vmatpush1.bf16.msra.mxu0 %v8234
    %10901 = vmatprep.subr.bf16.mxu0 %v8251
    %10902 = vmatpush1.bf16.msra.mxu0 %v8250
    %10903 = vmatprep.subr.bf16.mxu0 %v8267
    %10904 = vmatpush1.bf16.msra.mxu0 %v8266
    %10905 = vmatprep.subr.bf16.mxu0 %v8283
    %10906 = vmatpush1.bf16.msra.mxu0 %v8282
    %10907 = vmatprep.subr.bf16.mxu0 %v8299
    %10908 = vmatpush1.bf16.msra.mxu0 %v8298
    %10909 = vmatprep.subr.bf16.mxu0 %v8315
    %10910 = vmatpush1.bf16.msra.mxu0 %v8314
    %10911 = vmatprep.mubr.bf16.mxu0 %v3621
    %10912 = vmatmul.mubr.bf16.gmra.mrb[0].mxu0 %v3620
    %v10913 = vpop.f32.mrb[0].mxu0
    %v10914 = vadd.f32 %v10873, %v10913
    %v10915 = vpop.f32.mrb[0].mxu0
    %v10916 = vadd.f32 %v10875, %v10915
    %v10917 = vpop.f32.mrb[0].mxu0
    %v10918 = vpop.f32.mrb[0].mxu0
    %10919 = vdwg.mxu0
    %10920 = vmatprep.subr.bf16.mxu0 %v8331
    %10921 = vmatpush1.bf16.msra.mxu0 %v8330
    %10922 = vmatprep.subr.bf16.mxu0 %v8347
    %10923 = vmatpush1.bf16.msra.mxu0 %v8346
    %10924 = vmatprep.subr.bf16.mxu0 %v8363
    %10925 = vmatpush1.bf16.msra.mxu0 %v8362
    %10926 = vmatprep.subr.bf16.mxu0 %v8379
    %10927 = vmatpush1.bf16.msra.mxu0 %v8378
    %10928 = vmatprep.subr.bf16.mxu0 %v8395
    %10929 = vmatpush1.bf16.msra.mxu0 %v8394
    %10930 = vmatprep.subr.bf16.mxu0 %v8411
    %10931 = vmatpush1.bf16.msra.mxu0 %v8410
    %10932 = vmatprep.subr.bf16.mxu0 %v8427
    %10933 = vmatpush1.bf16.msra.mxu0 %v8426
    %10934 = vmatprep.subr.bf16.mxu0 %v8443
    %10935 = vmatpush1.bf16.msra.mxu0 %v8442
    %10936 = vmatprep.subr.bf16.mxu0 %v8459
    %10937 = vmatpush1.bf16.msra.mxu0 %v8458
    %10938 = vmatprep.subr.bf16.mxu0 %v8475
    %10939 = vmatpush1.bf16.msra.mxu0 %v8474
    %10940 = vmatprep.subr.bf16.mxu0 %v8491
    %10941 = vmatpush1.bf16.msra.mxu0 %v8490
    %10942 = vmatprep.subr.bf16.mxu0 %v8507
    %10943 = vmatpush1.bf16.msra.mxu0 %v8506
    %10944 = vmatprep.subr.bf16.mxu0 %v8523
    %10945 = vmatpush1.bf16.msra.mxu0 %v8522
    %10946 = vmatprep.subr.bf16.mxu0 %v8539
    %10947 = vmatpush1.bf16.msra.mxu0 %v8538
    %10948 = vmatprep.subr.bf16.mxu0 %v8555
    %10949 = vmatpush1.bf16.msra.mxu0 %v8554
    %10950 = vmatprep.subr.bf16.mxu0 %v8571
    %10951 = vmatpush1.bf16.msra.mxu0 %v8570
    %10952 = vmatprep.mubr.bf16.mxu0 %v3623
    %10953 = vmatmul.mubr.bf16.gmra.mrb[0].mxu0 %v3622
    %v10954 = vpop.f32.mrb[0].mxu0
    %v10955 = vadd.f32 %v10914, %v10954
    %v10956 = vpop.f32.mrb[0].mxu0
    %v10957 = vadd.f32 %v10916, %v10956
    %v10958 = vpop.f32.mrb[0].mxu0
    %v10959 = vpop.f32.mrb[0].mxu0
    %10960 = vdwg.mxu0
    %10961 = vmatprep.subr.bf16.mxu0 %v8587
    %10962 = vmatpush1.bf16.msra.mxu0 %v8586
    %10963 = vmatprep.subr.bf16.mxu0 %v8603
    %10964 = vmatpush1.bf16.msra.mxu0 %v8602
    %10965 = vmatprep.subr.bf16.mxu0 %v8619
    %10966 = vmatpush1.bf16.msra.mxu0 %v8618
    %10967 = vmatprep.subr.bf16.mxu0 %v8635
    %10968 = vmatpush1.bf16.msra.mxu0 %v8634
    %10969 = vmatprep.subr.bf16.mxu0 %v8651
    %10970 = vmatpush1.bf16.msra.mxu0 %v8650
    %10971 = vmatprep.subr.bf16.mxu0 %v8667
    %10972 = vmatpush1.bf16.msra.mxu0 %v8666
    %10973 = vmatprep.subr.bf16.mxu0 %v8683
    %10974 = vmatpush1.bf16.msra.mxu0 %v8682
    %10975 = vmatprep.subr.bf16.mxu0 %v8699
    %10976 = vmatpush1.bf16.msra.mxu0 %v8698
    %10977 = vmatprep.subr.bf16.mxu0 %v8715
    %10978 = vmatpush1.bf16.msra.mxu0 %v8714
    %10979 = vmatprep.subr.bf16.mxu0 %v8731
    %10980 = vmatpush1.bf16.msra.mxu0 %v8730
    %10981 = vmatprep.subr.bf16.mxu0 %v8747
    %10982 = vmatpush1.bf16.msra.mxu0 %v8746
    %10983 = vmatprep.subr.bf16.mxu0 %v8763
    %10984 = vmatpush1.bf16.msra.mxu0 %v8762
    %10985 = vmatprep.subr.bf16.mxu0 %v8779
    %10986 = vmatpush1.bf16.msra.mxu0 %v8778
    %10987 = vmatprep.subr.bf16.mxu0 %v8795
    %10988 = vmatpush1.bf16.msra.mxu0 %v8794
    %10989 = vmatprep.subr.bf16.mxu0 %v8811
    %10990 = vmatpush1.bf16.msra.mxu0 %v8810
    %10991 = vmatprep.subr.bf16.mxu0 %v8827
    %10992 = vmatpush1.bf16.msra.mxu0 %v8826
    %10993 = vmatprep.mubr.bf16.mxu0 %v3625
    %10994 = vmatmul.mubr.bf16.gmra.mrb[0].mxu0 %v3624
    %v10995 = vpop.f32.mrb[0].mxu0
    %v10996 = vadd.f32 %v10955, %v10995
    %v10997 = vpop.f32.mrb[0].mxu0
    %v10998 = vadd.f32 %v10957, %v10997
    %v10999 = vpop.f32.mrb[0].mxu0
    %v11000 = vpop.f32.mrb[0].mxu0
    %11001 = vdwg.mxu0
    %11002 = vmatprep.subr.bf16.mxu0 %v7821
    %11003 = vmatpush1.bf16.msra.mxu0 %v7820
    %11004 = vmatprep.subr.bf16.mxu0 %v7837
    %11005 = vmatpush1.bf16.msra.mxu0 %v7836
    %11006 = vmatprep.subr.bf16.mxu0 %v7853
    %11007 = vmatpush1.bf16.msra.mxu0 %v7852
    %11008 = vmatprep.subr.bf16.mxu0 %v7869
    %11009 = vmatpush1.bf16.msra.mxu0 %v7868
    %11010 = vmatprep.subr.bf16.mxu0 %v7885
    %11011 = vmatpush1.bf16.msra.mxu0 %v7884
    %11012 = vmatprep.subr.bf16.mxu0 %v7901
    %11013 = vmatpush1.bf16.msra.mxu0 %v7900
    %11014 = vmatprep.subr.bf16.mxu0 %v7917
    %11015 = vmatpush1.bf16.msra.mxu0 %v7916
    %11016 = vmatprep.subr.bf16.mxu0 %v7933
    %11017 = vmatpush1.bf16.msra.mxu0 %v7932
    %11018 = vmatprep.subr.bf16.mxu0 %v7949
    %11019 = vmatpush1.bf16.msra.mxu0 %v7948
    %11020 = vmatprep.subr.bf16.mxu0 %v7965
    %11021 = vmatpush1.bf16.msra.mxu0 %v7964
    %11022 = vmatprep.subr.bf16.mxu0 %v7981
    %11023 = vmatpush1.bf16.msra.mxu0 %v7980
    %11024 = vmatprep.subr.bf16.mxu0 %v7997
    %11025 = vmatpush1.bf16.msra.mxu0 %v7996
    %11026 = vmatprep.subr.bf16.mxu0 %v8013
    %11027 = vmatpush1.bf16.msra.mxu0 %v8012
    %11028 = vmatprep.subr.bf16.mxu0 %v8029
    %11029 = vmatpush1.bf16.msra.mxu0 %v8028
    %11030 = vmatprep.subr.bf16.mxu0 %v8045
    %11031 = vmatpush1.bf16.msra.mxu0 %v8044
    %11032 = vmatprep.subr.bf16.mxu0 %v8061
    %11033 = vmatpush1.bf16.msra.mxu0 %v8060
    %11034 = vmatprep.mubr.bf16.mxu0 %v3619
    %11035 = vmatmul.mubr.bf16.gmra.mrb[0].mxu0 %v3618
    %v11036 = vpop.f32.mrb[0].mxu0
    %v11037 = vadd.f32 %v4713, %v11036
    %v11038 = vpop.f32.mrb[0].mxu0
    %v11039 = vadd.f32 %v4717, %v11038
    %v11040 = vpop.f32.mrb[0].mxu0
    %v11041 = vpop.f32.mrb[0].mxu0
    %11042 = vdwg.mxu0
    %11043 = vmatprep.subr.bf16.mxu0 %v8077
    %11044 = vmatpush1.bf16.msra.mxu0 %v8076
    %11045 = vmatprep.subr.bf16.mxu0 %v8093
    %11046 = vmatpush1.bf16.msra.mxu0 %v8092
    %11047 = vmatprep.subr.bf16.mxu0 %v8109
    %11048 = vmatpush1.bf16.msra.mxu0 %v8108
    %11049 = vmatprep.subr.bf16.mxu0 %v8125
    %11050 = vmatpush1.bf16.msra.mxu0 %v8124
    %11051 = vmatprep.subr.bf16.mxu0 %v8141
    %11052 = vmatpush1.bf16.msra.mxu0 %v8140
    %11053 = vmatprep.subr.bf16.mxu0 %v8157
    %11054 = vmatpush1.bf16.msra.mxu0 %v8156
    %11055 = vmatprep.subr.bf16.mxu0 %v8173
    %11056 = vmatpush1.bf16.msra.mxu0 %v8172
    %11057 = vmatprep.subr.bf16.mxu0 %v8189
    %11058 = vmatpush1.bf16.msra.mxu0 %v8188
    %11059 = vmatprep.subr.bf16.mxu0 %v8205
    %11060 = vmatpush1.bf16.msra.mxu0 %v8204
    %11061 = vmatprep.subr.bf16.mxu0 %v8221
    %11062 = vmatpush1.bf16.msra.mxu0 %v8220
    %11063 = vmatprep.subr.bf16.mxu0 %v8237
    %11064 = vmatpush1.bf16.msra.mxu0 %v8236
    %11065 = vmatprep.subr.bf16.mxu0 %v8253
    %11066 = vmatpush1.bf16.msra.mxu0 %v8252
    %11067 = vmatprep.subr.bf16.mxu0 %v8269
    %11068 = vmatpush1.bf16.msra.mxu0 %v8268
    %11069 = vmatprep.subr.bf16.mxu0 %v8285
    %11070 = vmatpush1.bf16.msra.mxu0 %v8284
    %11071 = vmatprep.subr.bf16.mxu0 %v8301
    %11072 = vmatpush1.bf16.msra.mxu0 %v8300
    %11073 = vmatprep.subr.bf16.mxu0 %v8317
    %11074 = vmatpush1.bf16.msra.mxu0 %v8316
    %11075 = vmatprep.mubr.bf16.mxu0 %v3621
    %11076 = vmatmul.mubr.bf16.gmra.mrb[0].mxu0 %v3620
    %v11077 = vpop.f32.mrb[0].mxu0
    %v11078 = vadd.f32 %v11037, %v11077
    %v11079 = vpop.f32.mrb[0].mxu0
    %v11080 = vadd.f32 %v11039, %v11079
    %v11081 = vpop.f32.mrb[0].mxu0
    %v11082 = vpop.f32.mrb[0].mxu0
    %11083 = vdwg.mxu0
    %11084 = vmatprep.subr.bf16.mxu0 %v8333
    %11085 = vmatpush1.bf16.msra.mxu0 %v8332
    %11086 = vmatprep.subr.bf16.mxu0 %v8349
    %11087 = vmatpush1.bf16.msra.mxu0 %v8348
    %11088 = vmatprep.subr.bf16.mxu0 %v8365
    %11089 = vmatpush1.bf16.msra.mxu0 %v8364
    %11090 = vmatprep.subr.bf16.mxu0 %v8381
    %11091 = vmatpush1.bf16.msra.mxu0 %v8380
    %11092 = vmatprep.subr.bf16.mxu0 %v8397
    %11093 = vmatpush1.bf16.msra.mxu0 %v8396
    %11094 = vmatprep.subr.bf16.mxu0 %v8413
    %11095 = vmatpush1.bf16.msra.mxu0 %v8412
    %11096 = vmatprep.subr.bf16.mxu0 %v8429
    %11097 = vmatpush1.bf16.msra.mxu0 %v8428
    %11098 = vmatprep.subr.bf16.mxu0 %v8445
    %11099 = vmatpush1.bf16.msra.mxu0 %v8444
    %11100 = vmatprep.subr.bf16.mxu0 %v8461
    %11101 = vmatpush1.bf16.msra.mxu0 %v8460
    %11102 = vmatprep.subr.bf16.mxu0 %v8477
    %11103 = vmatpush1.bf16.msra.mxu0 %v8476
    %11104 = vmatprep.subr.bf16.mxu0 %v8493
    %11105 = vmatpush1.bf16.msra.mxu0 %v8492
    %11106 = vmatprep.subr.bf16.mxu0 %v8509
    %11107 = vmatpush1.bf16.msra.mxu0 %v8508
    %11108 = vmatprep.subr.bf16.mxu0 %v8525
    %11109 = vmatpush1.bf16.msra.mxu0 %v8524
    %11110 = vmatprep.subr.bf16.mxu0 %v8541
    %11111 = vmatpush1.bf16.msra.mxu0 %v8540
    %11112 = vmatprep.subr.bf16.mxu0 %v8557
    %11113 = vmatpush1.bf16.msra.mxu0 %v8556
    %11114 = vmatprep.subr.bf16.mxu0 %v8573
    %11115 = vmatpush1.bf16.msra.mxu0 %v8572
    %11116 = vmatprep.mubr.bf16.mxu0 %v3623
    %11117 = vmatmul.mubr.bf16.gmra.mrb[0].mxu0 %v3622
    %v11118 = vpop.f32.mrb[0].mxu0
    %v11119 = vadd.f32 %v11078, %v11118
    %v11120 = vpop.f32.mrb[0].mxu0
    %v11121 = vadd.f32 %v11080, %v11120
    %v11122 = vpop.f32.mrb[0].mxu0
    %v11123 = vpop.f32.mrb[0].mxu0
    %11124 = vdwg.mxu0
    %11125 = vmatprep.subr.bf16.mxu0 %v8589
    %11126 = vmatpush1.bf16.msra.mxu0 %v8588
    %11127 = vmatprep.subr.bf16.mxu0 %v8605
    %11128 = vmatpush1.bf16.msra.mxu0 %v8604
    %11129 = vmatprep.subr.bf16.mxu0 %v8621
    %11130 = vmatpush1.bf16.msra.mxu0 %v8620
    %11131 = vmatprep.subr.bf16.mxu0 %v8637
    %11132 = vmatpush1.bf16.msra.mxu0 %v8636
    %11133 = vmatprep.subr.bf16.mxu0 %v8653
    %11134 = vmatpush1.bf16.msra.mxu0 %v8652
    %11135 = vmatprep.subr.bf16.mxu0 %v8669
    %11136 = vmatpush1.bf16.msra.mxu0 %v8668
    %11137 = vmatprep.subr.bf16.mxu0 %v8685
    %11138 = vmatpush1.bf16.msra.mxu0 %v8684
    %11139 = vmatprep.subr.bf16.mxu0 %v8701
    %11140 = vmatpush1.bf16.msra.mxu0 %v8700
    %11141 = vmatprep.subr.bf16.mxu0 %v8717
    %11142 = vmatpush1.bf16.msra.mxu0 %v8716
    %11143 = vmatprep.subr.bf16.mxu0 %v8733
    %11144 = vmatpush1.bf16.msra.mxu0 %v8732
    %11145 = vmatprep.subr.bf16.mxu0 %v8749
    %11146 = vmatpush1.bf16.msra.mxu0 %v8748
    %11147 = vmatprep.subr.bf16.mxu0 %v8765
    %11148 = vmatpush1.bf16.msra.mxu0 %v8764
    %11149 = vmatprep.subr.bf16.mxu0 %v8781
    %11150 = vmatpush1.bf16.msra.mxu0 %v8780
    %11151 = vmatprep.subr.bf16.mxu0 %v8797
    %11152 = vmatpush1.bf16.msra.mxu0 %v8796
    %11153 = vmatprep.subr.bf16.mxu0 %v8813
    %11154 = vmatpush1.bf16.msra.mxu0 %v8812
    %11155 = vmatprep.subr.bf16.mxu0 %v8829
    %11156 = vmatpush1.bf16.msra.mxu0 %v8828
    %11157 = vmatprep.mubr.bf16.mxu0 %v3625
    %11158 = vmatmul.mubr.bf16.gmra.mrb[0].mxu0 %v3624
    %v11159 = vpop.f32.mrb[0].mxu0
    %v11160 = vadd.f32 %v11119, %v11159
    %v11161 = vpop.f32.mrb[0].mxu0
    %v11162 = vadd.f32 %v11121, %v11161
    %v11163 = vpop.f32.mrb[0].mxu0
    %v11164 = vpop.f32.mrb[0].mxu0
    %11165 = vdwg.mxu0
    %v11166 = vrot.slane %v10012, 4
    %v11167 = vadd.f32 %v10012, %v11166
    %v11168 = vrot.slane %v11167, 2
    %v11169 = vadd.f32 %v11167, %v11168
    %v11170 = vrot.slane %v11169, 1
    %v11171 = vadd.f32 %v11169, %v11170
    %v11172 = vrot.slane %v10014, 4
    %v11173 = vadd.f32 %v10014, %v11172
    %v11174 = vrot.slane %v11173, 2
    %v11175 = vadd.f32 %v11173, %v11174
    %v11176 = vrot.slane %v11175, 1
    %v11177 = vadd.f32 %v11175, %v11176
    %v11178 = vrot.slane %v10176, 4
    %v11179 = vadd.f32 %v10176, %v11178
    %v11180 = vrot.slane %v11179, 2
    %v11181 = vadd.f32 %v11179, %v11180
    %v11182 = vrot.slane %v11181, 1
    %v11183 = vadd.f32 %v11181, %v11182
    %v11184 = vrot.slane %v10178, 4
    %v11185 = vadd.f32 %v10178, %v11184
    %v11186 = vrot.slane %v11185, 2
    %v11187 = vadd.f32 %v11185, %v11186
    %v11188 = vrot.slane %v11187, 1
    %v11189 = vadd.f32 %v11187, %v11188
    %v11190 = vrot.slane %v10340, 4
    %v11191 = vadd.f32 %v10340, %v11190
    %v11192 = vrot.slane %v11191, 2
    %v11193 = vadd.f32 %v11191, %v11192
    %v11194 = vrot.slane %v11193, 1
    %v11195 = vadd.f32 %v11193, %v11194
    %v11196 = vrot.slane %v10342, 4
    %v11197 = vadd.f32 %v10342, %v11196
    %v11198 = vrot.slane %v11197, 2
    %v11199 = vadd.f32 %v11197, %v11198
    %v11200 = vrot.slane %v11199, 1
    %v11201 = vadd.f32 %v11199, %v11200
    %v11202 = vrot.slane %v10504, 4
    %v11203 = vadd.f32 %v10504, %v11202
    %v11204 = vrot.slane %v11203, 2
    %v11205 = vadd.f32 %v11203, %v11204
    %v11206 = vrot.slane %v11205, 1
    %v11207 = vadd.f32 %v11205, %v11206
    %v11208 = vrot.slane %v10506, 4
    %v11209 = vadd.f32 %v10506, %v11208
    %v11210 = vrot.slane %v11209, 2
    %v11211 = vadd.f32 %v11209, %v11210
    %v11212 = vrot.slane %v11211, 1
    %v11213 = vadd.f32 %v11211, %v11212
    %v11214 = vrot.slane %v10668, 4
    %v11215 = vadd.f32 %v10668, %v11214
    %v11216 = vrot.slane %v11215, 2
    %v11217 = vadd.f32 %v11215, %v11216
    %v11218 = vrot.slane %v11217, 1
    %v11219 = vadd.f32 %v11217, %v11218
    %v11220 = vrot.slane %v10670, 4
    %v11221 = vadd.f32 %v10670, %v11220
    %v11222 = vrot.slane %v11221, 2
    %v11223 = vadd.f32 %v11221, %v11222
    %v11224 = vrot.slane %v11223, 1
    %v11225 = vadd.f32 %v11223, %v11224
    %v11226 = vrot.slane %v10832, 4
    %v11227 = vadd.f32 %v10832, %v11226
    %v11228 = vrot.slane %v11227, 2
    %v11229 = vadd.f32 %v11227, %v11228
    %v11230 = vrot.slane %v11229, 1
    %v11231 = vadd.f32 %v11229, %v11230
    %v11232 = vrot.slane %v10834, 4
    %v11233 = vadd.f32 %v10834, %v11232
    %v11234 = vrot.slane %v11233, 2
    %v11235 = vadd.f32 %v11233, %v11234
    %v11236 = vrot.slane %v11235, 1
    %v11237 = vadd.f32 %v11235, %v11236
    %v11238 = vrot.slane %v10996, 4
    %v11239 = vadd.f32 %v10996, %v11238
    %v11240 = vrot.slane %v11239, 2
    %v11241 = vadd.f32 %v11239, %v11240
    %v11242 = vrot.slane %v11241, 1
    %v11243 = vadd.f32 %v11241, %v11242
    %v11244 = vrot.slane %v10998, 4
    %v11245 = vadd.f32 %v10998, %v11244
    %v11246 = vrot.slane %v11245, 2
    %v11247 = vadd.f32 %v11245, %v11246
    %v11248 = vrot.slane %v11247, 1
    %v11249 = vadd.f32 %v11247, %v11248
    %v11250 = vrot.slane %v11160, 4
    %v11251 = vadd.f32 %v11160, %v11250
    %v11252 = vrot.slane %v11251, 2
    %v11253 = vadd.f32 %v11251, %v11252
    %v11254 = vrot.slane %v11253, 1
    %v11255 = vadd.f32 %v11253, %v11254
    %v11256 = vrot.slane %v11162, 4
    %v11257 = vadd.f32 %v11162, %v11256
    %v11258 = vrot.slane %v11257, 2
    %v11259 = vadd.f32 %v11257, %v11258
    %v11260 = vrot.slane %v11259, 1
    %v11261 = vadd.f32 %v11259, %v11260
    %v11262 = vmul.f32 %v11171, %v577
    %v11263 = vmul.f32 %v11177, %v577
    %v11264 = vmul.f32 %v11183, %v577
    %v11265 = vmul.f32 %v11189, %v577
    %v11266 = vmul.f32 %v11195, %v577
    %v11267 = vmul.f32 %v11201, %v577
    %v11268 = vmul.f32 %v11207, %v577
    %v11269 = vmul.f32 %v11213, %v577
    %v11270 = vmul.f32 %v11219, %v577
    %v11271 = vmul.f32 %v11225, %v577
    %v11272 = vmul.f32 %v11231, %v577
    %v11273 = vmul.f32 %v11237, %v577
    %v11274 = vmul.f32 %v11243, %v577
    %v11275 = vmul.f32 %v11249, %v577
    %v11276 = vmul.f32 %v11255, %v577
    %v11277 = vmul.f32 %v11261, %v577
    %v11278 = vsub.f32 %v10012, %v11262
    %v11279 = vsub.f32 %v10014, %v11263
    %v11280 = vsub.f32 %v10176, %v11264
    %v11281 = vsub.f32 %v10178, %v11265
    %v11282 = vsub.f32 %v10340, %v11266
    %v11283 = vsub.f32 %v10342, %v11267
    %v11284 = vsub.f32 %v10504, %v11268
    %v11285 = vsub.f32 %v10506, %v11269
    %v11286 = vsub.f32 %v10668, %v11270
    %v11287 = vsub.f32 %v10670, %v11271
    %v11288 = vsub.f32 %v10832, %v11272
    %v11289 = vsub.f32 %v10834, %v11273
    %v11290 = vsub.f32 %v10996, %v11274
    %v11291 = vsub.f32 %v10998, %v11275
    %v11292 = vsub.f32 %v11160, %v11276
    %v11293 = vsub.f32 %v11162, %v11277
    %v11294 = vmul.f32 %v11278, %v11278
    %v11295 = vmul.f32 %v11279, %v11279
    %v11296 = vmul.f32 %v11280, %v11280
    %v11297 = vmul.f32 %v11281, %v11281
    %v11298 = vmul.f32 %v11282, %v11282
    %v11299 = vmul.f32 %v11283, %v11283
    %v11300 = vmul.f32 %v11284, %v11284
    %v11301 = vmul.f32 %v11285, %v11285
    %v11302 = vmul.f32 %v11286, %v11286
    %v11303 = vmul.f32 %v11287, %v11287
    %v11304 = vmul.f32 %v11288, %v11288
    %v11305 = vmul.f32 %v11289, %v11289
    %v11306 = vmul.f32 %v11290, %v11290
    %v11307 = vmul.f32 %v11291, %v11291
    %v11308 = vmul.f32 %v11292, %v11292
    %v11309 = vmul.f32 %v11293, %v11293
    %v11310 = vrot.slane %v11294, 4
    %v11311 = vadd.f32 %v11294, %v11310
    %v11312 = vrot.slane %v11311, 2
    %v11313 = vadd.f32 %v11311, %v11312
    %v11314 = vrot.slane %v11313, 1
    %v11315 = vadd.f32 %v11313, %v11314
    %v11316 = vrot.slane %v11295, 4
    %v11317 = vadd.f32 %v11295, %v11316
    %v11318 = vrot.slane %v11317, 2
    %v11319 = vadd.f32 %v11317, %v11318
    %v11320 = vrot.slane %v11319, 1
    %v11321 = vadd.f32 %v11319, %v11320
    %v11322 = vrot.slane %v11296, 4
    %v11323 = vadd.f32 %v11296, %v11322
    %v11324 = vrot.slane %v11323, 2
    %v11325 = vadd.f32 %v11323, %v11324
    %v11326 = vrot.slane %v11325, 1
    %v11327 = vadd.f32 %v11325, %v11326
    %v11328 = vrot.slane %v11297, 4
    %v11329 = vadd.f32 %v11297, %v11328
    %v11330 = vrot.slane %v11329, 2
    %v11331 = vadd.f32 %v11329, %v11330
    %v11332 = vrot.slane %v11331, 1
    %v11333 = vadd.f32 %v11331, %v11332
    %v11334 = vrot.slane %v11298, 4
    %v11335 = vadd.f32 %v11298, %v11334
    %v11336 = vrot.slane %v11335, 2
    %v11337 = vadd.f32 %v11335, %v11336
    %v11338 = vrot.slane %v11337, 1
    %v11339 = vadd.f32 %v11337, %v11338
    %v11340 = vrot.slane %v11299, 4
    %v11341 = vadd.f32 %v11299, %v11340
    %v11342 = vrot.slane %v11341, 2
    %v11343 = vadd.f32 %v11341, %v11342
    %v11344 = vrot.slane %v11343, 1
    %v11345 = vadd.f32 %v11343, %v11344
    %v11346 = vrot.slane %v11300, 4
    %v11347 = vadd.f32 %v11300, %v11346
    %v11348 = vrot.slane %v11347, 2
    %v11349 = vadd.f32 %v11347, %v11348
    %v11350 = vrot.slane %v11349, 1
    %v11351 = vadd.f32 %v11349, %v11350
    %v11352 = vrot.slane %v11301, 4
    %v11353 = vadd.f32 %v11301, %v11352
    %v11354 = vrot.slane %v11353, 2
    %v11355 = vadd.f32 %v11353, %v11354
    %v11356 = vrot.slane %v11355, 1
    %v11357 = vadd.f32 %v11355, %v11356
    %v11358 = vrot.slane %v11302, 4
    %v11359 = vadd.f32 %v11302, %v11358
    %v11360 = vrot.slane %v11359, 2
    %v11361 = vadd.f32 %v11359, %v11360
    %v11362 = vrot.slane %v11361, 1
    %v11363 = vadd.f32 %v11361, %v11362
    %v11364 = vrot.slane %v11303, 4
    %v11365 = vadd.f32 %v11303, %v11364
    %v11366 = vrot.slane %v11365, 2
    %v11367 = vadd.f32 %v11365, %v11366
    %v11368 = vrot.slane %v11367, 1
    %v11369 = vadd.f32 %v11367, %v11368
    %v11370 = vrot.slane %v11304, 4
    %v11371 = vadd.f32 %v11304, %v11370
    %v11372 = vrot.slane %v11371, 2
    %v11373 = vadd.f32 %v11371, %v11372
    %v11374 = vrot.slane %v11373, 1
    %v11375 = vadd.f32 %v11373, %v11374
    %v11376 = vrot.slane %v11305, 4
    %v11377 = vadd.f32 %v11305, %v11376
    %v11378 = vrot.slane %v11377, 2
    %v11379 = vadd.f32 %v11377, %v11378
    %v11380 = vrot.slane %v11379, 1
    %v11381 = vadd.f32 %v11379, %v11380
    %v11382 = vrot.slane %v11306, 4
    %v11383 = vadd.f32 %v11306, %v11382
    %v11384 = vrot.slane %v11383, 2
    %v11385 = vadd.f32 %v11383, %v11384
    %v11386 = vrot.slane %v11385, 1
    %v11387 = vadd.f32 %v11385, %v11386
    %v11388 = vrot.slane %v11307, 4
    %v11389 = vadd.f32 %v11307, %v11388
    %v11390 = vrot.slane %v11389, 2
    %v11391 = vadd.f32 %v11389, %v11390
    %v11392 = vrot.slane %v11391, 1
    %v11393 = vadd.f32 %v11391, %v11392
    %v11394 = vrot.slane %v11308, 4
    %v11395 = vadd.f32 %v11308, %v11394
    %v11396 = vrot.slane %v11395, 2
    %v11397 = vadd.f32 %v11395, %v11396
    %v11398 = vrot.slane %v11397, 1
    %v11399 = vadd.f32 %v11397, %v11398
    %v11400 = vrot.slane %v11309, 4
    %v11401 = vadd.f32 %v11309, %v11400
    %v11402 = vrot.slane %v11401, 2
    %v11403 = vadd.f32 %v11401, %v11402
    %v11404 = vrot.slane %v11403, 1
    %v11405 = vadd.f32 %v11403, %v11404
    %v11406 = vmul.f32 %v11315, %v577
    %v11407 = vmul.f32 %v11321, %v577
    %v11408 = vmul.f32 %v11327, %v577
    %v11409 = vmul.f32 %v11333, %v577
    %v11410 = vmul.f32 %v11339, %v577
    %v11411 = vmul.f32 %v11345, %v577
    %v11412 = vmul.f32 %v11351, %v577
    %v11413 = vmul.f32 %v11357, %v577
    %v11414 = vmul.f32 %v11363, %v577
    %v11415 = vmul.f32 %v11369, %v577
    %v11416 = vmul.f32 %v11375, %v577
    %v11417 = vmul.f32 %v11381, %v577
    %v11418 = vmul.f32 %v11387, %v577
    %v11419 = vmul.f32 %v11393, %v577
    %v11420 = vmul.f32 %v11399, %v577
    %v11421 = vmul.f32 %v11405, %v577
    %v11422 = vadd.f32 %v11406, 1e-05
    %v11423 = vadd.f32 %v11407, 1e-05
    %v11424 = vadd.f32 %v11408, 1e-05
    %v11425 = vadd.f32 %v11409, 1e-05
    %v11426 = vadd.f32 %v11410, 1e-05
    %v11427 = vadd.f32 %v11411, 1e-05
    %v11428 = vadd.f32 %v11412, 1e-05
    %v11429 = vadd.f32 %v11413, 1e-05
    %v11430 = vadd.f32 %v11414, 1e-05
    %v11431 = vadd.f32 %v11415, 1e-05
    %v11432 = vadd.f32 %v11416, 1e-05
    %v11433 = vadd.f32 %v11417, 1e-05
    %v11434 = vadd.f32 %v11418, 1e-05
    %v11435 = vadd.f32 %v11419, 1e-05
    %v11436 = vadd.f32 %v11420, 1e-05
    %v11437 = vadd.f32 %v11421, 1e-05
    %v11438 = vrsqrt.pop %v11422
    %v11439 = vrsqrt.pop %v11423
    %v11440 = vrsqrt.pop %v11424
    %v11441 = vrsqrt.pop %v11425
    %v11442 = vrsqrt.pop %v11426
    %v11443 = vrsqrt.pop %v11427
    %v11444 = vrsqrt.pop %v11428
    %v11445 = vrsqrt.pop %v11429
    %v11446 = vrsqrt.pop %v11430
    %v11447 = vrsqrt.pop %v11431
    %v11448 = vrsqrt.pop %v11432
    %v11449 = vrsqrt.pop %v11433
    %v11450 = vrsqrt.pop %v11434
    %v11451 = vrsqrt.pop %v11435
    %v11452 = vrsqrt.pop %v11436
    %v11453 = vrsqrt.pop %v11437
    %v11454 = vmul.f32 %v11278, %v11438
    %v11455 = vmul.f32 %v11279, %v11439
    %v11456 = vmul.f32 %v11280, %v11440
    %v11457 = vmul.f32 %v11281, %v11441
    %v11458 = vmul.f32 %v11282, %v11442
    %v11459 = vmul.f32 %v11283, %v11443
    %v11460 = vmul.f32 %v11284, %v11444
    %v11461 = vmul.f32 %v11285, %v11445
    %v11462 = vmul.f32 %v11286, %v11446
    %v11463 = vmul.f32 %v11287, %v11447
    %v11464 = vmul.f32 %v11288, %v11448
    %v11465 = vmul.f32 %v11289, %v11449
    %v11466 = vmul.f32 %v11290, %v11450
    %v11467 = vmul.f32 %v11291, %v11451
    %v11468 = vmul.f32 %v11292, %v11452
    %v11469 = vmul.f32 %v11293, %v11453
    %v11470 = vld [vmem:[#allocation32] sm:$0xff]
    %v11471 = vld [vmem:[#allocation32 + $0x8] sm:$0xff]
    %v11474 = vlaneseq
    %v11475 = vshrl.u32 %v11474, 7
    %v11476 = vsub.s32 0, %v11475
    %v11477 = vrot.slane %v11470, %v11476
    %v11478 = vlaneseq
    %v11479 = vshrl.u32 %v11478, 7
    %v11480 = vsub.s32 1, %v11479
    %v11481 = vrot.slane %v11470, %v11480
    %v11482 = vlaneseq
    %v11483 = vshrl.u32 %v11482, 7
    %v11484 = vsub.s32 2, %v11483
    %v11485 = vrot.slane %v11470, %v11484
    %v11486 = vlaneseq
    %v11487 = vshrl.u32 %v11486, 7
    %v11488 = vsub.s32 3, %v11487
    %v11489 = vrot.slane %v11470, %v11488
    %v11490 = vlaneseq
    %v11491 = vshrl.u32 %v11490, 7
    %v11492 = vsub.s32 4, %v11491
    %v11493 = vrot.slane %v11470, %v11492
    %v11494 = vlaneseq
    %v11495 = vshrl.u32 %v11494, 7
    %v11496 = vsub.s32 5, %v11495
    %v11497 = vrot.slane %v11470, %v11496
    %v11498 = vlaneseq
    %v11499 = vshrl.u32 %v11498, 7
    %v11500 = vsub.s32 6, %v11499
    %v11501 = vrot.slane %v11470, %v11500
    %v11502 = vlaneseq
    %v11503 = vshrl.u32 %v11502, 7
    %v11504 = vsub.s32 7, %v11503
    %v11505 = vrot.slane %v11470, %v11504
    %v11506 = vlaneseq
    %v11507 = vshrl.u32 %v11506, 7
    %v11508 = vsub.s32 0, %v11507
    %v11509 = vrot.slane %v11471, %v11508
    %v11510 = vlaneseq
    %v11511 = vshrl.u32 %v11510, 7
    %v11512 = vsub.s32 1, %v11511
    %v11513 = vrot.slane %v11471, %v11512
    %v11514 = vlaneseq
    %v11515 = vshrl.u32 %v11514, 7
    %v11516 = vsub.s32 2, %v11515
    %v11517 = vrot.slane %v11471, %v11516
    %v11518 = vlaneseq
    %v11519 = vshrl.u32 %v11518, 7
    %v11520 = vsub.s32 3, %v11519
    %v11521 = vrot.slane %v11471, %v11520
    %v11522 = vlaneseq
    %v11523 = vshrl.u32 %v11522, 7
    %v11524 = vsub.s32 4, %v11523
    %v11525 = vrot.slane %v11471, %v11524
    %v11526 = vlaneseq
    %v11527 = vshrl.u32 %v11526, 7
    %v11528 = vsub.s32 5, %v11527
    %v11529 = vrot.slane %v11471, %v11528
    %v11530 = vlaneseq
    %v11531 = vshrl.u32 %v11530, 7
    %v11532 = vsub.s32 6, %v11531
    %v11533 = vrot.slane %v11471, %v11532
    %v11534 = vlaneseq
    %v11535 = vshrl.u32 %v11534, 7
    %v11536 = vsub.s32 7, %v11535
    %v11537 = vrot.slane %v11471, %v11536
    %v11554 = vmul.f32 %v11454, %v11477
    %v11555 = vmul.f32 %v11455, %v11481
    %v11556 = vmul.f32 %v11456, %v11485
    %v11557 = vmul.f32 %v11457, %v11489
    %v11558 = vmul.f32 %v11458, %v11493
    %v11559 = vmul.f32 %v11459, %v11497
    %v11560 = vmul.f32 %v11460, %v11501
    %v11561 = vmul.f32 %v11461, %v11505
    %v11562 = vmul.f32 %v11462, %v11509
    %v11563 = vmul.f32 %v11463, %v11513
    %v11564 = vmul.f32 %v11464, %v11517
    %v11565 = vmul.f32 %v11465, %v11521
    %v11566 = vmul.f32 %v11466, %v11525
    %v11567 = vmul.f32 %v11467, %v11529
    %v11568 = vmul.f32 %v11468, %v11533
    %v11569 = vmul.f32 %v11469, %v11537
    %v11570 = vld [vmem:[#allocation34] sm:$0xff]
    %v11571 = vld [vmem:[#allocation34 + $0x8] sm:$0xff]
    %v11574 = vlaneseq
    %v11575 = vshrl.u32 %v11574, 7
    %v11576 = vsub.s32 0, %v11575
    %v11577 = vrot.slane %v11570, %v11576
    %v11578 = vlaneseq
    %v11579 = vshrl.u32 %v11578, 7
    %v11580 = vsub.s32 1, %v11579
    %v11581 = vrot.slane %v11570, %v11580
    %v11582 = vlaneseq
    %v11583 = vshrl.u32 %v11582, 7
    %v11584 = vsub.s32 2, %v11583
    %v11585 = vrot.slane %v11570, %v11584
    %v11586 = vlaneseq
    %v11587 = vshrl.u32 %v11586, 7
    %v11588 = vsub.s32 3, %v11587
    %v11589 = vrot.slane %v11570, %v11588
    %v11590 = vlaneseq
    %v11591 = vshrl.u32 %v11590, 7
    %v11592 = vsub.s32 4, %v11591
    %v11593 = vrot.slane %v11570, %v11592
    %v11594 = vlaneseq
    %v11595 = vshrl.u32 %v11594, 7
    %v11596 = vsub.s32 5, %v11595
    %v11597 = vrot.slane %v11570, %v11596
    %v11598 = vlaneseq
    %v11599 = vshrl.u32 %v11598, 7
    %v11600 = vsub.s32 6, %v11599
    %v11601 = vrot.slane %v11570, %v11600
    %v11602 = vlaneseq
    %v11603 = vshrl.u32 %v11602, 7
    %v11604 = vsub.s32 7, %v11603
    %v11605 = vrot.slane %v11570, %v11604
    %v11606 = vlaneseq
    %v11607 = vshrl.u32 %v11606, 7
    %v11608 = vsub.s32 0, %v11607
    %v11609 = vrot.slane %v11571, %v11608
    %v11610 = vlaneseq
    %v11611 = vshrl.u32 %v11610, 7
    %v11612 = vsub.s32 1, %v11611
    %v11613 = vrot.slane %v11571, %v11612
    %v11614 = vlaneseq
    %v11615 = vshrl.u32 %v11614, 7
    %v11616 = vsub.s32 2, %v11615
    %v11617 = vrot.slane %v11571, %v11616
    %v11618 = vlaneseq
    %v11619 = vshrl.u32 %v11618, 7
    %v11620 = vsub.s32 3, %v11619
    %v11621 = vrot.slane %v11571, %v11620
    %v11622 = vlaneseq
    %v11623 = vshrl.u32 %v11622, 7
    %v11624 = vsub.s32 4, %v11623
    %v11625 = vrot.slane %v11571, %v11624
    %v11626 = vlaneseq
    %v11627 = vshrl.u32 %v11626, 7
    %v11628 = vsub.s32 5, %v11627
    %v11629 = vrot.slane %v11571, %v11628
    %v11630 = vlaneseq
    %v11631 = vshrl.u32 %v11630, 7
    %v11632 = vsub.s32 6, %v11631
    %v11633 = vrot.slane %v11571, %v11632
    %v11634 = vlaneseq
    %v11635 = vshrl.u32 %v11634, 7
    %v11636 = vsub.s32 7, %v11635
    %v11637 = vrot.slane %v11571, %v11636
    %v11654 = vadd.f32 %v11554, %v11577
    %v11655 = vadd.f32 %v11555, %v11581
    %v11656 = vadd.f32 %v11556, %v11585
    %v11657 = vadd.f32 %v11557, %v11589
    %v11658 = vadd.f32 %v11558, %v11593
    %v11659 = vadd.f32 %v11559, %v11597
    %v11660 = vadd.f32 %v11560, %v11601
    %v11661 = vadd.f32 %v11561, %v11605
    %v11662 = vadd.f32 %v11562, %v11609
    %v11663 = vadd.f32 %v11563, %v11613
    %v11664 = vadd.f32 %v11564, %v11617
    %v11665 = vadd.f32 %v11565, %v11621
    %v11666 = vadd.f32 %v11566, %v11625
    %v11667 = vadd.f32 %v11567, %v11629
    %v11668 = vadd.f32 %v11568, %v11633
    %v11669 = vadd.f32 %v11569, %v11637
    %v11670 = vtanh.pop %v11654
    %v11671 = vtanh.pop %v11655
    %v11672 = vtanh.pop %v11656
    %v11673 = vtanh.pop %v11657
    %v11674 = vtanh.pop %v11658
    %v11675 = vtanh.pop %v11659
    %v11676 = vtanh.pop %v11660
    %v11677 = vtanh.pop %v11661
    %v11678 = vtanh.pop %v11662
    %v11679 = vtanh.pop %v11663
    %v11680 = vtanh.pop %v11664
    %v11681 = vtanh.pop %v11665
    %v11682 = vtanh.pop %v11666
    %v11683 = vtanh.pop %v11667
    %v11684 = vtanh.pop %v11668
    %v11685 = vtanh.pop %v11669
    %11686 = vst [vmem:[#allocation35] sm:$0xff] %v11670
    %11687 = vst [vmem:[#allocation35 + $0x8] sm:$0xff] %v11671
    %11688 = vst [vmem:[#allocation35 + $0x10] sm:$0xff] %v11672
    %11689 = vst [vmem:[#allocation35 + $0x18] sm:$0xff] %v11673
    %11690 = vst [vmem:[#allocation35 + $0x20] sm:$0xff] %v11674
    %11691 = vst [vmem:[#allocation35 + $0x28] sm:$0xff] %v11675
    %11692 = vst [vmem:[#allocation35 + $0x30] sm:$0xff] %v11676
    %11693 = vst [vmem:[#allocation35 + $0x38] sm:$0xff] %v11677
    %11694 = vst [vmem:[#allocation35 + $0x40] sm:$0xff] %v11678
    %11695 = vst [vmem:[#allocation35 + $0x48] sm:$0xff] %v11679
    %11696 = vst [vmem:[#allocation35 + $0x50] sm:$0xff] %v11680
    %11697 = vst [vmem:[#allocation35 + $0x58] sm:$0xff] %v11681
    %11698 = vst [vmem:[#allocation35 + $0x60] sm:$0xff] %v11682
    %11699 = vst [vmem:[#allocation35 + $0x68] sm:$0xff] %v11683
    %11700 = vst [vmem:[#allocation35 + $0x70] sm:$0xff] %v11684
    %11701 = vst [vmem:[#allocation35 + $0x78] sm:$0xff] %v11685
    // Predicated region
    $region170: #{tpu_custom_call.1} parent=1 // pred_check
      _
    $region171: #{tpu_custom_call.1} parent=1 // pred_check_branch
      %11703 = sbr.rel (0) target = $region173
    $region172: #{tpu_custom_call.1} parent=1 // pred_region
      %s11705 = ssub.s32 2048, 2048
      %11706 = vsyncadd [#allocation4], %s11705
      %s11708 = sshll.u32 [#allocation35], 4
      %s11709 = int_to_ptr.vmem [resolvable:$true] %s11708
      %11711 = dma.vmem_to_hbm [thread:$0]  %s11709, 2048, %s21, [#allocation4]
    $region173: #{tpu_custom_call.1} parent=1 // pred_fallthru
      _
    // Predicated region
    $region174: #{tpu_custom_call.1} parent=1 // pred_check
      _
    $region175: #{tpu_custom_call.1} parent=1 // pred_check_branch
      %11713 = sbr.rel (0) target = $region177
    $region176: #{tpu_custom_call.1} parent=1 // pred_region
      %11714 = dma.done [#allocation4], 2048
    $region177: #{tpu_custom_call.1} parent=1 // pred_fallthru
      _
    %11715 = vsyncpa [#allocation3], 1
    %11716 = vsyncpa [#allocation6], 1
    %11717 = vsyncpa [#allocation9], 1
    %11718 = vsyncpa [#allocation12], 1
    %11719 = vsyncpa [#allocation15], 1
    %11720 = vsyncpa [#allocation18], 1
    %11721 = vsyncpa [#allocation21], 1
    %11722 = vsyncpa [#allocation24], 1
    %11723 = vsyncpa [#allocation27], 1
    %11724 = vsyncpa [#allocation30], 1
    %11725 = vsyncpa [#allocation33], 1
    %11726 = vsyncpa [#allocation4], 1

</llo_original>
